<compile_context>
chip_gen: v6e
topology: v6e:2x2x1
jax: 0.10.0
libtpu: 0.0.40
codegen_flags: <defaults>
</compile_context>

<pallas_src>
import functools

import numpy as np
import jax
import jax.numpy as jnp
from jax.experimental import pallas as pl
from jax.experimental.pallas import tpu as pltpu

# ----------------------------- config ---------------------------------------
B, T, H, W = 2, 2, 8, 8          # small synthetic problem
CX, CM, CO = 2, 1, 1             # x_t / m_t / m_t_others channels
INPUT_DIM = CX + CM + CO         # concat on last axis
H_UNITS = [8, 8]                 # hidden_dim = h_units[0], out_dim = h_units[-1]
HIDDEN_DIM = H_UNITS[0]
OUTPUT_DIM = H_UNITS[-1]
N_LAYERS = len(H_UNITS)
NUM_CLASS = 10
KSIZE = 5                        # self.filter_size
PAD = KSIZE // 2
NTAP = KSIZE * KSIZE
M = B * H * W                    # 128  -> per-timestep lane-dense dim
MT = B * T * H * W               # 256  -> batched (non-recurrent) lane-dense dim


# --------------------- fused non-recurrent matmul kernels --------------------
def _matmul_act_kernel(w_ref, a_ref, b_ref, o_ref, *, act):
    # o (N, MT) = act(W (N, K) @ patches^T (K, MT) + bias (N, 1)) -- transposed
    # so the output lane dim is MT (= 256): dense unmasked stores.
    y = jnp.dot(w_ref[...], a_ref[...], preferred_element_type=jnp.float32)
    o_ref[...] = act(y + b_ref[...])


def _matmul_act_nobias_kernel(w_ref, a_ref, o_ref, *, act):
    o_ref[...] = act(
        jnp.dot(w_ref[...], a_ref[...], preferred_element_type=jnp.float32))


def pallas_matmul_act(w_t, a_t, bias, act):
    n = w_t.shape[0]
    m = a_t.shape[1]
    return pl.pallas_call(
        functools.partial(_matmul_act_kernel, act=act),
        out_shape=jax.ShapeDtypeStruct((n, m), jnp.float32),
    )(w_t.astype(jnp.bfloat16), a_t.astype(jnp.bfloat16),
      bias.reshape(n, 1).astype(jnp.float32))


def pallas_matmul_act_nobias(w_t, a_t, act):
    n = w_t.shape[0]
    m = a_t.shape[1]
    return pl.pallas_call(
        functools.partial(_matmul_act_nobias_kernel, act=act),
        out_shape=jax.ShapeDtypeStruct((n, m), jnp.float32),
    )(w_t.astype(jnp.bfloat16), a_t.astype(jnp.bfloat16))


# --------------------- tap-shift matrices (built once on host) ---------------
def make_shift_matrices():
    # s[tap, m_in, m_out] = 1  iff  (cat @ s[tap])[:, m_out] == cat[:, m_in]
    # with m = b*H*W + i*W + j and tap offset (kh - PAD, kw - PAD); zero-padded
    # borders fall out naturally (all-zero columns).
    s = np.zeros((NTAP, M, M), np.float32)
    for kh in range(KSIZE):
        for kw in range(KSIZE):
            tap = kh * KSIZE + kw
            dh, dw = kh - PAD, kw - PAD
            for b in range(B):
                for i in range(H):
                    for j in range(W):
                        ii, jj = i + dh, j + dw
                        if 0 <= ii < H and 0 <= jj < W:
                            m_out = (b * H + i) * W + j
                            m_in = (b * H + ii) * W + jj
                            s[tap, m_in, m_out] = 1.0
    return jnp.asarray(s, jnp.bfloat16)   # exact 0/1 in bf16


# --------------------- fused recurrent ConvLSTM-stack kernel -----------------
def _convlstm_seq_kernel(emb_ref, w_ref, b_ref, hinit_ref, cinit_ref, shift_ref,
                         hseq_ref, hfin_ref, cfin_ref):
    # emb_ref   : (1, HD, M)           this timestep's embedded frame (ch-major)
    # w_ref     : (L, 4HD, 25*2HD)     bf16 gate weights (tap-major columns)
    # b_ref     : (L, 4HD, 1)          f32 gate bias
    # hinit/cinit: (L, HD, M)          initial state
    # shift_ref : (25, M, M)           bf16 0/1 tap-shift matrices
    # hseq_ref  : (1, HD, M)           per-timestep last-layer h (output)
    # hfin/cfin : (L, HD, M)           VMEM-resident state (constant index_map)
    t = pl.program_id(0)
    hd = HIDDEN_DIM

    @pl.when(t == 0)
    def _init():
        hfin_ref[...] = hinit_ref[...]
        cfin_ref[...] = cinit_ref[...]

    inp_cm = emb_ref[0]                              # (HD, M) f32, channel-major
    for layer in range(N_LAYERS):
        h_cm = hfin_ref[layer]                       # (HD, M)
        c_cm = cfin_ref[layer]                       # (HD, M)

        # cat([x, h]) along channels: cheap sublane concat in channel-major.
        cat_bf = jnp.concatenate([inp_cm, h_cm], axis=0).astype(jnp.bfloat16)

        # in-kernel im2col via 25 tap-shift matmuls (pure selection on the MXU;
        # no padded scratch, no unaligned ref slices, no in-kernel reshapes).
        taps = []
        for tap in range(NTAP):
            sh = jnp.dot(cat_bf, shift_ref[tap],
                         preferred_element_type=jnp.float32)      # (2HD, M)
            taps.append(sh.astype(jnp.bfloat16))
        patches = jnp.concatenate(taps, axis=0)                   # (25*2HD, M)

        # single MXU matmul for all 4 gates, f32 accumulation, fused bias.
        g = jnp.dot(w_ref[layer], patches,
                    preferred_element_type=jnp.float32) + b_ref[layer]  # (4HD, M)

        # gate order (i, f, o, g); each slice is an aligned (8, 128) sublane view
        i_g = jax.nn.sigmoid(g[0 * hd:1 * hd, :])
        f_g = jax.nn.sigmoid(g[1 * hd:2 * hd, :])
        o_g = jax.nn.sigmoid(g[2 * hd:3 * hd, :])
        g_g = jnp.tanh(g[3 * hd:4 * hd, :])

        c_new = f_g * c_cm + i_g * g_g
        h_new = o_g * jnp.tanh(c_new)

        hfin_ref[layer] = h_new                      # state stays VMEM-resident
        cfin_ref[layer] = c_new
        inp_cm = h_new                               # feeds the next layer

    hseq_ref[0] = inp_cm                             # last layer's h, this step


def convlstm_sequence(emb_seq, cell_w, cell_b, h_init, c_init, shift_mats):
    hd = HIDDEN_DIM
    grid_spec = pltpu.PrefetchScalarGridSpec(
        num_scalar_prefetch=0,
        grid=(T,),
        in_specs=[
            pl.BlockSpec((1, hd, M), lambda t: (t, 0, 0)),                   # emb
            pl.BlockSpec((N_LAYERS, 4 * hd, NTAP * 2 * hd),
                         lambda t: (0, 0, 0)),                               # w
            pl.BlockSpec((N_LAYERS, 4 * hd, 1), lambda t: (0, 0, 0)),        # b
            pl.BlockSpec((N_LAYERS, hd, M), lambda t: (0, 0, 0)),            # h0
            pl.BlockSpec((N_LAYERS, hd, M), lambda t: (0, 0, 0)),            # c0
            pl.BlockSpec((NTAP, M, M), lambda t: (0, 0, 0)),                 # shift
        ],
        out_specs=[
            pl.BlockSpec((1, hd, M), lambda t: (t, 0, 0)),                   # h per t
            pl.BlockSpec((N_LAYERS, hd, M), lambda t: (0, 0, 0)),            # final h
            pl.BlockSpec((N_LAYERS, hd, M), lambda t: (0, 0, 0)),            # final c
        ],
    )
    return pl.pallas_call(
        _convlstm_seq_kernel,
        grid_spec=grid_spec,
        out_shape=(
            jax.ShapeDtypeStruct((T, hd, M), jnp.float32),
            jax.ShapeDtypeStruct((N_LAYERS, hd, M), jnp.float32),
            jax.ShapeDtypeStruct((N_LAYERS, hd, M), jnp.float32),
        ),
        compiler_params=pltpu.CompilerParams(
            dimension_semantics=("arbitrary",)),     # T is a true recurrence
    )(emb_seq, cell_w, cell_b, h_init, c_init, shift_mats)


# ----------------------------- im2col glue (plain JAX, non-recurrent only) ---
def im2col_2d(x, k):
    # x: (N, H, W, C) channel-last -> (N*H*W, k*k*C), K-order = (kh, kw, C_in)
    n, h, w, c = x.shape
    p = k // 2
    xp = jnp.pad(x, ((0, 0), (p, p), (p, p), (0, 0)))
    cols = []
    for i in range(k):
        for j in range(k):
            cols.append(xp[:, i:i + h, j:j + w, :])
    pat = jnp.stack(cols, axis=3)            # (N, H, W, k*k, C)
    return pat.reshape(n * h * w, k * k * c)


def im2col_3d(x, k):
    # x: (B, T, H, W, C) -> (B*T*H*W, k^3*C), K-order = (kd, kh, kw, C_in)
    b, t, h, w, c = x.shape
    p = k // 2
    xp = jnp.pad(x, ((0, 0), (p, p), (p, p), (p, p), (0, 0)))
    cols = []
    for d in range(k):
        for i in range(k):
            for j in range(k):
                cols.append(xp[:, d:d + t, i:i + h, j:j + w, :])
    pat = jnp.stack(cols, axis=4)            # (B, T, H, W, k^3, C)
    return pat.reshape(b * t * h * w, k ** 3 * c)


# ----------------------------- forward ---------------------------------------
def conv_nn_v2_forward(params, x_t, m_t, m_t_others, frame_predictor_hidden,
                       h_t, c_t, delta_c_list, delta_m_list):
    hd = HIDDEN_DIM
    # torch.cat([x_t, m_t, m_t_others], -1); the NCDHW permute is handled
    # implicitly by the channel-last / channel-major layouts used below.
    x = jnp.concatenate([x_t, m_t, m_t_others], axis=-1)       # (B, T, H, W, C)

    # ---- embed conv (5x5, pad 2) over ALL frames at once -----------------------
    frames = x.reshape(B * T, H, W, INPUT_DIM)
    emb_pat_t = im2col_2d(frames, KSIZE).T                     # (25*C_in, MT)
    emb_t = pallas_matmul_act(params["embed_w_t"], emb_pat_t,
                              params["embed_b"], act=lambda v: v)   # (HD, MT)
    emb_seq = (emb_t.reshape(hd, B, T, H, W)
               .transpose(2, 0, 1, 3, 4)
               .reshape(T, hd, M))                             # (T, HD, B*H*W)

    # ---- ConvLSTM stack: one grid=(T,) pallas_call, state resident in VMEM ----
    hs0, cs0 = frame_predictor_hidden
    h_init = jnp.stack([h.reshape(M, hd).T for h in hs0], axis=0)   # (L, HD, M)
    c_init = jnp.stack([c.reshape(M, hd).T for c in cs0], axis=0)
    h_seq, h_fin, c_fin = convlstm_sequence(
        emb_seq, params["cell_w"], params["cell_b"], h_init, c_init,
        params["shift_t"])

    # ---- output conv (5x5, pad 2) + tanh, all T frames in one kernel ----------
    h_seq_bhwc = (h_seq.reshape(T, hd, B, H, W)
                  .transpose(2, 0, 3, 4, 1)
                  .reshape(B * T, H, W, hd))
    out_pat_t = im2col_2d(h_seq_bhwc, KSIZE).T                 # (25*HD, MT)
    h_vol_t = pallas_matmul_act(params["out_w_t"], out_pat_t,
                                params["out_b"], act=jnp.tanh)  # (OUT, MT)
    h_vol = (h_vol_t.reshape(OUTPUT_DIM, B, T, H, W)
             .transpose(1, 2, 3, 4, 0))                        # (B, T, H, W, OUT)

    # ---- l3: Conv3d(OUT -> NUM_CLASS, k=5, pad=2, bias=False) + sigmoid -------
    l3_pat_t = im2col_3d(h_vol, KSIZE).T                       # (125*OUT, MT)
    pred_t = pallas_matmul_act_nobias(params["l3_w_t"], l3_pat_t,
                                      act=jax.nn.sigmoid)      # (NUM_CLASS, MT)
    pred_x_tp1 = (pred_t.reshape(NUM_CLASS, B, T, H, W)
                  .transpose(1, 2, 3, 4, 0))                   # (B, T, H, W, 10)

    # new hidden back to the caller-facing (B, H, W, HD) per-layer layout
    hs = tuple(h_fin[l].T.reshape(B, H, W, hd) for l in range(N_LAYERS))
    cs = tuple(c_fin[l].T.reshape(B, H, W, hd) for l in range(N_LAYERS))

    message = None
    new_hidden = (hs, cs)
    return pred_x_tp1, message, new_hidden, h_t, c_t, delta_c_list, delta_m_list


# ----------------------------- param init ------------------------------------
def init_params(key):
    ks = jax.random.split(key, 3 + N_LAYERS)
    scale = 0.1
    # PyTorch-convention weights, flattened ONCE at init into the transposed
    # matmul layouts the kernels consume (no per-call layout work).
    embed_w = scale * jax.random.normal(
        ks[0], (HIDDEN_DIM, INPUT_DIM, KSIZE, KSIZE), jnp.float32)
    out_w = scale * jax.random.normal(
        ks[1], (OUTPUT_DIM, HIDDEN_DIM, KSIZE, KSIZE), jnp.float32)
    l3_w = scale * jax.random.normal(
        ks[2], (NUM_CLASS, OUTPUT_DIM, KSIZE, KSIZE, KSIZE), jnp.float32)

    cell_ws, cell_bs = [], []
    for l in range(N_LAYERS):
        w = scale * jax.random.normal(
            ks[3 + l], (4 * HIDDEN_DIM, 2 * HIDDEN_DIM, KSIZE, KSIZE), jnp.float32)
        # (4HD, 2HD, kh, kw) -> (4HD, kh*kw*2HD); columns ordered (kh, kw, c_in)
        cell_ws.append(jnp.transpose(w, (0, 2, 3, 1))
                       .reshape(4 * HIDDEN_DIM, KSIZE * KSIZE * 2 * HIDDEN_DIM))
        cell_bs.append(jnp.zeros((4 * HIDDEN_DIM, 1), jnp.float32))

    return {
        # (C_out, C_in, kh, kw) -> (C_out, kh*kw*C_in): transposed-matmul LHS
        "embed_w_t": embed_w.transpose(0, 2, 3, 1).reshape(HIDDEN_DIM, -1),
        "embed_b": jnp.zeros((HIDDEN_DIM,), jnp.float32),
        "out_w_t": out_w.transpose(0, 2, 3, 1).reshape(OUTPUT_DIM, -1),
        "out_b": jnp.zeros((OUTPUT_DIM,), jnp.float32),
        # Conv3d, bias=False: (C_out, C_in, kd, kh, kw) -> (C_out, k^3*C_in)
        "l3_w_t": l3_w.transpose(0, 2, 3, 4, 1).reshape(NUM_CLASS, -1),
        "cell_w": jnp.stack(cell_ws, axis=0).astype(jnp.bfloat16),  # (L, 32, 400)
        "cell_b": jnp.stack(cell_bs, axis=0),                       # (L, 32, 1)
        "shift_t": make_shift_matrices(),                           # (25, M, M)
    }


# ----------------------------- main -------------------------------------------
if __name__ == "__main__":
    key = jax.random.PRNGKey(0)
    k_p, k_x, k_m, k_o = jax.random.split(key, 4)

    params = init_params(k_p)

    x_t = jax.random.normal(k_x, (B, T, H, W, CX), jnp.float32)
    m_t = jax.random.normal(k_m, (B, T, H, W, CM), jnp.float32)
    m_t_others = jax.random.normal(k_o, (B, T, H, W, CO), jnp.float32)

    zeros_state = jnp.zeros((B, H, W, HIDDEN_DIM), jnp.float32)
    frame_predictor_hidden = (
        tuple(zeros_state for _ in range(N_LAYERS)),
        tuple(zeros_state for _ in range(N_LAYERS)),
    )
    # passthrough args (unused by forward, returned unchanged)
    h_t = [zeros_state for _ in range(N_LAYERS)]
    c_t = [zeros_state for _ in range(N_LAYERS)]
    delta_c_list = [jnp.zeros((B, H, W, HIDDEN_DIM), jnp.float32)]
    delta_m_list = [jnp.zeros((B, H, W, HIDDEN_DIM), jnp.float32)]

    fwd = jax.jit(functools.partial(conv_nn_v2_forward, params))
    pred_x_tp1, message, new_hidden, h_t, c_t, delta_c_list, delta_m_list = fwd(
        x_t, m_t, m_t_others, frame_predictor_hidden, h_t, c_t,
        delta_c_list, delta_m_list)
    pred_x_tp1 = jax.block_until_ready(pred_x_tp1)

    assert pred_x_tp1.shape == (B, T, H, W, NUM_CLASS)
    assert bool(jnp.all(jnp.isfinite(pred_x_tp1)))
    assert bool(jnp.all((pred_x_tp1 >= 0.0) & (pred_x_tp1 <= 1.0)))  # sigmoid range
    hs_new, cs_new = new_hidden
    assert len(hs_new) == N_LAYERS and hs_new[0].shape == (B, H, W, HIDDEN_DIM)
    print("KERNEL_OK")
</pallas_src>

<mosaic_0001>
module attributes {stable_mosaic.version = 11 : i64} {
  func.func @_matmul_act_kernel(%arg0: memref<8x100xbf16, #tpu.memory_space<vmem>>, %arg1: memref<100x256xbf16, #tpu.memory_space<vmem>>, %arg2: memref<8x1xf32, #tpu.memory_space<vmem>>, %arg3: memref<8x256xf32, #tpu.memory_space<vmem>>) attributes {dimension_semantics = [], scalar_prefetch = 0 : i64, scratch_operands = 0 : i64, tpu.core_type = #tpu.core_type<tc>} {
    %c0 = arith.constant 0 : index
    %c0_0 = arith.constant 0 : index
    %0 = vector.load %arg0[%c0, %c0_0] : memref<8x100xbf16, #tpu.memory_space<vmem>>, vector<8x100xbf16>
    %c0_1 = arith.constant 0 : index
    %c0_2 = arith.constant 0 : index
    %1 = vector.load %arg1[%c0_1, %c0_2] : memref<100x256xbf16, #tpu.memory_space<vmem>>, vector<100x256xbf16>
    %cst = arith.constant dense<0.000000e+00> : vector<8x256xf32>
    %2 = tpu.matmul %0, %1, %cst {dimension_numbers = #tpu.dot_dimension_numbers<[1], [0], [0], [1], [0, 0, 1, 1], [], []>} : vector<8x100xbf16>, vector<100x256xbf16>, vector<8x256xf32> -> vector<8x256xf32>
    %c0_3 = arith.constant 0 : index
    %c0_4 = arith.constant 0 : index
    %3 = vector.load %arg2[%c0_3, %c0_4] : memref<8x1xf32, #tpu.memory_space<vmem>>, vector<8x1xf32>
    %4 = vector.broadcast %3 : vector<8x1xf32> to vector<8x256xf32>
    %5 = arith.addf %2, %4 : vector<8x256xf32>
    %c0_5 = arith.constant 0 : index
    %c0_6 = arith.constant 0 : index
    %6 = vector.load %arg3[%c0_5, %c0_6] : memref<8x256xf32, #tpu.memory_space<vmem>>, vector<8x256xf32>
    tpu.vector_store %arg3[%c0_5, %c0_6], %5 {strides = array<i32>} : memref<8x256xf32, #tpu.memory_space<vmem>>, vector<8x256xf32>,
    return
  }
}

module attributes {stable_mosaic.version = 11 : i64} {
  func.func @_convlstm_seq_kernel(%arg0: i32, %arg1: memref<1x8x128xf32, #tpu.memory_space<vmem>>, %arg2: memref<2x32x400xbf16, #tpu.memory_space<vmem>>, %arg3: memref<2x32x1xf32, #tpu.memory_space<vmem>>, %arg4: memref<2x8x128xf32, #tpu.memory_space<vmem>>, %arg5: memref<2x8x128xf32, #tpu.memory_space<vmem>>, %arg6: memref<25x128x128xbf16, #tpu.memory_space<vmem>>, %arg7: memref<1x8x128xf32, #tpu.memory_space<vmem>>, %arg8: memref<2x8x128xf32, #tpu.memory_space<vmem>>, %arg9: memref<2x8x128xf32, #tpu.memory_space<vmem>>) attributes {dimension_semantics = [#tpu.dimension_semantics<arbitrary>], iteration_bounds = array<i64: 2>, scalar_prefetch = 0 : i64, scratch_operands = 0 : i64, tpu.core_type = #tpu.core_type<tc>, window_params = [{transform_indices = @transform_0, window_bounds = array<i64: 1, 8, 128>}, {pipeline_mode = #tpu.pipeline_mode<synchronous>, transform_indices = @transform_1, window_bounds = array<i64: 2, 32, 400>}, {pipeline_mode = #tpu.pipeline_mode<synchronous>, transform_indices = @transform_2, window_bounds = array<i64: 2, 32, 1>}, {pipeline_mode = #tpu.pipeline_mode<synchronous>, transform_indices = @transform_3, window_bounds = array<i64: 2, 8, 128>}, {pipeline_mode = #tpu.pipeline_mode<synchronous>, transform_indices = @transform_4, window_bounds = array<i64: 2, 8, 128>}, {pipeline_mode = #tpu.pipeline_mode<synchronous>, transform_indices = @transform_5, window_bounds = array<i64: 25, 128, 128>}, {transform_indices = @transform_6, window_bounds = array<i64: 1, 8, 128>}, {pipeline_mode = #tpu.pipeline_mode<synchronous>, transform_indices = @transform_7, window_bounds = array<i64: 2, 8, 128>}, {pipeline_mode = #tpu.pipeline_mode<synchronous>, transform_indices = @transform_8, window_bounds = array<i64: 2, 8, 128>}]} {
    %c0_i32 = arith.constant 0 : i32
    %0 = arith.cmpi eq, %arg0, %c0_i32 : i32
    %1 = arith.extui %0 : i1 to i32
    %c0_i32_0 = arith.constant 0 : i32
    %2 = arith.cmpi ne, %1, %c0_i32_0 : i32
    scf.if %2 {
      %c0_225 = arith.constant 0 : index
      %c0_226 = arith.constant 0 : index
      %c0_227 = arith.constant 0 : index
      %302 = vector.load %arg4[%c0_225, %c0_226, %c0_227] : memref<2x8x128xf32, #tpu.memory_space<vmem>>, vector<2x8x128xf32>
      %c0_228 = arith.constant 0 : index
      %c0_229 = arith.constant 0 : index
      %c0_230 = arith.constant 0 : index
      %303 = vector.load %arg8[%c0_228, %c0_229, %c0_230] : memref<2x8x128xf32, #tpu.memory_space<vmem>>, vector<2x8x128xf32>
      tpu.vector_store %arg8[%c0_228, %c0_229, %c0_230], %302 {strides = array<i32>} : memref<2x8x128xf32, #tpu.memory_space<vmem>>, vector<2x8x128xf32>,
      %c0_231 = arith.constant 0 : index
      %c0_232 = arith.constant 0 : index
      %c0_233 = arith.constant 0 : index
      %304 = vector.load %arg5[%c0_231, %c0_232, %c0_233] : memref<2x8x128xf32, #tpu.memory_space<vmem>>, vector<2x8x128xf32>
      %c0_234 = arith.constant 0 : index
      %c0_235 = arith.constant 0 : index
      %c0_236 = arith.constant 0 : index
      %305 = vector.load %arg9[%c0_234, %c0_235, %c0_236] : memref<2x8x128xf32, #tpu.memory_space<vmem>>, vector<2x8x128xf32>
      tpu.vector_store %arg9[%c0_234, %c0_235, %c0_236], %304 {strides = array<i32>} : memref<2x8x128xf32, #tpu.memory_space<vmem>>, vector<2x8x128xf32>,
    } else {
    }
    %c0 = arith.constant 0 : index
    %c0_1 = arith.constant 0 : index
    %c0_2 = arith.constant 0 : index
    %3 = vector.load %arg1[%c0, %c0_1, %c0_2] : memref<1x8x128xf32, #tpu.memory_space<vmem>>, vector<1x8x128xf32>
    %4 = vector.shape_cast %3 : vector<1x8x128xf32> to vector<8x128xf32>
    %c0_3 = arith.constant 0 : index
    %c0_4 = arith.constant 0 : index
    %c0_5 = arith.constant 0 : index
    %5 = vector.load %arg8[%c0_3, %c0_4, %c0_5] : memref<2x8x128xf32, #tpu.memory_space<vmem>>, vector<1x8x128xf32>
    %6 = vector.shape_cast %5 : vector<1x8x128xf32> to vector<8x128xf32>
    %c0_6 = arith.constant 0 : index
    %c0_7 = arith.constant 0 : index
    %c0_8 = arith.constant 0 : index
    %7 = vector.load %arg9[%c0_6, %c0_7, %c0_8] : memref<2x8x128xf32, #tpu.memory_space<vmem>>, vector<1x8x128xf32>
    %8 = vector.shape_cast %7 : vector<1x8x128xf32> to vector<8x128xf32>
    %9 = tpu.concatenate %4, %6 in 0 : vector<8x128xf32>, vector<8x128xf32> -> vector<16x128xf32>
    %10 = arith.truncf %9 : vector<16x128xf32> to vector<16x128xbf16>
    %c0_9 = arith.constant 0 : index
    %c0_10 = arith.constant 0 : index
    %c0_11 = arith.constant 0 : index
    %11 = vector.load %arg6[%c0_9, %c0_10, %c0_11] : memref<25x128x128xbf16, #tpu.memory_space<vmem>>, vector<1x128x128xbf16>
    %12 = vector.shape_cast %11 : vector<1x128x128xbf16> to vector<128x128xbf16>
    %cst = arith.constant dense<0.000000e+00> : vector<16x128xf32>
    %13 = tpu.matmul %10, %12, %cst {dimension_numbers = #tpu.dot_dimension_numbers<[1], [0], [0], [1], [0, 0, 1, 1], [], []>} : vector<16x128xbf16>, vector<128x128xbf16>, vector<16x128xf32> -> vector<16x128xf32>
    %14 = arith.truncf %13 : vector<16x128xf32> to vector<16x128xbf16>
    %c1 = arith.constant 1 : index
    %c0_12 = arith.constant 0 : index
    %c0_13 = arith.constant 0 : index
    %15 = vector.load %arg6[%c1, %c0_12, %c0_13] : memref<25x128x128xbf16, #tpu.memory_space<vmem>>, vector<1x128x128xbf16>
    %16 = vector.shape_cast %15 : vector<1x128x128xbf16> to vector<128x128xbf16>
    %cst_14 = arith.constant dense<0.000000e+00> : vector<16x128xf32>
    %17 = tpu.matmul %10, %16, %cst_14 {dimension_numbers = #tpu.dot_dimension_numbers<[1], [0], [0], [1], [0, 0, 1, 1], [], []>} : vector<16x128xbf16>, vector<128x128xbf16>, vector<16x128xf32> -> vector<16x128xf32>
    %18 = arith.truncf %17 : vector<16x128xf32> to vector<16x128xbf16>
    %c2 = arith.constant 2 : index
    %c0_15 = arith.constant 0 : index
    %c0_16 = arith.constant 0 : index
    %19 = vector.load %arg6[%c2, %c0_15, %c0_16] : memref<25x128x128xbf16, #tpu.memory_space<vmem>>, vector<1x128x128xbf16>
    %20 = vector.shape_cast %19 : vector<1x128x128xbf16> to vector<128x128xbf16>
    %cst_17 = arith.constant dense<0.000000e+00> : vector<16x128xf32>
    %21 = tpu.matmul %10, %20, %cst_17 {dimension_numbers = #tpu.dot_dimension_numbers<[1], [0], [0], [1], [0, 0, 1, 1], [], []>} : vector<16x128xbf16>, vector<128x128xbf16>, vector<16x128xf32> -> vector<16x128xf32>
    %22 = arith.truncf %21 : vector<16x128xf32> to vector<16x128xbf16>
    %c3 = arith.constant 3 : index
    %c0_18 = arith.constant 0 : index
    %c0_19 = arith.constant 0 : index
    %23 = vector.load %arg6[%c3, %c0_18, %c0_19] : memref<25x128x128xbf16, #tpu.memory_space<vmem>>, vector<1x128x128xbf16>
    %24 = vector.shape_cast %23 : vector<1x128x128xbf16> to vector<128x128xbf16>
    %cst_20 = arith.constant dense<0.000000e+00> : vector<16x128xf32>
    %25 = tpu.matmul %10, %24, %cst_20 {dimension_numbers = #tpu.dot_dimension_numbers<[1], [0], [0], [1], [0, 0, 1, 1], [], []>} : vector<16x128xbf16>, vector<128x128xbf16>, vector<16x128xf32> -> vector<16x128xf32>
    %26 = arith.truncf %25 : vector<16x128xf32> to vector<16x128xbf16>
    %c4 = arith.constant 4 : index
    %c0_21 = arith.constant 0 : index
    %c0_22 = arith.constant 0 : index
    %27 = vector.load %arg6[%c4, %c0_21, %c0_22] : memref<25x128x128xbf16, #tpu.memory_space<vmem>>, vector<1x128x128xbf16>
    %28 = vector.shape_cast %27 : vector<1x128x128xbf16> to vector<128x128xbf16>
    %cst_23 = arith.constant dense<0.000000e+00> : vector<16x128xf32>
    %29 = tpu.matmul %10, %28, %cst_23 {dimension_numbers = #tpu.dot_dimension_numbers<[1], [0], [0], [1], [0, 0, 1, 1], [], []>} : vector<16x128xbf16>, vector<128x128xbf16>, vector<16x128xf32> -> vector<16x128xf32>
    %30 = arith.truncf %29 : vector<16x128xf32> to vector<16x128xbf16>
    %c5 = arith.constant 5 : index
    %c0_24 = arith.constant 0 : index
    %c0_25 = arith.constant 0 : index
    %31 = vector.load %arg6[%c5, %c0_24, %c0_25] : memref<25x128x128xbf16, #tpu.memory_space<vmem>>, vector<1x128x128xbf16>
    %32 = vector.shape_cast %31 : vector<1x128x128xbf16> to vector<128x128xbf16>
    %cst_26 = arith.constant dense<0.000000e+00> : vector<16x128xf32>
    %33 = tpu.matmul %10, %32, %cst_26 {dimension_numbers = #tpu.dot_dimension_numbers<[1], [0], [0], [1], [0, 0, 1, 1], [], []>} : vector<16x128xbf16>, vector<128x128xbf16>, vector<16x128xf32> -> vector<16x128xf32>
    %34 = arith.truncf %33 : vector<16x128xf32> to vector<16x128xbf16>
    %c6 = arith.constant 6 : index
    %c0_27 = arith.constant 0 : index
    %c0_28 = arith.constant 0 : index
    %35 = vector.load %arg6[%c6, %c0_27, %c0_28] : memref<25x128x128xbf16, #tpu.memory_space<vmem>>, vector<1x128x128xbf16>
    %36 = vector.shape_cast %35 : vector<1x128x128xbf16> to vector<128x128xbf16>
    %cst_29 = arith.constant dense<0.000000e+00> : vector<16x128xf32>
    %37 = tpu.matmul %10, %36, %cst_29 {dimension_numbers = #tpu.dot_dimension_numbers<[1], [0], [0], [1], [0, 0, 1, 1], [], []>} : vector<16x128xbf16>, vector<128x128xbf16>, vector<16x128xf32> -> vector<16x128xf32>
    %38 = arith.truncf %37 : vector<16x128xf32> to vector<16x128xbf16>
    %c7 = arith.constant 7 : index
    %c0_30 = arith.constant 0 : index
    %c0_31 = arith.constant 0 : index
    %39 = vector.load %arg6[%c7, %c0_30, %c0_31] : memref<25x128x128xbf16, #tpu.memory_space<vmem>>, vector<1x128x128xbf16>
    %40 = vector.shape_cast %39 : vector<1x128x128xbf16> to vector<128x128xbf16>
    %cst_32 = arith.constant dense<0.000000e+00> : vector<16x128xf32>
    %41 = tpu.matmul %10, %40, %cst_32 {dimension_numbers = #tpu.dot_dimension_numbers<[1], [0], [0], [1], [0, 0, 1, 1], [], []>} : vector<16x128xbf16>, vector<128x128xbf16>, vector<16x128xf32> -> vector<16x128xf32>
    %42 = arith.truncf %41 : vector<16x128xf32> to vector<16x128xbf16>
    %c8 = arith.constant 8 : index
    %c0_33 = arith.constant 0 : index
    %c0_34 = arith.constant 0 : index
    %43 = vector.load %arg6[%c8, %c0_33, %c0_34] : memref<25x128x128xbf16, #tpu.memory_space<vmem>>, vector<1x128x128xbf16>
    %44 = vector.shape_cast %43 : vector<1x128x128xbf16> to vector<128x128xbf16>
    %cst_35 = arith.constant dense<0.000000e+00> : vector<16x128xf32>
    %45 = tpu.matmul %10, %44, %cst_35 {dimension_numbers = #tpu.dot_dimension_numbers<[1], [0], [0], [1], [0, 0, 1, 1], [], []>} : vector<16x128xbf16>, vector<128x128xbf16>, vector<16x128xf32> -> vector<16x128xf32>
    %46 = arith.truncf %45 : vector<16x128xf32> to vector<16x128xbf16>
    %c9 = arith.constant 9 : index
    %c0_36 = arith.constant 0 : index
    %c0_37 = arith.constant 0 : index
    %47 = vector.load %arg6[%c9, %c0_36, %c0_37] : memref<25x128x128xbf16, #tpu.memory_space<vmem>>, vector<1x128x128xbf16>
    %48 = vector.shape_cast %47 : vector<1x128x128xbf16> to vector<128x128xbf16>
    %cst_38 = arith.constant dense<0.000000e+00> : vector<16x128xf32>
    %49 = tpu.matmul %10, %48, %cst_38 {dimension_numbers = #tpu.dot_dimension_numbers<[1], [0], [0], [1], [0, 0, 1, 1], [], []>} : vector<16x128xbf16>, vector<128x128xbf16>, vector<16x128xf32> -> vector<16x128xf32>
    %50 = arith.truncf %49 : vector<16x128xf32> to vector<16x128xbf16>
    %c10 = arith.constant 10 : index
    %c0_39 = arith.constant 0 : index
    %c0_40 = arith.constant 0 : index
    %51 = vector.load %arg6[%c10, %c0_39, %c0_40] : memref<25x128x128xbf16, #tpu.memory_space<vmem>>, vector<1x128x128xbf16>
    %52 = vector.shape_cast %51 : vector<1x128x128xbf16> to vector<128x128xbf16>
    %cst_41 = arith.constant dense<0.000000e+00> : vector<16x128xf32>
    %53 = tpu.matmul %10, %52, %cst_41 {dimension_numbers = #tpu.dot_dimension_numbers<[1], [0], [0], [1], [0, 0, 1, 1], [], []>} : vector<16x128xbf16>, vector<128x128xbf16>, vector<16x128xf32> -> vector<16x128xf32>
    %54 = arith.truncf %53 : vector<16x128xf32> to vector<16x128xbf16>
    %c11 = arith.constant 11 : index
    %c0_42 = arith.constant 0 : index
    %c0_43 = arith.constant 0 : index
    %55 = vector.load %arg6[%c11, %c0_42, %c0_43] : memref<25x128x128xbf16, #tpu.memory_space<vmem>>, vector<1x128x128xbf16>
    %56 = vector.shape_cast %55 : vector<1x128x128xbf16> to vector<128x128xbf16>
    %cst_44 = arith.constant dense<0.000000e+00> : vector<16x128xf32>
    %57 = tpu.matmul %10, %56, %cst_44 {dimension_numbers = #tpu.dot_dimension_numbers<[1], [0], [0], [1], [0, 0, 1, 1], [], []>} : vector<16x128xbf16>, vector<128x128xbf16>, vector<16x128xf32> -> vector<16x128xf32>
    %58 = arith.truncf %57 : vector<16x128xf32> to vector<16x128xbf16>
    %c12 = arith.constant 12 : index
    %c0_45 = arith.constant 0 : index
    %c0_46 = arith.constant 0 : index
    %59 = vector.load %arg6[%c12, %c0_45, %c0_46] : memref<25x128x128xbf16, #tpu.memory_space<vmem>>, vector<1x128x128xbf16>
    %60 = vector.shape_cast %59 : vector<1x128x128xbf16> to vector<128x128xbf16>
    %cst_47 = arith.constant dense<0.000000e+00> : vector<16x128xf32>
    %61 = tpu.matmul %10, %60, %cst_47 {dimension_numbers = #tpu.dot_dimension_numbers<[1], [0], [0], [1], [0, 0, 1, 1], [], []>} : vector<16x128xbf16>, vector<128x128xbf16>, vector<16x128xf32> -> vector<16x128xf32>
    %62 = arith.truncf %61 : vector<16x128xf32> to vector<16x128xbf16>
    %c13 = arith.constant 13 : index
    %c0_48 = arith.constant 0 : index
    %c0_49 = arith.constant 0 : index
    %63 = vector.load %arg6[%c13, %c0_48, %c0_49] : memref<25x128x128xbf16, #tpu.memory_space<vmem>>, vector<1x128x128xbf16>
    %64 = vector.shape_cast %63 : vector<1x128x128xbf16> to vector<128x128xbf16>
    %cst_50 = arith.constant dense<0.000000e+00> : vector<16x128xf32>
    %65 = tpu.matmul %10, %64, %cst_50 {dimension_numbers = #tpu.dot_dimension_numbers<[1], [0], [0], [1], [0, 0, 1, 1], [], []>} : vector<16x128xbf16>, vector<128x128xbf16>, vector<16x128xf32> -> vector<16x128xf32>
    %66 = arith.truncf %65 : vector<16x128xf32> to vector<16x128xbf16>
    %c14 = arith.constant 14 : index
    %c0_51 = arith.constant 0 : index
    %c0_52 = arith.constant 0 : index
    %67 = vector.load %arg6[%c14, %c0_51, %c0_52] : memref<25x128x128xbf16, #tpu.memory_space<vmem>>, vector<1x128x128xbf16>
    %68 = vector.shape_cast %67 : vector<1x128x128xbf16> to vector<128x128xbf16>
    %cst_53 = arith.constant dense<0.000000e+00> : vector<16x128xf32>
    %69 = tpu.matmul %10, %68, %cst_53 {dimension_numbers = #tpu.dot_dimension_numbers<[1], [0], [0], [1], [0, 0, 1, 1], [], []>} : vector<16x128xbf16>, vector<128x128xbf16>, vector<16x128xf32> -> vector<16x128xf32>
    %70 = arith.truncf %69 : vector<16x128xf32> to vector<16x128xbf16>
    %c15 = arith.constant 15 : index
    %c0_54 = arith.constant 0 : index
    %c0_55 = arith.constant 0 : index
    %71 = vector.load %arg6[%c15, %c0_54, %c0_55] : memref<25x128x128xbf16, #tpu.memory_space<vmem>>, vector<1x128x128xbf16>
    %72 = vector.shape_cast %71 : vector<1x128x128xbf16> to vector<128x128xbf16>
    %cst_56 = arith.constant dense<0.000000e+00> : vector<16x128xf32>
    %73 = tpu.matmul %10, %72, %cst_56 {dimension_numbers = #tpu.dot_dimension_numbers<[1], [0], [0], [1], [0, 0, 1, 1], [], []>} : vector<16x128xbf16>, vector<128x128xbf16>, vector<16x128xf32> -> vector<16x128xf32>
    %74 = arith.truncf %73 : vector<16x128xf32> to vector<16x128xbf16>
    %c16 = arith.constant 16 : index
    %c0_57 = arith.constant 0 : index
    %c0_58 = arith.constant 0 : index
    %75 = vector.load %arg6[%c16, %c0_57, %c0_58] : memref<25x128x128xbf16, #tpu.memory_space<vmem>>, vector<1x128x128xbf16>
    %76 = vector.shape_cast %75 : vector<1x128x128xbf16> to vector<128x128xbf16>
    %cst_59 = arith.constant dense<0.000000e+00> : vector<16x128xf32>
    %77 = tpu.matmul %10, %76, %cst_59 {dimension_numbers = #tpu.dot_dimension_numbers<[1], [0], [0], [1], [0, 0, 1, 1], [], []>} : vector<16x128xbf16>, vector<128x128xbf16>, vector<16x128xf32> -> vector<16x128xf32>
    %78 = arith.truncf %77 : vector<16x128xf32> to vector<16x128xbf16>
    %c17 = arith.constant 17 : index
    %c0_60 = arith.constant 0 : index
    %c0_61 = arith.constant 0 : index
    %79 = vector.load %arg6[%c17, %c0_60, %c0_61] : memref<25x128x128xbf16, #tpu.memory_space<vmem>>, vector<1x128x128xbf16>
    %80 = vector.shape_cast %79 : vector<1x128x128xbf16> to vector<128x128xbf16>
    %cst_62 = arith.constant dense<0.000000e+00> : vector<16x128xf32>
    %81 = tpu.matmul %10, %80, %cst_62 {dimension_numbers = #tpu.dot_dimension_numbers<[1], [0], [0], [1], [0, 0, 1, 1], [], []>} : vector<16x128xbf16>, vector<128x128xbf16>, vector<16x128xf32> -> vector<16x128xf32>
    %82 = arith.truncf %81 : vector<16x128xf32> to vector<16x128xbf16>
    %c18 = arith.constant 18 : index
    %c0_63 = arith.constant 0 : index
    %c0_64 = arith.constant 0 : index
    %83 = vector.load %arg6[%c18, %c0_63, %c0_64] : memref<25x128x128xbf16, #tpu.memory_space<vmem>>, vector<1x128x128xbf16>
    %84 = vector.shape_cast %83 : vector<1x128x128xbf16> to vector<128x128xbf16>
    %cst_65 = arith.constant dense<0.000000e+00> : vector<16x128xf32>
    %85 = tpu.matmul %10, %84, %cst_65 {dimension_numbers = #tpu.dot_dimension_numbers<[1], [0], [0], [1], [0, 0, 1, 1], [], []>} : vector<16x128xbf16>, vector<128x128xbf16>, vector<16x128xf32> -> vector<16x128xf32>
    %86 = arith.truncf %85 : vector<16x128xf32> to vector<16x128xbf16>
    %c19 = arith.constant 19 : index
    %c0_66 = arith.constant 0 : index
    %c0_67 = arith.constant 0 : index
    %87 = vector.load %arg6[%c19, %c0_66, %c0_67] : memref<25x128x128xbf16, #tpu.memory_space<vmem>>, vector<1x128x128xbf16>
    %88 = vector.shape_cast %87 : vector<1x128x128xbf16> to vector<128x128xbf16>
    %cst_68 = arith.constant dense<0.000000e+00> : vector<16x128xf32>
    %89 = tpu.matmul %10, %88, %cst_68 {dimension_numbers = #tpu.dot_dimension_numbers<[1], [0], [0], [1], [0, 0, 1, 1], [], []>} : vector<16x128xbf16>, vector<128x128xbf16>, vector<16x128xf32> -> vector<16x128xf32>
    %90 = arith.truncf %89 : vector<16x128xf32> to vector<16x128xbf16>
    %c20 = arith.constant 20 : index
    %c0_69 = arith.constant 0 : index
    %c0_70 = arith.constant 0 : index
    %91 = vector.load %arg6[%c20, %c0_69, %c0_70] : memref<25x128x128xbf16, #tpu.memory_space<vmem>>, vector<1x128x128xbf16>
    %92 = vector.shape_cast %91 : vector<1x128x128xbf16> to vector<128x128xbf16>
    %cst_71 = arith.constant dense<0.000000e+00> : vector<16x128xf32>
    %93 = tpu.matmul %10, %92, %cst_71 {dimension_numbers = #tpu.dot_dimension_numbers<[1], [0], [0], [1], [0, 0, 1, 1], [], []>} : vector<16x128xbf16>, vector<128x128xbf16>, vector<16x128xf32> -> vector<16x128xf32>
    %94 = arith.truncf %93 : vector<16x128xf32> to vector<16x128xbf16>
    %c21 = arith.constant 21 : index
    %c0_72 = arith.constant 0 : index
    %c0_73 = arith.constant 0 : index
    %95 = vector.load %arg6[%c21, %c0_72, %c0_73] : memref<25x128x128xbf16, #tpu.memory_space<vmem>>, vector<1x128x128xbf16>
    %96 = vector.shape_cast %95 : vector<1x128x128xbf16> to vector<128x128xbf16>
    %cst_74 = arith.constant dense<0.000000e+00> : vector<16x128xf32>
    %97 = tpu.matmul %10, %96, %cst_74 {dimension_numbers = #tpu.dot_dimension_numbers<[1], [0], [0], [1], [0, 0, 1, 1], [], []>} : vector<16x128xbf16>, vector<128x128xbf16>, vector<16x128xf32> -> vector<16x128xf32>
    %98 = arith.truncf %97 : vector<16x128xf32> to vector<16x128xbf16>
    %c22 = arith.constant 22 : index
    %c0_75 = arith.constant 0 : index
    %c0_76 = arith.constant 0 : index
    %99 = vector.load %arg6[%c22, %c0_75, %c0_76] : memref<25x128x128xbf16, #tpu.memory_space<vmem>>, vector<1x128x128xbf16>
    %100 = vector.shape_cast %99 : vector<1x128x128xbf16> to vector<128x128xbf16>
    %cst_77 = arith.constant dense<0.000000e+00> : vector<16x128xf32>
    %101 = tpu.matmul %10, %100, %cst_77 {dimension_numbers = #tpu.dot_dimension_numbers<[1], [0], [0], [1], [0, 0, 1, 1], [], []>} : vector<16x128xbf16>, vector<128x128xbf16>, vector<16x128xf32> -> vector<16x128xf32>
    %102 = arith.truncf %101 : vector<16x128xf32> to vector<16x128xbf16>
    %c23 = arith.constant 23 : index
    %c0_78 = arith.constant 0 : index
    %c0_79 = arith.constant 0 : index
    %103 = vector.load %arg6[%c23, %c0_78, %c0_79] : memref<25x128x128xbf16, #tpu.memory_space<vmem>>, vector<1x128x128xbf16>
    %104 = vector.shape_cast %103 : vector<1x128x128xbf16> to vector<128x128xbf16>
    %cst_80 = arith.constant dense<0.000000e+00> : vector<16x128xf32>
    %105 = tpu.matmul %10, %104, %cst_80 {dimension_numbers = #tpu.dot_dimension_numbers<[1], [0], [0], [1], [0, 0, 1, 1], [], []>} : vector<16x128xbf16>, vector<128x128xbf16>, vector<16x128xf32> -> vector<16x128xf32>
    %106 = arith.truncf %105 : vector<16x128xf32> to vector<16x128xbf16>
    %c24 = arith.constant 24 : index
    %c0_81 = arith.constant 0 : index
    %c0_82 = arith.constant 0 : index
    %107 = vector.load %arg6[%c24, %c0_81, %c0_82] : memref<25x128x128xbf16, #tpu.memory_space<vmem>>, vector<1x128x128xbf16>
    %108 = vector.shape_cast %107 : vector<1x128x128xbf16> to vector<128x128xbf16>
    %cst_83 = arith.constant dense<0.000000e+00> : vector<16x128xf32>
    %109 = tpu.matmul %10, %108, %cst_83 {dimension_numbers = #tpu.dot_dimension_numbers<[1], [0], [0], [1], [0, 0, 1, 1], [], []>} : vector<16x128xbf16>, vector<128x128xbf16>, vector<16x128xf32> -> vector<16x128xf32>
    %110 = arith.truncf %109 : vector<16x128xf32> to vector<16x128xbf16>
    %111 = tpu.concatenate %14, %18, %22, %26, %30, %34, %38, %42, %46, %50, %54, %58, %62, %66, %70, %74 in 0 : vector<16x128xbf16>, vector<16x128xbf16>, vector<16x128xbf16>, vector<16x128xbf16>, vector<16x128xbf16>, vector<16x128xbf16>, vector<16x128xbf16>, vector<16x128xbf16>, vector<16x128xbf16>, vector<16x128xbf16>, vector<16x128xbf16>, vector<16x128xbf16>, vector<16x128xbf16>, vector<16x128xbf16>, vector<16x128xbf16>, vector<16x128xbf16> -> vector<256x128xbf16>
    %112 = tpu.concatenate %78, %82, %86, %90, %94, %98, %102, %106, %110 in 0 : vector<16x128xbf16>, vector<16x128xbf16>, vector<16x128xbf16>, vector<16x128xbf16>, vector<16x128xbf16>, vector<16x128xbf16>, vector<16x128xbf16>, vector<16x128xbf16>, vector<16x128xbf16> -> vector<144x128xbf16>
    %113 = tpu.concatenate %111, %112 in 0 : vector<256x128xbf16>, vector<144x128xbf16> -> vector<400x128xbf16>
    %c0_84 = arith.constant 0 : index
    %c0_85 = arith.constant 0 : index
    %c0_86 = arith.constant 0 : index
    %114 = vector.load %arg2[%c0_84, %c0_85, %c0_86] : memref<2x32x400xbf16, #tpu.memory_space<vmem>>, vector<1x32x400xbf16>
    %115 = vector.shape_cast %114 : vector<1x32x400xbf16> to vector<32x400xbf16>
    %cst_87 = arith.constant dense<0.000000e+00> : vector<32x128xf32>
    %116 = tpu.matmul %115, %113, %cst_87 {dimension_numbers = #tpu.dot_dimension_numbers<[1], [0], [0], [1], [0, 0, 1, 1], [], []>} : vector<32x400xbf16>, vector<400x128xbf16>, vector<32x128xf32> -> vector<32x128xf32>
    %c0_88 = arith.constant 0 : index
    %c0_89 = arith.constant 0 : index
    %c0_90 = arith.constant 0 : index
    %117 = vector.load %arg3[%c0_88, %c0_89, %c0_90] : memref<2x32x1xf32, #tpu.memory_space<vmem>>, vector<1x32x1xf32>
    %118 = vector.shape_cast %117 : vector<1x32x1xf32> to vector<32x1xf32>
    %119 = vector.broadcast %118 : vector<32x1xf32> to vector<32x128xf32>
    %120 = arith.addf %116, %119 : vector<32x128xf32>
    %121 = vector.extract_strided_slice %120 {offsets = [0, 0], sizes = [8, 128], strides = [1, 1]} : vector<32x128xf32> to vector<8x128xf32>
    %122 = arith.negf %121 : vector<8x128xf32>
    %123 = math.exp %122 : vector<8x128xf32>
    %cst_91 = arith.constant 1.000000e+00 : f32
    %124 = vector.broadcast %cst_91 : f32 to vector<8x128xf32>
    %125 = arith.addf %124, %123 : vector<8x128xf32>
    %126 = arith.divf %124, %125 : vector<8x128xf32>
    %127 = vector.extract_strided_slice %120 {offsets = [8, 0], sizes = [8, 128], strides = [1, 1]} : vector<32x128xf32> to vector<8x128xf32>
    %128 = arith.negf %127 : vector<8x128xf32>
    %129 = math.exp %128 : vector<8x128xf32>
    %cst_92 = arith.constant 1.000000e+00 : f32
    %130 = vector.broadcast %cst_92 : f32 to vector<8x128xf32>
    %131 = arith.addf %130, %129 : vector<8x128xf32>
    %132 = arith.divf %130, %131 : vector<8x128xf32>
    %133 = vector.extract_strided_slice %120 {offsets = [16, 0], sizes = [8, 128], strides = [1, 1]} : vector<32x128xf32> to vector<8x128xf32>
    %134 = arith.negf %133 : vector<8x128xf32>
    %135 = math.exp %134 : vector<8x128xf32>
    %cst_93 = arith.constant 1.000000e+00 : f32
    %136 = vector.broadcast %cst_93 : f32 to vector<8x128xf32>
    %137 = arith.addf %136, %135 : vector<8x128xf32>
    %138 = arith.divf %136, %137 : vector<8x128xf32>
    %139 = vector.extract_strided_slice %120 {offsets = [24, 0], sizes = [8, 128], strides = [1, 1]} : vector<32x128xf32> to vector<8x128xf32>
    %140 = math.tanh %139 : vector<8x128xf32>
    %141 = arith.mulf %132, %8 : vector<8x128xf32>
    %142 = arith.mulf %126, %140 : vector<8x128xf32>
    %143 = arith.addf %141, %142 : vector<8x128xf32>
    %144 = math.tanh %143 : vector<8x128xf32>
    %145 = arith.mulf %138, %144 : vector<8x128xf32>
    %c0_94 = arith.constant 0 : index
    %c0_95 = arith.constant 0 : index
    %c0_96 = arith.constant 0 : index
    %146 = vector.load %arg8[%c0_94, %c0_95, %c0_96] : memref<2x8x128xf32, #tpu.memory_space<vmem>>, vector<1x8x128xf32>
    %147 = vector.shape_cast %146 : vector<1x8x128xf32> to vector<8x128xf32>
    %148 = vector.shape_cast %145 : vector<8x128xf32> to vector<1x8x128xf32>
    tpu.vector_store %arg8[%c0_94, %c0_95, %c0_96], %148 {strides = array<i32>} : memref<2x8x128xf32, #tpu.memory_space<vmem>>, vector<1x8x128xf32>,
    %c0_97 = arith.constant 0 : index
    %c0_98 = arith.constant 0 : index
    %c0_99 = arith.constant 0 : index
    %149 = vector.load %arg9[%c0_97, %c0_98, %c0_99] : memref<2x8x128xf32, #tpu.memory_space<vmem>>, vector<1x8x128xf32>
    %150 = vector.shape_cast %149 : vector<1x8x128xf32> to vector<8x128xf32>
    %151 = vector.shape_cast %143 : vector<8x128xf32> to vector<1x8x128xf32>
    tpu.vector_store %arg9[%c0_97, %c0_98, %c0_99], %151 {strides = array<i32>} : memref<2x8x128xf32, #tpu.memory_space<vmem>>, vector<1x8x128xf32>,
    %c1_100 = arith.constant 1 : index
    %c0_101 = arith.constant 0 : index
    %c0_102 = arith.constant 0 : index
    %152 = vector.load %arg8[%c1_100, %c0_101, %c0_102] : memref<2x8x128xf32, #tpu.memory_space<vmem>>, vector<1x8x128xf32>
    %153 = vector.shape_cast %152 : vector<1x8x128xf32> to vector<8x128xf32>
    %c1_103 = arith.constant 1 : index
    %c0_104 = arith.constant 0 : index
    %c0_105 = arith.constant 0 : index
    %154 = vector.load %arg9[%c1_103, %c0_104, %c0_105] : memref<2x8x128xf32, #tpu.memory_space<vmem>>, vector<1x8x128xf32>
    %155 = vector.shape_cast %154 : vector<1x8x128xf32> to vector<8x128xf32>
    %156 = tpu.concatenate %145, %153 in 0 : vector<8x128xf32>, vector<8x128xf32> -> vector<16x128xf32>
    %157 = arith.truncf %156 : vector<16x128xf32> to vector<16x128xbf16>
    %c0_106 = arith.constant 0 : index
    %c0_107 = arith.constant 0 : index
    %c0_108 = arith.constant 0 : index
    %158 = vector.load %arg6[%c0_106, %c0_107, %c0_108] : memref<25x128x128xbf16, #tpu.memory_space<vmem>>, vector<1x128x128xbf16>
    %159 = vector.shape_cast %158 : vector<1x128x128xbf16> to vector<128x128xbf16>
    %cst_109 = arith.constant dense<0.000000e+00> : vector<16x128xf32>
    %160 = tpu.matmul %157, %159, %cst_109 {dimension_numbers = #tpu.dot_dimension_numbers<[1], [0], [0], [1], [0, 0, 1, 1], [], []>} : vector<16x128xbf16>, vector<128x128xbf16>, vector<16x128xf32> -> vector<16x128xf32>
    %161 = arith.truncf %160 : vector<16x128xf32> to vector<16x128xbf16>
    %c1_110 = arith.constant 1 : index
    %c0_111 = arith.constant 0 : index
    %c0_112 = arith.constant 0 : index
    %162 = vector.load %arg6[%c1_110, %c0_111, %c0_112] : memref<25x128x128xbf16, #tpu.memory_space<vmem>>, vector<1x128x128xbf16>
    %163 = vector.shape_cast %162 : vector<1x128x128xbf16> to vector<128x128xbf16>
    %cst_113 = arith.constant dense<0.000000e+00> : vector<16x128xf32>
    %164 = tpu.matmul %157, %163, %cst_113 {dimension_numbers = #tpu.dot_dimension_numbers<[1], [0], [0], [1], [0, 0, 1, 1], [], []>} : vector<16x128xbf16>, vector<128x128xbf16>, vector<16x128xf32> -> vector<16x128xf32>
    %165 = arith.truncf %164 : vector<16x128xf32> to vector<16x128xbf16>
    %c2_114 = arith.constant 2 : index
    %c0_115 = arith.constant 0 : index
    %c0_116 = arith.constant 0 : index
    %166 = vector.load %arg6[%c2_114, %c0_115, %c0_116] : memref<25x128x128xbf16, #tpu.memory_space<vmem>>, vector<1x128x128xbf16>
    %167 = vector.shape_cast %166 : vector<1x128x128xbf16> to vector<128x128xbf16>
    %cst_117 = arith.constant dense<0.000000e+00> : vector<16x128xf32>
    %168 = tpu.matmul %157, %167, %cst_117 {dimension_numbers = #tpu.dot_dimension_numbers<[1], [0], [0], [1], [0, 0, 1, 1], [], []>} : vector<16x128xbf16>, vector<128x128xbf16>, vector<16x128xf32> -> vector<16x128xf32>
    %169 = arith.truncf %168 : vector<16x128xf32> to vector<16x128xbf16>
    %c3_118 = arith.constant 3 : index
    %c0_119 = arith.constant 0 : index
    %c0_120 = arith.constant 0 : index
    %170 = vector.load %arg6[%c3_118, %c0_119, %c0_120] : memref<25x128x128xbf16, #tpu.memory_space<vmem>>, vector<1x128x128xbf16>
    %171 = vector.shape_cast %170 : vector<1x128x128xbf16> to vector<128x128xbf16>
    %cst_121 = arith.constant dense<0.000000e+00> : vector<16x128xf32>
    %172 = tpu.matmul %157, %171, %cst_121 {dimension_numbers = #tpu.dot_dimension_numbers<[1], [0], [0], [1], [0, 0, 1, 1], [], []>} : vector<16x128xbf16>, vector<128x128xbf16>, vector<16x128xf32> -> vector<16x128xf32>
    %173 = arith.truncf %172 : vector<16x128xf32> to vector<16x128xbf16>
    %c4_122 = arith.constant 4 : index
    %c0_123 = arith.constant 0 : index
    %c0_124 = arith.constant 0 : index
    %174 = vector.load %arg6[%c4_122, %c0_123, %c0_124] : memref<25x128x128xbf16, #tpu.memory_space<vmem>>, vector<1x128x128xbf16>
    %175 = vector.shape_cast %174 : vector<1x128x128xbf16> to vector<128x128xbf16>
    %cst_125 = arith.constant dense<0.000000e+00> : vector<16x128xf32>
    %176 = tpu.matmul %157, %175, %cst_125 {dimension_numbers = #tpu.dot_dimension_numbers<[1], [0], [0], [1], [0, 0, 1, 1], [], []>} : vector<16x128xbf16>, vector<128x128xbf16>, vector<16x128xf32> -> vector<16x128xf32>
    %177 = arith.truncf %176 : vector<16x128xf32> to vector<16x128xbf16>
    %c5_126 = arith.constant 5 : index
    %c0_127 = arith.constant 0 : index
    %c0_128 = arith.constant 0 : index
    %178 = vector.load %arg6[%c5_126, %c0_127, %c0_128] : memref<25x128x128xbf16, #tpu.memory_space<vmem>>, vector<1x128x128xbf16>
    %179 = vector.shape_cast %178 : vector<1x128x128xbf16> to vector<128x128xbf16>
    %cst_129 = arith.constant dense<0.000000e+00> : vector<16x128xf32>
    %180 = tpu.matmul %157, %179, %cst_129 {dimension_numbers = #tpu.dot_dimension_numbers<[1], [0], [0], [1], [0, 0, 1, 1], [], []>} : vector<16x128xbf16>, vector<128x128xbf16>, vector<16x128xf32> -> vector<16x128xf32>
    %181 = arith.truncf %180 : vector<16x128xf32> to vector<16x128xbf16>
    %c6_130 = arith.constant 6 : index
    %c0_131 = arith.constant 0 : index
    %c0_132 = arith.constant 0 : index
    %182 = vector.load %arg6[%c6_130, %c0_131, %c0_132] : memref<25x128x128xbf16, #tpu.memory_space<vmem>>, vector<1x128x128xbf16>
    %183 = vector.shape_cast %182 : vector<1x128x128xbf16> to vector<128x128xbf16>
    %cst_133 = arith.constant dense<0.000000e+00> : vector<16x128xf32>
    %184 = tpu.matmul %157, %183, %cst_133 {dimension_numbers = #tpu.dot_dimension_numbers<[1], [0], [0], [1], [0, 0, 1, 1], [], []>} : vector<16x128xbf16>, vector<128x128xbf16>, vector<16x128xf32> -> vector<16x128xf32>
    %185 = arith.truncf %184 : vector<16x128xf32> to vector<16x128xbf16>
    %c7_134 = arith.constant 7 : index
    %c0_135 = arith.constant 0 : index
    %c0_136 = arith.constant 0 : index
    %186 = vector.load %arg6[%c7_134, %c0_135, %c0_136] : memref<25x128x128xbf16, #tpu.memory_space<vmem>>, vector<1x128x128xbf16>
    %187 = vector.shape_cast %186 : vector<1x128x128xbf16> to vector<128x128xbf16>
    %cst_137 = arith.constant dense<0.000000e+00> : vector<16x128xf32>
    %188 = tpu.matmul %157, %187, %cst_137 {dimension_numbers = #tpu.dot_dimension_numbers<[1], [0], [0], [1], [0, 0, 1, 1], [], []>} : vector<16x128xbf16>, vector<128x128xbf16>, vector<16x128xf32> -> vector<16x128xf32>
    %189 = arith.truncf %188 : vector<16x128xf32> to vector<16x128xbf16>
    %c8_138 = arith.constant 8 : index
    %c0_139 = arith.constant 0 : index
    %c0_140 = arith.constant 0 : index
    %190 = vector.load %arg6[%c8_138, %c0_139, %c0_140] : memref<25x128x128xbf16, #tpu.memory_space<vmem>>, vector<1x128x128xbf16>
    %191 = vector.shape_cast %190 : vector<1x128x128xbf16> to vector<128x128xbf16>
    %cst_141 = arith.constant dense<0.000000e+00> : vector<16x128xf32>
    %192 = tpu.matmul %157, %191, %cst_141 {dimension_numbers = #tpu.dot_dimension_numbers<[1], [0], [0], [1], [0, 0, 1, 1], [], []>} : vector<16x128xbf16>, vector<128x128xbf16>, vector<16x128xf32> -> vector<16x128xf32>
    %193 = arith.truncf %192 : vector<16x128xf32> to vector<16x128xbf16>
    %c9_142 = arith.constant 9 : index
    %c0_143 = arith.constant 0 : index
    %c0_144 = arith.constant 0 : index
    %194 = vector.load %arg6[%c9_142, %c0_143, %c0_144] : memref<25x128x128xbf16, #tpu.memory_space<vmem>>, vector<1x128x128xbf16>
    %195 = vector.shape_cast %194 : vector<1x128x128xbf16> to vector<128x128xbf16>
    %cst_145 = arith.constant dense<0.000000e+00> : vector<16x128xf32>
    %196 = tpu.matmul %157, %195, %cst_145 {dimension_numbers = #tpu.dot_dimension_numbers<[1], [0], [0], [1], [0, 0, 1, 1], [], []>} : vector<16x128xbf16>, vector<128x128xbf16>, vector<16x128xf32> -> vector<16x128xf32>
    %197 = arith.truncf %196 : vector<16x128xf32> to vector<16x128xbf16>
    %c10_146 = arith.constant 10 : index
    %c0_147 = arith.constant 0 : index
    %c0_148 = arith.constant 0 : index
    %198 = vector.load %arg6[%c10_146, %c0_147, %c0_148] : memref<25x128x128xbf16, #tpu.memory_space<vmem>>, vector<1x128x128xbf16>
    %199 = vector.shape_cast %198 : vector<1x128x128xbf16> to vector<128x128xbf16>
    %cst_149 = arith.constant dense<0.000000e+00> : vector<16x128xf32>
    %200 = tpu.matmul %157, %199, %cst_149 {dimension_numbers = #tpu.dot_dimension_numbers<[1], [0], [0], [1], [0, 0, 1, 1], [], []>} : vector<16x128xbf16>, vector<128x128xbf16>, vector<16x128xf32> -> vector<16x128xf32>
    %201 = arith.truncf %200 : vector<16x128xf32> to vector<16x128xbf16>
    %c11_150 = arith.constant 11 : index
    %c0_151 = arith.constant 0 : index
    %c0_152 = arith.constant 0 : index
    %202 = vector.load %arg6[%c11_150, %c0_151, %c0_152] : memref<25x128x128xbf16, #tpu.memory_space<vmem>>, vector<1x128x128xbf16>
    %203 = vector.shape_cast %202 : vector<1x128x128xbf16> to vector<128x128xbf16>
    %cst_153 = arith.constant dense<0.000000e+00> : vector<16x128xf32>
    %204 = tpu.matmul %157, %203, %cst_153 {dimension_numbers = #tpu.dot_dimension_numbers<[1], [0], [0], [1], [0, 0, 1, 1], [], []>} : vector<16x128xbf16>, vector<128x128xbf16>, vector<16x128xf32> -> vector<16x128xf32>
    %205 = arith.truncf %204 : vector<16x128xf32> to vector<16x128xbf16>
    %c12_154 = arith.constant 12 : index
    %c0_155 = arith.constant 0 : index
    %c0_156 = arith.constant 0 : index
    %206 = vector.load %arg6[%c12_154, %c0_155, %c0_156] : memref<25x128x128xbf16, #tpu.memory_space<vmem>>, vector<1x128x128xbf16>
    %207 = vector.shape_cast %206 : vector<1x128x128xbf16> to vector<128x128xbf16>
    %cst_157 = arith.constant dense<0.000000e+00> : vector<16x128xf32>
    %208 = tpu.matmul %157, %207, %cst_157 {dimension_numbers = #tpu.dot_dimension_numbers<[1], [0], [0], [1], [0, 0, 1, 1], [], []>} : vector<16x128xbf16>, vector<128x128xbf16>, vector<16x128xf32> -> vector<16x128xf32>
    %209 = arith.truncf %208 : vector<16x128xf32> to vector<16x128xbf16>
    %c13_158 = arith.constant 13 : index
    %c0_159 = arith.constant 0 : index
    %c0_160 = arith.constant 0 : index
    %210 = vector.load %arg6[%c13_158, %c0_159, %c0_160] : memref<25x128x128xbf16, #tpu.memory_space<vmem>>, vector<1x128x128xbf16>
    %211 = vector.shape_cast %210 : vector<1x128x128xbf16> to vector<128x128xbf16>
    %cst_161 = arith.constant dense<0.000000e+00> : vector<16x128xf32>
    %212 = tpu.matmul %157, %211, %cst_161 {dimension_numbers = #tpu.dot_dimension_numbers<[1], [0], [0], [1], [0, 0, 1, 1], [], []>} : vector<16x128xbf16>, vector<128x128xbf16>, vector<16x128xf32> -> vector<16x128xf32>
    %213 = arith.truncf %212 : vector<16x128xf32> to vector<16x128xbf16>
    %c14_162 = arith.constant 14 : index
    %c0_163 = arith.constant 0 : index
    %c0_164 = arith.constant 0 : index
    %214 = vector.load %arg6[%c14_162, %c0_163, %c0_164] : memref<25x128x128xbf16, #tpu.memory_space<vmem>>, vector<1x128x128xbf16>
    %215 = vector.shape_cast %214 : vector<1x128x128xbf16> to vector<128x128xbf16>
    %cst_165 = arith.constant dense<0.000000e+00> : vector<16x128xf32>
    %216 = tpu.matmul %157, %215, %cst_165 {dimension_numbers = #tpu.dot_dimension_numbers<[1], [0], [0], [1], [0, 0, 1, 1], [], []>} : vector<16x128xbf16>, vector<128x128xbf16>, vector<16x128xf32> -> vector<16x128xf32>
    %217 = arith.truncf %216 : vector<16x128xf32> to vector<16x128xbf16>
    %c15_166 = arith.constant 15 : index
    %c0_167 = arith.constant 0 : index
    %c0_168 = arith.constant 0 : index
    %218 = vector.load %arg6[%c15_166, %c0_167, %c0_168] : memref<25x128x128xbf16, #tpu.memory_space<vmem>>, vector<1x128x128xbf16>
    %219 = vector.shape_cast %218 : vector<1x128x128xbf16> to vector<128x128xbf16>
    %cst_169 = arith.constant dense<0.000000e+00> : vector<16x128xf32>
    %220 = tpu.matmul %157, %219, %cst_169 {dimension_numbers = #tpu.dot_dimension_numbers<[1], [0], [0], [1], [0, 0, 1, 1], [], []>} : vector<16x128xbf16>, vector<128x128xbf16>, vector<16x128xf32> -> vector<16x128xf32>
    %221 = arith.truncf %220 : vector<16x128xf32> to vector<16x128xbf16>
    %c16_170 = arith.constant 16 : index
    %c0_171 = arith.constant 0 : index
    %c0_172 = arith.constant 0 : index
    %222 = vector.load %arg6[%c16_170, %c0_171, %c0_172] : memref<25x128x128xbf16, #tpu.memory_space<vmem>>, vector<1x128x128xbf16>
    %223 = vector.shape_cast %222 : vector<1x128x128xbf16> to vector<128x128xbf16>
    %cst_173 = arith.constant dense<0.000000e+00> : vector<16x128xf32>
    %224 = tpu.matmul %157, %223, %cst_173 {dimension_numbers = #tpu.dot_dimension_numbers<[1], [0], [0], [1], [0, 0, 1, 1], [], []>} : vector<16x128xbf16>, vector<128x128xbf16>, vector<16x128xf32> -> vector<16x128xf32>
    %225 = arith.truncf %224 : vector<16x128xf32> to vector<16x128xbf16>
    %c17_174 = arith.constant 17 : index
    %c0_175 = arith.constant 0 : index
    %c0_176 = arith.constant 0 : index
    %226 = vector.load %arg6[%c17_174, %c0_175, %c0_176] : memref<25x128x128xbf16, #tpu.memory_space<vmem>>, vector<1x128x128xbf16>
    %227 = vector.shape_cast %226 : vector<1x128x128xbf16> to vector<128x128xbf16>
    %cst_177 = arith.constant dense<0.000000e+00> : vector<16x128xf32>
    %228 = tpu.matmul %157, %227, %cst_177 {dimension_numbers = #tpu.dot_dimension_numbers<[1], [0], [0], [1], [0, 0, 1, 1], [], []>} : vector<16x128xbf16>, vector<128x128xbf16>, vector<16x128xf32> -> vector<16x128xf32>
    %229 = arith.truncf %228 : vector<16x128xf32> to vector<16x128xbf16>
    %c18_178 = arith.constant 18 : index
    %c0_179 = arith.constant 0 : index
    %c0_180 = arith.constant 0 : index
    %230 = vector.load %arg6[%c18_178, %c0_179, %c0_180] : memref<25x128x128xbf16, #tpu.memory_space<vmem>>, vector<1x128x128xbf16>
    %231 = vector.shape_cast %230 : vector<1x128x128xbf16> to vector<128x128xbf16>
    %cst_181 = arith.constant dense<0.000000e+00> : vector<16x128xf32>
    %232 = tpu.matmul %157, %231, %cst_181 {dimension_numbers = #tpu.dot_dimension_numbers<[1], [0], [0], [1], [0, 0, 1, 1], [], []>} : vector<16x128xbf16>, vector<128x128xbf16>, vector<16x128xf32> -> vector<16x128xf32>
    %233 = arith.truncf %232 : vector<16x128xf32> to vector<16x128xbf16>
    %c19_182 = arith.constant 19 : index
    %c0_183 = arith.constant 0 : index
    %c0_184 = arith.constant 0 : index
    %234 = vector.load %arg6[%c19_182, %c0_183, %c0_184] : memref<25x128x128xbf16, #tpu.memory_space<vmem>>, vector<1x128x128xbf16>
    %235 = vector.shape_cast %234 : vector<1x128x128xbf16> to vector<128x128xbf16>
    %cst_185 = arith.constant dense<0.000000e+00> : vector<16x128xf32>
    %236 = tpu.matmul %157, %235, %cst_185 {dimension_numbers = #tpu.dot_dimension_numbers<[1], [0], [0], [1], [0, 0, 1, 1], [], []>} : vector<16x128xbf16>, vector<128x128xbf16>, vector<16x128xf32> -> vector<16x128xf32>
    %237 = arith.truncf %236 : vector<16x128xf32> to vector<16x128xbf16>
    %c20_186 = arith.constant 20 : index
    %c0_187 = arith.constant 0 : index
    %c0_188 = arith.constant 0 : index
    %238 = vector.load %arg6[%c20_186, %c0_187, %c0_188] : memref<25x128x128xbf16, #tpu.memory_space<vmem>>, vector<1x128x128xbf16>
    %239 = vector.shape_cast %238 : vector<1x128x128xbf16> to vector<128x128xbf16>
    %cst_189 = arith.constant dense<0.000000e+00> : vector<16x128xf32>
    %240 = tpu.matmul %157, %239, %cst_189 {dimension_numbers = #tpu.dot_dimension_numbers<[1], [0], [0], [1], [0, 0, 1, 1], [], []>} : vector<16x128xbf16>, vector<128x128xbf16>, vector<16x128xf32> -> vector<16x128xf32>
    %241 = arith.truncf %240 : vector<16x128xf32> to vector<16x128xbf16>
    %c21_190 = arith.constant 21 : index
    %c0_191 = arith.constant 0 : index
    %c0_192 = arith.constant 0 : index
    %242 = vector.load %arg6[%c21_190, %c0_191, %c0_192] : memref<25x128x128xbf16, #tpu.memory_space<vmem>>, vector<1x128x128xbf16>
    %243 = vector.shape_cast %242 : vector<1x128x128xbf16> to vector<128x128xbf16>
    %cst_193 = arith.constant dense<0.000000e+00> : vector<16x128xf32>
    %244 = tpu.matmul %157, %243, %cst_193 {dimension_numbers = #tpu.dot_dimension_numbers<[1], [0], [0], [1], [0, 0, 1, 1], [], []>} : vector<16x128xbf16>, vector<128x128xbf16>, vector<16x128xf32> -> vector<16x128xf32>
    %245 = arith.truncf %244 : vector<16x128xf32> to vector<16x128xbf16>
    %c22_194 = arith.constant 22 : index
    %c0_195 = arith.constant 0 : index
    %c0_196 = arith.constant 0 : index
    %246 = vector.load %arg6[%c22_194, %c0_195, %c0_196] : memref<25x128x128xbf16, #tpu.memory_space<vmem>>, vector<1x128x128xbf16>
    %247 = vector.shape_cast %246 : vector<1x128x128xbf16> to vector<128x128xbf16>
    %cst_197 = arith.constant dense<0.000000e+00> : vector<16x128xf32>
    %248 = tpu.matmul %157, %247, %cst_197 {dimension_numbers = #tpu.dot_dimension_numbers<[1], [0], [0], [1], [0, 0, 1, 1], [], []>} : vector<16x128xbf16>, vector<128x128xbf16>, vector<16x128xf32> -> vector<16x128xf32>
    %249 = arith.truncf %248 : vector<16x128xf32> to vector<16x128xbf16>
    %c23_198 = arith.constant 23 : index
    %c0_199 = arith.constant 0 : index
    %c0_200 = arith.constant 0 : index
    %250 = vector.load %arg6[%c23_198, %c0_199, %c0_200] : memref<25x128x128xbf16, #tpu.memory_space<vmem>>, vector<1x128x128xbf16>
    %251 = vector.shape_cast %250 : vector<1x128x128xbf16> to vector<128x128xbf16>
    %cst_201 = arith.constant dense<0.000000e+00> : vector<16x128xf32>
    %252 = tpu.matmul %157, %251, %cst_201 {dimension_numbers = #tpu.dot_dimension_numbers<[1], [0], [0], [1], [0, 0, 1, 1], [], []>} : vector<16x128xbf16>, vector<128x128xbf16>, vector<16x128xf32> -> vector<16x128xf32>
    %253 = arith.truncf %252 : vector<16x128xf32> to vector<16x128xbf16>
    %c24_202 = arith.constant 24 : index
    %c0_203 = arith.constant 0 : index
    %c0_204 = arith.constant 0 : index
    %254 = vector.load %arg6[%c24_202, %c0_203, %c0_204] : memref<25x128x128xbf16, #tpu.memory_space<vmem>>, vector<1x128x128xbf16>
    %255 = vector.shape_cast %254 : vector<1x128x128xbf16> to vector<128x128xbf16>
    %cst_205 = arith.constant dense<0.000000e+00> : vector<16x128xf32>
    %256 = tpu.matmul %157, %255, %cst_205 {dimension_numbers = #tpu.dot_dimension_numbers<[1], [0], [0], [1], [0, 0, 1, 1], [], []>} : vector<16x128xbf16>, vector<128x128xbf16>, vector<16x128xf32> -> vector<16x128xf32>
    %257 = arith.truncf %256 : vector<16x128xf32> to vector<16x128xbf16>
    %258 = tpu.concatenate %161, %165, %169, %173, %177, %181, %185, %189, %193, %197, %201, %205, %209, %213, %217, %221 in 0 : vector<16x128xbf16>, vector<16x128xbf16>, vector<16x128xbf16>, vector<16x128xbf16>, vector<16x128xbf16>, vector<16x128xbf16>, vector<16x128xbf16>, vector<16x128xbf16>, vector<16x128xbf16>, vector<16x128xbf16>, vector<16x128xbf16>, vector<16x128xbf16>, vector<16x128xbf16>, vector<16x128xbf16>, vector<16x128xbf16>, vector<16x128xbf16> -> vector<256x128xbf16>
    %259 = tpu.concatenate %225, %229, %233, %237, %241, %245, %249, %253, %257 in 0 : vector<16x128xbf16>, vector<16x128xbf16>, vector<16x128xbf16>, vector<16x128xbf16>, vector<16x128xbf16>, vector<16x128xbf16>, vector<16x128xbf16>, vector<16x128xbf16>, vector<16x128xbf16> -> vector<144x128xbf16>
    %260 = tpu.concatenate %258, %259 in 0 : vector<256x128xbf16>, vector<144x128xbf16> -> vector<400x128xbf16>
    %c1_206 = arith.constant 1 : index
    %c0_207 = arith.constant 0 : index
    %c0_208 = arith.constant 0 : index
    %261 = vector.load %arg2[%c1_206, %c0_207, %c0_208] : memref<2x32x400xbf16, #tpu.memory_space<vmem>>, vector<1x32x400xbf16>
    %262 = vector.shape_cast %261 : vector<1x32x400xbf16> to vector<32x400xbf16>
    %cst_209 = arith.constant dense<0.000000e+00> : vector<32x128xf32>
    %263 = tpu.matmul %262, %260, %cst_209 {dimension_numbers = #tpu.dot_dimension_numbers<[1], [0], [0], [1], [0, 0, 1, 1], [], []>} : vector<32x400xbf16>, vector<400x128xbf16>, vector<32x128xf32> -> vector<32x128xf32>
    %c1_210 = arith.constant 1 : index
    %c0_211 = arith.constant 0 : index
    %c0_212 = arith.constant 0 : index
    %264 = vector.load %arg3[%c1_210, %c0_211, %c0_212] : memref<2x32x1xf32, #tpu.memory_space<vmem>>, vector<1x32x1xf32>
    %265 = vector.shape_cast %264 : vector<1x32x1xf32> to vector<32x1xf32>
    %266 = vector.broadcast %265 : vector<32x1xf32> to vector<32x128xf32>
    %267 = arith.addf %263, %266 : vector<32x128xf32>
    %268 = vector.extract_strided_slice %267 {offsets = [0, 0], sizes = [8, 128], strides = [1, 1]} : vector<32x128xf32> to vector<8x128xf32>
    %269 = arith.negf %268 : vector<8x128xf32>
    %270 = math.exp %269 : vector<8x128xf32>
    %cst_213 = arith.constant 1.000000e+00 : f32
    %271 = vector.broadcast %cst_213 : f32 to vector<8x128xf32>
    %272 = arith.addf %271, %270 : vector<8x128xf32>
    %273 = arith.divf %271, %272 : vector<8x128xf32>
    %274 = vector.extract_strided_slice %267 {offsets = [8, 0], sizes = [8, 128], strides = [1, 1]} : vector<32x128xf32> to vector<8x128xf32>
    %275 = arith.negf %274 : vector<8x128xf32>
    %276 = math.exp %275 : vector<8x128xf32>
    %cst_214 = arith.constant 1.000000e+00 : f32
    %277 = vector.broadcast %cst_214 : f32 to vector<8x128xf32>
    %278 = arith.addf %277, %276 : vector<8x128xf32>
    %279 = arith.divf %277, %278 : vector<8x128xf32>
    %280 = vector.extract_strided_slice %267 {offsets = [16, 0], sizes = [8, 128], strides = [1, 1]} : vector<32x128xf32> to vector<8x128xf32>
    %281 = arith.negf %280 : vector<8x128xf32>
    %282 = math.exp %281 : vector<8x128xf32>
    %cst_215 = arith.constant 1.000000e+00 : f32
    %283 = vector.broadcast %cst_215 : f32 to vector<8x128xf32>
    %284 = arith.addf %283, %282 : vector<8x128xf32>
    %285 = arith.divf %283, %284 : vector<8x128xf32>
    %286 = vector.extract_strided_slice %267 {offsets = [24, 0], sizes = [8, 128], strides = [1, 1]} : vector<32x128xf32> to vector<8x128xf32>
    %287 = math.tanh %286 : vector<8x128xf32>
    %288 = arith.mulf %279, %155 : vector<8x128xf32>
    %289 = arith.mulf %273, %287 : vector<8x128xf32>
    %290 = arith.addf %288, %289 : vector<8x128xf32>
    %291 = math.tanh %290 : vector<8x128xf32>
    %292 = arith.mulf %285, %291 : vector<8x128xf32>
    %c1_216 = arith.constant 1 : index
    %c0_217 = arith.constant 0 : index
    %c0_218 = arith.constant 0 : index
    %293 = vector.load %arg8[%c1_216, %c0_217, %c0_218] : memref<2x8x128xf32, #tpu.memory_space<vmem>>, vector<1x8x128xf32>
    %294 = vector.shape_cast %293 : vector<1x8x128xf32> to vector<8x128xf32>
    %295 = vector.shape_cast %292 : vector<8x128xf32> to vector<1x8x128xf32>
    tpu.vector_store %arg8[%c1_216, %c0_217, %c0_218], %295 {strides = array<i32>} : memref<2x8x128xf32, #tpu.memory_space<vmem>>, vector<1x8x128xf32>,
    %c1_219 = arith.constant 1 : index
    %c0_220 = arith.constant 0 : index
    %c0_221 = arith.constant 0 : index
    %296 = vector.load %arg9[%c1_219, %c0_220, %c0_221] : memref<2x8x128xf32, #tpu.memory_space<vmem>>, vector<1x8x128xf32>
    %297 = vector.shape_cast %296 : vector<1x8x128xf32> to vector<8x128xf32>
    %298 = vector.shape_cast %290 : vector<8x128xf32> to vector<1x8x128xf32>
    tpu.vector_store %arg9[%c1_219, %c0_220, %c0_221], %298 {strides = array<i32>} : memref<2x8x128xf32, #tpu.memory_space<vmem>>, vector<1x8x128xf32>,
    %c0_222 = arith.constant 0 : index
    %c0_223 = arith.constant 0 : index
    %c0_224 = arith.constant 0 : index
    %299 = vector.load %arg7[%c0_222, %c0_223, %c0_224] : memref<1x8x128xf32, #tpu.memory_space<vmem>>, vector<1x8x128xf32>
    %300 = vector.shape_cast %299 : vector<1x8x128xf32> to vector<8x128xf32>
    %301 = vector.shape_cast %292 : vector<8x128xf32> to vector<1x8x128xf32>
    tpu.vector_store %arg7[%c0_222, %c0_223, %c0_224], %301 {strides = array<i32>} : memref<1x8x128xf32, #tpu.memory_space<vmem>>, vector<1x8x128xf32>,
    return
  }
  func.func @transform_0(%arg0: i32) -> (i32, i32, i32) {
    %c0_i32 = arith.constant 0 : i32
    %c0_i32_0 = arith.constant 0 : i32
    %c0_i32_1 = arith.constant 0 : i32
    return %arg0, %c0_i32, %c0_i32_0 : i32, i32, i32
  }
  func.func @transform_1(%arg0: i32) -> (i32, i32, i32) {
    %c0_i32 = arith.constant 0 : i32
    %c0_i32_0 = arith.constant 0 : i32
    %c0_i32_1 = arith.constant 0 : i32
    %c0_i32_2 = arith.constant 0 : i32
    return %c0_i32, %c0_i32_0, %c0_i32_1 : i32, i32, i32
  }
  func.func @transform_2(%arg0: i32) -> (i32, i32, i32) {
    %c0_i32 = arith.constant 0 : i32
    %c0_i32_0 = arith.constant 0 : i32
    %c0_i32_1 = arith.constant 0 : i32
    %c0_i32_2 = arith.constant 0 : i32
    return %c0_i32, %c0_i32_0, %c0_i32_1 : i32, i32, i32
  }
  func.func @transform_3(%arg0: i32) -> (i32, i32, i32) {
    %c0_i32 = arith.constant 0 : i32
    %c0_i32_0 = arith.constant 0 : i32
    %c0_i32_1 = arith.constant 0 : i32
    %c0_i32_2 = arith.constant 0 : i32
    return %c0_i32, %c0_i32_0, %c0_i32_1 : i32, i32, i32
  }
  func.func @transform_4(%arg0: i32) -> (i32, i32, i32) {
    %c0_i32 = arith.constant 0 : i32
    %c0_i32_0 = arith.constant 0 : i32
    %c0_i32_1 = arith.constant 0 : i32
    %c0_i32_2 = arith.constant 0 : i32
    return %c0_i32, %c0_i32_0, %c0_i32_1 : i32, i32, i32
  }
  func.func @transform_5(%arg0: i32) -> (i32, i32, i32) {
    %c0_i32 = arith.constant 0 : i32
    %c0_i32_0 = arith.constant 0 : i32
    %c0_i32_1 = arith.constant 0 : i32
    %c0_i32_2 = arith.constant 0 : i32
    return %c0_i32, %c0_i32_0, %c0_i32_1 : i32, i32, i32
  }
  func.func @transform_6(%arg0: i32) -> (i32, i32, i32) {
    %c0_i32 = arith.constant 0 : i32
    %c0_i32_0 = arith.constant 0 : i32
    %c0_i32_1 = arith.constant 0 : i32
    return %arg0, %c0_i32, %c0_i32_0 : i32, i32, i32
  }
  func.func @transform_7(%arg0: i32) -> (i32, i32, i32) {
    %c0_i32 = arith.constant 0 : i32
    %c0_i32_0 = arith.constant 0 : i32
    %c0_i32_1 = arith.constant 0 : i32
    %c0_i32_2 = arith.constant 0 : i32
    return %c0_i32, %c0_i32_0, %c0_i32_1 : i32, i32, i32
  }
  func.func @transform_8(%arg0: i32) -> (i32, i32, i32) {
    %c0_i32 = arith.constant 0 : i32
    %c0_i32_0 = arith.constant 0 : i32
    %c0_i32_1 = arith.constant 0 : i32
    %c0_i32_2 = arith.constant 0 : i32
    return %c0_i32, %c0_i32_0, %c0_i32_1 : i32, i32, i32
  }
}

module attributes {stable_mosaic.version = 11 : i64} {
  func.func @_matmul_act_kernel(%arg0: memref<8x200xbf16, #tpu.memory_space<vmem>>, %arg1: memref<200x256xbf16, #tpu.memory_space<vmem>>, %arg2: memref<8x1xf32, #tpu.memory_space<vmem>>, %arg3: memref<8x256xf32, #tpu.memory_space<vmem>>) attributes {dimension_semantics = [], scalar_prefetch = 0 : i64, scratch_operands = 0 : i64, tpu.core_type = #tpu.core_type<tc>} {
    %c0 = arith.constant 0 : index
    %c0_0 = arith.constant 0 : index
    %0 = vector.load %arg0[%c0, %c0_0] : memref<8x200xbf16, #tpu.memory_space<vmem>>, vector<8x200xbf16>
    %c0_1 = arith.constant 0 : index
    %c0_2 = arith.constant 0 : index
    %1 = vector.load %arg1[%c0_1, %c0_2] : memref<200x256xbf16, #tpu.memory_space<vmem>>, vector<200x256xbf16>
    %cst = arith.constant dense<0.000000e+00> : vector<8x256xf32>
    %2 = tpu.matmul %0, %1, %cst {dimension_numbers = #tpu.dot_dimension_numbers<[1], [0], [0], [1], [0, 0, 1, 1], [], []>} : vector<8x200xbf16>, vector<200x256xbf16>, vector<8x256xf32> -> vector<8x256xf32>
    %c0_3 = arith.constant 0 : index
    %c0_4 = arith.constant 0 : index
    %3 = vector.load %arg2[%c0_3, %c0_4] : memref<8x1xf32, #tpu.memory_space<vmem>>, vector<8x1xf32>
    %4 = vector.broadcast %3 : vector<8x1xf32> to vector<8x256xf32>
    %5 = arith.addf %2, %4 : vector<8x256xf32>
    %6 = math.tanh %5 : vector<8x256xf32>
    %c0_5 = arith.constant 0 : index
    %c0_6 = arith.constant 0 : index
    %7 = vector.load %arg3[%c0_5, %c0_6] : memref<8x256xf32, #tpu.memory_space<vmem>>, vector<8x256xf32>
    tpu.vector_store %arg3[%c0_5, %c0_6], %6 {strides = array<i32>} : memref<8x256xf32, #tpu.memory_space<vmem>>, vector<8x256xf32>,
    return
  }
}

module attributes {stable_mosaic.version = 11 : i64} {
  func.func @_matmul_act_nobias_kernel(%arg0: memref<10x1000xbf16, #tpu.memory_space<vmem>>, %arg1: memref<1000x256xbf16, #tpu.memory_space<vmem>>, %arg2: memref<10x256xf32, #tpu.memory_space<vmem>>) attributes {dimension_semantics = [], scalar_prefetch = 0 : i64, scratch_operands = 0 : i64, tpu.core_type = #tpu.core_type<tc>} {
    %c0 = arith.constant 0 : index
    %c0_0 = arith.constant 0 : index
    %0 = vector.load %arg0[%c0, %c0_0] : memref<10x1000xbf16, #tpu.memory_space<vmem>>, vector<10x1000xbf16>
    %c0_1 = arith.constant 0 : index
    %c0_2 = arith.constant 0 : index
    %1 = vector.load %arg1[%c0_1, %c0_2] : memref<1000x256xbf16, #tpu.memory_space<vmem>>, vector<1000x256xbf16>
    %cst = arith.constant dense<0.000000e+00> : vector<10x256xf32>
    %2 = tpu.matmul %0, %1, %cst {dimension_numbers = #tpu.dot_dimension_numbers<[1], [0], [0], [1], [0, 0, 1, 1], [], []>} : vector<10x1000xbf16>, vector<1000x256xbf16>, vector<10x256xf32> -> vector<10x256xf32>
    %3 = arith.negf %2 : vector<10x256xf32>
    %4 = math.exp %3 : vector<10x256xf32>
    %cst_3 = arith.constant 1.000000e+00 : f32
    %5 = vector.broadcast %cst_3 : f32 to vector<10x256xf32>
    %6 = arith.addf %5, %4 : vector<10x256xf32>
    %7 = arith.divf %5, %6 : vector<10x256xf32>
    %c0_4 = arith.constant 0 : index
    %c0_5 = arith.constant 0 : index
    %8 = vector.load %arg2[%c0_4, %c0_5] : memref<10x256xf32, #tpu.memory_space<vmem>>, vector<10x256xf32>
    tpu.vector_store %arg2[%c0_4, %c0_5], %7 {strides = array<i32>} : memref<10x256xf32, #tpu.memory_space<vmem>>, vector<10x256xf32>,
    return
  }
}

</mosaic_0001>

<llo_original>
// kernel: conv_nn_v2_forward.4
$region0: #{conv_nn_v2_forward.4}
  #allocation0 [shape = 'u32[]', space=smem, size = 0x4, offset = 0x4, fixed_abs, tag = 'smem constant byte address 0x4 - core index']
  #allocation1 [shape = 'u32[144,128]{1,0:T(1,128)}', space=vmem, size = 0x12000, scoped, tag = 'internal scratch']
  %s0 = inlined_call_operand.hbm [shape: bf16[8,100], index: 0, kind: input, shape index: {}]
  %s1 = inlined_call_operand.vmem [shape: bf16[100,256], index: 1, kind: input, shape index: {}]
  %s2 = inlined_call_operand.vmem [shape: f32[8,1], index: 2, kind: input, shape index: {}]
  %s3 = inlined_call_operand.vmem [shape: f32[8,256], index: 3, kind: output, shape index: {}]
  %s4 = sld [smem:[#allocation0]]
  $region26: #{conv_nn_v2_forward.4} parent=0
    _
  %s6 = ssub.s32 1, %s4
  %s7 = scalar_select 0, %s6, %s4
  $region1: #{conv_nn_v2_forward.4} parent=0
    #allocation2 [shape = 'u8[2048]{0}', space=vmem, size = 0x800, scoped, tag = 'input window, operand 0, single buffered']
    #allocation3 [shape = 's32[1]{0}', space=sflag, size = 0x4, scoped, tag = 'scoped memory for conv_nn_v2_forward.4']
    %8 = vsyncpa [#allocation3], 0
    // Predicated region
    $region2: #{conv_nn_v2_forward.4} parent=1 // pred_check
      _
    $region3: #{conv_nn_v2_forward.4} parent=1 // pred_check_branch
      %10 = sbr.rel (0) target = $region5
    $region4: #{conv_nn_v2_forward.4} parent=1 // pred_region
      %s12 = ssub.s32 64, 64
      %13 = vsyncadd [#allocation3], %s12
      %s15 = sshll.u32 [#allocation2], 4
      %s16 = int_to_ptr.vmem [resolvable:$true] %s15
      %18 = dma.hbm_to_vmem [thread:$0]  %s0, 64, %s16, [#allocation3]
    $region5: #{conv_nn_v2_forward.4} parent=1 // pred_fallthru
      _
    // Predicated region
    $region6: #{conv_nn_v2_forward.4} parent=1 // pred_check
      _
    $region7: #{conv_nn_v2_forward.4} parent=1 // pred_check_branch
      %20 = sbr.rel (0) target = $region9
    $region8: #{conv_nn_v2_forward.4} parent=1 // pred_region
      _
    $region9: #{conv_nn_v2_forward.4} parent=1 // pred_fallthru
      _
    // Predicated region
    $region10: #{conv_nn_v2_forward.4} parent=1 // pred_check
      _
    $region11: #{conv_nn_v2_forward.4} parent=1 // pred_check_branch
      %22 = sbr.rel (0) target = $region13
    $region12: #{conv_nn_v2_forward.4} parent=1 // pred_region
      _
    $region13: #{conv_nn_v2_forward.4} parent=1 // pred_fallthru
      _
    // Predicated region
    $region14: #{conv_nn_v2_forward.4} parent=1 // pred_check
      _
    $region15: #{conv_nn_v2_forward.4} parent=1 // pred_check_branch
      %24 = sbr.rel (0) target = $region17
    $region16: #{conv_nn_v2_forward.4} parent=1 // pred_region
      %25 = dma.done [#allocation3], 64
    $region17: #{conv_nn_v2_forward.4} parent=1 // pred_fallthru
      _
    %v27 = vld [vmem:[#allocation2] sm:$0xf]
    %v28 = vld [vmem:[%s1] sm:$0xff]
    %v29 = vld [vmem:[%s1 + $0x8] sm:$0xff]
    %v30 = vld [vmem:[%s1 + $0x10] sm:$0xff]
    %v31 = vld [vmem:[%s1 + $0x18] sm:$0xff]
    %v32 = vld [vmem:[%s1 + $0x20] sm:$0xff]
    %v33 = vld [vmem:[%s1 + $0x28] sm:$0xff]
    %v34 = vld [vmem:[%s1 + $0x30] sm:$0xff]
    %v35 = vld [vmem:[%s1 + $0x38] sm:$0xff]
    %v36 = vld [vmem:[%s1 + $0x40] sm:$0xff]
    %v37 = vld [vmem:[%s1 + $0x48] sm:$0xff]
    %v38 = vld [vmem:[%s1 + $0x50] sm:$0xff]
    %v39 = vld [vmem:[%s1 + $0x58] sm:$0xff]
    %v40 = vld [vmem:[%s1 + $0x60] sm:$0x33]
    %v41 = vld [vmem:[%s2] sm:$0xff]
    %43 = vset.pattern.permute.xlu0 0
    %44 = vperm.xlu0 %43, %v41
    %v45 = vpop.permute.xlu0 %44
    %v60 = vunpack.c.l.b16 %v28
    %v61 = vunpack.c.h.b16 %v28
    %v62 = vunpack.c.l.b16 %v29
    %v63 = vunpack.c.h.b16 %v29
    %v64 = vunpack.c.l.b16 %v30
    %v65 = vunpack.c.h.b16 %v30
    %v66 = vunpack.c.l.b16 %v31
    %v67 = vunpack.c.h.b16 %v31
    %v68 = vunpack.c.l.b16 %v32
    %v69 = vunpack.c.h.b16 %v32
    %v70 = vunpack.c.l.b16 %v33
    %v71 = vunpack.c.h.b16 %v33
    %v72 = vunpack.c.l.b16 %v34
    %v73 = vunpack.c.h.b16 %v34
    %v74 = vunpack.c.l.b16 %v35
    %v75 = vunpack.c.h.b16 %v35
    %v76 = vunpack.c.l.b16 %v36
    %v77 = vunpack.c.h.b16 %v36
    %v78 = vunpack.c.l.b16 %v37
    %v79 = vunpack.c.h.b16 %v37
    %v80 = vunpack.c.l.b16 %v38
    %v81 = vunpack.c.h.b16 %v38
    %v82 = vunpack.c.l.b16 %v39
    %v83 = vunpack.c.h.b16 %v39
    %v84 = vunpack.c.l.b16 %v40
    %v85 = vunpack.c.h.b16 %v40
    %v86 = vpack.c.b16 %v62, %v60
    %v87 = vpack.c.b16 %v63, %v61
    %v88 = vpack.c.b16 %v66, %v64
    %v89 = vpack.c.b16 %v67, %v65
    %v90 = vpack.c.b16 %v70, %v68
    %v91 = vpack.c.b16 %v71, %v69
    %v92 = vpack.c.b16 %v74, %v72
    %v93 = vpack.c.b16 %v75, %v73
    %v94 = vpack.c.b16 %v78, %v76
    %v95 = vpack.c.b16 %v79, %v77
    %v96 = vpack.c.b16 %v82, %v80
    %v97 = vpack.c.b16 %v83, %v81
    %v98 = vpack.c.b16 %v84, %v84
    %v99 = vpack.c.b16 %v85, %v85
    %vm112 = vcmask 818176
    %v114 = vsel %vm112, %v27, 0
    %vm116 = vcmask 1041408
    %v118 = vsel %vm116, %v98, 0
    %v121 = vsel %vm116, %v99, 0
    %123 = vmatprep.subr.bf16.mxu0 0
    %124 = vmatpush1.bf16.msra.mxu0 0
    %125 = vmatprep.subr.bf16.mxu0 %v121
    %126 = vmatpush1.bf16.msra.mxu0 %v118
    %127 = vmatprep.subr.bf16.mxu0 %v97
    %128 = vmatpush1.bf16.msra.mxu0 %v96
    %129 = vmatprep.subr.bf16.mxu0 %v95
    %130 = vmatpush1.bf16.msra.mxu0 %v94
    %131 = vmatprep.subr.bf16.mxu0 %v93
    %132 = vmatpush1.bf16.msra.mxu0 %v92
    %133 = vmatprep.subr.bf16.mxu0 %v91
    %134 = vmatpush1.bf16.msra.mxu0 %v90
    %135 = vmatprep.subr.bf16.mxu0 %v89
    %136 = vmatpush1.bf16.msra.mxu0 %v88
    %137 = vmatprep.subr.bf16.mxu0 %v87
    %138 = vmatpush1.bf16.msra.mxu0 %v86
    %139 = vmatprep.subr.bf16.mxu0 0
    %140 = vmatpush2.bf16.msra.mxu0 0
    %141 = vmatprep.subr.bf16.mxu0 0
    %142 = vmatpush2.bf16.msra.mxu0 0
    %143 = vmatprep.subr.bf16.mxu0 0
    %144 = vmatpush2.bf16.msra.mxu0 0
    %145 = vmatprep.subr.bf16.mxu0 0
    %146 = vmatpush2.bf16.msra.mxu0 0
    %147 = vmatprep.subr.bf16.mxu0 0
    %148 = vmatpush2.bf16.msra.mxu0 0
    %149 = vmatprep.subr.bf16.mxu0 0
    %150 = vmatpush2.bf16.msra.mxu0 0
    %151 = vmatprep.subr.bf16.mxu0 0
    %152 = vmatpush2.bf16.msra.mxu0 0
    %153 = vmatprep.subr.bf16.mxu0 0
    %154 = vmatpush2.bf16.msra.mxu0 0
    %155 = vmatprep.mubr.bf16.mxu0 0
    %156 = vmatmul.mubr.bf16.gmra.mxu0 %v114
    %v157 = vpop.f32.mrf.mxu0
    %v158 = vadd.f32 %v45, %v157
    %v159 = vpop.f32.mrf.mxu0
    %v160 = vadd.f32 %v45, %v159
    %v161 = vpop.f32.mrf.mxu0
    %v162 = vpop.f32.mrf.mxu0
    %163 = vdwg.mxu0
    %164 = vst [vmem:[%s3] sm:$0xff] %v158
    %165 = vst [vmem:[%s3 + $0x8] sm:$0xff] %v160
    // Predicated region
    $region18: #{conv_nn_v2_forward.4} parent=1 // pred_check
      _
    $region19: #{conv_nn_v2_forward.4} parent=1 // pred_check_branch
      %167 = sbr.rel (0) target = $region21
    $region20: #{conv_nn_v2_forward.4} parent=1 // pred_region
      _
    $region21: #{conv_nn_v2_forward.4} parent=1 // pred_fallthru
      _
    // Predicated region
    $region22: #{conv_nn_v2_forward.4} parent=1 // pred_check
      _
    $region23: #{conv_nn_v2_forward.4} parent=1 // pred_check_branch
      %169 = sbr.rel (0) target = $region25
    $region24: #{conv_nn_v2_forward.4} parent=1 // pred_region
      _
    $region25: #{conv_nn_v2_forward.4} parent=1 // pred_fallthru
      _
    %170 = vsyncpa [#allocation3], 1

// kernel: conv_nn_v2_forward.5
$region0: #{conv_nn_v2_forward.5}
  #allocation0 [shape = 'u32[]', space=smem, size = 0x4, offset = 0x4, fixed_abs, tag = 'smem constant byte address 0x4 - core index']
  #allocation1 [shape = 'u32[144,128]{1,0:T(1,128)}', space=vmem, size = 0x12000, scoped, tag = 'internal scratch']
  %s0 = inlined_call_operand.vmem [shape: f32[2,8,128], index: 0, kind: input, shape index: {}]
  %s1 = inlined_call_operand.hbm [shape: bf16[2,32,400], index: 1, kind: input, shape index: {}]
  %s2 = inlined_call_operand.vmem [shape: f32[2,32,1], index: 2, kind: input, shape index: {}]
  %s3 = inlined_call_operand.vmem [shape: f32[2,8,128], index: 3, kind: input, shape index: {}]
  %s4 = inlined_call_operand.vmem [shape: f32[2,8,128], index: 4, kind: input, shape index: {}]
  %s5 = inlined_call_operand.hbm [shape: bf16[25,128,128], index: 5, kind: input, shape index: {}]
  %s6 = inlined_call_operand.vmem [shape: f32[2,8,128], index: 6, kind: output, shape index: {0}]
  %s7 = inlined_call_operand.vmem [shape: f32[2,8,128], index: 7, kind: output, shape index: {1}]
  %s8 = inlined_call_operand.vmem [shape: f32[2,8,128], index: 8, kind: output, shape index: {2}]
  %9 = xla_tuple %s6, %s7, %s8
  %s10 = sld [smem:[#allocation0]]
  $region85: #{conv_nn_v2_forward.5} parent=0
    _
  %s12 = ssub.s32 1, %s10
  %s13 = scalar_select 0, %s12, %s10
  $region1: #{conv_nn_v2_forward.5} parent=0
    #allocation2 [shape = 'u8[65536]{0}', space=vmem, size = 0x10000, scoped, tag = 'input window, operand 1, single buffered']
    #allocation3 [shape = 's32[2]{0}', space=sflag, size = 0x8, scoped, tag = 'scoped memory for conv_nn_v2_forward.5']
    #allocation4 [shape = 'u8[819200]{0}', space=vmem, size = 0xc8000, scoped, tag = 'input window, operand 5, single buffered']
    #allocation5 [shape = 's32[1]{0}', space=sflag, size = 0x4, scoped, tag = 'scoped memory for conv_nn_v2_forward.5']
    %14 = vsyncpa [#allocation3], 0
    %15 = vsyncpa [#allocation5], 0
    loop: start=0, step=1, limit=4
    $region2: #{conv_nn_v2_forward.5} parent=1 // loop_pre_header
      _
    $region3: #{conv_nn_v2_forward.5} parent=1 // loop_header
      %s17 = sphi 0, %s21
      %p18 = scmp.ge.s32.totalorder %s17, 4
      %s27 = sphi 0, %s29
      %s30 = sphi 0, %s27
      %s31 = sphi 0, %s30
      %s47 = sphi 0, %s31
      %s51 = sphi 0, %s51
      %s53 = sphi 0, %s51
      %s54 = sphi 0, %s53
      %s68 = sphi 0, %s54
      %s72 = sphi 0, %s72
      %s74 = sphi 0, %s72
      %s75 = sphi 0, %s74
      %s89 = sphi 0, %s75
      %s93 = sphi 0, %s93
      %s95 = sphi 0, %s93
      %s96 = sphi 0, %s95
      %s110 = sphi 0, %s96
      %s114 = sphi 0, %s114
      %s116 = sphi 0, %s114
      %s117 = sphi 0, %s116
      %s131 = sphi 0, %s117
      %s135 = sphi 0, %s135
      %s137 = sphi 0, %s135
      %s138 = sphi 0, %s137
      %s152 = sphi 0, %s138
      %s158 = sphi 0, %s160
      %s161 = sphi 0, %s158
      %s162 = sphi 0, %s161
      %s178 = sphi 0, %s162
      %s182 = sphi 0, %s182
      %s184 = sphi 0, %s182
      %s185 = sphi 0, %s184
      %s199 = sphi 0, %s185
      %s203 = sphi 0, %s203
      %s205 = sphi 0, %s203
      %s206 = sphi 0, %s205
      %s220 = sphi 0, %s206
    $region4: #{conv_nn_v2_forward.5} parent=1 // loop_header_branch
      %20 = sbr.rel (%p18) target = $region8
    $region5: #{conv_nn_v2_forward.5} parent=1 // loop_body
      %s22 = ssub.s32 %s17, 1
      %s23 = ssub.s32 %s17, 2
      %s24 = sadd.s32 %s17, 1
      %s25 = ssub.s32 %s17, %s24
      %p26 = scmp.eq.s32.totalorder %s25, 0
      %s28 = sadd.s32 %s27, 1
      %s29 = scalar_select %p26, %s27, %s28
      %p32 = pneg %p26
      %p33 = scmp.eq.s32.totalorder %s17, 1
      %p34 = por %p32, %p33
      %p35 = scmp.ne.s32.totalorder %s27, %s30
      %p36 = scmp.eq.s32.totalorder %s17, 0
      %p37 = por %p35, %p36
      %p38 = scmp.ne.s32.totalorder %s27, %s30
      %p39 = scmp.eq.s32.totalorder %s22, 1
      %p40 = por %p38, %p39
      %p41 = scmp.ne.s32.totalorder %s30, %s31
      %p42 = scmp.eq.s32.totalorder %s22, 0
      %p43 = por %p41, %p42
      %p44 = scmp.ne.s32.totalorder %s30, %s31
      %p45 = scmp.eq.s32.totalorder %s23, 1
      %p46 = por %p44, %p45
      %p48 = scmp.ne.s32.totalorder %s31, %s47
      %p49 = scmp.eq.s32.totalorder %s23, 0
      %p50 = por %p48, %p49
      %s52 = sadd.s32 %s51, 1
      %p55 = scmp.eq.s32.totalorder %s17, 1
      %p56 = scmp.ne.s32.totalorder %s51, %s53
      %p57 = scmp.eq.s32.totalorder %s17, 0
      %p58 = por %p56, %p57
      %p59 = scmp.ne.s32.totalorder %s51, %s53
      %p60 = scmp.eq.s32.totalorder %s22, 1
      %p61 = por %p59, %p60
      %p62 = scmp.ne.s32.totalorder %s53, %s54
      %p63 = scmp.eq.s32.totalorder %s22, 0
      %p64 = por %p62, %p63
      %p65 = scmp.ne.s32.totalorder %s53, %s54
      %p66 = scmp.eq.s32.totalorder %s23, 1
      %p67 = por %p65, %p66
      %p69 = scmp.ne.s32.totalorder %s54, %s68
      %p70 = scmp.eq.s32.totalorder %s23, 0
      %p71 = por %p69, %p70
      %s73 = sadd.s32 %s72, 1
      %p76 = scmp.eq.s32.totalorder %s17, 1
      %p77 = scmp.ne.s32.totalorder %s72, %s74
      %p78 = scmp.eq.s32.totalorder %s17, 0
      %p79 = por %p77, %p78
      %p80 = scmp.ne.s32.totalorder %s72, %s74
      %p81 = scmp.eq.s32.totalorder %s22, 1
      %p82 = por %p80, %p81
      %p83 = scmp.ne.s32.totalorder %s74, %s75
      %p84 = scmp.eq.s32.totalorder %s22, 0
      %p85 = por %p83, %p84
      %p86 = scmp.ne.s32.totalorder %s74, %s75
      %p87 = scmp.eq.s32.totalorder %s23, 1
      %p88 = por %p86, %p87
      %p90 = scmp.ne.s32.totalorder %s75, %s89
      %p91 = scmp.eq.s32.totalorder %s23, 0
      %p92 = por %p90, %p91
      %s94 = sadd.s32 %s93, 1
      %p97 = scmp.eq.s32.totalorder %s17, 1
      %p98 = scmp.ne.s32.totalorder %s93, %s95
      %p99 = scmp.eq.s32.totalorder %s17, 0
      %p100 = por %p98, %p99
      %p101 = scmp.ne.s32.totalorder %s93, %s95
      %p102 = scmp.eq.s32.totalorder %s22, 1
      %p103 = por %p101, %p102
      %p104 = scmp.ne.s32.totalorder %s95, %s96
      %p105 = scmp.eq.s32.totalorder %s22, 0
      %p106 = por %p104, %p105
      %p107 = scmp.ne.s32.totalorder %s95, %s96
      %p108 = scmp.eq.s32.totalorder %s23, 1
      %p109 = por %p107, %p108
      %p111 = scmp.ne.s32.totalorder %s96, %s110
      %p112 = scmp.eq.s32.totalorder %s23, 0
      %p113 = por %p111, %p112
      %s115 = sadd.s32 %s114, 1
      %p118 = scmp.eq.s32.totalorder %s17, 1
      %p119 = scmp.ne.s32.totalorder %s114, %s116
      %p120 = scmp.eq.s32.totalorder %s17, 0
      %p121 = por %p119, %p120
      %p122 = scmp.ne.s32.totalorder %s114, %s116
      %p123 = scmp.eq.s32.totalorder %s22, 1
      %p124 = por %p122, %p123
      %p125 = scmp.ne.s32.totalorder %s116, %s117
      %p126 = scmp.eq.s32.totalorder %s22, 0
      %p127 = por %p125, %p126
      %p128 = scmp.ne.s32.totalorder %s116, %s117
      %p129 = scmp.eq.s32.totalorder %s23, 1
      %p130 = por %p128, %p129
      %p132 = scmp.ne.s32.totalorder %s117, %s131
      %p133 = scmp.eq.s32.totalorder %s23, 0
      %p134 = por %p132, %p133
      %s136 = sadd.s32 %s135, 1
      %p139 = scmp.eq.s32.totalorder %s17, 1
      %p140 = scmp.ne.s32.totalorder %s135, %s137
      %p141 = scmp.eq.s32.totalorder %s17, 0
      %p142 = por %p140, %p141
      %p143 = scmp.ne.s32.totalorder %s135, %s137
      %p144 = scmp.eq.s32.totalorder %s22, 1
      %p145 = por %p143, %p144
      %p146 = scmp.ne.s32.totalorder %s137, %s138
      %p147 = scmp.eq.s32.totalorder %s22, 0
      %p148 = por %p146, %p147
      %p149 = scmp.ne.s32.totalorder %s137, %s138
      %p150 = scmp.eq.s32.totalorder %s23, 1
      %p151 = por %p149, %p150
      %p153 = scmp.ne.s32.totalorder %s138, %s152
      %p154 = scmp.eq.s32.totalorder %s23, 0
      %p155 = por %p153, %p154
      %s156 = ssub.s32 %s17, %s24
      %p157 = scmp.eq.s32.totalorder %s156, 0
      %s159 = sadd.s32 %s158, 1
      %s160 = scalar_select %p157, %s158, %s159
      %p163 = pneg %p157
      %p164 = scmp.eq.s32.totalorder %s17, 1
      %p165 = por %p163, %p164
      %p166 = scmp.ne.s32.totalorder %s158, %s161
      %p167 = scmp.eq.s32.totalorder %s17, 0
      %p168 = por %p166, %p167
      %p169 = scmp.ne.s32.totalorder %s158, %s161
      %p170 = scmp.eq.s32.totalorder %s22, 1
      %p171 = por %p169, %p170
      %p172 = scmp.ne.s32.totalorder %s161, %s162
      %p173 = scmp.eq.s32.totalorder %s22, 0
      %p174 = por %p172, %p173
      %p175 = scmp.ne.s32.totalorder %s161, %s162
      %p176 = scmp.eq.s32.totalorder %s23, 1
      %p177 = por %p175, %p176
      %p179 = scmp.ne.s32.totalorder %s162, %s178
      %p180 = scmp.eq.s32.totalorder %s23, 0
      %p181 = por %p179, %p180
      %s183 = sadd.s32 %s182, 1
      %p186 = scmp.eq.s32.totalorder %s17, 1
      %p187 = scmp.ne.s32.totalorder %s182, %s184
      %p188 = scmp.eq.s32.totalorder %s17, 0
      %p189 = por %p187, %p188
      %p190 = scmp.ne.s32.totalorder %s182, %s184
      %p191 = scmp.eq.s32.totalorder %s22, 1
      %p192 = por %p190, %p191
      %p193 = scmp.ne.s32.totalorder %s184, %s185
      %p194 = scmp.eq.s32.totalorder %s22, 0
      %p195 = por %p193, %p194
      %p196 = scmp.ne.s32.totalorder %s184, %s185
      %p197 = scmp.eq.s32.totalorder %s23, 1
      %p198 = por %p196, %p197
      %p200 = scmp.ne.s32.totalorder %s185, %s199
      %p201 = scmp.eq.s32.totalorder %s23, 0
      %p202 = por %p200, %p201
      %s204 = sadd.s32 %s203, 1
      %p207 = scmp.eq.s32.totalorder %s17, 1
      %p208 = scmp.ne.s32.totalorder %s203, %s205
      %p209 = scmp.eq.s32.totalorder %s17, 0
      %p210 = por %p208, %p209
      %p211 = scmp.ne.s32.totalorder %s203, %s205
      %p212 = scmp.eq.s32.totalorder %s22, 1
      %p213 = por %p211, %p212
      %p214 = scmp.ne.s32.totalorder %s205, %s206
      %p215 = scmp.eq.s32.totalorder %s22, 0
      %p216 = por %p214, %p215
      %p217 = scmp.ne.s32.totalorder %s205, %s206
      %p218 = scmp.eq.s32.totalorder %s23, 1
      %p219 = por %p217, %p218
      %p221 = scmp.ne.s32.totalorder %s206, %s220
      %p222 = scmp.eq.s32.totalorder %s23, 0
      %p223 = por %p221, %p222
      %p224 = scmp.le.s32.totalorder 1, %s17
      %p225 = scmp.lt.s32.totalorder %s17, 3
      %p226 = pnand %p224, %p225
      %p227 = pneg %p226
      // Predicated region
      $region9: #{conv_nn_v2_forward.5} parent=5 // pred_check
        _
      $region10: #{conv_nn_v2_forward.5} parent=5 // pred_check_branch
        %229 = sbr.rel (%p226) target = $region12
      $region11: #{conv_nn_v2_forward.5} parent=5 // pred_region
        %s230 = ssub.s32 %s17, 1
        // Predicated region
        $region13: #{conv_nn_v2_forward.5} parent=11 // pred_check
          %p231 = pneg %p64
        $region14: #{conv_nn_v2_forward.5} parent=11 // pred_check_branch
          %233 = sbr.rel (%p231) target = $region16
        $region15: #{conv_nn_v2_forward.5} parent=11 // pred_region
          %s235 = ssub.s32 2048, 2048
          %236 = vsyncadd [#allocation3], %s235
          %s237 = sshll.u32 [#allocation2], 4
          %s238 = int_to_ptr.vmem [resolvable:$true] %s237
          %243 = dma.hbm_to_vmem [thread:$0]  %s1, 2048, %s238, [#allocation3], 256, 256, 16
        $region16: #{conv_nn_v2_forward.5} parent=11 // pred_fallthru
          _
        // Predicated region
        $region17: #{conv_nn_v2_forward.5} parent=11 // pred_check
          %p244 = pneg %p85
        $region18: #{conv_nn_v2_forward.5} parent=11 // pred_check_branch
          %246 = sbr.rel (%p244) target = $region20
        $region19: #{conv_nn_v2_forward.5} parent=11 // pred_region
          _
        $region20: #{conv_nn_v2_forward.5} parent=11 // pred_fallthru
          _
        // Predicated region
        $region21: #{conv_nn_v2_forward.5} parent=11 // pred_check
          %p247 = pneg %p106
        $region22: #{conv_nn_v2_forward.5} parent=11 // pred_check_branch
          %249 = sbr.rel (%p247) target = $region24
        $region23: #{conv_nn_v2_forward.5} parent=11 // pred_region
          _
        $region24: #{conv_nn_v2_forward.5} parent=11 // pred_fallthru
          _
        // Predicated region
        $region25: #{conv_nn_v2_forward.5} parent=11 // pred_check
          %p250 = pneg %p127
        $region26: #{conv_nn_v2_forward.5} parent=11 // pred_check_branch
          %252 = sbr.rel (%p250) target = $region28
        $region27: #{conv_nn_v2_forward.5} parent=11 // pred_region
          _
        $region28: #{conv_nn_v2_forward.5} parent=11 // pred_fallthru
          _
        // Predicated region
        $region29: #{conv_nn_v2_forward.5} parent=11 // pred_check
          %p253 = pneg %p148
        $region30: #{conv_nn_v2_forward.5} parent=11 // pred_check_branch
          %255 = sbr.rel (%p253) target = $region32
        $region31: #{conv_nn_v2_forward.5} parent=11 // pred_region
          %s257 = ssub.s32 25600, 25600
          %258 = vsyncadd [#allocation5], %s257
          %s259 = sshll.u32 [#allocation4], 4
          %s260 = int_to_ptr.vmem [resolvable:$true] %s259
          %265 = dma.hbm_to_vmem [thread:$0]  %s5, 25600, %s260, [#allocation5], 64, 64, 4
        $region32: #{conv_nn_v2_forward.5} parent=11 // pred_fallthru
          _
      $region12: #{conv_nn_v2_forward.5} parent=5 // pred_fallthru
        _
      %p266 = scmp.lt.s32.totalorder %s17, 2
      // Predicated region
      $region33: #{conv_nn_v2_forward.5} parent=5 // pred_check
        %p267 = pneg %p266
      $region34: #{conv_nn_v2_forward.5} parent=5 // pred_check_branch
        %269 = sbr.rel (%p267) target = $region36
      $region35: #{conv_nn_v2_forward.5} parent=5 // pred_region
        // Predicated region
        $region37: #{conv_nn_v2_forward.5} parent=35 // pred_check
          %p270 = pneg %p37
        $region38: #{conv_nn_v2_forward.5} parent=35 // pred_check_branch
          %272 = sbr.rel (%p270) target = $region40
        $region39: #{conv_nn_v2_forward.5} parent=35 // pred_region
          %p273 = scmp.lt.s32.totalorder %s17, 1
          %s274 = scalar_select %p273, %s17, 1
          %s275 = smul.addr %s274, 8
          %s276 = scalar_lea.vmem %s0, %s275
        $region40: #{conv_nn_v2_forward.5} parent=35 // pred_fallthru
          _
      $region36: #{conv_nn_v2_forward.5} parent=5 // pred_fallthru
        _
      %p277 = scmp.le.s32.totalorder 1, %s17
      %p278 = scmp.lt.s32.totalorder %s17, 3
      %p279 = pnand %p277, %p278
      %p280 = pneg %p279
      // Predicated region
      $region41: #{conv_nn_v2_forward.5} parent=5 // pred_check
        _
      $region42: #{conv_nn_v2_forward.5} parent=5 // pred_check_branch
        %282 = sbr.rel (%p279) target = $region44
      $region43: #{conv_nn_v2_forward.5} parent=5 // pred_region
        %s283 = ssub.s32 %s17, 1
        // Predicated region
        $region45: #{conv_nn_v2_forward.5} parent=43 // pred_check
          %p284 = pneg %p64
        $region46: #{conv_nn_v2_forward.5} parent=43 // pred_check_branch
          %286 = sbr.rel (%p284) target = $region48
        $region47: #{conv_nn_v2_forward.5} parent=43 // pred_region
          %287 = dma.done [#allocation3], 2048
        $region48: #{conv_nn_v2_forward.5} parent=43 // pred_fallthru
          _
        // Predicated region
        $region49: #{conv_nn_v2_forward.5} parent=43 // pred_check
          %p288 = pneg %p148
        $region50: #{conv_nn_v2_forward.5} parent=43 // pred_check_branch
          %290 = sbr.rel (%p288) target = $region52
        $region51: #{conv_nn_v2_forward.5} parent=43 // pred_region
          %291 = dma.done [#allocation5], 25600
        $region52: #{conv_nn_v2_forward.5} parent=43 // pred_fallthru
          _
        %p292 = scmp.lt.s32.totalorder %s22, 1
        %s293 = scalar_select %p292, %s22, 1
        %s294 = smul.addr %s293, 8
        %s295 = scalar_lea.vmem %s0, %s294
        %p296 = pneg %p43
        %p297 = pneg %p40
        %p298 = pneg %p64
        %p299 = pneg %p61
        %p300 = pneg %p85
        %p301 = pneg %p82
        %p302 = pneg %p106
        %p303 = pneg %p103
        %p304 = pneg %p127
        %p305 = pneg %p124
        %p306 = pneg %p148
        %p307 = pneg %p145
        %p308 = pneg %p174
        %p309 = pneg %p171
        %p310 = scmp.lt.s32.totalorder %s22, 1
        %s311 = scalar_select %p310, %s22, 1
        %s312 = smul.addr %s311, 8
        %s313 = scalar_lea.vmem %s6, %s312
        %p314 = pneg %p195
        %p315 = pneg %p192
        %p316 = pneg %p216
        %p317 = pneg %p213
        %p318 = scmp.lt.s32.totalorder %s22, 1
        %s319 = scalar_select %p318, %s22, 1
        %s320 = smul.addr %s319, 8
        %s321 = scalar_lea.vmem %s0, %s320
        %p322 = scmp.lt.s32.totalorder %s22, 1
        %s323 = scalar_select %p322, %s22, 1
        %s324 = smul.addr %s323, 8
        %s325 = scalar_lea.vmem %s6, %s324
        %p327 = scmp.eq.s32.totalorder %s22, 0
        // Predicated region
        $region53: #{conv_nn_v2_forward.5} parent=43 // pred_check
          %p328 = pneg %p327
        $region54: #{conv_nn_v2_forward.5} parent=43 // pred_check_branch
          %330 = sbr.rel (%p328) target = $region56
        $region55: #{conv_nn_v2_forward.5} parent=43 // pred_region
          %v331 = vld [vmem:[%s3] sm:$0xff]
          %v332 = vld [vmem:[%s3 + $0x8] sm:$0xff]
          %333 = vst [vmem:[%s7] sm:$0xff] %v331
          %334 = vst [vmem:[%s7 + $0x8] sm:$0xff] %v332
          %v335 = vld [vmem:[%s4] sm:$0xff]
          %v336 = vld [vmem:[%s4 + $0x8] sm:$0xff]
          %337 = vst [vmem:[%s8] sm:$0xff] %v335
          %338 = vst [vmem:[%s8 + $0x8] sm:$0xff] %v336
        $region56: #{conv_nn_v2_forward.5} parent=43 // pred_fallthru
          _
        %v339 = vld [vmem:[%s321] sm:$0xff]
        %v340 = vld [vmem:[%s7] sm:$0xff]
        %v341 = vld [vmem:[%s8] sm:$0xff]
        %v342 = vpack.c.bf16 %v340, %v339
        %v343 = vld [vmem:[#allocation4] sm:$0xf]
        %v344 = vld [vmem:[#allocation4 + $0x4] sm:$0xf]
        %v345 = vld [vmem:[#allocation4 + $0x8] sm:$0xf]
        %v346 = vld [vmem:[#allocation4 + $0xc] sm:$0xf]
        %v347 = vld [vmem:[#allocation4 + $0x10] sm:$0xf]
        %v348 = vld [vmem:[#allocation4 + $0x14] sm:$0xf]
        %v349 = vld [vmem:[#allocation4 + $0x18] sm:$0xf]
        %v350 = vld [vmem:[#allocation4 + $0x1c] sm:$0xf]
        %v351 = vld [vmem:[#allocation4 + $0x20] sm:$0xf]
        %v352 = vld [vmem:[#allocation4 + $0x24] sm:$0xf]
        %v353 = vld [vmem:[#allocation4 + $0x28] sm:$0xf]
        %v354 = vld [vmem:[#allocation4 + $0x2c] sm:$0xf]
        %v355 = vld [vmem:[#allocation4 + $0x30] sm:$0xf]
        %v356 = vld [vmem:[#allocation4 + $0x34] sm:$0xf]
        %v357 = vld [vmem:[#allocation4 + $0x38] sm:$0xf]
        %v358 = vld [vmem:[#allocation4 + $0x3c] sm:$0xf]
        %v375 = vunpack.c.l.b16 %v343
        %v376 = vunpack.c.l.b16 %v344
        %v377 = vunpack.c.l.b16 %v345
        %v378 = vunpack.c.l.b16 %v346
        %v379 = vunpack.c.l.b16 %v347
        %v380 = vunpack.c.l.b16 %v348
        %v381 = vunpack.c.l.b16 %v349
        %v382 = vunpack.c.l.b16 %v350
        %v383 = vunpack.c.l.b16 %v351
        %v384 = vunpack.c.l.b16 %v352
        %v385 = vunpack.c.l.b16 %v353
        %v386 = vunpack.c.l.b16 %v354
        %v387 = vunpack.c.l.b16 %v355
        %v388 = vunpack.c.l.b16 %v356
        %v389 = vunpack.c.l.b16 %v357
        %v390 = vunpack.c.l.b16 %v358
        %v391 = vpack.c.b16 %v376, %v375
        %v392 = vpack.c.b16 %v378, %v377
        %v393 = vpack.c.b16 %v380, %v379
        %v394 = vpack.c.b16 %v382, %v381
        %v395 = vpack.c.b16 %v384, %v383
        %v396 = vpack.c.b16 %v386, %v385
        %v397 = vpack.c.b16 %v388, %v387
        %v398 = vpack.c.b16 %v390, %v389
        %407 = vmatprep.subr.bf16.mxu0 0
        %408 = vmatpush1.bf16.msra.mxu0 %v398
        %409 = vmatprep.subr.bf16.mxu0 0
        %410 = vmatpush1.bf16.msra.mxu0 %v397
        %411 = vmatprep.subr.bf16.mxu0 0
        %412 = vmatpush1.bf16.msra.mxu0 %v396
        %413 = vmatprep.subr.bf16.mxu0 0
        %414 = vmatpush1.bf16.msra.mxu0 %v395
        %415 = vmatprep.subr.bf16.mxu0 0
        %416 = vmatpush1.bf16.msra.mxu0 %v394
        %417 = vmatprep.subr.bf16.mxu0 0
        %418 = vmatpush1.bf16.msra.mxu0 %v393
        %419 = vmatprep.subr.bf16.mxu0 0
        %420 = vmatpush1.bf16.msra.mxu0 %v392
        %421 = vmatprep.subr.bf16.mxu0 0
        %422 = vmatpush1.bf16.msra.mxu0 %v391
        %423 = vmatprep.subr.bf16.mxu0 0
        %424 = vmatpush2.bf16.msra.mxu0 0
        %425 = vmatprep.subr.bf16.mxu0 0
        %426 = vmatpush2.bf16.msra.mxu0 0
        %427 = vmatprep.subr.bf16.mxu0 0
        %428 = vmatpush2.bf16.msra.mxu0 0
        %429 = vmatprep.subr.bf16.mxu0 0
        %430 = vmatpush2.bf16.msra.mxu0 0
        %431 = vmatprep.subr.bf16.mxu0 0
        %432 = vmatpush2.bf16.msra.mxu0 0
        %433 = vmatprep.subr.bf16.mxu0 0
        %434 = vmatpush2.bf16.msra.mxu0 0
        %435 = vmatprep.subr.bf16.mxu0 0
        %436 = vmatpush2.bf16.msra.mxu0 0
        %437 = vmatprep.subr.bf16.mxu0 0
        %438 = vmatpush2.bf16.msra.mxu0 0
        %439 = vmatprep.mubr.bf16.mxu0 0
        %440 = vmatmul.mubr.bf16.gmra.mxu0 %v342
        %v441 = vpop.f32.mrf.mxu0
        %v442 = vadd.f32 0.0, %v441
        %v443 = vpop.f32.mrf.mxu0
        %v444 = vpop.f32.mrf.mxu0
        %v445 = vadd.f32 0.0, %v444
        %v446 = vpop.f32.mrf.mxu0
        %447 = vdwg.mxu0
        %v448 = vpack.c.bf16 %v445, %v442
        %s449 = scalar_lea.vmem [#allocation4], 64
        %v450 = vld [vmem:[%s449] sm:$0xf]
        %v451 = vld [vmem:[%s449 + $0x4] sm:$0xf]
        %v452 = vld [vmem:[%s449 + $0x8] sm:$0xf]
        %v453 = vld [vmem:[%s449 + $0xc] sm:$0xf]
        %v454 = vld [vmem:[%s449 + $0x10] sm:$0xf]
        %v455 = vld [vmem:[%s449 + $0x14] sm:$0xf]
        %v456 = vld [vmem:[%s449 + $0x18] sm:$0xf]
        %v457 = vld [vmem:[%s449 + $0x1c] sm:$0xf]
        %v458 = vld [vmem:[%s449 + $0x20] sm:$0xf]
        %v459 = vld [vmem:[%s449 + $0x24] sm:$0xf]
        %v460 = vld [vmem:[%s449 + $0x28] sm:$0xf]
        %v461 = vld [vmem:[%s449 + $0x2c] sm:$0xf]
        %v462 = vld [vmem:[%s449 + $0x30] sm:$0xf]
        %v463 = vld [vmem:[%s449 + $0x34] sm:$0xf]
        %v464 = vld [vmem:[%s449 + $0x38] sm:$0xf]
        %v465 = vld [vmem:[%s449 + $0x3c] sm:$0xf]
        %v482 = vunpack.c.l.b16 %v450
        %v483 = vunpack.c.l.b16 %v451
        %v484 = vunpack.c.l.b16 %v452
        %v485 = vunpack.c.l.b16 %v453
        %v486 = vunpack.c.l.b16 %v454
        %v487 = vunpack.c.l.b16 %v455
        %v488 = vunpack.c.l.b16 %v456
        %v489 = vunpack.c.l.b16 %v457
        %v490 = vunpack.c.l.b16 %v458
        %v491 = vunpack.c.l.b16 %v459
        %v492 = vunpack.c.l.b16 %v460
        %v493 = vunpack.c.l.b16 %v461
        %v494 = vunpack.c.l.b16 %v462
        %v495 = vunpack.c.l.b16 %v463
        %v496 = vunpack.c.l.b16 %v464
        %v497 = vunpack.c.l.b16 %v465
        %v498 = vpack.c.b16 %v483, %v482
        %v499 = vpack.c.b16 %v485, %v484
        %v500 = vpack.c.b16 %v487, %v486
        %v501 = vpack.c.b16 %v489, %v488
        %v502 = vpack.c.b16 %v491, %v490
        %v503 = vpack.c.b16 %v493, %v492
        %v504 = vpack.c.b16 %v495, %v494
        %v505 = vpack.c.b16 %v497, %v496
        %514 = vmatprep.subr.bf16.mxu0 0
        %515 = vmatpush1.bf16.msra.mxu0 %v505
        %516 = vmatprep.subr.bf16.mxu0 0
        %517 = vmatpush1.bf16.msra.mxu0 %v504
        %518 = vmatprep.subr.bf16.mxu0 0
        %519 = vmatpush1.bf16.msra.mxu0 %v503
        %520 = vmatprep.subr.bf16.mxu0 0
        %521 = vmatpush1.bf16.msra.mxu0 %v502
        %522 = vmatprep.subr.bf16.mxu0 0
        %523 = vmatpush1.bf16.msra.mxu0 %v501
        %524 = vmatprep.subr.bf16.mxu0 0
        %525 = vmatpush1.bf16.msra.mxu0 %v500
        %526 = vmatprep.subr.bf16.mxu0 0
        %527 = vmatpush1.bf16.msra.mxu0 %v499
        %528 = vmatprep.subr.bf16.mxu0 0
        %529 = vmatpush1.bf16.msra.mxu0 %v498
        %530 = vmatprep.subr.bf16.mxu0 0
        %531 = vmatpush2.bf16.msra.mxu0 0
        %532 = vmatprep.subr.bf16.mxu0 0
        %533 = vmatpush2.bf16.msra.mxu0 0
        %534 = vmatprep.subr.bf16.mxu0 0
        %535 = vmatpush2.bf16.msra.mxu0 0
        %536 = vmatprep.subr.bf16.mxu0 0
        %537 = vmatpush2.bf16.msra.mxu0 0
        %538 = vmatprep.subr.bf16.mxu0 0
        %539 = vmatpush2.bf16.msra.mxu0 0
        %540 = vmatprep.subr.bf16.mxu0 0
        %541 = vmatpush2.bf16.msra.mxu0 0
        %542 = vmatprep.subr.bf16.mxu0 0
        %543 = vmatpush2.bf16.msra.mxu0 0
        %544 = vmatprep.subr.bf16.mxu0 0
        %545 = vmatpush2.bf16.msra.mxu0 0
        %546 = vmatprep.mubr.bf16.mxu0 0
        %547 = vmatmul.mubr.bf16.gmra.mxu0 %v342
        %v548 = vpop.f32.mrf.mxu0
        %v549 = vadd.f32 0.0, %v548
        %v550 = vpop.f32.mrf.mxu0
        %v551 = vpop.f32.mrf.mxu0
        %v552 = vadd.f32 0.0, %v551
        %v553 = vpop.f32.mrf.mxu0
        %554 = vdwg.mxu0
        %v555 = vpack.c.bf16 %v552, %v549
        %s556 = scalar_lea.vmem [#allocation4], 128
        %v557 = vld [vmem:[%s556] sm:$0xf]
        %v558 = vld [vmem:[%s556 + $0x4] sm:$0xf]
        %v559 = vld [vmem:[%s556 + $0x8] sm:$0xf]
        %v560 = vld [vmem:[%s556 + $0xc] sm:$0xf]
        %v561 = vld [vmem:[%s556 + $0x10] sm:$0xf]
        %v562 = vld [vmem:[%s556 + $0x14] sm:$0xf]
        %v563 = vld [vmem:[%s556 + $0x18] sm:$0xf]
        %v564 = vld [vmem:[%s556 + $0x1c] sm:$0xf]
        %v565 = vld [vmem:[%s556 + $0x20] sm:$0xf]
        %v566 = vld [vmem:[%s556 + $0x24] sm:$0xf]
        %v567 = vld [vmem:[%s556 + $0x28] sm:$0xf]
        %v568 = vld [vmem:[%s556 + $0x2c] sm:$0xf]
        %v569 = vld [vmem:[%s556 + $0x30] sm:$0xf]
        %v570 = vld [vmem:[%s556 + $0x34] sm:$0xf]
        %v571 = vld [vmem:[%s556 + $0x38] sm:$0xf]
        %v572 = vld [vmem:[%s556 + $0x3c] sm:$0xf]
        %v589 = vunpack.c.l.b16 %v557
        %v590 = vunpack.c.l.b16 %v558
        %v591 = vunpack.c.l.b16 %v559
        %v592 = vunpack.c.l.b16 %v560
        %v593 = vunpack.c.l.b16 %v561
        %v594 = vunpack.c.l.b16 %v562
        %v595 = vunpack.c.l.b16 %v563
        %v596 = vunpack.c.l.b16 %v564
        %v597 = vunpack.c.l.b16 %v565
        %v598 = vunpack.c.l.b16 %v566
        %v599 = vunpack.c.l.b16 %v567
        %v600 = vunpack.c.l.b16 %v568
        %v601 = vunpack.c.l.b16 %v569
        %v602 = vunpack.c.l.b16 %v570
        %v603 = vunpack.c.l.b16 %v571
        %v604 = vunpack.c.l.b16 %v572
        %v605 = vpack.c.b16 %v590, %v589
        %v606 = vpack.c.b16 %v592, %v591
        %v607 = vpack.c.b16 %v594, %v593
        %v608 = vpack.c.b16 %v596, %v595
        %v609 = vpack.c.b16 %v598, %v597
        %v610 = vpack.c.b16 %v600, %v599
        %v611 = vpack.c.b16 %v602, %v601
        %v612 = vpack.c.b16 %v604, %v603
        %621 = vmatprep.subr.bf16.mxu0 0
        %622 = vmatpush1.bf16.msra.mxu0 %v612
        %623 = vmatprep.subr.bf16.mxu0 0
        %624 = vmatpush1.bf16.msra.mxu0 %v611
        %625 = vmatprep.subr.bf16.mxu0 0
        %626 = vmatpush1.bf16.msra.mxu0 %v610
        %627 = vmatprep.subr.bf16.mxu0 0
        %628 = vmatpush1.bf16.msra.mxu0 %v609
        %629 = vmatprep.subr.bf16.mxu0 0
        %630 = vmatpush1.bf16.msra.mxu0 %v608
        %631 = vmatprep.subr.bf16.mxu0 0
        %632 = vmatpush1.bf16.msra.mxu0 %v607
        %633 = vmatprep.subr.bf16.mxu0 0
        %634 = vmatpush1.bf16.msra.mxu0 %v606
        %635 = vmatprep.subr.bf16.mxu0 0
        %636 = vmatpush1.bf16.msra.mxu0 %v605
        %637 = vmatprep.subr.bf16.mxu0 0
        %638 = vmatpush2.bf16.msra.mxu0 0
        %639 = vmatprep.subr.bf16.mxu0 0
        %640 = vmatpush2.bf16.msra.mxu0 0
        %641 = vmatprep.subr.bf16.mxu0 0
        %642 = vmatpush2.bf16.msra.mxu0 0
        %643 = vmatprep.subr.bf16.mxu0 0
        %644 = vmatpush2.bf16.msra.mxu0 0
        %645 = vmatprep.subr.bf16.mxu0 0
        %646 = vmatpush2.bf16.msra.mxu0 0
        %647 = vmatprep.subr.bf16.mxu0 0
        %648 = vmatpush2.bf16.msra.mxu0 0
        %649 = vmatprep.subr.bf16.mxu0 0
        %650 = vmatpush2.bf16.msra.mxu0 0
        %651 = vmatprep.subr.bf16.mxu0 0
        %652 = vmatpush2.bf16.msra.mxu0 0
        %653 = vmatprep.mubr.bf16.mxu0 0
        %654 = vmatmul.mubr.bf16.gmra.mxu0 %v342
        %v655 = vpop.f32.mrf.mxu0
        %v656 = vadd.f32 0.0, %v655
        %v657 = vpop.f32.mrf.mxu0
        %v658 = vpop.f32.mrf.mxu0
        %v659 = vadd.f32 0.0, %v658
        %v660 = vpop.f32.mrf.mxu0
        %661 = vdwg.mxu0
        %v662 = vpack.c.bf16 %v659, %v656
        %s663 = scalar_lea.vmem [#allocation4], 192
        %v664 = vld [vmem:[%s663] sm:$0xf]
        %v665 = vld [vmem:[%s663 + $0x4] sm:$0xf]
        %v666 = vld [vmem:[%s663 + $0x8] sm:$0xf]
        %v667 = vld [vmem:[%s663 + $0xc] sm:$0xf]
        %v668 = vld [vmem:[%s663 + $0x10] sm:$0xf]
        %v669 = vld [vmem:[%s663 + $0x14] sm:$0xf]
        %v670 = vld [vmem:[%s663 + $0x18] sm:$0xf]
        %v671 = vld [vmem:[%s663 + $0x1c] sm:$0xf]
        %v672 = vld [vmem:[%s663 + $0x20] sm:$0xf]
        %v673 = vld [vmem:[%s663 + $0x24] sm:$0xf]
        %v674 = vld [vmem:[%s663 + $0x28] sm:$0xf]
        %v675 = vld [vmem:[%s663 + $0x2c] sm:$0xf]
        %v676 = vld [vmem:[%s663 + $0x30] sm:$0xf]
        %v677 = vld [vmem:[%s663 + $0x34] sm:$0xf]
        %v678 = vld [vmem:[%s663 + $0x38] sm:$0xf]
        %v679 = vld [vmem:[%s663 + $0x3c] sm:$0xf]
        %v696 = vunpack.c.l.b16 %v664
        %v697 = vunpack.c.l.b16 %v665
        %v698 = vunpack.c.l.b16 %v666
        %v699 = vunpack.c.l.b16 %v667
        %v700 = vunpack.c.l.b16 %v668
        %v701 = vunpack.c.l.b16 %v669
        %v702 = vunpack.c.l.b16 %v670
        %v703 = vunpack.c.l.b16 %v671
        %v704 = vunpack.c.l.b16 %v672
        %v705 = vunpack.c.l.b16 %v673
        %v706 = vunpack.c.l.b16 %v674
        %v707 = vunpack.c.l.b16 %v675
        %v708 = vunpack.c.l.b16 %v676
        %v709 = vunpack.c.l.b16 %v677
        %v710 = vunpack.c.l.b16 %v678
        %v711 = vunpack.c.l.b16 %v679
        %v712 = vpack.c.b16 %v697, %v696
        %v713 = vpack.c.b16 %v699, %v698
        %v714 = vpack.c.b16 %v701, %v700
        %v715 = vpack.c.b16 %v703, %v702
        %v716 = vpack.c.b16 %v705, %v704
        %v717 = vpack.c.b16 %v707, %v706
        %v718 = vpack.c.b16 %v709, %v708
        %v719 = vpack.c.b16 %v711, %v710
        %728 = vmatprep.subr.bf16.mxu0 0
        %729 = vmatpush1.bf16.msra.mxu0 %v719
        %730 = vmatprep.subr.bf16.mxu0 0
        %731 = vmatpush1.bf16.msra.mxu0 %v718
        %732 = vmatprep.subr.bf16.mxu0 0
        %733 = vmatpush1.bf16.msra.mxu0 %v717
        %734 = vmatprep.subr.bf16.mxu0 0
        %735 = vmatpush1.bf16.msra.mxu0 %v716
        %736 = vmatprep.subr.bf16.mxu0 0
        %737 = vmatpush1.bf16.msra.mxu0 %v715
        %738 = vmatprep.subr.bf16.mxu0 0
        %739 = vmatpush1.bf16.msra.mxu0 %v714
        %740 = vmatprep.subr.bf16.mxu0 0
        %741 = vmatpush1.bf16.msra.mxu0 %v713
        %742 = vmatprep.subr.bf16.mxu0 0
        %743 = vmatpush1.bf16.msra.mxu0 %v712
        %744 = vmatprep.subr.bf16.mxu0 0
        %745 = vmatpush2.bf16.msra.mxu0 0
        %746 = vmatprep.subr.bf16.mxu0 0
        %747 = vmatpush2.bf16.msra.mxu0 0
        %748 = vmatprep.subr.bf16.mxu0 0
        %749 = vmatpush2.bf16.msra.mxu0 0
        %750 = vmatprep.subr.bf16.mxu0 0
        %751 = vmatpush2.bf16.msra.mxu0 0
        %752 = vmatprep.subr.bf16.mxu0 0
        %753 = vmatpush2.bf16.msra.mxu0 0
        %754 = vmatprep.subr.bf16.mxu0 0
        %755 = vmatpush2.bf16.msra.mxu0 0
        %756 = vmatprep.subr.bf16.mxu0 0
        %757 = vmatpush2.bf16.msra.mxu0 0
        %758 = vmatprep.subr.bf16.mxu0 0
        %759 = vmatpush2.bf16.msra.mxu0 0
        %760 = vmatprep.mubr.bf16.mxu0 0
        %761 = vmatmul.mubr.bf16.gmra.mxu0 %v342
        %v762 = vpop.f32.mrf.mxu0
        %v763 = vadd.f32 0.0, %v762
        %v764 = vpop.f32.mrf.mxu0
        %v765 = vpop.f32.mrf.mxu0
        %v766 = vadd.f32 0.0, %v765
        %v767 = vpop.f32.mrf.mxu0
        %768 = vdwg.mxu0
        %v769 = vpack.c.bf16 %v766, %v763
        %s770 = scalar_lea.vmem [#allocation4], 256
        %v771 = vld [vmem:[%s770] sm:$0xf]
        %v772 = vld [vmem:[%s770 + $0x4] sm:$0xf]
        %v773 = vld [vmem:[%s770 + $0x8] sm:$0xf]
        %v774 = vld [vmem:[%s770 + $0xc] sm:$0xf]
        %v775 = vld [vmem:[%s770 + $0x10] sm:$0xf]
        %v776 = vld [vmem:[%s770 + $0x14] sm:$0xf]
        %v777 = vld [vmem:[%s770 + $0x18] sm:$0xf]
        %v778 = vld [vmem:[%s770 + $0x1c] sm:$0xf]
        %v779 = vld [vmem:[%s770 + $0x20] sm:$0xf]
        %v780 = vld [vmem:[%s770 + $0x24] sm:$0xf]
        %v781 = vld [vmem:[%s770 + $0x28] sm:$0xf]
        %v782 = vld [vmem:[%s770 + $0x2c] sm:$0xf]
        %v783 = vld [vmem:[%s770 + $0x30] sm:$0xf]
        %v784 = vld [vmem:[%s770 + $0x34] sm:$0xf]
        %v785 = vld [vmem:[%s770 + $0x38] sm:$0xf]
        %v786 = vld [vmem:[%s770 + $0x3c] sm:$0xf]
        %v803 = vunpack.c.l.b16 %v771
        %v804 = vunpack.c.l.b16 %v772
        %v805 = vunpack.c.l.b16 %v773
        %v806 = vunpack.c.l.b16 %v774
        %v807 = vunpack.c.l.b16 %v775
        %v808 = vunpack.c.l.b16 %v776
        %v809 = vunpack.c.l.b16 %v777
        %v810 = vunpack.c.l.b16 %v778
        %v811 = vunpack.c.l.b16 %v779
        %v812 = vunpack.c.l.b16 %v780
        %v813 = vunpack.c.l.b16 %v781
        %v814 = vunpack.c.l.b16 %v782
        %v815 = vunpack.c.l.b16 %v783
        %v816 = vunpack.c.l.b16 %v784
        %v817 = vunpack.c.l.b16 %v785
        %v818 = vunpack.c.l.b16 %v786
        %v819 = vpack.c.b16 %v804, %v803
        %v820 = vpack.c.b16 %v806, %v805
        %v821 = vpack.c.b16 %v808, %v807
        %v822 = vpack.c.b16 %v810, %v809
        %v823 = vpack.c.b16 %v812, %v811
        %v824 = vpack.c.b16 %v814, %v813
        %v825 = vpack.c.b16 %v816, %v815
        %v826 = vpack.c.b16 %v818, %v817
        %835 = vmatprep.subr.bf16.mxu0 0
        %836 = vmatpush1.bf16.msra.mxu0 %v826
        %837 = vmatprep.subr.bf16.mxu0 0
        %838 = vmatpush1.bf16.msra.mxu0 %v825
        %839 = vmatprep.subr.bf16.mxu0 0
        %840 = vmatpush1.bf16.msra.mxu0 %v824
        %841 = vmatprep.subr.bf16.mxu0 0
        %842 = vmatpush1.bf16.msra.mxu0 %v823
        %843 = vmatprep.subr.bf16.mxu0 0
        %844 = vmatpush1.bf16.msra.mxu0 %v822
        %845 = vmatprep.subr.bf16.mxu0 0
        %846 = vmatpush1.bf16.msra.mxu0 %v821
        %847 = vmatprep.subr.bf16.mxu0 0
        %848 = vmatpush1.bf16.msra.mxu0 %v820
        %849 = vmatprep.subr.bf16.mxu0 0
        %850 = vmatpush1.bf16.msra.mxu0 %v819
        %851 = vmatprep.subr.bf16.mxu0 0
        %852 = vmatpush2.bf16.msra.mxu0 0
        %853 = vmatprep.subr.bf16.mxu0 0
        %854 = vmatpush2.bf16.msra.mxu0 0
        %855 = vmatprep.subr.bf16.mxu0 0
        %856 = vmatpush2.bf16.msra.mxu0 0
        %857 = vmatprep.subr.bf16.mxu0 0
        %858 = vmatpush2.bf16.msra.mxu0 0
        %859 = vmatprep.subr.bf16.mxu0 0
        %860 = vmatpush2.bf16.msra.mxu0 0
        %861 = vmatprep.subr.bf16.mxu0 0
        %862 = vmatpush2.bf16.msra.mxu0 0
        %863 = vmatprep.subr.bf16.mxu0 0
        %864 = vmatpush2.bf16.msra.mxu0 0
        %865 = vmatprep.subr.bf16.mxu0 0
        %866 = vmatpush2.bf16.msra.mxu0 0
        %867 = vmatprep.mubr.bf16.mxu0 0
        %868 = vmatmul.mubr.bf16.gmra.mxu0 %v342
        %v869 = vpop.f32.mrf.mxu0
        %v870 = vadd.f32 0.0, %v869
        %v871 = vpop.f32.mrf.mxu0
        %v872 = vpop.f32.mrf.mxu0
        %v873 = vadd.f32 0.0, %v872
        %v874 = vpop.f32.mrf.mxu0
        %875 = vdwg.mxu0
        %v876 = vpack.c.bf16 %v873, %v870
        %s877 = scalar_lea.vmem [#allocation4], 320
        %v878 = vld [vmem:[%s877] sm:$0xf]
        %v879 = vld [vmem:[%s877 + $0x4] sm:$0xf]
        %v880 = vld [vmem:[%s877 + $0x8] sm:$0xf]
        %v881 = vld [vmem:[%s877 + $0xc] sm:$0xf]
        %v882 = vld [vmem:[%s877 + $0x10] sm:$0xf]
        %v883 = vld [vmem:[%s877 + $0x14] sm:$0xf]
        %v884 = vld [vmem:[%s877 + $0x18] sm:$0xf]
        %v885 = vld [vmem:[%s877 + $0x1c] sm:$0xf]
        %v886 = vld [vmem:[%s877 + $0x20] sm:$0xf]
        %v887 = vld [vmem:[%s877 + $0x24] sm:$0xf]
        %v888 = vld [vmem:[%s877 + $0x28] sm:$0xf]
        %v889 = vld [vmem:[%s877 + $0x2c] sm:$0xf]
        %v890 = vld [vmem:[%s877 + $0x30] sm:$0xf]
        %v891 = vld [vmem:[%s877 + $0x34] sm:$0xf]
        %v892 = vld [vmem:[%s877 + $0x38] sm:$0xf]
        %v893 = vld [vmem:[%s877 + $0x3c] sm:$0xf]
        %v910 = vunpack.c.l.b16 %v878
        %v911 = vunpack.c.l.b16 %v879
        %v912 = vunpack.c.l.b16 %v880
        %v913 = vunpack.c.l.b16 %v881
        %v914 = vunpack.c.l.b16 %v882
        %v915 = vunpack.c.l.b16 %v883
        %v916 = vunpack.c.l.b16 %v884
        %v917 = vunpack.c.l.b16 %v885
        %v918 = vunpack.c.l.b16 %v886
        %v919 = vunpack.c.l.b16 %v887
        %v920 = vunpack.c.l.b16 %v888
        %v921 = vunpack.c.l.b16 %v889
        %v922 = vunpack.c.l.b16 %v890
        %v923 = vunpack.c.l.b16 %v891
        %v924 = vunpack.c.l.b16 %v892
        %v925 = vunpack.c.l.b16 %v893
        %v926 = vpack.c.b16 %v911, %v910
        %v927 = vpack.c.b16 %v913, %v912
        %v928 = vpack.c.b16 %v915, %v914
        %v929 = vpack.c.b16 %v917, %v916
        %v930 = vpack.c.b16 %v919, %v918
        %v931 = vpack.c.b16 %v921, %v920
        %v932 = vpack.c.b16 %v923, %v922
        %v933 = vpack.c.b16 %v925, %v924
        %942 = vmatprep.subr.bf16.mxu0 0
        %943 = vmatpush1.bf16.msra.mxu0 %v933
        %944 = vmatprep.subr.bf16.mxu0 0
        %945 = vmatpush1.bf16.msra.mxu0 %v932
        %946 = vmatprep.subr.bf16.mxu0 0
        %947 = vmatpush1.bf16.msra.mxu0 %v931
        %948 = vmatprep.subr.bf16.mxu0 0
        %949 = vmatpush1.bf16.msra.mxu0 %v930
        %950 = vmatprep.subr.bf16.mxu0 0
        %951 = vmatpush1.bf16.msra.mxu0 %v929
        %952 = vmatprep.subr.bf16.mxu0 0
        %953 = vmatpush1.bf16.msra.mxu0 %v928
        %954 = vmatprep.subr.bf16.mxu0 0
        %955 = vmatpush1.bf16.msra.mxu0 %v927
        %956 = vmatprep.subr.bf16.mxu0 0
        %957 = vmatpush1.bf16.msra.mxu0 %v926
        %958 = vmatprep.subr.bf16.mxu0 0
        %959 = vmatpush2.bf16.msra.mxu0 0
        %960 = vmatprep.subr.bf16.mxu0 0
        %961 = vmatpush2.bf16.msra.mxu0 0
        %962 = vmatprep.subr.bf16.mxu0 0
        %963 = vmatpush2.bf16.msra.mxu0 0
        %964 = vmatprep.subr.bf16.mxu0 0
        %965 = vmatpush2.bf16.msra.mxu0 0
        %966 = vmatprep.subr.bf16.mxu0 0
        %967 = vmatpush2.bf16.msra.mxu0 0
        %968 = vmatprep.subr.bf16.mxu0 0
        %969 = vmatpush2.bf16.msra.mxu0 0
        %970 = vmatprep.subr.bf16.mxu0 0
        %971 = vmatpush2.bf16.msra.mxu0 0
        %972 = vmatprep.subr.bf16.mxu0 0
        %973 = vmatpush2.bf16.msra.mxu0 0
        %974 = vmatprep.mubr.bf16.mxu0 0
        %975 = vmatmul.mubr.bf16.gmra.mxu0 %v342
        %v976 = vpop.f32.mrf.mxu0
        %v977 = vadd.f32 0.0, %v976
        %v978 = vpop.f32.mrf.mxu0
        %v979 = vpop.f32.mrf.mxu0
        %v980 = vadd.f32 0.0, %v979
        %v981 = vpop.f32.mrf.mxu0
        %982 = vdwg.mxu0
        %v983 = vpack.c.bf16 %v980, %v977
        %s984 = scalar_lea.vmem [#allocation4], 384
        %v985 = vld [vmem:[%s984] sm:$0xf]
        %v986 = vld [vmem:[%s984 + $0x4] sm:$0xf]
        %v987 = vld [vmem:[%s984 + $0x8] sm:$0xf]
        %v988 = vld [vmem:[%s984 + $0xc] sm:$0xf]
        %v989 = vld [vmem:[%s984 + $0x10] sm:$0xf]
        %v990 = vld [vmem:[%s984 + $0x14] sm:$0xf]
        %v991 = vld [vmem:[%s984 + $0x18] sm:$0xf]
        %v992 = vld [vmem:[%s984 + $0x1c] sm:$0xf]
        %v993 = vld [vmem:[%s984 + $0x20] sm:$0xf]
        %v994 = vld [vmem:[%s984 + $0x24] sm:$0xf]
        %v995 = vld [vmem:[%s984 + $0x28] sm:$0xf]
        %v996 = vld [vmem:[%s984 + $0x2c] sm:$0xf]
        %v997 = vld [vmem:[%s984 + $0x30] sm:$0xf]
        %v998 = vld [vmem:[%s984 + $0x34] sm:$0xf]
        %v999 = vld [vmem:[%s984 + $0x38] sm:$0xf]
        %v1000 = vld [vmem:[%s984 + $0x3c] sm:$0xf]
        %v1017 = vunpack.c.l.b16 %v985
        %v1018 = vunpack.c.l.b16 %v986
        %v1019 = vunpack.c.l.b16 %v987
        %v1020 = vunpack.c.l.b16 %v988
        %v1021 = vunpack.c.l.b16 %v989
        %v1022 = vunpack.c.l.b16 %v990
        %v1023 = vunpack.c.l.b16 %v991
        %v1024 = vunpack.c.l.b16 %v992
        %v1025 = vunpack.c.l.b16 %v993
        %v1026 = vunpack.c.l.b16 %v994
        %v1027 = vunpack.c.l.b16 %v995
        %v1028 = vunpack.c.l.b16 %v996
        %v1029 = vunpack.c.l.b16 %v997
        %v1030 = vunpack.c.l.b16 %v998
        %v1031 = vunpack.c.l.b16 %v999
        %v1032 = vunpack.c.l.b16 %v1000
        %v1033 = vpack.c.b16 %v1018, %v1017
        %v1034 = vpack.c.b16 %v1020, %v1019
        %v1035 = vpack.c.b16 %v1022, %v1021
        %v1036 = vpack.c.b16 %v1024, %v1023
        %v1037 = vpack.c.b16 %v1026, %v1025
        %v1038 = vpack.c.b16 %v1028, %v1027
        %v1039 = vpack.c.b16 %v1030, %v1029
        %v1040 = vpack.c.b16 %v1032, %v1031
        %1049 = vmatprep.subr.bf16.mxu0 0
        %1050 = vmatpush1.bf16.msra.mxu0 %v1040
        %1051 = vmatprep.subr.bf16.mxu0 0
        %1052 = vmatpush1.bf16.msra.mxu0 %v1039
        %1053 = vmatprep.subr.bf16.mxu0 0
        %1054 = vmatpush1.bf16.msra.mxu0 %v1038
        %1055 = vmatprep.subr.bf16.mxu0 0
        %1056 = vmatpush1.bf16.msra.mxu0 %v1037
        %1057 = vmatprep.subr.bf16.mxu0 0
        %1058 = vmatpush1.bf16.msra.mxu0 %v1036
        %1059 = vmatprep.subr.bf16.mxu0 0
        %1060 = vmatpush1.bf16.msra.mxu0 %v1035
        %1061 = vmatprep.subr.bf16.mxu0 0
        %1062 = vmatpush1.bf16.msra.mxu0 %v1034
        %1063 = vmatprep.subr.bf16.mxu0 0
        %1064 = vmatpush1.bf16.msra.mxu0 %v1033
        %1065 = vmatprep.subr.bf16.mxu0 0
        %1066 = vmatpush2.bf16.msra.mxu0 0
        %1067 = vmatprep.subr.bf16.mxu0 0
        %1068 = vmatpush2.bf16.msra.mxu0 0
        %1069 = vmatprep.subr.bf16.mxu0 0
        %1070 = vmatpush2.bf16.msra.mxu0 0
        %1071 = vmatprep.subr.bf16.mxu0 0
        %1072 = vmatpush2.bf16.msra.mxu0 0
        %1073 = vmatprep.subr.bf16.mxu0 0
        %1074 = vmatpush2.bf16.msra.mxu0 0
        %1075 = vmatprep.subr.bf16.mxu0 0
        %1076 = vmatpush2.bf16.msra.mxu0 0
        %1077 = vmatprep.subr.bf16.mxu0 0
        %1078 = vmatpush2.bf16.msra.mxu0 0
        %1079 = vmatprep.subr.bf16.mxu0 0
        %1080 = vmatpush2.bf16.msra.mxu0 0
        %1081 = vmatprep.mubr.bf16.mxu0 0
        %1082 = vmatmul.mubr.bf16.gmra.mxu0 %v342
        %v1083 = vpop.f32.mrf.mxu0
        %v1084 = vadd.f32 0.0, %v1083
        %v1085 = vpop.f32.mrf.mxu0
        %v1086 = vpop.f32.mrf.mxu0
        %v1087 = vadd.f32 0.0, %v1086
        %v1088 = vpop.f32.mrf.mxu0
        %1089 = vdwg.mxu0
        %v1090 = vpack.c.bf16 %v1087, %v1084
        %s1091 = scalar_lea.vmem [#allocation4], 448
        %v1092 = vld [vmem:[%s1091] sm:$0xf]
        %v1093 = vld [vmem:[%s1091 + $0x4] sm:$0xf]
        %v1094 = vld [vmem:[%s1091 + $0x8] sm:$0xf]
        %v1095 = vld [vmem:[%s1091 + $0xc] sm:$0xf]
        %v1096 = vld [vmem:[%s1091 + $0x10] sm:$0xf]
        %v1097 = vld [vmem:[%s1091 + $0x14] sm:$0xf]
        %v1098 = vld [vmem:[%s1091 + $0x18] sm:$0xf]
        %v1099 = vld [vmem:[%s1091 + $0x1c] sm:$0xf]
        %v1100 = vld [vmem:[%s1091 + $0x20] sm:$0xf]
        %v1101 = vld [vmem:[%s1091 + $0x24] sm:$0xf]
        %v1102 = vld [vmem:[%s1091 + $0x28] sm:$0xf]
        %v1103 = vld [vmem:[%s1091 + $0x2c] sm:$0xf]
        %v1104 = vld [vmem:[%s1091 + $0x30] sm:$0xf]
        %v1105 = vld [vmem:[%s1091 + $0x34] sm:$0xf]
        %v1106 = vld [vmem:[%s1091 + $0x38] sm:$0xf]
        %v1107 = vld [vmem:[%s1091 + $0x3c] sm:$0xf]
        %v1124 = vunpack.c.l.b16 %v1092
        %v1125 = vunpack.c.l.b16 %v1093
        %v1126 = vunpack.c.l.b16 %v1094
        %v1127 = vunpack.c.l.b16 %v1095
        %v1128 = vunpack.c.l.b16 %v1096
        %v1129 = vunpack.c.l.b16 %v1097
        %v1130 = vunpack.c.l.b16 %v1098
        %v1131 = vunpack.c.l.b16 %v1099
        %v1132 = vunpack.c.l.b16 %v1100
        %v1133 = vunpack.c.l.b16 %v1101
        %v1134 = vunpack.c.l.b16 %v1102
        %v1135 = vunpack.c.l.b16 %v1103
        %v1136 = vunpack.c.l.b16 %v1104
        %v1137 = vunpack.c.l.b16 %v1105
        %v1138 = vunpack.c.l.b16 %v1106
        %v1139 = vunpack.c.l.b16 %v1107
        %v1140 = vpack.c.b16 %v1125, %v1124
        %v1141 = vpack.c.b16 %v1127, %v1126
        %v1142 = vpack.c.b16 %v1129, %v1128
        %v1143 = vpack.c.b16 %v1131, %v1130
        %v1144 = vpack.c.b16 %v1133, %v1132
        %v1145 = vpack.c.b16 %v1135, %v1134
        %v1146 = vpack.c.b16 %v1137, %v1136
        %v1147 = vpack.c.b16 %v1139, %v1138
        %1156 = vmatprep.subr.bf16.mxu0 0
        %1157 = vmatpush1.bf16.msra.mxu0 %v1147
        %1158 = vmatprep.subr.bf16.mxu0 0
        %1159 = vmatpush1.bf16.msra.mxu0 %v1146
        %1160 = vmatprep.subr.bf16.mxu0 0
        %1161 = vmatpush1.bf16.msra.mxu0 %v1145
        %1162 = vmatprep.subr.bf16.mxu0 0
        %1163 = vmatpush1.bf16.msra.mxu0 %v1144
        %1164 = vmatprep.subr.bf16.mxu0 0
        %1165 = vmatpush1.bf16.msra.mxu0 %v1143
        %1166 = vmatprep.subr.bf16.mxu0 0
        %1167 = vmatpush1.bf16.msra.mxu0 %v1142
        %1168 = vmatprep.subr.bf16.mxu0 0
        %1169 = vmatpush1.bf16.msra.mxu0 %v1141
        %1170 = vmatprep.subr.bf16.mxu0 0
        %1171 = vmatpush1.bf16.msra.mxu0 %v1140
        %1172 = vmatprep.subr.bf16.mxu0 0
        %1173 = vmatpush2.bf16.msra.mxu0 0
        %1174 = vmatprep.subr.bf16.mxu0 0
        %1175 = vmatpush2.bf16.msra.mxu0 0
        %1176 = vmatprep.subr.bf16.mxu0 0
        %1177 = vmatpush2.bf16.msra.mxu0 0
        %1178 = vmatprep.subr.bf16.mxu0 0
        %1179 = vmatpush2.bf16.msra.mxu0 0
        %1180 = vmatprep.subr.bf16.mxu0 0
        %1181 = vmatpush2.bf16.msra.mxu0 0
        %1182 = vmatprep.subr.bf16.mxu0 0
        %1183 = vmatpush2.bf16.msra.mxu0 0
        %1184 = vmatprep.subr.bf16.mxu0 0
        %1185 = vmatpush2.bf16.msra.mxu0 0
        %1186 = vmatprep.subr.bf16.mxu0 0
        %1187 = vmatpush2.bf16.msra.mxu0 0
        %1188 = vmatprep.mubr.bf16.mxu0 0
        %1189 = vmatmul.mubr.bf16.gmra.mxu0 %v342
        %v1190 = vpop.f32.mrf.mxu0
        %v1191 = vadd.f32 0.0, %v1190
        %v1192 = vpop.f32.mrf.mxu0
        %v1193 = vpop.f32.mrf.mxu0
        %v1194 = vadd.f32 0.0, %v1193
        %v1195 = vpop.f32.mrf.mxu0
        %1196 = vdwg.mxu0
        %v1197 = vpack.c.bf16 %v1194, %v1191
        %s1198 = scalar_lea.vmem [#allocation4], 512
        %v1199 = vld [vmem:[%s1198] sm:$0xf]
        %v1200 = vld [vmem:[%s1198 + $0x4] sm:$0xf]
        %v1201 = vld [vmem:[%s1198 + $0x8] sm:$0xf]
        %v1202 = vld [vmem:[%s1198 + $0xc] sm:$0xf]
        %v1203 = vld [vmem:[%s1198 + $0x10] sm:$0xf]
        %v1204 = vld [vmem:[%s1198 + $0x14] sm:$0xf]
        %v1205 = vld [vmem:[%s1198 + $0x18] sm:$0xf]
        %v1206 = vld [vmem:[%s1198 + $0x1c] sm:$0xf]
        %v1207 = vld [vmem:[%s1198 + $0x20] sm:$0xf]
        %v1208 = vld [vmem:[%s1198 + $0x24] sm:$0xf]
        %v1209 = vld [vmem:[%s1198 + $0x28] sm:$0xf]
        %v1210 = vld [vmem:[%s1198 + $0x2c] sm:$0xf]
        %v1211 = vld [vmem:[%s1198 + $0x30] sm:$0xf]
        %v1212 = vld [vmem:[%s1198 + $0x34] sm:$0xf]
        %v1213 = vld [vmem:[%s1198 + $0x38] sm:$0xf]
        %v1214 = vld [vmem:[%s1198 + $0x3c] sm:$0xf]
        %v1231 = vunpack.c.l.b16 %v1199
        %v1232 = vunpack.c.l.b16 %v1200
        %v1233 = vunpack.c.l.b16 %v1201
        %v1234 = vunpack.c.l.b16 %v1202
        %v1235 = vunpack.c.l.b16 %v1203
        %v1236 = vunpack.c.l.b16 %v1204
        %v1237 = vunpack.c.l.b16 %v1205
        %v1238 = vunpack.c.l.b16 %v1206
        %v1239 = vunpack.c.l.b16 %v1207
        %v1240 = vunpack.c.l.b16 %v1208
        %v1241 = vunpack.c.l.b16 %v1209
        %v1242 = vunpack.c.l.b16 %v1210
        %v1243 = vunpack.c.l.b16 %v1211
        %v1244 = vunpack.c.l.b16 %v1212
        %v1245 = vunpack.c.l.b16 %v1213
        %v1246 = vunpack.c.l.b16 %v1214
        %v1247 = vpack.c.b16 %v1232, %v1231
        %v1248 = vpack.c.b16 %v1234, %v1233
        %v1249 = vpack.c.b16 %v1236, %v1235
        %v1250 = vpack.c.b16 %v1238, %v1237
        %v1251 = vpack.c.b16 %v1240, %v1239
        %v1252 = vpack.c.b16 %v1242, %v1241
        %v1253 = vpack.c.b16 %v1244, %v1243
        %v1254 = vpack.c.b16 %v1246, %v1245
        %1263 = vmatprep.subr.bf16.mxu0 0
        %1264 = vmatpush1.bf16.msra.mxu0 %v1254
        %1265 = vmatprep.subr.bf16.mxu0 0
        %1266 = vmatpush1.bf16.msra.mxu0 %v1253
        %1267 = vmatprep.subr.bf16.mxu0 0
        %1268 = vmatpush1.bf16.msra.mxu0 %v1252
        %1269 = vmatprep.subr.bf16.mxu0 0
        %1270 = vmatpush1.bf16.msra.mxu0 %v1251
        %1271 = vmatprep.subr.bf16.mxu0 0
        %1272 = vmatpush1.bf16.msra.mxu0 %v1250
        %1273 = vmatprep.subr.bf16.mxu0 0
        %1274 = vmatpush1.bf16.msra.mxu0 %v1249
        %1275 = vmatprep.subr.bf16.mxu0 0
        %1276 = vmatpush1.bf16.msra.mxu0 %v1248
        %1277 = vmatprep.subr.bf16.mxu0 0
        %1278 = vmatpush1.bf16.msra.mxu0 %v1247
        %1279 = vmatprep.subr.bf16.mxu0 0
        %1280 = vmatpush2.bf16.msra.mxu0 0
        %1281 = vmatprep.subr.bf16.mxu0 0
        %1282 = vmatpush2.bf16.msra.mxu0 0
        %1283 = vmatprep.subr.bf16.mxu0 0
        %1284 = vmatpush2.bf16.msra.mxu0 0
        %1285 = vmatprep.subr.bf16.mxu0 0
        %1286 = vmatpush2.bf16.msra.mxu0 0
        %1287 = vmatprep.subr.bf16.mxu0 0
        %1288 = vmatpush2.bf16.msra.mxu0 0
        %1289 = vmatprep.subr.bf16.mxu0 0
        %1290 = vmatpush2.bf16.msra.mxu0 0
        %1291 = vmatprep.subr.bf16.mxu0 0
        %1292 = vmatpush2.bf16.msra.mxu0 0
        %1293 = vmatprep.subr.bf16.mxu0 0
        %1294 = vmatpush2.bf16.msra.mxu0 0
        %1295 = vmatprep.mubr.bf16.mxu0 0
        %1296 = vmatmul.mubr.bf16.gmra.mxu0 %v342
        %v1297 = vpop.f32.mrf.mxu0
        %v1298 = vadd.f32 0.0, %v1297
        %v1299 = vpop.f32.mrf.mxu0
        %v1300 = vpop.f32.mrf.mxu0
        %v1301 = vadd.f32 0.0, %v1300
        %v1302 = vpop.f32.mrf.mxu0
        %1303 = vdwg.mxu0
        %v1304 = vpack.c.bf16 %v1301, %v1298
        %s1305 = scalar_lea.vmem [#allocation4], 576
        %v1306 = vld [vmem:[%s1305] sm:$0xf]
        %v1307 = vld [vmem:[%s1305 + $0x4] sm:$0xf]
        %v1308 = vld [vmem:[%s1305 + $0x8] sm:$0xf]
        %v1309 = vld [vmem:[%s1305 + $0xc] sm:$0xf]
        %v1310 = vld [vmem:[%s1305 + $0x10] sm:$0xf]
        %v1311 = vld [vmem:[%s1305 + $0x14] sm:$0xf]
        %v1312 = vld [vmem:[%s1305 + $0x18] sm:$0xf]
        %v1313 = vld [vmem:[%s1305 + $0x1c] sm:$0xf]
        %v1314 = vld [vmem:[%s1305 + $0x20] sm:$0xf]
        %v1315 = vld [vmem:[%s1305 + $0x24] sm:$0xf]
        %v1316 = vld [vmem:[%s1305 + $0x28] sm:$0xf]
        %v1317 = vld [vmem:[%s1305 + $0x2c] sm:$0xf]
        %v1318 = vld [vmem:[%s1305 + $0x30] sm:$0xf]
        %v1319 = vld [vmem:[%s1305 + $0x34] sm:$0xf]
        %v1320 = vld [vmem:[%s1305 + $0x38] sm:$0xf]
        %v1321 = vld [vmem:[%s1305 + $0x3c] sm:$0xf]
        %v1338 = vunpack.c.l.b16 %v1306
        %v1339 = vunpack.c.l.b16 %v1307
        %v1340 = vunpack.c.l.b16 %v1308
        %v1341 = vunpack.c.l.b16 %v1309
        %v1342 = vunpack.c.l.b16 %v1310
        %v1343 = vunpack.c.l.b16 %v1311
        %v1344 = vunpack.c.l.b16 %v1312
        %v1345 = vunpack.c.l.b16 %v1313
        %v1346 = vunpack.c.l.b16 %v1314
        %v1347 = vunpack.c.l.b16 %v1315
        %v1348 = vunpack.c.l.b16 %v1316
        %v1349 = vunpack.c.l.b16 %v1317
        %v1350 = vunpack.c.l.b16 %v1318
        %v1351 = vunpack.c.l.b16 %v1319
        %v1352 = vunpack.c.l.b16 %v1320
        %v1353 = vunpack.c.l.b16 %v1321
        %v1354 = vpack.c.b16 %v1339, %v1338
        %v1355 = vpack.c.b16 %v1341, %v1340
        %v1356 = vpack.c.b16 %v1343, %v1342
        %v1357 = vpack.c.b16 %v1345, %v1344
        %v1358 = vpack.c.b16 %v1347, %v1346
        %v1359 = vpack.c.b16 %v1349, %v1348
        %v1360 = vpack.c.b16 %v1351, %v1350
        %v1361 = vpack.c.b16 %v1353, %v1352
        %1370 = vmatprep.subr.bf16.mxu0 0
        %1371 = vmatpush1.bf16.msra.mxu0 %v1361
        %1372 = vmatprep.subr.bf16.mxu0 0
        %1373 = vmatpush1.bf16.msra.mxu0 %v1360
        %1374 = vmatprep.subr.bf16.mxu0 0
        %1375 = vmatpush1.bf16.msra.mxu0 %v1359
        %1376 = vmatprep.subr.bf16.mxu0 0
        %1377 = vmatpush1.bf16.msra.mxu0 %v1358
        %1378 = vmatprep.subr.bf16.mxu0 0
        %1379 = vmatpush1.bf16.msra.mxu0 %v1357
        %1380 = vmatprep.subr.bf16.mxu0 0
        %1381 = vmatpush1.bf16.msra.mxu0 %v1356
        %1382 = vmatprep.subr.bf16.mxu0 0
        %1383 = vmatpush1.bf16.msra.mxu0 %v1355
        %1384 = vmatprep.subr.bf16.mxu0 0
        %1385 = vmatpush1.bf16.msra.mxu0 %v1354
        %1386 = vmatprep.subr.bf16.mxu0 0
        %1387 = vmatpush2.bf16.msra.mxu0 0
        %1388 = vmatprep.subr.bf16.mxu0 0
        %1389 = vmatpush2.bf16.msra.mxu0 0
        %1390 = vmatprep.subr.bf16.mxu0 0
        %1391 = vmatpush2.bf16.msra.mxu0 0
        %1392 = vmatprep.subr.bf16.mxu0 0
        %1393 = vmatpush2.bf16.msra.mxu0 0
        %1394 = vmatprep.subr.bf16.mxu0 0
        %1395 = vmatpush2.bf16.msra.mxu0 0
        %1396 = vmatprep.subr.bf16.mxu0 0
        %1397 = vmatpush2.bf16.msra.mxu0 0
        %1398 = vmatprep.subr.bf16.mxu0 0
        %1399 = vmatpush2.bf16.msra.mxu0 0
        %1400 = vmatprep.subr.bf16.mxu0 0
        %1401 = vmatpush2.bf16.msra.mxu0 0
        %1402 = vmatprep.mubr.bf16.mxu0 0
        %1403 = vmatmul.mubr.bf16.gmra.mxu0 %v342
        %v1404 = vpop.f32.mrf.mxu0
        %v1405 = vadd.f32 0.0, %v1404
        %v1406 = vpop.f32.mrf.mxu0
        %v1407 = vpop.f32.mrf.mxu0
        %v1408 = vadd.f32 0.0, %v1407
        %v1409 = vpop.f32.mrf.mxu0
        %1410 = vdwg.mxu0
        %v1411 = vpack.c.bf16 %v1408, %v1405
        %s1412 = scalar_lea.vmem [#allocation4], 640
        %v1413 = vld [vmem:[%s1412] sm:$0xf]
        %v1414 = vld [vmem:[%s1412 + $0x4] sm:$0xf]
        %v1415 = vld [vmem:[%s1412 + $0x8] sm:$0xf]
        %v1416 = vld [vmem:[%s1412 + $0xc] sm:$0xf]
        %v1417 = vld [vmem:[%s1412 + $0x10] sm:$0xf]
        %v1418 = vld [vmem:[%s1412 + $0x14] sm:$0xf]
        %v1419 = vld [vmem:[%s1412 + $0x18] sm:$0xf]
        %v1420 = vld [vmem:[%s1412 + $0x1c] sm:$0xf]
        %v1421 = vld [vmem:[%s1412 + $0x20] sm:$0xf]
        %v1422 = vld [vmem:[%s1412 + $0x24] sm:$0xf]
        %v1423 = vld [vmem:[%s1412 + $0x28] sm:$0xf]
        %v1424 = vld [vmem:[%s1412 + $0x2c] sm:$0xf]
        %v1425 = vld [vmem:[%s1412 + $0x30] sm:$0xf]
        %v1426 = vld [vmem:[%s1412 + $0x34] sm:$0xf]
        %v1427 = vld [vmem:[%s1412 + $0x38] sm:$0xf]
        %v1428 = vld [vmem:[%s1412 + $0x3c] sm:$0xf]
        %v1445 = vunpack.c.l.b16 %v1413
        %v1446 = vunpack.c.l.b16 %v1414
        %v1447 = vunpack.c.l.b16 %v1415
        %v1448 = vunpack.c.l.b16 %v1416
        %v1449 = vunpack.c.l.b16 %v1417
        %v1450 = vunpack.c.l.b16 %v1418
        %v1451 = vunpack.c.l.b16 %v1419
        %v1452 = vunpack.c.l.b16 %v1420
        %v1453 = vunpack.c.l.b16 %v1421
        %v1454 = vunpack.c.l.b16 %v1422
        %v1455 = vunpack.c.l.b16 %v1423
        %v1456 = vunpack.c.l.b16 %v1424
        %v1457 = vunpack.c.l.b16 %v1425
        %v1458 = vunpack.c.l.b16 %v1426
        %v1459 = vunpack.c.l.b16 %v1427
        %v1460 = vunpack.c.l.b16 %v1428
        %v1461 = vpack.c.b16 %v1446, %v1445
        %v1462 = vpack.c.b16 %v1448, %v1447
        %v1463 = vpack.c.b16 %v1450, %v1449
        %v1464 = vpack.c.b16 %v1452, %v1451
        %v1465 = vpack.c.b16 %v1454, %v1453
        %v1466 = vpack.c.b16 %v1456, %v1455
        %v1467 = vpack.c.b16 %v1458, %v1457
        %v1468 = vpack.c.b16 %v1460, %v1459
        %1477 = vmatprep.subr.bf16.mxu0 0
        %1478 = vmatpush1.bf16.msra.mxu0 %v1468
        %1479 = vmatprep.subr.bf16.mxu0 0
        %1480 = vmatpush1.bf16.msra.mxu0 %v1467
        %1481 = vmatprep.subr.bf16.mxu0 0
        %1482 = vmatpush1.bf16.msra.mxu0 %v1466
        %1483 = vmatprep.subr.bf16.mxu0 0
        %1484 = vmatpush1.bf16.msra.mxu0 %v1465
        %1485 = vmatprep.subr.bf16.mxu0 0
        %1486 = vmatpush1.bf16.msra.mxu0 %v1464
        %1487 = vmatprep.subr.bf16.mxu0 0
        %1488 = vmatpush1.bf16.msra.mxu0 %v1463
        %1489 = vmatprep.subr.bf16.mxu0 0
        %1490 = vmatpush1.bf16.msra.mxu0 %v1462
        %1491 = vmatprep.subr.bf16.mxu0 0
        %1492 = vmatpush1.bf16.msra.mxu0 %v1461
        %1493 = vmatprep.subr.bf16.mxu0 0
        %1494 = vmatpush2.bf16.msra.mxu0 0
        %1495 = vmatprep.subr.bf16.mxu0 0
        %1496 = vmatpush2.bf16.msra.mxu0 0
        %1497 = vmatprep.subr.bf16.mxu0 0
        %1498 = vmatpush2.bf16.msra.mxu0 0
        %1499 = vmatprep.subr.bf16.mxu0 0
        %1500 = vmatpush2.bf16.msra.mxu0 0
        %1501 = vmatprep.subr.bf16.mxu0 0
        %1502 = vmatpush2.bf16.msra.mxu0 0
        %1503 = vmatprep.subr.bf16.mxu0 0
        %1504 = vmatpush2.bf16.msra.mxu0 0
        %1505 = vmatprep.subr.bf16.mxu0 0
        %1506 = vmatpush2.bf16.msra.mxu0 0
        %1507 = vmatprep.subr.bf16.mxu0 0
        %1508 = vmatpush2.bf16.msra.mxu0 0
        %1509 = vmatprep.mubr.bf16.mxu0 0
        %1510 = vmatmul.mubr.bf16.gmra.mxu0 %v342
        %v1511 = vpop.f32.mrf.mxu0
        %v1512 = vadd.f32 0.0, %v1511
        %v1513 = vpop.f32.mrf.mxu0
        %v1514 = vpop.f32.mrf.mxu0
        %v1515 = vadd.f32 0.0, %v1514
        %v1516 = vpop.f32.mrf.mxu0
        %1517 = vdwg.mxu0
        %v1518 = vpack.c.bf16 %v1515, %v1512
        %s1519 = scalar_lea.vmem [#allocation4], 704
        %v1520 = vld [vmem:[%s1519] sm:$0xf]
        %v1521 = vld [vmem:[%s1519 + $0x4] sm:$0xf]
        %v1522 = vld [vmem:[%s1519 + $0x8] sm:$0xf]
        %v1523 = vld [vmem:[%s1519 + $0xc] sm:$0xf]
        %v1524 = vld [vmem:[%s1519 + $0x10] sm:$0xf]
        %v1525 = vld [vmem:[%s1519 + $0x14] sm:$0xf]
        %v1526 = vld [vmem:[%s1519 + $0x18] sm:$0xf]
        %v1527 = vld [vmem:[%s1519 + $0x1c] sm:$0xf]
        %v1528 = vld [vmem:[%s1519 + $0x20] sm:$0xf]
        %v1529 = vld [vmem:[%s1519 + $0x24] sm:$0xf]
        %v1530 = vld [vmem:[%s1519 + $0x28] sm:$0xf]
        %v1531 = vld [vmem:[%s1519 + $0x2c] sm:$0xf]
        %v1532 = vld [vmem:[%s1519 + $0x30] sm:$0xf]
        %v1533 = vld [vmem:[%s1519 + $0x34] sm:$0xf]
        %v1534 = vld [vmem:[%s1519 + $0x38] sm:$0xf]
        %v1535 = vld [vmem:[%s1519 + $0x3c] sm:$0xf]
        %v1552 = vunpack.c.l.b16 %v1520
        %v1553 = vunpack.c.l.b16 %v1521
        %v1554 = vunpack.c.l.b16 %v1522
        %v1555 = vunpack.c.l.b16 %v1523
        %v1556 = vunpack.c.l.b16 %v1524
        %v1557 = vunpack.c.l.b16 %v1525
        %v1558 = vunpack.c.l.b16 %v1526
        %v1559 = vunpack.c.l.b16 %v1527
        %v1560 = vunpack.c.l.b16 %v1528
        %v1561 = vunpack.c.l.b16 %v1529
        %v1562 = vunpack.c.l.b16 %v1530
        %v1563 = vunpack.c.l.b16 %v1531
        %v1564 = vunpack.c.l.b16 %v1532
        %v1565 = vunpack.c.l.b16 %v1533
        %v1566 = vunpack.c.l.b16 %v1534
        %v1567 = vunpack.c.l.b16 %v1535
        %v1568 = vpack.c.b16 %v1553, %v1552
        %v1569 = vpack.c.b16 %v1555, %v1554
        %v1570 = vpack.c.b16 %v1557, %v1556
        %v1571 = vpack.c.b16 %v1559, %v1558
        %v1572 = vpack.c.b16 %v1561, %v1560
        %v1573 = vpack.c.b16 %v1563, %v1562
        %v1574 = vpack.c.b16 %v1565, %v1564
        %v1575 = vpack.c.b16 %v1567, %v1566
        %1584 = vmatprep.subr.bf16.mxu0 0
        %1585 = vmatpush1.bf16.msra.mxu0 %v1575
        %1586 = vmatprep.subr.bf16.mxu0 0
        %1587 = vmatpush1.bf16.msra.mxu0 %v1574
        %1588 = vmatprep.subr.bf16.mxu0 0
        %1589 = vmatpush1.bf16.msra.mxu0 %v1573
        %1590 = vmatprep.subr.bf16.mxu0 0
        %1591 = vmatpush1.bf16.msra.mxu0 %v1572
        %1592 = vmatprep.subr.bf16.mxu0 0
        %1593 = vmatpush1.bf16.msra.mxu0 %v1571
        %1594 = vmatprep.subr.bf16.mxu0 0
        %1595 = vmatpush1.bf16.msra.mxu0 %v1570
        %1596 = vmatprep.subr.bf16.mxu0 0
        %1597 = vmatpush1.bf16.msra.mxu0 %v1569
        %1598 = vmatprep.subr.bf16.mxu0 0
        %1599 = vmatpush1.bf16.msra.mxu0 %v1568
        %1600 = vmatprep.subr.bf16.mxu0 0
        %1601 = vmatpush2.bf16.msra.mxu0 0
        %1602 = vmatprep.subr.bf16.mxu0 0
        %1603 = vmatpush2.bf16.msra.mxu0 0
        %1604 = vmatprep.subr.bf16.mxu0 0
        %1605 = vmatpush2.bf16.msra.mxu0 0
        %1606 = vmatprep.subr.bf16.mxu0 0
        %1607 = vmatpush2.bf16.msra.mxu0 0
        %1608 = vmatprep.subr.bf16.mxu0 0
        %1609 = vmatpush2.bf16.msra.mxu0 0
        %1610 = vmatprep.subr.bf16.mxu0 0
        %1611 = vmatpush2.bf16.msra.mxu0 0
        %1612 = vmatprep.subr.bf16.mxu0 0
        %1613 = vmatpush2.bf16.msra.mxu0 0
        %1614 = vmatprep.subr.bf16.mxu0 0
        %1615 = vmatpush2.bf16.msra.mxu0 0
        %1616 = vmatprep.mubr.bf16.mxu0 0
        %1617 = vmatmul.mubr.bf16.gmra.mxu0 %v342
        %v1618 = vpop.f32.mrf.mxu0
        %v1619 = vadd.f32 0.0, %v1618
        %v1620 = vpop.f32.mrf.mxu0
        %v1621 = vpop.f32.mrf.mxu0
        %v1622 = vadd.f32 0.0, %v1621
        %v1623 = vpop.f32.mrf.mxu0
        %1624 = vdwg.mxu0
        %v1625 = vpack.c.bf16 %v1622, %v1619
        %s1626 = scalar_lea.vmem [#allocation4], 768
        %v1627 = vld [vmem:[%s1626] sm:$0xf]
        %v1628 = vld [vmem:[%s1626 + $0x4] sm:$0xf]
        %v1629 = vld [vmem:[%s1626 + $0x8] sm:$0xf]
        %v1630 = vld [vmem:[%s1626 + $0xc] sm:$0xf]
        %v1631 = vld [vmem:[%s1626 + $0x10] sm:$0xf]
        %v1632 = vld [vmem:[%s1626 + $0x14] sm:$0xf]
        %v1633 = vld [vmem:[%s1626 + $0x18] sm:$0xf]
        %v1634 = vld [vmem:[%s1626 + $0x1c] sm:$0xf]
        %v1635 = vld [vmem:[%s1626 + $0x20] sm:$0xf]
        %v1636 = vld [vmem:[%s1626 + $0x24] sm:$0xf]
        %v1637 = vld [vmem:[%s1626 + $0x28] sm:$0xf]
        %v1638 = vld [vmem:[%s1626 + $0x2c] sm:$0xf]
        %v1639 = vld [vmem:[%s1626 + $0x30] sm:$0xf]
        %v1640 = vld [vmem:[%s1626 + $0x34] sm:$0xf]
        %v1641 = vld [vmem:[%s1626 + $0x38] sm:$0xf]
        %v1642 = vld [vmem:[%s1626 + $0x3c] sm:$0xf]
        %v1659 = vunpack.c.l.b16 %v1627
        %v1660 = vunpack.c.l.b16 %v1628
        %v1661 = vunpack.c.l.b16 %v1629
        %v1662 = vunpack.c.l.b16 %v1630
        %v1663 = vunpack.c.l.b16 %v1631
        %v1664 = vunpack.c.l.b16 %v1632
        %v1665 = vunpack.c.l.b16 %v1633
        %v1666 = vunpack.c.l.b16 %v1634
        %v1667 = vunpack.c.l.b16 %v1635
        %v1668 = vunpack.c.l.b16 %v1636
        %v1669 = vunpack.c.l.b16 %v1637
        %v1670 = vunpack.c.l.b16 %v1638
        %v1671 = vunpack.c.l.b16 %v1639
        %v1672 = vunpack.c.l.b16 %v1640
        %v1673 = vunpack.c.l.b16 %v1641
        %v1674 = vunpack.c.l.b16 %v1642
        %v1675 = vpack.c.b16 %v1660, %v1659
        %v1676 = vpack.c.b16 %v1662, %v1661
        %v1677 = vpack.c.b16 %v1664, %v1663
        %v1678 = vpack.c.b16 %v1666, %v1665
        %v1679 = vpack.c.b16 %v1668, %v1667
        %v1680 = vpack.c.b16 %v1670, %v1669
        %v1681 = vpack.c.b16 %v1672, %v1671
        %v1682 = vpack.c.b16 %v1674, %v1673
        %1691 = vmatprep.subr.bf16.mxu0 0
        %1692 = vmatpush1.bf16.msra.mxu0 %v1682
        %1693 = vmatprep.subr.bf16.mxu0 0
        %1694 = vmatpush1.bf16.msra.mxu0 %v1681
        %1695 = vmatprep.subr.bf16.mxu0 0
        %1696 = vmatpush1.bf16.msra.mxu0 %v1680
        %1697 = vmatprep.subr.bf16.mxu0 0
        %1698 = vmatpush1.bf16.msra.mxu0 %v1679
        %1699 = vmatprep.subr.bf16.mxu0 0
        %1700 = vmatpush1.bf16.msra.mxu0 %v1678
        %1701 = vmatprep.subr.bf16.mxu0 0
        %1702 = vmatpush1.bf16.msra.mxu0 %v1677
        %1703 = vmatprep.subr.bf16.mxu0 0
        %1704 = vmatpush1.bf16.msra.mxu0 %v1676
        %1705 = vmatprep.subr.bf16.mxu0 0
        %1706 = vmatpush1.bf16.msra.mxu0 %v1675
        %1707 = vmatprep.subr.bf16.mxu0 0
        %1708 = vmatpush2.bf16.msra.mxu0 0
        %1709 = vmatprep.subr.bf16.mxu0 0
        %1710 = vmatpush2.bf16.msra.mxu0 0
        %1711 = vmatprep.subr.bf16.mxu0 0
        %1712 = vmatpush2.bf16.msra.mxu0 0
        %1713 = vmatprep.subr.bf16.mxu0 0
        %1714 = vmatpush2.bf16.msra.mxu0 0
        %1715 = vmatprep.subr.bf16.mxu0 0
        %1716 = vmatpush2.bf16.msra.mxu0 0
        %1717 = vmatprep.subr.bf16.mxu0 0
        %1718 = vmatpush2.bf16.msra.mxu0 0
        %1719 = vmatprep.subr.bf16.mxu0 0
        %1720 = vmatpush2.bf16.msra.mxu0 0
        %1721 = vmatprep.subr.bf16.mxu0 0
        %1722 = vmatpush2.bf16.msra.mxu0 0
        %1723 = vmatprep.mubr.bf16.mxu0 0
        %1724 = vmatmul.mubr.bf16.gmra.mxu0 %v342
        %v1725 = vpop.f32.mrf.mxu0
        %v1726 = vadd.f32 0.0, %v1725
        %v1727 = vpop.f32.mrf.mxu0
        %v1728 = vpop.f32.mrf.mxu0
        %v1729 = vadd.f32 0.0, %v1728
        %v1730 = vpop.f32.mrf.mxu0
        %1731 = vdwg.mxu0
        %v1732 = vpack.c.bf16 %v1729, %v1726
        %s1733 = scalar_lea.vmem [#allocation4], 832
        %v1734 = vld [vmem:[%s1733] sm:$0xf]
        %v1735 = vld [vmem:[%s1733 + $0x4] sm:$0xf]
        %v1736 = vld [vmem:[%s1733 + $0x8] sm:$0xf]
        %v1737 = vld [vmem:[%s1733 + $0xc] sm:$0xf]
        %v1738 = vld [vmem:[%s1733 + $0x10] sm:$0xf]
        %v1739 = vld [vmem:[%s1733 + $0x14] sm:$0xf]
        %v1740 = vld [vmem:[%s1733 + $0x18] sm:$0xf]
        %v1741 = vld [vmem:[%s1733 + $0x1c] sm:$0xf]
        %v1742 = vld [vmem:[%s1733 + $0x20] sm:$0xf]
        %v1743 = vld [vmem:[%s1733 + $0x24] sm:$0xf]
        %v1744 = vld [vmem:[%s1733 + $0x28] sm:$0xf]
        %v1745 = vld [vmem:[%s1733 + $0x2c] sm:$0xf]
        %v1746 = vld [vmem:[%s1733 + $0x30] sm:$0xf]
        %v1747 = vld [vmem:[%s1733 + $0x34] sm:$0xf]
        %v1748 = vld [vmem:[%s1733 + $0x38] sm:$0xf]
        %v1749 = vld [vmem:[%s1733 + $0x3c] sm:$0xf]
        %v1766 = vunpack.c.l.b16 %v1734
        %v1767 = vunpack.c.l.b16 %v1735
        %v1768 = vunpack.c.l.b16 %v1736
        %v1769 = vunpack.c.l.b16 %v1737
        %v1770 = vunpack.c.l.b16 %v1738
        %v1771 = vunpack.c.l.b16 %v1739
        %v1772 = vunpack.c.l.b16 %v1740
        %v1773 = vunpack.c.l.b16 %v1741
        %v1774 = vunpack.c.l.b16 %v1742
        %v1775 = vunpack.c.l.b16 %v1743
        %v1776 = vunpack.c.l.b16 %v1744
        %v1777 = vunpack.c.l.b16 %v1745
        %v1778 = vunpack.c.l.b16 %v1746
        %v1779 = vunpack.c.l.b16 %v1747
        %v1780 = vunpack.c.l.b16 %v1748
        %v1781 = vunpack.c.l.b16 %v1749
        %v1782 = vpack.c.b16 %v1767, %v1766
        %v1783 = vpack.c.b16 %v1769, %v1768
        %v1784 = vpack.c.b16 %v1771, %v1770
        %v1785 = vpack.c.b16 %v1773, %v1772
        %v1786 = vpack.c.b16 %v1775, %v1774
        %v1787 = vpack.c.b16 %v1777, %v1776
        %v1788 = vpack.c.b16 %v1779, %v1778
        %v1789 = vpack.c.b16 %v1781, %v1780
        %1798 = vmatprep.subr.bf16.mxu0 0
        %1799 = vmatpush1.bf16.msra.mxu0 %v1789
        %1800 = vmatprep.subr.bf16.mxu0 0
        %1801 = vmatpush1.bf16.msra.mxu0 %v1788
        %1802 = vmatprep.subr.bf16.mxu0 0
        %1803 = vmatpush1.bf16.msra.mxu0 %v1787
        %1804 = vmatprep.subr.bf16.mxu0 0
        %1805 = vmatpush1.bf16.msra.mxu0 %v1786
        %1806 = vmatprep.subr.bf16.mxu0 0
        %1807 = vmatpush1.bf16.msra.mxu0 %v1785
        %1808 = vmatprep.subr.bf16.mxu0 0
        %1809 = vmatpush1.bf16.msra.mxu0 %v1784
        %1810 = vmatprep.subr.bf16.mxu0 0
        %1811 = vmatpush1.bf16.msra.mxu0 %v1783
        %1812 = vmatprep.subr.bf16.mxu0 0
        %1813 = vmatpush1.bf16.msra.mxu0 %v1782
        %1814 = vmatprep.subr.bf16.mxu0 0
        %1815 = vmatpush2.bf16.msra.mxu0 0
        %1816 = vmatprep.subr.bf16.mxu0 0
        %1817 = vmatpush2.bf16.msra.mxu0 0
        %1818 = vmatprep.subr.bf16.mxu0 0
        %1819 = vmatpush2.bf16.msra.mxu0 0
        %1820 = vmatprep.subr.bf16.mxu0 0
        %1821 = vmatpush2.bf16.msra.mxu0 0
        %1822 = vmatprep.subr.bf16.mxu0 0
        %1823 = vmatpush2.bf16.msra.mxu0 0
        %1824 = vmatprep.subr.bf16.mxu0 0
        %1825 = vmatpush2.bf16.msra.mxu0 0
        %1826 = vmatprep.subr.bf16.mxu0 0
        %1827 = vmatpush2.bf16.msra.mxu0 0
        %1828 = vmatprep.subr.bf16.mxu0 0
        %1829 = vmatpush2.bf16.msra.mxu0 0
        %1830 = vmatprep.mubr.bf16.mxu0 0
        %1831 = vmatmul.mubr.bf16.gmra.mxu0 %v342
        %v1832 = vpop.f32.mrf.mxu0
        %v1833 = vadd.f32 0.0, %v1832
        %v1834 = vpop.f32.mrf.mxu0
        %v1835 = vpop.f32.mrf.mxu0
        %v1836 = vadd.f32 0.0, %v1835
        %v1837 = vpop.f32.mrf.mxu0
        %1838 = vdwg.mxu0
        %v1839 = vpack.c.bf16 %v1836, %v1833
        %s1840 = scalar_lea.vmem [#allocation4], 896
        %v1841 = vld [vmem:[%s1840] sm:$0xf]
        %v1842 = vld [vmem:[%s1840 + $0x4] sm:$0xf]
        %v1843 = vld [vmem:[%s1840 + $0x8] sm:$0xf]
        %v1844 = vld [vmem:[%s1840 + $0xc] sm:$0xf]
        %v1845 = vld [vmem:[%s1840 + $0x10] sm:$0xf]
        %v1846 = vld [vmem:[%s1840 + $0x14] sm:$0xf]
        %v1847 = vld [vmem:[%s1840 + $0x18] sm:$0xf]
        %v1848 = vld [vmem:[%s1840 + $0x1c] sm:$0xf]
        %v1849 = vld [vmem:[%s1840 + $0x20] sm:$0xf]
        %v1850 = vld [vmem:[%s1840 + $0x24] sm:$0xf]
        %v1851 = vld [vmem:[%s1840 + $0x28] sm:$0xf]
        %v1852 = vld [vmem:[%s1840 + $0x2c] sm:$0xf]
        %v1853 = vld [vmem:[%s1840 + $0x30] sm:$0xf]
        %v1854 = vld [vmem:[%s1840 + $0x34] sm:$0xf]
        %v1855 = vld [vmem:[%s1840 + $0x38] sm:$0xf]
        %v1856 = vld [vmem:[%s1840 + $0x3c] sm:$0xf]
        %v1873 = vunpack.c.l.b16 %v1841
        %v1874 = vunpack.c.l.b16 %v1842
        %v1875 = vunpack.c.l.b16 %v1843
        %v1876 = vunpack.c.l.b16 %v1844
        %v1877 = vunpack.c.l.b16 %v1845
        %v1878 = vunpack.c.l.b16 %v1846
        %v1879 = vunpack.c.l.b16 %v1847
        %v1880 = vunpack.c.l.b16 %v1848
        %v1881 = vunpack.c.l.b16 %v1849
        %v1882 = vunpack.c.l.b16 %v1850
        %v1883 = vunpack.c.l.b16 %v1851
        %v1884 = vunpack.c.l.b16 %v1852
        %v1885 = vunpack.c.l.b16 %v1853
        %v1886 = vunpack.c.l.b16 %v1854
        %v1887 = vunpack.c.l.b16 %v1855
        %v1888 = vunpack.c.l.b16 %v1856
        %v1889 = vpack.c.b16 %v1874, %v1873
        %v1890 = vpack.c.b16 %v1876, %v1875
        %v1891 = vpack.c.b16 %v1878, %v1877
        %v1892 = vpack.c.b16 %v1880, %v1879
        %v1893 = vpack.c.b16 %v1882, %v1881
        %v1894 = vpack.c.b16 %v1884, %v1883
        %v1895 = vpack.c.b16 %v1886, %v1885
        %v1896 = vpack.c.b16 %v1888, %v1887
        %1905 = vmatprep.subr.bf16.mxu0 0
        %1906 = vmatpush1.bf16.msra.mxu0 %v1896
        %1907 = vmatprep.subr.bf16.mxu0 0
        %1908 = vmatpush1.bf16.msra.mxu0 %v1895
        %1909 = vmatprep.subr.bf16.mxu0 0
        %1910 = vmatpush1.bf16.msra.mxu0 %v1894
        %1911 = vmatprep.subr.bf16.mxu0 0
        %1912 = vmatpush1.bf16.msra.mxu0 %v1893
        %1913 = vmatprep.subr.bf16.mxu0 0
        %1914 = vmatpush1.bf16.msra.mxu0 %v1892
        %1915 = vmatprep.subr.bf16.mxu0 0
        %1916 = vmatpush1.bf16.msra.mxu0 %v1891
        %1917 = vmatprep.subr.bf16.mxu0 0
        %1918 = vmatpush1.bf16.msra.mxu0 %v1890
        %1919 = vmatprep.subr.bf16.mxu0 0
        %1920 = vmatpush1.bf16.msra.mxu0 %v1889
        %1921 = vmatprep.subr.bf16.mxu0 0
        %1922 = vmatpush2.bf16.msra.mxu0 0
        %1923 = vmatprep.subr.bf16.mxu0 0
        %1924 = vmatpush2.bf16.msra.mxu0 0
        %1925 = vmatprep.subr.bf16.mxu0 0
        %1926 = vmatpush2.bf16.msra.mxu0 0
        %1927 = vmatprep.subr.bf16.mxu0 0
        %1928 = vmatpush2.bf16.msra.mxu0 0
        %1929 = vmatprep.subr.bf16.mxu0 0
        %1930 = vmatpush2.bf16.msra.mxu0 0
        %1931 = vmatprep.subr.bf16.mxu0 0
        %1932 = vmatpush2.bf16.msra.mxu0 0
        %1933 = vmatprep.subr.bf16.mxu0 0
        %1934 = vmatpush2.bf16.msra.mxu0 0
        %1935 = vmatprep.subr.bf16.mxu0 0
        %1936 = vmatpush2.bf16.msra.mxu0 0
        %1937 = vmatprep.mubr.bf16.mxu0 0
        %1938 = vmatmul.mubr.bf16.gmra.mxu0 %v342
        %v1939 = vpop.f32.mrf.mxu0
        %v1940 = vadd.f32 0.0, %v1939
        %v1941 = vpop.f32.mrf.mxu0
        %v1942 = vpop.f32.mrf.mxu0
        %v1943 = vadd.f32 0.0, %v1942
        %v1944 = vpop.f32.mrf.mxu0
        %1945 = vdwg.mxu0
        %v1946 = vpack.c.bf16 %v1943, %v1940
        %s1947 = scalar_lea.vmem [#allocation4], 960
        %v1948 = vld [vmem:[%s1947] sm:$0xf]
        %v1949 = vld [vmem:[%s1947 + $0x4] sm:$0xf]
        %v1950 = vld [vmem:[%s1947 + $0x8] sm:$0xf]
        %v1951 = vld [vmem:[%s1947 + $0xc] sm:$0xf]
        %v1952 = vld [vmem:[%s1947 + $0x10] sm:$0xf]
        %v1953 = vld [vmem:[%s1947 + $0x14] sm:$0xf]
        %v1954 = vld [vmem:[%s1947 + $0x18] sm:$0xf]
        %v1955 = vld [vmem:[%s1947 + $0x1c] sm:$0xf]
        %v1956 = vld [vmem:[%s1947 + $0x20] sm:$0xf]
        %v1957 = vld [vmem:[%s1947 + $0x24] sm:$0xf]
        %v1958 = vld [vmem:[%s1947 + $0x28] sm:$0xf]
        %v1959 = vld [vmem:[%s1947 + $0x2c] sm:$0xf]
        %v1960 = vld [vmem:[%s1947 + $0x30] sm:$0xf]
        %v1961 = vld [vmem:[%s1947 + $0x34] sm:$0xf]
        %v1962 = vld [vmem:[%s1947 + $0x38] sm:$0xf]
        %v1963 = vld [vmem:[%s1947 + $0x3c] sm:$0xf]
        %v1980 = vunpack.c.l.b16 %v1948
        %v1981 = vunpack.c.l.b16 %v1949
        %v1982 = vunpack.c.l.b16 %v1950
        %v1983 = vunpack.c.l.b16 %v1951
        %v1984 = vunpack.c.l.b16 %v1952
        %v1985 = vunpack.c.l.b16 %v1953
        %v1986 = vunpack.c.l.b16 %v1954
        %v1987 = vunpack.c.l.b16 %v1955
        %v1988 = vunpack.c.l.b16 %v1956
        %v1989 = vunpack.c.l.b16 %v1957
        %v1990 = vunpack.c.l.b16 %v1958
        %v1991 = vunpack.c.l.b16 %v1959
        %v1992 = vunpack.c.l.b16 %v1960
        %v1993 = vunpack.c.l.b16 %v1961
        %v1994 = vunpack.c.l.b16 %v1962
        %v1995 = vunpack.c.l.b16 %v1963
        %v1996 = vpack.c.b16 %v1981, %v1980
        %v1997 = vpack.c.b16 %v1983, %v1982
        %v1998 = vpack.c.b16 %v1985, %v1984
        %v1999 = vpack.c.b16 %v1987, %v1986
        %v2000 = vpack.c.b16 %v1989, %v1988
        %v2001 = vpack.c.b16 %v1991, %v1990
        %v2002 = vpack.c.b16 %v1993, %v1992
        %v2003 = vpack.c.b16 %v1995, %v1994
        %2012 = vmatprep.subr.bf16.mxu0 0
        %2013 = vmatpush1.bf16.msra.mxu0 %v2003
        %2014 = vmatprep.subr.bf16.mxu0 0
        %2015 = vmatpush1.bf16.msra.mxu0 %v2002
        %2016 = vmatprep.subr.bf16.mxu0 0
        %2017 = vmatpush1.bf16.msra.mxu0 %v2001
        %2018 = vmatprep.subr.bf16.mxu0 0
        %2019 = vmatpush1.bf16.msra.mxu0 %v2000
        %2020 = vmatprep.subr.bf16.mxu0 0
        %2021 = vmatpush1.bf16.msra.mxu0 %v1999
        %2022 = vmatprep.subr.bf16.mxu0 0
        %2023 = vmatpush1.bf16.msra.mxu0 %v1998
        %2024 = vmatprep.subr.bf16.mxu0 0
        %2025 = vmatpush1.bf16.msra.mxu0 %v1997
        %2026 = vmatprep.subr.bf16.mxu0 0
        %2027 = vmatpush1.bf16.msra.mxu0 %v1996
        %2028 = vmatprep.subr.bf16.mxu0 0
        %2029 = vmatpush2.bf16.msra.mxu0 0
        %2030 = vmatprep.subr.bf16.mxu0 0
        %2031 = vmatpush2.bf16.msra.mxu0 0
        %2032 = vmatprep.subr.bf16.mxu0 0
        %2033 = vmatpush2.bf16.msra.mxu0 0
        %2034 = vmatprep.subr.bf16.mxu0 0
        %2035 = vmatpush2.bf16.msra.mxu0 0
        %2036 = vmatprep.subr.bf16.mxu0 0
        %2037 = vmatpush2.bf16.msra.mxu0 0
        %2038 = vmatprep.subr.bf16.mxu0 0
        %2039 = vmatpush2.bf16.msra.mxu0 0
        %2040 = vmatprep.subr.bf16.mxu0 0
        %2041 = vmatpush2.bf16.msra.mxu0 0
        %2042 = vmatprep.subr.bf16.mxu0 0
        %2043 = vmatpush2.bf16.msra.mxu0 0
        %2044 = vmatprep.mubr.bf16.mxu0 0
        %2045 = vmatmul.mubr.bf16.gmra.mxu0 %v342
        %v2046 = vpop.f32.mrf.mxu0
        %v2047 = vadd.f32 0.0, %v2046
        %v2048 = vpop.f32.mrf.mxu0
        %v2049 = vpop.f32.mrf.mxu0
        %v2050 = vadd.f32 0.0, %v2049
        %v2051 = vpop.f32.mrf.mxu0
        %2052 = vdwg.mxu0
        %v2053 = vpack.c.bf16 %v2050, %v2047
        %s2054 = scalar_lea.vmem [#allocation4], 1024
        %v2055 = vld [vmem:[%s2054] sm:$0xf]
        %v2056 = vld [vmem:[%s2054 + $0x4] sm:$0xf]
        %v2057 = vld [vmem:[%s2054 + $0x8] sm:$0xf]
        %v2058 = vld [vmem:[%s2054 + $0xc] sm:$0xf]
        %v2059 = vld [vmem:[%s2054 + $0x10] sm:$0xf]
        %v2060 = vld [vmem:[%s2054 + $0x14] sm:$0xf]
        %v2061 = vld [vmem:[%s2054 + $0x18] sm:$0xf]
        %v2062 = vld [vmem:[%s2054 + $0x1c] sm:$0xf]
        %v2063 = vld [vmem:[%s2054 + $0x20] sm:$0xf]
        %v2064 = vld [vmem:[%s2054 + $0x24] sm:$0xf]
        %v2065 = vld [vmem:[%s2054 + $0x28] sm:$0xf]
        %v2066 = vld [vmem:[%s2054 + $0x2c] sm:$0xf]
        %v2067 = vld [vmem:[%s2054 + $0x30] sm:$0xf]
        %v2068 = vld [vmem:[%s2054 + $0x34] sm:$0xf]
        %v2069 = vld [vmem:[%s2054 + $0x38] sm:$0xf]
        %v2070 = vld [vmem:[%s2054 + $0x3c] sm:$0xf]
        %v2087 = vunpack.c.l.b16 %v2055
        %v2088 = vunpack.c.l.b16 %v2056
        %v2089 = vunpack.c.l.b16 %v2057
        %v2090 = vunpack.c.l.b16 %v2058
        %v2091 = vunpack.c.l.b16 %v2059
        %v2092 = vunpack.c.l.b16 %v2060
        %v2093 = vunpack.c.l.b16 %v2061
        %v2094 = vunpack.c.l.b16 %v2062
        %v2095 = vunpack.c.l.b16 %v2063
        %v2096 = vunpack.c.l.b16 %v2064
        %v2097 = vunpack.c.l.b16 %v2065
        %v2098 = vunpack.c.l.b16 %v2066
        %v2099 = vunpack.c.l.b16 %v2067
        %v2100 = vunpack.c.l.b16 %v2068
        %v2101 = vunpack.c.l.b16 %v2069
        %v2102 = vunpack.c.l.b16 %v2070
        %v2103 = vpack.c.b16 %v2088, %v2087
        %v2104 = vpack.c.b16 %v2090, %v2089
        %v2105 = vpack.c.b16 %v2092, %v2091
        %v2106 = vpack.c.b16 %v2094, %v2093
        %v2107 = vpack.c.b16 %v2096, %v2095
        %v2108 = vpack.c.b16 %v2098, %v2097
        %v2109 = vpack.c.b16 %v2100, %v2099
        %v2110 = vpack.c.b16 %v2102, %v2101
        %2119 = vmatprep.subr.bf16.mxu0 0
        %2120 = vmatpush1.bf16.msra.mxu0 %v2110
        %2121 = vmatprep.subr.bf16.mxu0 0
        %2122 = vmatpush1.bf16.msra.mxu0 %v2109
        %2123 = vmatprep.subr.bf16.mxu0 0
        %2124 = vmatpush1.bf16.msra.mxu0 %v2108
        %2125 = vmatprep.subr.bf16.mxu0 0
        %2126 = vmatpush1.bf16.msra.mxu0 %v2107
        %2127 = vmatprep.subr.bf16.mxu0 0
        %2128 = vmatpush1.bf16.msra.mxu0 %v2106
        %2129 = vmatprep.subr.bf16.mxu0 0
        %2130 = vmatpush1.bf16.msra.mxu0 %v2105
        %2131 = vmatprep.subr.bf16.mxu0 0
        %2132 = vmatpush1.bf16.msra.mxu0 %v2104
        %2133 = vmatprep.subr.bf16.mxu0 0
        %2134 = vmatpush1.bf16.msra.mxu0 %v2103
        %2135 = vmatprep.subr.bf16.mxu0 0
        %2136 = vmatpush2.bf16.msra.mxu0 0
        %2137 = vmatprep.subr.bf16.mxu0 0
        %2138 = vmatpush2.bf16.msra.mxu0 0
        %2139 = vmatprep.subr.bf16.mxu0 0
        %2140 = vmatpush2.bf16.msra.mxu0 0
        %2141 = vmatprep.subr.bf16.mxu0 0
        %2142 = vmatpush2.bf16.msra.mxu0 0
        %2143 = vmatprep.subr.bf16.mxu0 0
        %2144 = vmatpush2.bf16.msra.mxu0 0
        %2145 = vmatprep.subr.bf16.mxu0 0
        %2146 = vmatpush2.bf16.msra.mxu0 0
        %2147 = vmatprep.subr.bf16.mxu0 0
        %2148 = vmatpush2.bf16.msra.mxu0 0
        %2149 = vmatprep.subr.bf16.mxu0 0
        %2150 = vmatpush2.bf16.msra.mxu0 0
        %2151 = vmatprep.mubr.bf16.mxu0 0
        %2152 = vmatmul.mubr.bf16.gmra.mxu0 %v342
        %v2153 = vpop.f32.mrf.mxu0
        %v2154 = vadd.f32 0.0, %v2153
        %v2155 = vpop.f32.mrf.mxu0
        %v2156 = vpop.f32.mrf.mxu0
        %v2157 = vadd.f32 0.0, %v2156
        %v2158 = vpop.f32.mrf.mxu0
        %2159 = vdwg.mxu0
        %v2160 = vpack.c.bf16 %v2157, %v2154
        %s2161 = scalar_lea.vmem [#allocation4], 1088
        %v2162 = vld [vmem:[%s2161] sm:$0xf]
        %v2163 = vld [vmem:[%s2161 + $0x4] sm:$0xf]
        %v2164 = vld [vmem:[%s2161 + $0x8] sm:$0xf]
        %v2165 = vld [vmem:[%s2161 + $0xc] sm:$0xf]
        %v2166 = vld [vmem:[%s2161 + $0x10] sm:$0xf]
        %v2167 = vld [vmem:[%s2161 + $0x14] sm:$0xf]
        %v2168 = vld [vmem:[%s2161 + $0x18] sm:$0xf]
        %v2169 = vld [vmem:[%s2161 + $0x1c] sm:$0xf]
        %v2170 = vld [vmem:[%s2161 + $0x20] sm:$0xf]
        %v2171 = vld [vmem:[%s2161 + $0x24] sm:$0xf]
        %v2172 = vld [vmem:[%s2161 + $0x28] sm:$0xf]
        %v2173 = vld [vmem:[%s2161 + $0x2c] sm:$0xf]
        %v2174 = vld [vmem:[%s2161 + $0x30] sm:$0xf]
        %v2175 = vld [vmem:[%s2161 + $0x34] sm:$0xf]
        %v2176 = vld [vmem:[%s2161 + $0x38] sm:$0xf]
        %v2177 = vld [vmem:[%s2161 + $0x3c] sm:$0xf]
        %v2194 = vunpack.c.l.b16 %v2162
        %v2195 = vunpack.c.l.b16 %v2163
        %v2196 = vunpack.c.l.b16 %v2164
        %v2197 = vunpack.c.l.b16 %v2165
        %v2198 = vunpack.c.l.b16 %v2166
        %v2199 = vunpack.c.l.b16 %v2167
        %v2200 = vunpack.c.l.b16 %v2168
        %v2201 = vunpack.c.l.b16 %v2169
        %v2202 = vunpack.c.l.b16 %v2170
        %v2203 = vunpack.c.l.b16 %v2171
        %v2204 = vunpack.c.l.b16 %v2172
        %v2205 = vunpack.c.l.b16 %v2173
        %v2206 = vunpack.c.l.b16 %v2174
        %v2207 = vunpack.c.l.b16 %v2175
        %v2208 = vunpack.c.l.b16 %v2176
        %v2209 = vunpack.c.l.b16 %v2177
        %v2210 = vpack.c.b16 %v2195, %v2194
        %v2211 = vpack.c.b16 %v2197, %v2196
        %v2212 = vpack.c.b16 %v2199, %v2198
        %v2213 = vpack.c.b16 %v2201, %v2200
        %v2214 = vpack.c.b16 %v2203, %v2202
        %v2215 = vpack.c.b16 %v2205, %v2204
        %v2216 = vpack.c.b16 %v2207, %v2206
        %v2217 = vpack.c.b16 %v2209, %v2208
        %2226 = vmatprep.subr.bf16.mxu0 0
        %2227 = vmatpush1.bf16.msra.mxu0 %v2217
        %2228 = vmatprep.subr.bf16.mxu0 0
        %2229 = vmatpush1.bf16.msra.mxu0 %v2216
        %2230 = vmatprep.subr.bf16.mxu0 0
        %2231 = vmatpush1.bf16.msra.mxu0 %v2215
        %2232 = vmatprep.subr.bf16.mxu0 0
        %2233 = vmatpush1.bf16.msra.mxu0 %v2214
        %2234 = vmatprep.subr.bf16.mxu0 0
        %2235 = vmatpush1.bf16.msra.mxu0 %v2213
        %2236 = vmatprep.subr.bf16.mxu0 0
        %2237 = vmatpush1.bf16.msra.mxu0 %v2212
        %2238 = vmatprep.subr.bf16.mxu0 0
        %2239 = vmatpush1.bf16.msra.mxu0 %v2211
        %2240 = vmatprep.subr.bf16.mxu0 0
        %2241 = vmatpush1.bf16.msra.mxu0 %v2210
        %2242 = vmatprep.subr.bf16.mxu0 0
        %2243 = vmatpush2.bf16.msra.mxu0 0
        %2244 = vmatprep.subr.bf16.mxu0 0
        %2245 = vmatpush2.bf16.msra.mxu0 0
        %2246 = vmatprep.subr.bf16.mxu0 0
        %2247 = vmatpush2.bf16.msra.mxu0 0
        %2248 = vmatprep.subr.bf16.mxu0 0
        %2249 = vmatpush2.bf16.msra.mxu0 0
        %2250 = vmatprep.subr.bf16.mxu0 0
        %2251 = vmatpush2.bf16.msra.mxu0 0
        %2252 = vmatprep.subr.bf16.mxu0 0
        %2253 = vmatpush2.bf16.msra.mxu0 0
        %2254 = vmatprep.subr.bf16.mxu0 0
        %2255 = vmatpush2.bf16.msra.mxu0 0
        %2256 = vmatprep.subr.bf16.mxu0 0
        %2257 = vmatpush2.bf16.msra.mxu0 0
        %2258 = vmatprep.mubr.bf16.mxu0 0
        %2259 = vmatmul.mubr.bf16.gmra.mxu0 %v342
        %v2260 = vpop.f32.mrf.mxu0
        %v2261 = vadd.f32 0.0, %v2260
        %v2262 = vpop.f32.mrf.mxu0
        %v2263 = vpop.f32.mrf.mxu0
        %v2264 = vadd.f32 0.0, %v2263
        %v2265 = vpop.f32.mrf.mxu0
        %2266 = vdwg.mxu0
        %v2267 = vpack.c.bf16 %v2264, %v2261
        %s2268 = scalar_lea.vmem [#allocation4], 1152
        %v2269 = vld [vmem:[%s2268] sm:$0xf]
        %v2270 = vld [vmem:[%s2268 + $0x4] sm:$0xf]
        %v2271 = vld [vmem:[%s2268 + $0x8] sm:$0xf]
        %v2272 = vld [vmem:[%s2268 + $0xc] sm:$0xf]
        %v2273 = vld [vmem:[%s2268 + $0x10] sm:$0xf]
        %v2274 = vld [vmem:[%s2268 + $0x14] sm:$0xf]
        %v2275 = vld [vmem:[%s2268 + $0x18] sm:$0xf]
        %v2276 = vld [vmem:[%s2268 + $0x1c] sm:$0xf]
        %v2277 = vld [vmem:[%s2268 + $0x20] sm:$0xf]
        %v2278 = vld [vmem:[%s2268 + $0x24] sm:$0xf]
        %v2279 = vld [vmem:[%s2268 + $0x28] sm:$0xf]
        %v2280 = vld [vmem:[%s2268 + $0x2c] sm:$0xf]
        %v2281 = vld [vmem:[%s2268 + $0x30] sm:$0xf]
        %v2282 = vld [vmem:[%s2268 + $0x34] sm:$0xf]
        %v2283 = vld [vmem:[%s2268 + $0x38] sm:$0xf]
        %v2284 = vld [vmem:[%s2268 + $0x3c] sm:$0xf]
        %v2301 = vunpack.c.l.b16 %v2269
        %v2302 = vunpack.c.l.b16 %v2270
        %v2303 = vunpack.c.l.b16 %v2271
        %v2304 = vunpack.c.l.b16 %v2272
        %v2305 = vunpack.c.l.b16 %v2273
        %v2306 = vunpack.c.l.b16 %v2274
        %v2307 = vunpack.c.l.b16 %v2275
        %v2308 = vunpack.c.l.b16 %v2276
        %v2309 = vunpack.c.l.b16 %v2277
        %v2310 = vunpack.c.l.b16 %v2278
        %v2311 = vunpack.c.l.b16 %v2279
        %v2312 = vunpack.c.l.b16 %v2280
        %v2313 = vunpack.c.l.b16 %v2281
        %v2314 = vunpack.c.l.b16 %v2282
        %v2315 = vunpack.c.l.b16 %v2283
        %v2316 = vunpack.c.l.b16 %v2284
        %v2317 = vpack.c.b16 %v2302, %v2301
        %v2318 = vpack.c.b16 %v2304, %v2303
        %v2319 = vpack.c.b16 %v2306, %v2305
        %v2320 = vpack.c.b16 %v2308, %v2307
        %v2321 = vpack.c.b16 %v2310, %v2309
        %v2322 = vpack.c.b16 %v2312, %v2311
        %v2323 = vpack.c.b16 %v2314, %v2313
        %v2324 = vpack.c.b16 %v2316, %v2315
        %2333 = vmatprep.subr.bf16.mxu0 0
        %2334 = vmatpush1.bf16.msra.mxu0 %v2324
        %2335 = vmatprep.subr.bf16.mxu0 0
        %2336 = vmatpush1.bf16.msra.mxu0 %v2323
        %2337 = vmatprep.subr.bf16.mxu0 0
        %2338 = vmatpush1.bf16.msra.mxu0 %v2322
        %2339 = vmatprep.subr.bf16.mxu0 0
        %2340 = vmatpush1.bf16.msra.mxu0 %v2321
        %2341 = vmatprep.subr.bf16.mxu0 0
        %2342 = vmatpush1.bf16.msra.mxu0 %v2320
        %2343 = vmatprep.subr.bf16.mxu0 0
        %2344 = vmatpush1.bf16.msra.mxu0 %v2319
        %2345 = vmatprep.subr.bf16.mxu0 0
        %2346 = vmatpush1.bf16.msra.mxu0 %v2318
        %2347 = vmatprep.subr.bf16.mxu0 0
        %2348 = vmatpush1.bf16.msra.mxu0 %v2317
        %2349 = vmatprep.subr.bf16.mxu0 0
        %2350 = vmatpush2.bf16.msra.mxu0 0
        %2351 = vmatprep.subr.bf16.mxu0 0
        %2352 = vmatpush2.bf16.msra.mxu0 0
        %2353 = vmatprep.subr.bf16.mxu0 0
        %2354 = vmatpush2.bf16.msra.mxu0 0
        %2355 = vmatprep.subr.bf16.mxu0 0
        %2356 = vmatpush2.bf16.msra.mxu0 0
        %2357 = vmatprep.subr.bf16.mxu0 0
        %2358 = vmatpush2.bf16.msra.mxu0 0
        %2359 = vmatprep.subr.bf16.mxu0 0
        %2360 = vmatpush2.bf16.msra.mxu0 0
        %2361 = vmatprep.subr.bf16.mxu0 0
        %2362 = vmatpush2.bf16.msra.mxu0 0
        %2363 = vmatprep.subr.bf16.mxu0 0
        %2364 = vmatpush2.bf16.msra.mxu0 0
        %2365 = vmatprep.mubr.bf16.mxu0 0
        %2366 = vmatmul.mubr.bf16.gmra.mxu0 %v342
        %v2367 = vpop.f32.mrf.mxu0
        %v2368 = vadd.f32 0.0, %v2367
        %v2369 = vpop.f32.mrf.mxu0
        %v2370 = vpop.f32.mrf.mxu0
        %v2371 = vadd.f32 0.0, %v2370
        %v2372 = vpop.f32.mrf.mxu0
        %2373 = vdwg.mxu0
        %v2374 = vpack.c.bf16 %v2371, %v2368
        %s2375 = scalar_lea.vmem [#allocation4], 1216
        %v2376 = vld [vmem:[%s2375] sm:$0xf]
        %v2377 = vld [vmem:[%s2375 + $0x4] sm:$0xf]
        %v2378 = vld [vmem:[%s2375 + $0x8] sm:$0xf]
        %v2379 = vld [vmem:[%s2375 + $0xc] sm:$0xf]
        %v2380 = vld [vmem:[%s2375 + $0x10] sm:$0xf]
        %v2381 = vld [vmem:[%s2375 + $0x14] sm:$0xf]
        %v2382 = vld [vmem:[%s2375 + $0x18] sm:$0xf]
        %v2383 = vld [vmem:[%s2375 + $0x1c] sm:$0xf]
        %v2384 = vld [vmem:[%s2375 + $0x20] sm:$0xf]
        %v2385 = vld [vmem:[%s2375 + $0x24] sm:$0xf]
        %v2386 = vld [vmem:[%s2375 + $0x28] sm:$0xf]
        %v2387 = vld [vmem:[%s2375 + $0x2c] sm:$0xf]
        %v2388 = vld [vmem:[%s2375 + $0x30] sm:$0xf]
        %v2389 = vld [vmem:[%s2375 + $0x34] sm:$0xf]
        %v2390 = vld [vmem:[%s2375 + $0x38] sm:$0xf]
        %v2391 = vld [vmem:[%s2375 + $0x3c] sm:$0xf]
        %v2408 = vunpack.c.l.b16 %v2376
        %v2409 = vunpack.c.l.b16 %v2377
        %v2410 = vunpack.c.l.b16 %v2378
        %v2411 = vunpack.c.l.b16 %v2379
        %v2412 = vunpack.c.l.b16 %v2380
        %v2413 = vunpack.c.l.b16 %v2381
        %v2414 = vunpack.c.l.b16 %v2382
        %v2415 = vunpack.c.l.b16 %v2383
        %v2416 = vunpack.c.l.b16 %v2384
        %v2417 = vunpack.c.l.b16 %v2385
        %v2418 = vunpack.c.l.b16 %v2386
        %v2419 = vunpack.c.l.b16 %v2387
        %v2420 = vunpack.c.l.b16 %v2388
        %v2421 = vunpack.c.l.b16 %v2389
        %v2422 = vunpack.c.l.b16 %v2390
        %v2423 = vunpack.c.l.b16 %v2391
        %v2424 = vpack.c.b16 %v2409, %v2408
        %v2425 = vpack.c.b16 %v2411, %v2410
        %v2426 = vpack.c.b16 %v2413, %v2412
        %v2427 = vpack.c.b16 %v2415, %v2414
        %v2428 = vpack.c.b16 %v2417, %v2416
        %v2429 = vpack.c.b16 %v2419, %v2418
        %v2430 = vpack.c.b16 %v2421, %v2420
        %v2431 = vpack.c.b16 %v2423, %v2422
        %2440 = vmatprep.subr.bf16.mxu0 0
        %2441 = vmatpush1.bf16.msra.mxu0 %v2431
        %2442 = vmatprep.subr.bf16.mxu0 0
        %2443 = vmatpush1.bf16.msra.mxu0 %v2430
        %2444 = vmatprep.subr.bf16.mxu0 0
        %2445 = vmatpush1.bf16.msra.mxu0 %v2429
        %2446 = vmatprep.subr.bf16.mxu0 0
        %2447 = vmatpush1.bf16.msra.mxu0 %v2428
        %2448 = vmatprep.subr.bf16.mxu0 0
        %2449 = vmatpush1.bf16.msra.mxu0 %v2427
        %2450 = vmatprep.subr.bf16.mxu0 0
        %2451 = vmatpush1.bf16.msra.mxu0 %v2426
        %2452 = vmatprep.subr.bf16.mxu0 0
        %2453 = vmatpush1.bf16.msra.mxu0 %v2425
        %2454 = vmatprep.subr.bf16.mxu0 0
        %2455 = vmatpush1.bf16.msra.mxu0 %v2424
        %2456 = vmatprep.subr.bf16.mxu0 0
        %2457 = vmatpush2.bf16.msra.mxu0 0
        %2458 = vmatprep.subr.bf16.mxu0 0
        %2459 = vmatpush2.bf16.msra.mxu0 0
        %2460 = vmatprep.subr.bf16.mxu0 0
        %2461 = vmatpush2.bf16.msra.mxu0 0
        %2462 = vmatprep.subr.bf16.mxu0 0
        %2463 = vmatpush2.bf16.msra.mxu0 0
        %2464 = vmatprep.subr.bf16.mxu0 0
        %2465 = vmatpush2.bf16.msra.mxu0 0
        %2466 = vmatprep.subr.bf16.mxu0 0
        %2467 = vmatpush2.bf16.msra.mxu0 0
        %2468 = vmatprep.subr.bf16.mxu0 0
        %2469 = vmatpush2.bf16.msra.mxu0 0
        %2470 = vmatprep.subr.bf16.mxu0 0
        %2471 = vmatpush2.bf16.msra.mxu0 0
        %2472 = vmatprep.mubr.bf16.mxu0 0
        %2473 = vmatmul.mubr.bf16.gmra.mxu0 %v342
        %v2474 = vpop.f32.mrf.mxu0
        %v2475 = vadd.f32 0.0, %v2474
        %v2476 = vpop.f32.mrf.mxu0
        %v2477 = vpop.f32.mrf.mxu0
        %v2478 = vadd.f32 0.0, %v2477
        %v2479 = vpop.f32.mrf.mxu0
        %2480 = vdwg.mxu0
        %v2481 = vpack.c.bf16 %v2478, %v2475
        %s2482 = scalar_lea.vmem [#allocation4], 1280
        %v2483 = vld [vmem:[%s2482] sm:$0xf]
        %v2484 = vld [vmem:[%s2482 + $0x4] sm:$0xf]
        %v2485 = vld [vmem:[%s2482 + $0x8] sm:$0xf]
        %v2486 = vld [vmem:[%s2482 + $0xc] sm:$0xf]
        %v2487 = vld [vmem:[%s2482 + $0x10] sm:$0xf]
        %v2488 = vld [vmem:[%s2482 + $0x14] sm:$0xf]
        %v2489 = vld [vmem:[%s2482 + $0x18] sm:$0xf]
        %v2490 = vld [vmem:[%s2482 + $0x1c] sm:$0xf]
        %v2491 = vld [vmem:[%s2482 + $0x20] sm:$0xf]
        %v2492 = vld [vmem:[%s2482 + $0x24] sm:$0xf]
        %v2493 = vld [vmem:[%s2482 + $0x28] sm:$0xf]
        %v2494 = vld [vmem:[%s2482 + $0x2c] sm:$0xf]
        %v2495 = vld [vmem:[%s2482 + $0x30] sm:$0xf]
        %v2496 = vld [vmem:[%s2482 + $0x34] sm:$0xf]
        %v2497 = vld [vmem:[%s2482 + $0x38] sm:$0xf]
        %v2498 = vld [vmem:[%s2482 + $0x3c] sm:$0xf]
        %v2515 = vunpack.c.l.b16 %v2483
        %v2516 = vunpack.c.l.b16 %v2484
        %v2517 = vunpack.c.l.b16 %v2485
        %v2518 = vunpack.c.l.b16 %v2486
        %v2519 = vunpack.c.l.b16 %v2487
        %v2520 = vunpack.c.l.b16 %v2488
        %v2521 = vunpack.c.l.b16 %v2489
        %v2522 = vunpack.c.l.b16 %v2490
        %v2523 = vunpack.c.l.b16 %v2491
        %v2524 = vunpack.c.l.b16 %v2492
        %v2525 = vunpack.c.l.b16 %v2493
        %v2526 = vunpack.c.l.b16 %v2494
        %v2527 = vunpack.c.l.b16 %v2495
        %v2528 = vunpack.c.l.b16 %v2496
        %v2529 = vunpack.c.l.b16 %v2497
        %v2530 = vunpack.c.l.b16 %v2498
        %v2531 = vpack.c.b16 %v2516, %v2515
        %v2532 = vpack.c.b16 %v2518, %v2517
        %v2533 = vpack.c.b16 %v2520, %v2519
        %v2534 = vpack.c.b16 %v2522, %v2521
        %v2535 = vpack.c.b16 %v2524, %v2523
        %v2536 = vpack.c.b16 %v2526, %v2525
        %v2537 = vpack.c.b16 %v2528, %v2527
        %v2538 = vpack.c.b16 %v2530, %v2529
        %2547 = vmatprep.subr.bf16.mxu0 0
        %2548 = vmatpush1.bf16.msra.mxu0 %v2538
        %2549 = vmatprep.subr.bf16.mxu0 0
        %2550 = vmatpush1.bf16.msra.mxu0 %v2537
        %2551 = vmatprep.subr.bf16.mxu0 0
        %2552 = vmatpush1.bf16.msra.mxu0 %v2536
        %2553 = vmatprep.subr.bf16.mxu0 0
        %2554 = vmatpush1.bf16.msra.mxu0 %v2535
        %2555 = vmatprep.subr.bf16.mxu0 0
        %2556 = vmatpush1.bf16.msra.mxu0 %v2534
        %2557 = vmatprep.subr.bf16.mxu0 0
        %2558 = vmatpush1.bf16.msra.mxu0 %v2533
        %2559 = vmatprep.subr.bf16.mxu0 0
        %2560 = vmatpush1.bf16.msra.mxu0 %v2532
        %2561 = vmatprep.subr.bf16.mxu0 0
        %2562 = vmatpush1.bf16.msra.mxu0 %v2531
        %2563 = vmatprep.subr.bf16.mxu0 0
        %2564 = vmatpush2.bf16.msra.mxu0 0
        %2565 = vmatprep.subr.bf16.mxu0 0
        %2566 = vmatpush2.bf16.msra.mxu0 0
        %2567 = vmatprep.subr.bf16.mxu0 0
        %2568 = vmatpush2.bf16.msra.mxu0 0
        %2569 = vmatprep.subr.bf16.mxu0 0
        %2570 = vmatpush2.bf16.msra.mxu0 0
        %2571 = vmatprep.subr.bf16.mxu0 0
        %2572 = vmatpush2.bf16.msra.mxu0 0
        %2573 = vmatprep.subr.bf16.mxu0 0
        %2574 = vmatpush2.bf16.msra.mxu0 0
        %2575 = vmatprep.subr.bf16.mxu0 0
        %2576 = vmatpush2.bf16.msra.mxu0 0
        %2577 = vmatprep.subr.bf16.mxu0 0
        %2578 = vmatpush2.bf16.msra.mxu0 0
        %2579 = vmatprep.mubr.bf16.mxu0 0
        %2580 = vmatmul.mubr.bf16.gmra.mxu0 %v342
        %v2581 = vpop.f32.mrf.mxu0
        %v2582 = vadd.f32 0.0, %v2581
        %v2583 = vpop.f32.mrf.mxu0
        %v2584 = vpop.f32.mrf.mxu0
        %v2585 = vadd.f32 0.0, %v2584
        %v2586 = vpop.f32.mrf.mxu0
        %2587 = vdwg.mxu0
        %v2588 = vpack.c.bf16 %v2585, %v2582
        %s2589 = scalar_lea.vmem [#allocation4], 1344
        %v2590 = vld [vmem:[%s2589] sm:$0xf]
        %v2591 = vld [vmem:[%s2589 + $0x4] sm:$0xf]
        %v2592 = vld [vmem:[%s2589 + $0x8] sm:$0xf]
        %v2593 = vld [vmem:[%s2589 + $0xc] sm:$0xf]
        %v2594 = vld [vmem:[%s2589 + $0x10] sm:$0xf]
        %v2595 = vld [vmem:[%s2589 + $0x14] sm:$0xf]
        %v2596 = vld [vmem:[%s2589 + $0x18] sm:$0xf]
        %v2597 = vld [vmem:[%s2589 + $0x1c] sm:$0xf]
        %v2598 = vld [vmem:[%s2589 + $0x20] sm:$0xf]
        %v2599 = vld [vmem:[%s2589 + $0x24] sm:$0xf]
        %v2600 = vld [vmem:[%s2589 + $0x28] sm:$0xf]
        %v2601 = vld [vmem:[%s2589 + $0x2c] sm:$0xf]
        %v2602 = vld [vmem:[%s2589 + $0x30] sm:$0xf]
        %v2603 = vld [vmem:[%s2589 + $0x34] sm:$0xf]
        %v2604 = vld [vmem:[%s2589 + $0x38] sm:$0xf]
        %v2605 = vld [vmem:[%s2589 + $0x3c] sm:$0xf]
        %v2622 = vunpack.c.l.b16 %v2590
        %v2623 = vunpack.c.l.b16 %v2591
        %v2624 = vunpack.c.l.b16 %v2592
        %v2625 = vunpack.c.l.b16 %v2593
        %v2626 = vunpack.c.l.b16 %v2594
        %v2627 = vunpack.c.l.b16 %v2595
        %v2628 = vunpack.c.l.b16 %v2596
        %v2629 = vunpack.c.l.b16 %v2597
        %v2630 = vunpack.c.l.b16 %v2598
        %v2631 = vunpack.c.l.b16 %v2599
        %v2632 = vunpack.c.l.b16 %v2600
        %v2633 = vunpack.c.l.b16 %v2601
        %v2634 = vunpack.c.l.b16 %v2602
        %v2635 = vunpack.c.l.b16 %v2603
        %v2636 = vunpack.c.l.b16 %v2604
        %v2637 = vunpack.c.l.b16 %v2605
        %v2638 = vpack.c.b16 %v2623, %v2622
        %v2639 = vpack.c.b16 %v2625, %v2624
        %v2640 = vpack.c.b16 %v2627, %v2626
        %v2641 = vpack.c.b16 %v2629, %v2628
        %v2642 = vpack.c.b16 %v2631, %v2630
        %v2643 = vpack.c.b16 %v2633, %v2632
        %v2644 = vpack.c.b16 %v2635, %v2634
        %v2645 = vpack.c.b16 %v2637, %v2636
        %2654 = vmatprep.subr.bf16.mxu0 0
        %2655 = vmatpush1.bf16.msra.mxu0 %v2645
        %2656 = vmatprep.subr.bf16.mxu0 0
        %2657 = vmatpush1.bf16.msra.mxu0 %v2644
        %2658 = vmatprep.subr.bf16.mxu0 0
        %2659 = vmatpush1.bf16.msra.mxu0 %v2643
        %2660 = vmatprep.subr.bf16.mxu0 0
        %2661 = vmatpush1.bf16.msra.mxu0 %v2642
        %2662 = vmatprep.subr.bf16.mxu0 0
        %2663 = vmatpush1.bf16.msra.mxu0 %v2641
        %2664 = vmatprep.subr.bf16.mxu0 0
        %2665 = vmatpush1.bf16.msra.mxu0 %v2640
        %2666 = vmatprep.subr.bf16.mxu0 0
        %2667 = vmatpush1.bf16.msra.mxu0 %v2639
        %2668 = vmatprep.subr.bf16.mxu0 0
        %2669 = vmatpush1.bf16.msra.mxu0 %v2638
        %2670 = vmatprep.subr.bf16.mxu0 0
        %2671 = vmatpush2.bf16.msra.mxu0 0
        %2672 = vmatprep.subr.bf16.mxu0 0
        %2673 = vmatpush2.bf16.msra.mxu0 0
        %2674 = vmatprep.subr.bf16.mxu0 0
        %2675 = vmatpush2.bf16.msra.mxu0 0
        %2676 = vmatprep.subr.bf16.mxu0 0
        %2677 = vmatpush2.bf16.msra.mxu0 0
        %2678 = vmatprep.subr.bf16.mxu0 0
        %2679 = vmatpush2.bf16.msra.mxu0 0
        %2680 = vmatprep.subr.bf16.mxu0 0
        %2681 = vmatpush2.bf16.msra.mxu0 0
        %2682 = vmatprep.subr.bf16.mxu0 0
        %2683 = vmatpush2.bf16.msra.mxu0 0
        %2684 = vmatprep.subr.bf16.mxu0 0
        %2685 = vmatpush2.bf16.msra.mxu0 0
        %2686 = vmatprep.mubr.bf16.mxu0 0
        %2687 = vmatmul.mubr.bf16.gmra.mxu0 %v342
        %v2688 = vpop.f32.mrf.mxu0
        %v2689 = vadd.f32 0.0, %v2688
        %v2690 = vpop.f32.mrf.mxu0
        %v2691 = vpop.f32.mrf.mxu0
        %v2692 = vadd.f32 0.0, %v2691
        %v2693 = vpop.f32.mrf.mxu0
        %2694 = vdwg.mxu0
        %v2695 = vpack.c.bf16 %v2692, %v2689
        %s2696 = scalar_lea.vmem [#allocation4], 1408
        %v2697 = vld [vmem:[%s2696] sm:$0xf]
        %v2698 = vld [vmem:[%s2696 + $0x4] sm:$0xf]
        %v2699 = vld [vmem:[%s2696 + $0x8] sm:$0xf]
        %v2700 = vld [vmem:[%s2696 + $0xc] sm:$0xf]
        %v2701 = vld [vmem:[%s2696 + $0x10] sm:$0xf]
        %v2702 = vld [vmem:[%s2696 + $0x14] sm:$0xf]
        %v2703 = vld [vmem:[%s2696 + $0x18] sm:$0xf]
        %v2704 = vld [vmem:[%s2696 + $0x1c] sm:$0xf]
        %v2705 = vld [vmem:[%s2696 + $0x20] sm:$0xf]
        %v2706 = vld [vmem:[%s2696 + $0x24] sm:$0xf]
        %v2707 = vld [vmem:[%s2696 + $0x28] sm:$0xf]
        %v2708 = vld [vmem:[%s2696 + $0x2c] sm:$0xf]
        %v2709 = vld [vmem:[%s2696 + $0x30] sm:$0xf]
        %v2710 = vld [vmem:[%s2696 + $0x34] sm:$0xf]
        %v2711 = vld [vmem:[%s2696 + $0x38] sm:$0xf]
        %v2712 = vld [vmem:[%s2696 + $0x3c] sm:$0xf]
        %v2729 = vunpack.c.l.b16 %v2697
        %v2730 = vunpack.c.l.b16 %v2698
        %v2731 = vunpack.c.l.b16 %v2699
        %v2732 = vunpack.c.l.b16 %v2700
        %v2733 = vunpack.c.l.b16 %v2701
        %v2734 = vunpack.c.l.b16 %v2702
        %v2735 = vunpack.c.l.b16 %v2703
        %v2736 = vunpack.c.l.b16 %v2704
        %v2737 = vunpack.c.l.b16 %v2705
        %v2738 = vunpack.c.l.b16 %v2706
        %v2739 = vunpack.c.l.b16 %v2707
        %v2740 = vunpack.c.l.b16 %v2708
        %v2741 = vunpack.c.l.b16 %v2709
        %v2742 = vunpack.c.l.b16 %v2710
        %v2743 = vunpack.c.l.b16 %v2711
        %v2744 = vunpack.c.l.b16 %v2712
        %v2745 = vpack.c.b16 %v2730, %v2729
        %v2746 = vpack.c.b16 %v2732, %v2731
        %v2747 = vpack.c.b16 %v2734, %v2733
        %v2748 = vpack.c.b16 %v2736, %v2735
        %v2749 = vpack.c.b16 %v2738, %v2737
        %v2750 = vpack.c.b16 %v2740, %v2739
        %v2751 = vpack.c.b16 %v2742, %v2741
        %v2752 = vpack.c.b16 %v2744, %v2743
        %2761 = vmatprep.subr.bf16.mxu0 0
        %2762 = vmatpush1.bf16.msra.mxu0 %v2752
        %2763 = vmatprep.subr.bf16.mxu0 0
        %2764 = vmatpush1.bf16.msra.mxu0 %v2751
        %2765 = vmatprep.subr.bf16.mxu0 0
        %2766 = vmatpush1.bf16.msra.mxu0 %v2750
        %2767 = vmatprep.subr.bf16.mxu0 0
        %2768 = vmatpush1.bf16.msra.mxu0 %v2749
        %2769 = vmatprep.subr.bf16.mxu0 0
        %2770 = vmatpush1.bf16.msra.mxu0 %v2748
        %2771 = vmatprep.subr.bf16.mxu0 0
        %2772 = vmatpush1.bf16.msra.mxu0 %v2747
        %2773 = vmatprep.subr.bf16.mxu0 0
        %2774 = vmatpush1.bf16.msra.mxu0 %v2746
        %2775 = vmatprep.subr.bf16.mxu0 0
        %2776 = vmatpush1.bf16.msra.mxu0 %v2745
        %2777 = vmatprep.subr.bf16.mxu0 0
        %2778 = vmatpush2.bf16.msra.mxu0 0
        %2779 = vmatprep.subr.bf16.mxu0 0
        %2780 = vmatpush2.bf16.msra.mxu0 0
        %2781 = vmatprep.subr.bf16.mxu0 0
        %2782 = vmatpush2.bf16.msra.mxu0 0
        %2783 = vmatprep.subr.bf16.mxu0 0
        %2784 = vmatpush2.bf16.msra.mxu0 0
        %2785 = vmatprep.subr.bf16.mxu0 0
        %2786 = vmatpush2.bf16.msra.mxu0 0
        %2787 = vmatprep.subr.bf16.mxu0 0
        %2788 = vmatpush2.bf16.msra.mxu0 0
        %2789 = vmatprep.subr.bf16.mxu0 0
        %2790 = vmatpush2.bf16.msra.mxu0 0
        %2791 = vmatprep.subr.bf16.mxu0 0
        %2792 = vmatpush2.bf16.msra.mxu0 0
        %2793 = vmatprep.mubr.bf16.mxu0 0
        %2794 = vmatmul.mubr.bf16.gmra.mxu0 %v342
        %v2795 = vpop.f32.mrf.mxu0
        %v2796 = vadd.f32 0.0, %v2795
        %v2797 = vpop.f32.mrf.mxu0
        %v2798 = vpop.f32.mrf.mxu0
        %v2799 = vadd.f32 0.0, %v2798
        %v2800 = vpop.f32.mrf.mxu0
        %2801 = vdwg.mxu0
        %v2802 = vpack.c.bf16 %v2799, %v2796
        %s2803 = scalar_lea.vmem [#allocation4], 1472
        %v2804 = vld [vmem:[%s2803] sm:$0xf]
        %v2805 = vld [vmem:[%s2803 + $0x4] sm:$0xf]
        %v2806 = vld [vmem:[%s2803 + $0x8] sm:$0xf]
        %v2807 = vld [vmem:[%s2803 + $0xc] sm:$0xf]
        %v2808 = vld [vmem:[%s2803 + $0x10] sm:$0xf]
        %v2809 = vld [vmem:[%s2803 + $0x14] sm:$0xf]
        %v2810 = vld [vmem:[%s2803 + $0x18] sm:$0xf]
        %v2811 = vld [vmem:[%s2803 + $0x1c] sm:$0xf]
        %v2812 = vld [vmem:[%s2803 + $0x20] sm:$0xf]
        %v2813 = vld [vmem:[%s2803 + $0x24] sm:$0xf]
        %v2814 = vld [vmem:[%s2803 + $0x28] sm:$0xf]
        %v2815 = vld [vmem:[%s2803 + $0x2c] sm:$0xf]
        %v2816 = vld [vmem:[%s2803 + $0x30] sm:$0xf]
        %v2817 = vld [vmem:[%s2803 + $0x34] sm:$0xf]
        %v2818 = vld [vmem:[%s2803 + $0x38] sm:$0xf]
        %v2819 = vld [vmem:[%s2803 + $0x3c] sm:$0xf]
        %v2836 = vunpack.c.l.b16 %v2804
        %v2837 = vunpack.c.l.b16 %v2805
        %v2838 = vunpack.c.l.b16 %v2806
        %v2839 = vunpack.c.l.b16 %v2807
        %v2840 = vunpack.c.l.b16 %v2808
        %v2841 = vunpack.c.l.b16 %v2809
        %v2842 = vunpack.c.l.b16 %v2810
        %v2843 = vunpack.c.l.b16 %v2811
        %v2844 = vunpack.c.l.b16 %v2812
        %v2845 = vunpack.c.l.b16 %v2813
        %v2846 = vunpack.c.l.b16 %v2814
        %v2847 = vunpack.c.l.b16 %v2815
        %v2848 = vunpack.c.l.b16 %v2816
        %v2849 = vunpack.c.l.b16 %v2817
        %v2850 = vunpack.c.l.b16 %v2818
        %v2851 = vunpack.c.l.b16 %v2819
        %v2852 = vpack.c.b16 %v2837, %v2836
        %v2853 = vpack.c.b16 %v2839, %v2838
        %v2854 = vpack.c.b16 %v2841, %v2840
        %v2855 = vpack.c.b16 %v2843, %v2842
        %v2856 = vpack.c.b16 %v2845, %v2844
        %v2857 = vpack.c.b16 %v2847, %v2846
        %v2858 = vpack.c.b16 %v2849, %v2848
        %v2859 = vpack.c.b16 %v2851, %v2850
        %2868 = vmatprep.subr.bf16.mxu0 0
        %2869 = vmatpush1.bf16.msra.mxu0 %v2859
        %2870 = vmatprep.subr.bf16.mxu0 0
        %2871 = vmatpush1.bf16.msra.mxu0 %v2858
        %2872 = vmatprep.subr.bf16.mxu0 0
        %2873 = vmatpush1.bf16.msra.mxu0 %v2857
        %2874 = vmatprep.subr.bf16.mxu0 0
        %2875 = vmatpush1.bf16.msra.mxu0 %v2856
        %2876 = vmatprep.subr.bf16.mxu0 0
        %2877 = vmatpush1.bf16.msra.mxu0 %v2855
        %2878 = vmatprep.subr.bf16.mxu0 0
        %2879 = vmatpush1.bf16.msra.mxu0 %v2854
        %2880 = vmatprep.subr.bf16.mxu0 0
        %2881 = vmatpush1.bf16.msra.mxu0 %v2853
        %2882 = vmatprep.subr.bf16.mxu0 0
        %2883 = vmatpush1.bf16.msra.mxu0 %v2852
        %2884 = vmatprep.subr.bf16.mxu0 0
        %2885 = vmatpush2.bf16.msra.mxu0 0
        %2886 = vmatprep.subr.bf16.mxu0 0
        %2887 = vmatpush2.bf16.msra.mxu0 0
        %2888 = vmatprep.subr.bf16.mxu0 0
        %2889 = vmatpush2.bf16.msra.mxu0 0
        %2890 = vmatprep.subr.bf16.mxu0 0
        %2891 = vmatpush2.bf16.msra.mxu0 0
        %2892 = vmatprep.subr.bf16.mxu0 0
        %2893 = vmatpush2.bf16.msra.mxu0 0
        %2894 = vmatprep.subr.bf16.mxu0 0
        %2895 = vmatpush2.bf16.msra.mxu0 0
        %2896 = vmatprep.subr.bf16.mxu0 0
        %2897 = vmatpush2.bf16.msra.mxu0 0
        %2898 = vmatprep.subr.bf16.mxu0 0
        %2899 = vmatpush2.bf16.msra.mxu0 0
        %2900 = vmatprep.mubr.bf16.mxu0 0
        %2901 = vmatmul.mubr.bf16.gmra.mxu0 %v342
        %v2902 = vpop.f32.mrf.mxu0
        %v2903 = vadd.f32 0.0, %v2902
        %v2904 = vpop.f32.mrf.mxu0
        %v2905 = vpop.f32.mrf.mxu0
        %v2906 = vadd.f32 0.0, %v2905
        %v2907 = vpop.f32.mrf.mxu0
        %2908 = vdwg.mxu0
        %v2909 = vpack.c.bf16 %v2906, %v2903
        %s2910 = scalar_lea.vmem [#allocation4], 1536
        %v2911 = vld [vmem:[%s2910] sm:$0xf]
        %v2912 = vld [vmem:[%s2910 + $0x4] sm:$0xf]
        %v2913 = vld [vmem:[%s2910 + $0x8] sm:$0xf]
        %v2914 = vld [vmem:[%s2910 + $0xc] sm:$0xf]
        %v2915 = vld [vmem:[%s2910 + $0x10] sm:$0xf]
        %v2916 = vld [vmem:[%s2910 + $0x14] sm:$0xf]
        %v2917 = vld [vmem:[%s2910 + $0x18] sm:$0xf]
        %v2918 = vld [vmem:[%s2910 + $0x1c] sm:$0xf]
        %v2919 = vld [vmem:[%s2910 + $0x20] sm:$0xf]
        %v2920 = vld [vmem:[%s2910 + $0x24] sm:$0xf]
        %v2921 = vld [vmem:[%s2910 + $0x28] sm:$0xf]
        %v2922 = vld [vmem:[%s2910 + $0x2c] sm:$0xf]
        %v2923 = vld [vmem:[%s2910 + $0x30] sm:$0xf]
        %v2924 = vld [vmem:[%s2910 + $0x34] sm:$0xf]
        %v2925 = vld [vmem:[%s2910 + $0x38] sm:$0xf]
        %v2926 = vld [vmem:[%s2910 + $0x3c] sm:$0xf]
        %v2943 = vunpack.c.l.b16 %v2911
        %v2944 = vunpack.c.l.b16 %v2912
        %v2945 = vunpack.c.l.b16 %v2913
        %v2946 = vunpack.c.l.b16 %v2914
        %v2947 = vunpack.c.l.b16 %v2915
        %v2948 = vunpack.c.l.b16 %v2916
        %v2949 = vunpack.c.l.b16 %v2917
        %v2950 = vunpack.c.l.b16 %v2918
        %v2951 = vunpack.c.l.b16 %v2919
        %v2952 = vunpack.c.l.b16 %v2920
        %v2953 = vunpack.c.l.b16 %v2921
        %v2954 = vunpack.c.l.b16 %v2922
        %v2955 = vunpack.c.l.b16 %v2923
        %v2956 = vunpack.c.l.b16 %v2924
        %v2957 = vunpack.c.l.b16 %v2925
        %v2958 = vunpack.c.l.b16 %v2926
        %v2959 = vpack.c.b16 %v2944, %v2943
        %v2960 = vpack.c.b16 %v2946, %v2945
        %v2961 = vpack.c.b16 %v2948, %v2947
        %v2962 = vpack.c.b16 %v2950, %v2949
        %v2963 = vpack.c.b16 %v2952, %v2951
        %v2964 = vpack.c.b16 %v2954, %v2953
        %v2965 = vpack.c.b16 %v2956, %v2955
        %v2966 = vpack.c.b16 %v2958, %v2957
        %2975 = vmatprep.subr.bf16.mxu0 0
        %2976 = vmatpush1.bf16.msra.mxu0 %v2966
        %2977 = vmatprep.subr.bf16.mxu0 0
        %2978 = vmatpush1.bf16.msra.mxu0 %v2965
        %2979 = vmatprep.subr.bf16.mxu0 0
        %2980 = vmatpush1.bf16.msra.mxu0 %v2964
        %2981 = vmatprep.subr.bf16.mxu0 0
        %2982 = vmatpush1.bf16.msra.mxu0 %v2963
        %2983 = vmatprep.subr.bf16.mxu0 0
        %2984 = vmatpush1.bf16.msra.mxu0 %v2962
        %2985 = vmatprep.subr.bf16.mxu0 0
        %2986 = vmatpush1.bf16.msra.mxu0 %v2961
        %2987 = vmatprep.subr.bf16.mxu0 0
        %2988 = vmatpush1.bf16.msra.mxu0 %v2960
        %2989 = vmatprep.subr.bf16.mxu0 0
        %2990 = vmatpush1.bf16.msra.mxu0 %v2959
        %2991 = vmatprep.subr.bf16.mxu0 0
        %2992 = vmatpush2.bf16.msra.mxu0 0
        %2993 = vmatprep.subr.bf16.mxu0 0
        %2994 = vmatpush2.bf16.msra.mxu0 0
        %2995 = vmatprep.subr.bf16.mxu0 0
        %2996 = vmatpush2.bf16.msra.mxu0 0
        %2997 = vmatprep.subr.bf16.mxu0 0
        %2998 = vmatpush2.bf16.msra.mxu0 0
        %2999 = vmatprep.subr.bf16.mxu0 0
        %3000 = vmatpush2.bf16.msra.mxu0 0
        %3001 = vmatprep.subr.bf16.mxu0 0
        %3002 = vmatpush2.bf16.msra.mxu0 0
        %3003 = vmatprep.subr.bf16.mxu0 0
        %3004 = vmatpush2.bf16.msra.mxu0 0
        %3005 = vmatprep.subr.bf16.mxu0 0
        %3006 = vmatpush2.bf16.msra.mxu0 0
        %3007 = vmatprep.mubr.bf16.mxu0 0
        %3008 = vmatmul.mubr.bf16.gmra.mxu0 %v342
        %v3009 = vpop.f32.mrf.mxu0
        %v3010 = vadd.f32 0.0, %v3009
        %v3011 = vpop.f32.mrf.mxu0
        %v3012 = vpop.f32.mrf.mxu0
        %v3013 = vadd.f32 0.0, %v3012
        %v3014 = vpop.f32.mrf.mxu0
        %3015 = vdwg.mxu0
        %v3016 = vpack.c.bf16 %v3013, %v3010
        %v3017 = vld [vmem:[#allocation2] sm:$0xff]
        %v3018 = vld [vmem:[#allocation2 + $0x8] sm:$0xff]
        %v3019 = vld [vmem:[#allocation2 + $0x10] sm:$0xff]
        %v3020 = vld [vmem:[#allocation2 + $0x18] sm:$0xff]
        %v3021 = vld [vmem:[#allocation2 + $0x20] sm:$0xff]
        %v3022 = vld [vmem:[#allocation2 + $0x28] sm:$0xff]
        %v3023 = vld [vmem:[#allocation2 + $0x30] sm:$0xff]
        %v3024 = vld [vmem:[#allocation2 + $0x38] sm:$0xff]
        %v3025 = vld [vmem:[%s2] sm:$0xff]
        %v3026 = vld [vmem:[%s2 + $0x8] sm:$0xff]
        %v3027 = vld [vmem:[%s2 + $0x10] sm:$0xff]
        %v3028 = vld [vmem:[%s2 + $0x18] sm:$0xff]
        %3030 = vset.pattern.permute.xlu0 0
        %3031 = vperm.xlu0 %3030, %v3025
        %v3032 = vpop.permute.xlu0 %3031
        %3035 = vset.pattern.permute.xlu0 0
        %3036 = vperm.xlu0 %3035, %v3026
        %v3037 = vpop.permute.xlu0 %3036
        %3040 = vset.pattern.permute.xlu0 0
        %3041 = vperm.xlu0 %3040, %v3027
        %v3042 = vpop.permute.xlu0 %3041
        %3045 = vset.pattern.permute.xlu0 0
        %3046 = vperm.xlu0 %3045, %v3028
        %v3047 = vpop.permute.xlu0 %3046
        %v3057 = vunpack.c.l.b16 %v3017
        %v3058 = vunpack.c.h.b16 %v3017
        %v3059 = vunpack.c.l.b16 %v3018
        %v3060 = vunpack.c.h.b16 %v3018
        %v3061 = vunpack.c.l.b16 %v3019
        %v3062 = vunpack.c.h.b16 %v3019
        %v3063 = vunpack.c.l.b16 %v3020
        %v3064 = vunpack.c.h.b16 %v3020
        %v3065 = vunpack.c.l.b16 %v3021
        %v3066 = vunpack.c.h.b16 %v3021
        %v3067 = vunpack.c.l.b16 %v3022
        %v3068 = vunpack.c.h.b16 %v3022
        %v3069 = vunpack.c.l.b16 %v3023
        %v3070 = vunpack.c.h.b16 %v3023
        %v3071 = vunpack.c.l.b16 %v3024
        %v3072 = vunpack.c.h.b16 %v3024
        %v3073 = vpack.c.b16 %v3061, %v3057
        %v3074 = vpack.c.b16 %v3062, %v3058
        %v3075 = vpack.c.b16 %v3063, %v3059
        %v3076 = vpack.c.b16 %v3064, %v3060
        %v3077 = vpack.c.b16 %v3069, %v3065
        %v3078 = vpack.c.b16 %v3070, %v3066
        %v3079 = vpack.c.b16 %v3071, %v3067
        %v3080 = vpack.c.b16 %v3072, %v3068
        %vm3087 = vcmask 130048
        %v3089 = vsel %vm3087, %v3076, 0
        %v3092 = vsel %vm3087, %v3080, 0
        %3094 = vmatprep.subr.bf16.mxu0 0
        %3095 = vmatpush1.bf16.msra.mxu0 %v1197
        %3096 = vmatprep.subr.bf16.mxu0 0
        %3097 = vmatpush1.bf16.msra.mxu0 %v1090
        %3098 = vmatprep.subr.bf16.mxu0 0
        %3099 = vmatpush1.bf16.msra.mxu0 %v983
        %3100 = vmatprep.subr.bf16.mxu0 0
        %3101 = vmatpush1.bf16.msra.mxu0 %v876
        %3102 = vmatprep.subr.bf16.mxu0 0
        %3103 = vmatpush1.bf16.msra.mxu0 %v769
        %3104 = vmatprep.subr.bf16.mxu0 0
        %3105 = vmatpush1.bf16.msra.mxu0 %v662
        %3106 = vmatprep.subr.bf16.mxu0 0
        %3107 = vmatpush1.bf16.msra.mxu0 %v555
        %3108 = vmatprep.subr.bf16.mxu0 0
        %3109 = vmatpush1.bf16.msra.mxu0 %v448
        %3110 = vmatprep.subr.bf16.mxu0 0
        %3111 = vmatpush2.bf16.msra.mxu0 %v2053
        %3112 = vmatprep.subr.bf16.mxu0 0
        %3113 = vmatpush2.bf16.msra.mxu0 %v1946
        %3114 = vmatprep.subr.bf16.mxu0 0
        %3115 = vmatpush2.bf16.msra.mxu0 %v1839
        %3116 = vmatprep.subr.bf16.mxu0 0
        %3117 = vmatpush2.bf16.msra.mxu0 %v1732
        %3118 = vmatprep.subr.bf16.mxu0 0
        %3119 = vmatpush2.bf16.msra.mxu0 %v1625
        %3120 = vmatprep.subr.bf16.mxu0 0
        %3121 = vmatpush2.bf16.msra.mxu0 %v1518
        %3122 = vmatprep.subr.bf16.mxu0 0
        %3123 = vmatpush2.bf16.msra.mxu0 %v1411
        %3124 = vmatprep.subr.bf16.mxu0 0
        %3125 = vmatpush2.bf16.msra.mxu0 %v1304
        %3126 = vmatprep.mubr.bf16.mxu0 %v3074
        %3127 = vmatmul.mubr.bf16.gmra.mxu0 %v3073
        %v3128 = vpop.f32.mrf.mxu0
        %v3129 = vadd.f32 %v3032, %v3128
        %v3130 = vpop.f32.mrf.mxu0
        %v3131 = vpop.f32.mrf.mxu0
        %v3132 = vadd.f32 %v3037, %v3131
        %v3133 = vpop.f32.mrf.mxu0
        %3134 = vmatprep.mubr.bf16.mxu0 %v3078
        %3135 = vmatmul.mubr.bf16.gmra.mxu0 %v3077
        %v3136 = vpop.f32.mrf.mxu0
        %v3137 = vadd.f32 %v3042, %v3136
        %v3138 = vpop.f32.mrf.mxu0
        %v3139 = vpop.f32.mrf.mxu0
        %v3140 = vadd.f32 %v3047, %v3139
        %v3141 = vpop.f32.mrf.mxu0
        %3142 = vdwg.mxu0
        %3143 = vmatprep.subr.bf16.mxu0 0
        %3144 = vmatpush1.bf16.msra.mxu0 %v2909
        %3145 = vmatprep.subr.bf16.mxu0 0
        %3146 = vmatpush1.bf16.msra.mxu0 %v2802
        %3147 = vmatprep.subr.bf16.mxu0 0
        %3148 = vmatpush1.bf16.msra.mxu0 %v2695
        %3149 = vmatprep.subr.bf16.mxu0 0
        %3150 = vmatpush1.bf16.msra.mxu0 %v2588
        %3151 = vmatprep.subr.bf16.mxu0 0
        %3152 = vmatpush1.bf16.msra.mxu0 %v2481
        %3153 = vmatprep.subr.bf16.mxu0 0
        %3154 = vmatpush1.bf16.msra.mxu0 %v2374
        %3155 = vmatprep.subr.bf16.mxu0 0
        %3156 = vmatpush1.bf16.msra.mxu0 %v2267
        %3157 = vmatprep.subr.bf16.mxu0 0
        %3158 = vmatpush1.bf16.msra.mxu0 %v2160
        %3159 = vmatprep.subr.bf16.mxu0 0
        %3160 = vmatpush2.bf16.msra.mxu0 0
        %3161 = vmatprep.subr.bf16.mxu0 0
        %3162 = vmatpush2.bf16.msra.mxu0 0
        %3163 = vmatprep.subr.bf16.mxu0 0
        %3164 = vmatpush2.bf16.msra.mxu0 0
        %3165 = vmatprep.subr.bf16.mxu0 0
        %3166 = vmatpush2.bf16.msra.mxu0 0
        %3167 = vmatprep.subr.bf16.mxu0 0
        %3168 = vmatpush2.bf16.msra.mxu0 0
        %3169 = vmatprep.subr.bf16.mxu0 0
        %3170 = vmatpush2.bf16.msra.mxu0 0
        %3171 = vmatprep.subr.bf16.mxu0 0
        %3172 = vmatpush2.bf16.msra.mxu0 0
        %3173 = vmatprep.subr.bf16.mxu0 0
        %3174 = vmatpush2.bf16.msra.mxu0 %v3016
        %3175 = vmatprep.mubr.bf16.mxu0 %v3089
        %3176 = vmatmul.mubr.bf16.gmra.mxu0 %v3075
        %v3177 = vpop.f32.mrf.mxu0
        %v3178 = vadd.f32 %v3129, %v3177
        %v3179 = vpop.f32.mrf.mxu0
        %v3180 = vpop.f32.mrf.mxu0
        %v3181 = vadd.f32 %v3132, %v3180
        %v3182 = vpop.f32.mrf.mxu0
        %3183 = vmatprep.mubr.bf16.mxu0 %v3092
        %3184 = vmatmul.mubr.bf16.gmra.mxu0 %v3079
        %v3185 = vpop.f32.mrf.mxu0
        %v3186 = vadd.f32 %v3137, %v3185
        %v3187 = vpop.f32.mrf.mxu0
        %v3188 = vpop.f32.mrf.mxu0
        %v3189 = vadd.f32 %v3140, %v3188
        %v3190 = vpop.f32.mrf.mxu0
        %3191 = vdwg.mxu0
        %v3192 = vxor.u32 %v3178, 2147483648
        %v3193 = vmul.f32 %v3192, 1.442695
        %v3194 = vpow.pop %v3193
        %v3195 = vadd.f32 %v3194, 1.0
        %v3196 = vrcp.pop %v3195
        %v3197 = vmul.f32 1.0, %v3196
        %v3198 = vxor.u32 %v3181, 2147483648
        %v3199 = vmul.f32 %v3198, 1.442695
        %v3200 = vpow.pop %v3199
        %v3201 = vadd.f32 %v3200, 1.0
        %v3202 = vrcp.pop %v3201
        %v3203 = vmul.f32 1.0, %v3202
        %v3204 = vxor.u32 %v3186, 2147483648
        %v3205 = vmul.f32 %v3204, 1.442695
        %v3206 = vpow.pop %v3205
        %v3207 = vadd.f32 %v3206, 1.0
        %v3208 = vrcp.pop %v3207
        %v3209 = vmul.f32 1.0, %v3208
        %v3210 = vtanh.pop %v3189
        %v3211 = vmul.f32 %v3203, %v341
        %v3212 = vmul.f32 %v3197, %v3210
        %v3213 = vadd.f32 %v3211, %v3212
        %v3214 = vtanh.pop %v3213
        %v3215 = vmul.f32 %v3209, %v3214
        %3216 = vst [vmem:[%s7] sm:$0xff] %v3215
        %3217 = vst [vmem:[%s8] sm:$0xff] %v3213
        %s3218 = scalar_lea.vmem %s7, 8
        %v3219 = vld [vmem:[%s3218] sm:$0xff]
        %s3220 = scalar_lea.vmem %s8, 8
        %v3221 = vld [vmem:[%s3220] sm:$0xff]
        %v3222 = vpack.c.bf16 %v3219, %v3215
        %v3223 = vld [vmem:[#allocation4] sm:$0xf]
        %v3224 = vld [vmem:[#allocation4 + $0x4] sm:$0xf]
        %v3225 = vld [vmem:[#allocation4 + $0x8] sm:$0xf]
        %v3226 = vld [vmem:[#allocation4 + $0xc] sm:$0xf]
        %v3227 = vld [vmem:[#allocation4 + $0x10] sm:$0xf]
        %v3228 = vld [vmem:[#allocation4 + $0x14] sm:$0xf]
        %v3229 = vld [vmem:[#allocation4 + $0x18] sm:$0xf]
        %v3230 = vld [vmem:[#allocation4 + $0x1c] sm:$0xf]
        %v3231 = vld [vmem:[#allocation4 + $0x20] sm:$0xf]
        %v3232 = vld [vmem:[#allocation4 + $0x24] sm:$0xf]
        %v3233 = vld [vmem:[#allocation4 + $0x28] sm:$0xf]
        %v3234 = vld [vmem:[#allocation4 + $0x2c] sm:$0xf]
        %v3235 = vld [vmem:[#allocation4 + $0x30] sm:$0xf]
        %v3236 = vld [vmem:[#allocation4 + $0x34] sm:$0xf]
        %v3237 = vld [vmem:[#allocation4 + $0x38] sm:$0xf]
        %v3238 = vld [vmem:[#allocation4 + $0x3c] sm:$0xf]
        %v3255 = vunpack.c.l.b16 %v3223
        %v3256 = vunpack.c.l.b16 %v3224
        %v3257 = vunpack.c.l.b16 %v3225
        %v3258 = vunpack.c.l.b16 %v3226
        %v3259 = vunpack.c.l.b16 %v3227
        %v3260 = vunpack.c.l.b16 %v3228
        %v3261 = vunpack.c.l.b16 %v3229
        %v3262 = vunpack.c.l.b16 %v3230
        %v3263 = vunpack.c.l.b16 %v3231
        %v3264 = vunpack.c.l.b16 %v3232
        %v3265 = vunpack.c.l.b16 %v3233
        %v3266 = vunpack.c.l.b16 %v3234
        %v3267 = vunpack.c.l.b16 %v3235
        %v3268 = vunpack.c.l.b16 %v3236
        %v3269 = vunpack.c.l.b16 %v3237
        %v3270 = vunpack.c.l.b16 %v3238
        %v3271 = vpack.c.b16 %v3256, %v3255
        %v3272 = vpack.c.b16 %v3258, %v3257
        %v3273 = vpack.c.b16 %v3260, %v3259
        %v3274 = vpack.c.b16 %v3262, %v3261
        %v3275 = vpack.c.b16 %v3264, %v3263
        %v3276 = vpack.c.b16 %v3266, %v3265
        %v3277 = vpack.c.b16 %v3268, %v3267
        %v3278 = vpack.c.b16 %v3270, %v3269
        %3287 = vmatprep.subr.bf16.mxu0 0
        %3288 = vmatpush1.bf16.msra.mxu0 %v3278
        %3289 = vmatprep.subr.bf16.mxu0 0
        %3290 = vmatpush1.bf16.msra.mxu0 %v3277
        %3291 = vmatprep.subr.bf16.mxu0 0
        %3292 = vmatpush1.bf16.msra.mxu0 %v3276
        %3293 = vmatprep.subr.bf16.mxu0 0
        %3294 = vmatpush1.bf16.msra.mxu0 %v3275
        %3295 = vmatprep.subr.bf16.mxu0 0
        %3296 = vmatpush1.bf16.msra.mxu0 %v3274
        %3297 = vmatprep.subr.bf16.mxu0 0
        %3298 = vmatpush1.bf16.msra.mxu0 %v3273
        %3299 = vmatprep.subr.bf16.mxu0 0
        %3300 = vmatpush1.bf16.msra.mxu0 %v3272
        %3301 = vmatprep.subr.bf16.mxu0 0
        %3302 = vmatpush1.bf16.msra.mxu0 %v3271
        %3303 = vmatprep.subr.bf16.mxu0 0
        %3304 = vmatpush2.bf16.msra.mxu0 0
        %3305 = vmatprep.subr.bf16.mxu0 0
        %3306 = vmatpush2.bf16.msra.mxu0 0
        %3307 = vmatprep.subr.bf16.mxu0 0
        %3308 = vmatpush2.bf16.msra.mxu0 0
        %3309 = vmatprep.subr.bf16.mxu0 0
        %3310 = vmatpush2.bf16.msra.mxu0 0
        %3311 = vmatprep.subr.bf16.mxu0 0
        %3312 = vmatpush2.bf16.msra.mxu0 0
        %3313 = vmatprep.subr.bf16.mxu0 0
        %3314 = vmatpush2.bf16.msra.mxu0 0
        %3315 = vmatprep.subr.bf16.mxu0 0
        %3316 = vmatpush2.bf16.msra.mxu0 0
        %3317 = vmatprep.subr.bf16.mxu0 0
        %3318 = vmatpush2.bf16.msra.mxu0 0
        %3319 = vmatprep.mubr.bf16.mxu0 0
        %3320 = vmatmul.mubr.bf16.gmra.mxu0 %v3222
        %v3321 = vpop.f32.mrf.mxu0
        %v3322 = vadd.f32 0.0, %v3321
        %v3323 = vpop.f32.mrf.mxu0
        %v3324 = vpop.f32.mrf.mxu0
        %v3325 = vadd.f32 0.0, %v3324
        %v3326 = vpop.f32.mrf.mxu0
        %3327 = vdwg.mxu0
        %v3328 = vpack.c.bf16 %v3325, %v3322
        %v3329 = vld [vmem:[%s449] sm:$0xf]
        %v3330 = vld [vmem:[%s449 + $0x4] sm:$0xf]
        %v3331 = vld [vmem:[%s449 + $0x8] sm:$0xf]
        %v3332 = vld [vmem:[%s449 + $0xc] sm:$0xf]
        %v3333 = vld [vmem:[%s449 + $0x10] sm:$0xf]
        %v3334 = vld [vmem:[%s449 + $0x14] sm:$0xf]
        %v3335 = vld [vmem:[%s449 + $0x18] sm:$0xf]
        %v3336 = vld [vmem:[%s449 + $0x1c] sm:$0xf]
        %v3337 = vld [vmem:[%s449 + $0x20] sm:$0xf]
        %v3338 = vld [vmem:[%s449 + $0x24] sm:$0xf]
        %v3339 = vld [vmem:[%s449 + $0x28] sm:$0xf]
        %v3340 = vld [vmem:[%s449 + $0x2c] sm:$0xf]
        %v3341 = vld [vmem:[%s449 + $0x30] sm:$0xf]
        %v3342 = vld [vmem:[%s449 + $0x34] sm:$0xf]
        %v3343 = vld [vmem:[%s449 + $0x38] sm:$0xf]
        %v3344 = vld [vmem:[%s449 + $0x3c] sm:$0xf]
        %v3361 = vunpack.c.l.b16 %v3329
        %v3362 = vunpack.c.l.b16 %v3330
        %v3363 = vunpack.c.l.b16 %v3331
        %v3364 = vunpack.c.l.b16 %v3332
        %v3365 = vunpack.c.l.b16 %v3333
        %v3366 = vunpack.c.l.b16 %v3334
        %v3367 = vunpack.c.l.b16 %v3335
        %v3368 = vunpack.c.l.b16 %v3336
        %v3369 = vunpack.c.l.b16 %v3337
        %v3370 = vunpack.c.l.b16 %v3338
        %v3371 = vunpack.c.l.b16 %v3339
        %v3372 = vunpack.c.l.b16 %v3340
        %v3373 = vunpack.c.l.b16 %v3341
        %v3374 = vunpack.c.l.b16 %v3342
        %v3375 = vunpack.c.l.b16 %v3343
        %v3376 = vunpack.c.l.b16 %v3344
        %v3377 = vpack.c.b16 %v3362, %v3361
        %v3378 = vpack.c.b16 %v3364, %v3363
        %v3379 = vpack.c.b16 %v3366, %v3365
        %v3380 = vpack.c.b16 %v3368, %v3367
        %v3381 = vpack.c.b16 %v3370, %v3369
        %v3382 = vpack.c.b16 %v3372, %v3371
        %v3383 = vpack.c.b16 %v3374, %v3373
        %v3384 = vpack.c.b16 %v3376, %v3375
        %3393 = vmatprep.subr.bf16.mxu0 0
        %3394 = vmatpush1.bf16.msra.mxu0 %v3384
        %3395 = vmatprep.subr.bf16.mxu0 0
        %3396 = vmatpush1.bf16.msra.mxu0 %v3383
        %3397 = vmatprep.subr.bf16.mxu0 0
        %3398 = vmatpush1.bf16.msra.mxu0 %v3382
        %3399 = vmatprep.subr.bf16.mxu0 0
        %3400 = vmatpush1.bf16.msra.mxu0 %v3381
        %3401 = vmatprep.subr.bf16.mxu0 0
        %3402 = vmatpush1.bf16.msra.mxu0 %v3380
        %3403 = vmatprep.subr.bf16.mxu0 0
        %3404 = vmatpush1.bf16.msra.mxu0 %v3379
        %3405 = vmatprep.subr.bf16.mxu0 0
        %3406 = vmatpush1.bf16.msra.mxu0 %v3378
        %3407 = vmatprep.subr.bf16.mxu0 0
        %3408 = vmatpush1.bf16.msra.mxu0 %v3377
        %3409 = vmatprep.subr.bf16.mxu0 0
        %3410 = vmatpush2.bf16.msra.mxu0 0
        %3411 = vmatprep.subr.bf16.mxu0 0
        %3412 = vmatpush2.bf16.msra.mxu0 0
        %3413 = vmatprep.subr.bf16.mxu0 0
        %3414 = vmatpush2.bf16.msra.mxu0 0
        %3415 = vmatprep.subr.bf16.mxu0 0
        %3416 = vmatpush2.bf16.msra.mxu0 0
        %3417 = vmatprep.subr.bf16.mxu0 0
        %3418 = vmatpush2.bf16.msra.mxu0 0
        %3419 = vmatprep.subr.bf16.mxu0 0
        %3420 = vmatpush2.bf16.msra.mxu0 0
        %3421 = vmatprep.subr.bf16.mxu0 0
        %3422 = vmatpush2.bf16.msra.mxu0 0
        %3423 = vmatprep.subr.bf16.mxu0 0
        %3424 = vmatpush2.bf16.msra.mxu0 0
        %3425 = vmatprep.mubr.bf16.mxu0 0
        %3426 = vmatmul.mubr.bf16.gmra.mxu0 %v3222
        %v3427 = vpop.f32.mrf.mxu0
        %v3428 = vadd.f32 0.0, %v3427
        %v3429 = vpop.f32.mrf.mxu0
        %v3430 = vpop.f32.mrf.mxu0
        %v3431 = vadd.f32 0.0, %v3430
        %v3432 = vpop.f32.mrf.mxu0
        %3433 = vdwg.mxu0
        %v3434 = vpack.c.bf16 %v3431, %v3428
        %v3435 = vld [vmem:[%s556] sm:$0xf]
        %v3436 = vld [vmem:[%s556 + $0x4] sm:$0xf]
        %v3437 = vld [vmem:[%s556 + $0x8] sm:$0xf]
        %v3438 = vld [vmem:[%s556 + $0xc] sm:$0xf]
        %v3439 = vld [vmem:[%s556 + $0x10] sm:$0xf]
        %v3440 = vld [vmem:[%s556 + $0x14] sm:$0xf]
        %v3441 = vld [vmem:[%s556 + $0x18] sm:$0xf]
        %v3442 = vld [vmem:[%s556 + $0x1c] sm:$0xf]
        %v3443 = vld [vmem:[%s556 + $0x20] sm:$0xf]
        %v3444 = vld [vmem:[%s556 + $0x24] sm:$0xf]
        %v3445 = vld [vmem:[%s556 + $0x28] sm:$0xf]
        %v3446 = vld [vmem:[%s556 + $0x2c] sm:$0xf]
        %v3447 = vld [vmem:[%s556 + $0x30] sm:$0xf]
        %v3448 = vld [vmem:[%s556 + $0x34] sm:$0xf]
        %v3449 = vld [vmem:[%s556 + $0x38] sm:$0xf]
        %v3450 = vld [vmem:[%s556 + $0x3c] sm:$0xf]
        %v3467 = vunpack.c.l.b16 %v3435
        %v3468 = vunpack.c.l.b16 %v3436
        %v3469 = vunpack.c.l.b16 %v3437
        %v3470 = vunpack.c.l.b16 %v3438
        %v3471 = vunpack.c.l.b16 %v3439
        %v3472 = vunpack.c.l.b16 %v3440
        %v3473 = vunpack.c.l.b16 %v3441
        %v3474 = vunpack.c.l.b16 %v3442
        %v3475 = vunpack.c.l.b16 %v3443
        %v3476 = vunpack.c.l.b16 %v3444
        %v3477 = vunpack.c.l.b16 %v3445
        %v3478 = vunpack.c.l.b16 %v3446
        %v3479 = vunpack.c.l.b16 %v3447
        %v3480 = vunpack.c.l.b16 %v3448
        %v3481 = vunpack.c.l.b16 %v3449
        %v3482 = vunpack.c.l.b16 %v3450
        %v3483 = vpack.c.b16 %v3468, %v3467
        %v3484 = vpack.c.b16 %v3470, %v3469
        %v3485 = vpack.c.b16 %v3472, %v3471
        %v3486 = vpack.c.b16 %v3474, %v3473
        %v3487 = vpack.c.b16 %v3476, %v3475
        %v3488 = vpack.c.b16 %v3478, %v3477
        %v3489 = vpack.c.b16 %v3480, %v3479
        %v3490 = vpack.c.b16 %v3482, %v3481
        %3499 = vmatprep.subr.bf16.mxu0 0
        %3500 = vmatpush1.bf16.msra.mxu0 %v3490
        %3501 = vmatprep.subr.bf16.mxu0 0
        %3502 = vmatpush1.bf16.msra.mxu0 %v3489
        %3503 = vmatprep.subr.bf16.mxu0 0
        %3504 = vmatpush1.bf16.msra.mxu0 %v3488
        %3505 = vmatprep.subr.bf16.mxu0 0
        %3506 = vmatpush1.bf16.msra.mxu0 %v3487
        %3507 = vmatprep.subr.bf16.mxu0 0
        %3508 = vmatpush1.bf16.msra.mxu0 %v3486
        %3509 = vmatprep.subr.bf16.mxu0 0
        %3510 = vmatpush1.bf16.msra.mxu0 %v3485
        %3511 = vmatprep.subr.bf16.mxu0 0
        %3512 = vmatpush1.bf16.msra.mxu0 %v3484
        %3513 = vmatprep.subr.bf16.mxu0 0
        %3514 = vmatpush1.bf16.msra.mxu0 %v3483
        %3515 = vmatprep.subr.bf16.mxu0 0
        %3516 = vmatpush2.bf16.msra.mxu0 0
        %3517 = vmatprep.subr.bf16.mxu0 0
        %3518 = vmatpush2.bf16.msra.mxu0 0
        %3519 = vmatprep.subr.bf16.mxu0 0
        %3520 = vmatpush2.bf16.msra.mxu0 0
        %3521 = vmatprep.subr.bf16.mxu0 0
        %3522 = vmatpush2.bf16.msra.mxu0 0
        %3523 = vmatprep.subr.bf16.mxu0 0
        %3524 = vmatpush2.bf16.msra.mxu0 0
        %3525 = vmatprep.subr.bf16.mxu0 0
        %3526 = vmatpush2.bf16.msra.mxu0 0
        %3527 = vmatprep.subr.bf16.mxu0 0
        %3528 = vmatpush2.bf16.msra.mxu0 0
        %3529 = vmatprep.subr.bf16.mxu0 0
        %3530 = vmatpush2.bf16.msra.mxu0 0
        %3531 = vmatprep.mubr.bf16.mxu0 0
        %3532 = vmatmul.mubr.bf16.gmra.mxu0 %v3222
        %v3533 = vpop.f32.mrf.mxu0
        %v3534 = vadd.f32 0.0, %v3533
        %v3535 = vpop.f32.mrf.mxu0
        %v3536 = vpop.f32.mrf.mxu0
        %v3537 = vadd.f32 0.0, %v3536
        %v3538 = vpop.f32.mrf.mxu0
        %3539 = vdwg.mxu0
        %v3540 = vpack.c.bf16 %v3537, %v3534
        %v3541 = vld [vmem:[%s663] sm:$0xf]
        %v3542 = vld [vmem:[%s663 + $0x4] sm:$0xf]
        %v3543 = vld [vmem:[%s663 + $0x8] sm:$0xf]
        %v3544 = vld [vmem:[%s663 + $0xc] sm:$0xf]
        %v3545 = vld [vmem:[%s663 + $0x10] sm:$0xf]
        %v3546 = vld [vmem:[%s663 + $0x14] sm:$0xf]
        %v3547 = vld [vmem:[%s663 + $0x18] sm:$0xf]
        %v3548 = vld [vmem:[%s663 + $0x1c] sm:$0xf]
        %v3549 = vld [vmem:[%s663 + $0x20] sm:$0xf]
        %v3550 = vld [vmem:[%s663 + $0x24] sm:$0xf]
        %v3551 = vld [vmem:[%s663 + $0x28] sm:$0xf]
        %v3552 = vld [vmem:[%s663 + $0x2c] sm:$0xf]
        %v3553 = vld [vmem:[%s663 + $0x30] sm:$0xf]
        %v3554 = vld [vmem:[%s663 + $0x34] sm:$0xf]
        %v3555 = vld [vmem:[%s663 + $0x38] sm:$0xf]
        %v3556 = vld [vmem:[%s663 + $0x3c] sm:$0xf]
        %v3573 = vunpack.c.l.b16 %v3541
        %v3574 = vunpack.c.l.b16 %v3542
        %v3575 = vunpack.c.l.b16 %v3543
        %v3576 = vunpack.c.l.b16 %v3544
        %v3577 = vunpack.c.l.b16 %v3545
        %v3578 = vunpack.c.l.b16 %v3546
        %v3579 = vunpack.c.l.b16 %v3547
        %v3580 = vunpack.c.l.b16 %v3548
        %v3581 = vunpack.c.l.b16 %v3549
        %v3582 = vunpack.c.l.b16 %v3550
        %v3583 = vunpack.c.l.b16 %v3551
        %v3584 = vunpack.c.l.b16 %v3552
        %v3585 = vunpack.c.l.b16 %v3553
        %v3586 = vunpack.c.l.b16 %v3554
        %v3587 = vunpack.c.l.b16 %v3555
        %v3588 = vunpack.c.l.b16 %v3556
        %v3589 = vpack.c.b16 %v3574, %v3573
        %v3590 = vpack.c.b16 %v3576, %v3575
        %v3591 = vpack.c.b16 %v3578, %v3577
        %v3592 = vpack.c.b16 %v3580, %v3579
        %v3593 = vpack.c.b16 %v3582, %v3581
        %v3594 = vpack.c.b16 %v3584, %v3583
        %v3595 = vpack.c.b16 %v3586, %v3585
        %v3596 = vpack.c.b16 %v3588, %v3587
        %3605 = vmatprep.subr.bf16.mxu0 0
        %3606 = vmatpush1.bf16.msra.mxu0 %v3596
        %3607 = vmatprep.subr.bf16.mxu0 0
        %3608 = vmatpush1.bf16.msra.mxu0 %v3595
        %3609 = vmatprep.subr.bf16.mxu0 0
        %3610 = vmatpush1.bf16.msra.mxu0 %v3594
        %3611 = vmatprep.subr.bf16.mxu0 0
        %3612 = vmatpush1.bf16.msra.mxu0 %v3593
        %3613 = vmatprep.subr.bf16.mxu0 0
        %3614 = vmatpush1.bf16.msra.mxu0 %v3592
        %3615 = vmatprep.subr.bf16.mxu0 0
        %3616 = vmatpush1.bf16.msra.mxu0 %v3591
        %3617 = vmatprep.subr.bf16.mxu0 0
        %3618 = vmatpush1.bf16.msra.mxu0 %v3590
        %3619 = vmatprep.subr.bf16.mxu0 0
        %3620 = vmatpush1.bf16.msra.mxu0 %v3589
        %3621 = vmatprep.subr.bf16.mxu0 0
        %3622 = vmatpush2.bf16.msra.mxu0 0
        %3623 = vmatprep.subr.bf16.mxu0 0
        %3624 = vmatpush2.bf16.msra.mxu0 0
        %3625 = vmatprep.subr.bf16.mxu0 0
        %3626 = vmatpush2.bf16.msra.mxu0 0
        %3627 = vmatprep.subr.bf16.mxu0 0
        %3628 = vmatpush2.bf16.msra.mxu0 0
        %3629 = vmatprep.subr.bf16.mxu0 0
        %3630 = vmatpush2.bf16.msra.mxu0 0
        %3631 = vmatprep.subr.bf16.mxu0 0
        %3632 = vmatpush2.bf16.msra.mxu0 0
        %3633 = vmatprep.subr.bf16.mxu0 0
        %3634 = vmatpush2.bf16.msra.mxu0 0
        %3635 = vmatprep.subr.bf16.mxu0 0
        %3636 = vmatpush2.bf16.msra.mxu0 0
        %3637 = vmatprep.mubr.bf16.mxu0 0
        %3638 = vmatmul.mubr.bf16.gmra.mxu0 %v3222
        %v3639 = vpop.f32.mrf.mxu0
        %v3640 = vadd.f32 0.0, %v3639
        %v3641 = vpop.f32.mrf.mxu0
        %v3642 = vpop.f32.mrf.mxu0
        %v3643 = vadd.f32 0.0, %v3642
        %v3644 = vpop.f32.mrf.mxu0
        %3645 = vdwg.mxu0
        %v3646 = vpack.c.bf16 %v3643, %v3640
        %v3647 = vld [vmem:[%s770] sm:$0xf]
        %v3648 = vld [vmem:[%s770 + $0x4] sm:$0xf]
        %v3649 = vld [vmem:[%s770 + $0x8] sm:$0xf]
        %v3650 = vld [vmem:[%s770 + $0xc] sm:$0xf]
        %v3651 = vld [vmem:[%s770 + $0x10] sm:$0xf]
        %v3652 = vld [vmem:[%s770 + $0x14] sm:$0xf]
        %v3653 = vld [vmem:[%s770 + $0x18] sm:$0xf]
        %v3654 = vld [vmem:[%s770 + $0x1c] sm:$0xf]
        %v3655 = vld [vmem:[%s770 + $0x20] sm:$0xf]
        %v3656 = vld [vmem:[%s770 + $0x24] sm:$0xf]
        %v3657 = vld [vmem:[%s770 + $0x28] sm:$0xf]
        %v3658 = vld [vmem:[%s770 + $0x2c] sm:$0xf]
        %v3659 = vld [vmem:[%s770 + $0x30] sm:$0xf]
        %v3660 = vld [vmem:[%s770 + $0x34] sm:$0xf]
        %v3661 = vld [vmem:[%s770 + $0x38] sm:$0xf]
        %v3662 = vld [vmem:[%s770 + $0x3c] sm:$0xf]
        %v3679 = vunpack.c.l.b16 %v3647
        %v3680 = vunpack.c.l.b16 %v3648
        %v3681 = vunpack.c.l.b16 %v3649
        %v3682 = vunpack.c.l.b16 %v3650
        %v3683 = vunpack.c.l.b16 %v3651
        %v3684 = vunpack.c.l.b16 %v3652
        %v3685 = vunpack.c.l.b16 %v3653
        %v3686 = vunpack.c.l.b16 %v3654
        %v3687 = vunpack.c.l.b16 %v3655
        %v3688 = vunpack.c.l.b16 %v3656
        %v3689 = vunpack.c.l.b16 %v3657
        %v3690 = vunpack.c.l.b16 %v3658
        %v3691 = vunpack.c.l.b16 %v3659
        %v3692 = vunpack.c.l.b16 %v3660
        %v3693 = vunpack.c.l.b16 %v3661
        %v3694 = vunpack.c.l.b16 %v3662
        %v3695 = vpack.c.b16 %v3680, %v3679
        %v3696 = vpack.c.b16 %v3682, %v3681
        %v3697 = vpack.c.b16 %v3684, %v3683
        %v3698 = vpack.c.b16 %v3686, %v3685
        %v3699 = vpack.c.b16 %v3688, %v3687
        %v3700 = vpack.c.b16 %v3690, %v3689
        %v3701 = vpack.c.b16 %v3692, %v3691
        %v3702 = vpack.c.b16 %v3694, %v3693
        %3711 = vmatprep.subr.bf16.mxu0 0
        %3712 = vmatpush1.bf16.msra.mxu0 %v3702
        %3713 = vmatprep.subr.bf16.mxu0 0
        %3714 = vmatpush1.bf16.msra.mxu0 %v3701
        %3715 = vmatprep.subr.bf16.mxu0 0
        %3716 = vmatpush1.bf16.msra.mxu0 %v3700
        %3717 = vmatprep.subr.bf16.mxu0 0
        %3718 = vmatpush1.bf16.msra.mxu0 %v3699
        %3719 = vmatprep.subr.bf16.mxu0 0
        %3720 = vmatpush1.bf16.msra.mxu0 %v3698
        %3721 = vmatprep.subr.bf16.mxu0 0
        %3722 = vmatpush1.bf16.msra.mxu0 %v3697
        %3723 = vmatprep.subr.bf16.mxu0 0
        %3724 = vmatpush1.bf16.msra.mxu0 %v3696
        %3725 = vmatprep.subr.bf16.mxu0 0
        %3726 = vmatpush1.bf16.msra.mxu0 %v3695
        %3727 = vmatprep.subr.bf16.mxu0 0
        %3728 = vmatpush2.bf16.msra.mxu0 0
        %3729 = vmatprep.subr.bf16.mxu0 0
        %3730 = vmatpush2.bf16.msra.mxu0 0
        %3731 = vmatprep.subr.bf16.mxu0 0
        %3732 = vmatpush2.bf16.msra.mxu0 0
        %3733 = vmatprep.subr.bf16.mxu0 0
        %3734 = vmatpush2.bf16.msra.mxu0 0
        %3735 = vmatprep.subr.bf16.mxu0 0
        %3736 = vmatpush2.bf16.msra.mxu0 0
        %3737 = vmatprep.subr.bf16.mxu0 0
        %3738 = vmatpush2.bf16.msra.mxu0 0
        %3739 = vmatprep.subr.bf16.mxu0 0
        %3740 = vmatpush2.bf16.msra.mxu0 0
        %3741 = vmatprep.subr.bf16.mxu0 0
        %3742 = vmatpush2.bf16.msra.mxu0 0
        %3743 = vmatprep.mubr.bf16.mxu0 0
        %3744 = vmatmul.mubr.bf16.gmra.mxu0 %v3222
        %v3745 = vpop.f32.mrf.mxu0
        %v3746 = vadd.f32 0.0, %v3745
        %v3747 = vpop.f32.mrf.mxu0
        %v3748 = vpop.f32.mrf.mxu0
        %v3749 = vadd.f32 0.0, %v3748
        %v3750 = vpop.f32.mrf.mxu0
        %3751 = vdwg.mxu0
        %v3752 = vpack.c.bf16 %v3749, %v3746
        %v3753 = vld [vmem:[%s877] sm:$0xf]
        %v3754 = vld [vmem:[%s877 + $0x4] sm:$0xf]
        %v3755 = vld [vmem:[%s877 + $0x8] sm:$0xf]
        %v3756 = vld [vmem:[%s877 + $0xc] sm:$0xf]
        %v3757 = vld [vmem:[%s877 + $0x10] sm:$0xf]
        %v3758 = vld [vmem:[%s877 + $0x14] sm:$0xf]
        %v3759 = vld [vmem:[%s877 + $0x18] sm:$0xf]
        %v3760 = vld [vmem:[%s877 + $0x1c] sm:$0xf]
        %v3761 = vld [vmem:[%s877 + $0x20] sm:$0xf]
        %v3762 = vld [vmem:[%s877 + $0x24] sm:$0xf]
        %v3763 = vld [vmem:[%s877 + $0x28] sm:$0xf]
        %v3764 = vld [vmem:[%s877 + $0x2c] sm:$0xf]
        %v3765 = vld [vmem:[%s877 + $0x30] sm:$0xf]
        %v3766 = vld [vmem:[%s877 + $0x34] sm:$0xf]
        %v3767 = vld [vmem:[%s877 + $0x38] sm:$0xf]
        %v3768 = vld [vmem:[%s877 + $0x3c] sm:$0xf]
        %v3785 = vunpack.c.l.b16 %v3753
        %v3786 = vunpack.c.l.b16 %v3754
        %v3787 = vunpack.c.l.b16 %v3755
        %v3788 = vunpack.c.l.b16 %v3756
        %v3789 = vunpack.c.l.b16 %v3757
        %v3790 = vunpack.c.l.b16 %v3758
        %v3791 = vunpack.c.l.b16 %v3759
        %v3792 = vunpack.c.l.b16 %v3760
        %v3793 = vunpack.c.l.b16 %v3761
        %v3794 = vunpack.c.l.b16 %v3762
        %v3795 = vunpack.c.l.b16 %v3763
        %v3796 = vunpack.c.l.b16 %v3764
        %v3797 = vunpack.c.l.b16 %v3765
        %v3798 = vunpack.c.l.b16 %v3766
        %v3799 = vunpack.c.l.b16 %v3767
        %v3800 = vunpack.c.l.b16 %v3768
        %v3801 = vpack.c.b16 %v3786, %v3785
        %v3802 = vpack.c.b16 %v3788, %v3787
        %v3803 = vpack.c.b16 %v3790, %v3789
        %v3804 = vpack.c.b16 %v3792, %v3791
        %v3805 = vpack.c.b16 %v3794, %v3793
        %v3806 = vpack.c.b16 %v3796, %v3795
        %v3807 = vpack.c.b16 %v3798, %v3797
        %v3808 = vpack.c.b16 %v3800, %v3799
        %3817 = vmatprep.subr.bf16.mxu0 0
        %3818 = vmatpush1.bf16.msra.mxu0 %v3808
        %3819 = vmatprep.subr.bf16.mxu0 0
        %3820 = vmatpush1.bf16.msra.mxu0 %v3807
        %3821 = vmatprep.subr.bf16.mxu0 0
        %3822 = vmatpush1.bf16.msra.mxu0 %v3806
        %3823 = vmatprep.subr.bf16.mxu0 0
        %3824 = vmatpush1.bf16.msra.mxu0 %v3805
        %3825 = vmatprep.subr.bf16.mxu0 0
        %3826 = vmatpush1.bf16.msra.mxu0 %v3804
        %3827 = vmatprep.subr.bf16.mxu0 0
        %3828 = vmatpush1.bf16.msra.mxu0 %v3803
        %3829 = vmatprep.subr.bf16.mxu0 0
        %3830 = vmatpush1.bf16.msra.mxu0 %v3802
        %3831 = vmatprep.subr.bf16.mxu0 0
        %3832 = vmatpush1.bf16.msra.mxu0 %v3801
        %3833 = vmatprep.subr.bf16.mxu0 0
        %3834 = vmatpush2.bf16.msra.mxu0 0
        %3835 = vmatprep.subr.bf16.mxu0 0
        %3836 = vmatpush2.bf16.msra.mxu0 0
        %3837 = vmatprep.subr.bf16.mxu0 0
        %3838 = vmatpush2.bf16.msra.mxu0 0
        %3839 = vmatprep.subr.bf16.mxu0 0
        %3840 = vmatpush2.bf16.msra.mxu0 0
        %3841 = vmatprep.subr.bf16.mxu0 0
        %3842 = vmatpush2.bf16.msra.mxu0 0
        %3843 = vmatprep.subr.bf16.mxu0 0
        %3844 = vmatpush2.bf16.msra.mxu0 0
        %3845 = vmatprep.subr.bf16.mxu0 0
        %3846 = vmatpush2.bf16.msra.mxu0 0
        %3847 = vmatprep.subr.bf16.mxu0 0
        %3848 = vmatpush2.bf16.msra.mxu0 0
        %3849 = vmatprep.mubr.bf16.mxu0 0
        %3850 = vmatmul.mubr.bf16.gmra.mxu0 %v3222
        %v3851 = vpop.f32.mrf.mxu0
        %v3852 = vadd.f32 0.0, %v3851
        %v3853 = vpop.f32.mrf.mxu0
        %v3854 = vpop.f32.mrf.mxu0
        %v3855 = vadd.f32 0.0, %v3854
        %v3856 = vpop.f32.mrf.mxu0
        %3857 = vdwg.mxu0
        %v3858 = vpack.c.bf16 %v3855, %v3852
        %v3859 = vld [vmem:[%s984] sm:$0xf]
        %v3860 = vld [vmem:[%s984 + $0x4] sm:$0xf]
        %v3861 = vld [vmem:[%s984 + $0x8] sm:$0xf]
        %v3862 = vld [vmem:[%s984 + $0xc] sm:$0xf]
        %v3863 = vld [vmem:[%s984 + $0x10] sm:$0xf]
        %v3864 = vld [vmem:[%s984 + $0x14] sm:$0xf]
        %v3865 = vld [vmem:[%s984 + $0x18] sm:$0xf]
        %v3866 = vld [vmem:[%s984 + $0x1c] sm:$0xf]
        %v3867 = vld [vmem:[%s984 + $0x20] sm:$0xf]
        %v3868 = vld [vmem:[%s984 + $0x24] sm:$0xf]
        %v3869 = vld [vmem:[%s984 + $0x28] sm:$0xf]
        %v3870 = vld [vmem:[%s984 + $0x2c] sm:$0xf]
        %v3871 = vld [vmem:[%s984 + $0x30] sm:$0xf]
        %v3872 = vld [vmem:[%s984 + $0x34] sm:$0xf]
        %v3873 = vld [vmem:[%s984 + $0x38] sm:$0xf]
        %v3874 = vld [vmem:[%s984 + $0x3c] sm:$0xf]
        %v3891 = vunpack.c.l.b16 %v3859
        %v3892 = vunpack.c.l.b16 %v3860
        %v3893 = vunpack.c.l.b16 %v3861
        %v3894 = vunpack.c.l.b16 %v3862
        %v3895 = vunpack.c.l.b16 %v3863
        %v3896 = vunpack.c.l.b16 %v3864
        %v3897 = vunpack.c.l.b16 %v3865
        %v3898 = vunpack.c.l.b16 %v3866
        %v3899 = vunpack.c.l.b16 %v3867
        %v3900 = vunpack.c.l.b16 %v3868
        %v3901 = vunpack.c.l.b16 %v3869
        %v3902 = vunpack.c.l.b16 %v3870
        %v3903 = vunpack.c.l.b16 %v3871
        %v3904 = vunpack.c.l.b16 %v3872
        %v3905 = vunpack.c.l.b16 %v3873
        %v3906 = vunpack.c.l.b16 %v3874
        %v3907 = vpack.c.b16 %v3892, %v3891
        %v3908 = vpack.c.b16 %v3894, %v3893
        %v3909 = vpack.c.b16 %v3896, %v3895
        %v3910 = vpack.c.b16 %v3898, %v3897
        %v3911 = vpack.c.b16 %v3900, %v3899
        %v3912 = vpack.c.b16 %v3902, %v3901
        %v3913 = vpack.c.b16 %v3904, %v3903
        %v3914 = vpack.c.b16 %v3906, %v3905
        %3923 = vmatprep.subr.bf16.mxu0 0
        %3924 = vmatpush1.bf16.msra.mxu0 %v3914
        %3925 = vmatprep.subr.bf16.mxu0 0
        %3926 = vmatpush1.bf16.msra.mxu0 %v3913
        %3927 = vmatprep.subr.bf16.mxu0 0
        %3928 = vmatpush1.bf16.msra.mxu0 %v3912
        %3929 = vmatprep.subr.bf16.mxu0 0
        %3930 = vmatpush1.bf16.msra.mxu0 %v3911
        %3931 = vmatprep.subr.bf16.mxu0 0
        %3932 = vmatpush1.bf16.msra.mxu0 %v3910
        %3933 = vmatprep.subr.bf16.mxu0 0
        %3934 = vmatpush1.bf16.msra.mxu0 %v3909
        %3935 = vmatprep.subr.bf16.mxu0 0
        %3936 = vmatpush1.bf16.msra.mxu0 %v3908
        %3937 = vmatprep.subr.bf16.mxu0 0
        %3938 = vmatpush1.bf16.msra.mxu0 %v3907
        %3939 = vmatprep.subr.bf16.mxu0 0
        %3940 = vmatpush2.bf16.msra.mxu0 0
        %3941 = vmatprep.subr.bf16.mxu0 0
        %3942 = vmatpush2.bf16.msra.mxu0 0
        %3943 = vmatprep.subr.bf16.mxu0 0
        %3944 = vmatpush2.bf16.msra.mxu0 0
        %3945 = vmatprep.subr.bf16.mxu0 0
        %3946 = vmatpush2.bf16.msra.mxu0 0
        %3947 = vmatprep.subr.bf16.mxu0 0
        %3948 = vmatpush2.bf16.msra.mxu0 0
        %3949 = vmatprep.subr.bf16.mxu0 0
        %3950 = vmatpush2.bf16.msra.mxu0 0
        %3951 = vmatprep.subr.bf16.mxu0 0
        %3952 = vmatpush2.bf16.msra.mxu0 0
        %3953 = vmatprep.subr.bf16.mxu0 0
        %3954 = vmatpush2.bf16.msra.mxu0 0
        %3955 = vmatprep.mubr.bf16.mxu0 0
        %3956 = vmatmul.mubr.bf16.gmra.mxu0 %v3222
        %v3957 = vpop.f32.mrf.mxu0
        %v3958 = vadd.f32 0.0, %v3957
        %v3959 = vpop.f32.mrf.mxu0
        %v3960 = vpop.f32.mrf.mxu0
        %v3961 = vadd.f32 0.0, %v3960
        %v3962 = vpop.f32.mrf.mxu0
        %3963 = vdwg.mxu0
        %v3964 = vpack.c.bf16 %v3961, %v3958
        %v3965 = vld [vmem:[%s1091] sm:$0xf]
        %v3966 = vld [vmem:[%s1091 + $0x4] sm:$0xf]
        %v3967 = vld [vmem:[%s1091 + $0x8] sm:$0xf]
        %v3968 = vld [vmem:[%s1091 + $0xc] sm:$0xf]
        %v3969 = vld [vmem:[%s1091 + $0x10] sm:$0xf]
        %v3970 = vld [vmem:[%s1091 + $0x14] sm:$0xf]
        %v3971 = vld [vmem:[%s1091 + $0x18] sm:$0xf]
        %v3972 = vld [vmem:[%s1091 + $0x1c] sm:$0xf]
        %v3973 = vld [vmem:[%s1091 + $0x20] sm:$0xf]
        %v3974 = vld [vmem:[%s1091 + $0x24] sm:$0xf]
        %v3975 = vld [vmem:[%s1091 + $0x28] sm:$0xf]
        %v3976 = vld [vmem:[%s1091 + $0x2c] sm:$0xf]
        %v3977 = vld [vmem:[%s1091 + $0x30] sm:$0xf]
        %v3978 = vld [vmem:[%s1091 + $0x34] sm:$0xf]
        %v3979 = vld [vmem:[%s1091 + $0x38] sm:$0xf]
        %v3980 = vld [vmem:[%s1091 + $0x3c] sm:$0xf]
        %v3997 = vunpack.c.l.b16 %v3965
        %v3998 = vunpack.c.l.b16 %v3966
        %v3999 = vunpack.c.l.b16 %v3967
        %v4000 = vunpack.c.l.b16 %v3968
        %v4001 = vunpack.c.l.b16 %v3969
        %v4002 = vunpack.c.l.b16 %v3970
        %v4003 = vunpack.c.l.b16 %v3971
        %v4004 = vunpack.c.l.b16 %v3972
        %v4005 = vunpack.c.l.b16 %v3973
        %v4006 = vunpack.c.l.b16 %v3974
        %v4007 = vunpack.c.l.b16 %v3975
        %v4008 = vunpack.c.l.b16 %v3976
        %v4009 = vunpack.c.l.b16 %v3977
        %v4010 = vunpack.c.l.b16 %v3978
        %v4011 = vunpack.c.l.b16 %v3979
        %v4012 = vunpack.c.l.b16 %v3980
        %v4013 = vpack.c.b16 %v3998, %v3997
        %v4014 = vpack.c.b16 %v4000, %v3999
        %v4015 = vpack.c.b16 %v4002, %v4001
        %v4016 = vpack.c.b16 %v4004, %v4003
        %v4017 = vpack.c.b16 %v4006, %v4005
        %v4018 = vpack.c.b16 %v4008, %v4007
        %v4019 = vpack.c.b16 %v4010, %v4009
        %v4020 = vpack.c.b16 %v4012, %v4011
        %4029 = vmatprep.subr.bf16.mxu0 0
        %4030 = vmatpush1.bf16.msra.mxu0 %v4020
        %4031 = vmatprep.subr.bf16.mxu0 0
        %4032 = vmatpush1.bf16.msra.mxu0 %v4019
        %4033 = vmatprep.subr.bf16.mxu0 0
        %4034 = vmatpush1.bf16.msra.mxu0 %v4018
        %4035 = vmatprep.subr.bf16.mxu0 0
        %4036 = vmatpush1.bf16.msra.mxu0 %v4017
        %4037 = vmatprep.subr.bf16.mxu0 0
        %4038 = vmatpush1.bf16.msra.mxu0 %v4016
        %4039 = vmatprep.subr.bf16.mxu0 0
        %4040 = vmatpush1.bf16.msra.mxu0 %v4015
        %4041 = vmatprep.subr.bf16.mxu0 0
        %4042 = vmatpush1.bf16.msra.mxu0 %v4014
        %4043 = vmatprep.subr.bf16.mxu0 0
        %4044 = vmatpush1.bf16.msra.mxu0 %v4013
        %4045 = vmatprep.subr.bf16.mxu0 0
        %4046 = vmatpush2.bf16.msra.mxu0 0
        %4047 = vmatprep.subr.bf16.mxu0 0
        %4048 = vmatpush2.bf16.msra.mxu0 0
        %4049 = vmatprep.subr.bf16.mxu0 0
        %4050 = vmatpush2.bf16.msra.mxu0 0
        %4051 = vmatprep.subr.bf16.mxu0 0
        %4052 = vmatpush2.bf16.msra.mxu0 0
        %4053 = vmatprep.subr.bf16.mxu0 0
        %4054 = vmatpush2.bf16.msra.mxu0 0
        %4055 = vmatprep.subr.bf16.mxu0 0
        %4056 = vmatpush2.bf16.msra.mxu0 0
        %4057 = vmatprep.subr.bf16.mxu0 0
        %4058 = vmatpush2.bf16.msra.mxu0 0
        %4059 = vmatprep.subr.bf16.mxu0 0
        %4060 = vmatpush2.bf16.msra.mxu0 0
        %4061 = vmatprep.mubr.bf16.mxu0 0
        %4062 = vmatmul.mubr.bf16.gmra.mxu0 %v3222
        %v4063 = vpop.f32.mrf.mxu0
        %v4064 = vadd.f32 0.0, %v4063
        %v4065 = vpop.f32.mrf.mxu0
        %v4066 = vpop.f32.mrf.mxu0
        %v4067 = vadd.f32 0.0, %v4066
        %v4068 = vpop.f32.mrf.mxu0
        %4069 = vdwg.mxu0
        %v4070 = vpack.c.bf16 %v4067, %v4064
        %v4071 = vld [vmem:[%s1198] sm:$0xf]
        %v4072 = vld [vmem:[%s1198 + $0x4] sm:$0xf]
        %v4073 = vld [vmem:[%s1198 + $0x8] sm:$0xf]
        %v4074 = vld [vmem:[%s1198 + $0xc] sm:$0xf]
        %v4075 = vld [vmem:[%s1198 + $0x10] sm:$0xf]
        %v4076 = vld [vmem:[%s1198 + $0x14] sm:$0xf]
        %v4077 = vld [vmem:[%s1198 + $0x18] sm:$0xf]
        %v4078 = vld [vmem:[%s1198 + $0x1c] sm:$0xf]
        %v4079 = vld [vmem:[%s1198 + $0x20] sm:$0xf]
        %v4080 = vld [vmem:[%s1198 + $0x24] sm:$0xf]
        %v4081 = vld [vmem:[%s1198 + $0x28] sm:$0xf]
        %v4082 = vld [vmem:[%s1198 + $0x2c] sm:$0xf]
        %v4083 = vld [vmem:[%s1198 + $0x30] sm:$0xf]
        %v4084 = vld [vmem:[%s1198 + $0x34] sm:$0xf]
        %v4085 = vld [vmem:[%s1198 + $0x38] sm:$0xf]
        %v4086 = vld [vmem:[%s1198 + $0x3c] sm:$0xf]
        %v4103 = vunpack.c.l.b16 %v4071
        %v4104 = vunpack.c.l.b16 %v4072
        %v4105 = vunpack.c.l.b16 %v4073
        %v4106 = vunpack.c.l.b16 %v4074
        %v4107 = vunpack.c.l.b16 %v4075
        %v4108 = vunpack.c.l.b16 %v4076
        %v4109 = vunpack.c.l.b16 %v4077
        %v4110 = vunpack.c.l.b16 %v4078
        %v4111 = vunpack.c.l.b16 %v4079
        %v4112 = vunpack.c.l.b16 %v4080
        %v4113 = vunpack.c.l.b16 %v4081
        %v4114 = vunpack.c.l.b16 %v4082
        %v4115 = vunpack.c.l.b16 %v4083
        %v4116 = vunpack.c.l.b16 %v4084
        %v4117 = vunpack.c.l.b16 %v4085
        %v4118 = vunpack.c.l.b16 %v4086
        %v4119 = vpack.c.b16 %v4104, %v4103
        %v4120 = vpack.c.b16 %v4106, %v4105
        %v4121 = vpack.c.b16 %v4108, %v4107
        %v4122 = vpack.c.b16 %v4110, %v4109
        %v4123 = vpack.c.b16 %v4112, %v4111
        %v4124 = vpack.c.b16 %v4114, %v4113
        %v4125 = vpack.c.b16 %v4116, %v4115
        %v4126 = vpack.c.b16 %v4118, %v4117
        %4135 = vmatprep.subr.bf16.mxu0 0
        %4136 = vmatpush1.bf16.msra.mxu0 %v4126
        %4137 = vmatprep.subr.bf16.mxu0 0
        %4138 = vmatpush1.bf16.msra.mxu0 %v4125
        %4139 = vmatprep.subr.bf16.mxu0 0
        %4140 = vmatpush1.bf16.msra.mxu0 %v4124
        %4141 = vmatprep.subr.bf16.mxu0 0
        %4142 = vmatpush1.bf16.msra.mxu0 %v4123
        %4143 = vmatprep.subr.bf16.mxu0 0
        %4144 = vmatpush1.bf16.msra.mxu0 %v4122
        %4145 = vmatprep.subr.bf16.mxu0 0
        %4146 = vmatpush1.bf16.msra.mxu0 %v4121
        %4147 = vmatprep.subr.bf16.mxu0 0
        %4148 = vmatpush1.bf16.msra.mxu0 %v4120
        %4149 = vmatprep.subr.bf16.mxu0 0
        %4150 = vmatpush1.bf16.msra.mxu0 %v4119
        %4151 = vmatprep.subr.bf16.mxu0 0
        %4152 = vmatpush2.bf16.msra.mxu0 0
        %4153 = vmatprep.subr.bf16.mxu0 0
        %4154 = vmatpush2.bf16.msra.mxu0 0
        %4155 = vmatprep.subr.bf16.mxu0 0
        %4156 = vmatpush2.bf16.msra.mxu0 0
        %4157 = vmatprep.subr.bf16.mxu0 0
        %4158 = vmatpush2.bf16.msra.mxu0 0
        %4159 = vmatprep.subr.bf16.mxu0 0
        %4160 = vmatpush2.bf16.msra.mxu0 0
        %4161 = vmatprep.subr.bf16.mxu0 0
        %4162 = vmatpush2.bf16.msra.mxu0 0
        %4163 = vmatprep.subr.bf16.mxu0 0
        %4164 = vmatpush2.bf16.msra.mxu0 0
        %4165 = vmatprep.subr.bf16.mxu0 0
        %4166 = vmatpush2.bf16.msra.mxu0 0
        %4167 = vmatprep.mubr.bf16.mxu0 0
        %4168 = vmatmul.mubr.bf16.gmra.mxu0 %v3222
        %v4169 = vpop.f32.mrf.mxu0
        %v4170 = vadd.f32 0.0, %v4169
        %v4171 = vpop.f32.mrf.mxu0
        %v4172 = vpop.f32.mrf.mxu0
        %v4173 = vadd.f32 0.0, %v4172
        %v4174 = vpop.f32.mrf.mxu0
        %4175 = vdwg.mxu0
        %v4176 = vpack.c.bf16 %v4173, %v4170
        %v4177 = vld [vmem:[%s1305] sm:$0xf]
        %v4178 = vld [vmem:[%s1305 + $0x4] sm:$0xf]
        %v4179 = vld [vmem:[%s1305 + $0x8] sm:$0xf]
        %v4180 = vld [vmem:[%s1305 + $0xc] sm:$0xf]
        %v4181 = vld [vmem:[%s1305 + $0x10] sm:$0xf]
        %v4182 = vld [vmem:[%s1305 + $0x14] sm:$0xf]
        %v4183 = vld [vmem:[%s1305 + $0x18] sm:$0xf]
        %v4184 = vld [vmem:[%s1305 + $0x1c] sm:$0xf]
        %v4185 = vld [vmem:[%s1305 + $0x20] sm:$0xf]
        %v4186 = vld [vmem:[%s1305 + $0x24] sm:$0xf]
        %v4187 = vld [vmem:[%s1305 + $0x28] sm:$0xf]
        %v4188 = vld [vmem:[%s1305 + $0x2c] sm:$0xf]
        %v4189 = vld [vmem:[%s1305 + $0x30] sm:$0xf]
        %v4190 = vld [vmem:[%s1305 + $0x34] sm:$0xf]
        %v4191 = vld [vmem:[%s1305 + $0x38] sm:$0xf]
        %v4192 = vld [vmem:[%s1305 + $0x3c] sm:$0xf]
        %v4209 = vunpack.c.l.b16 %v4177
        %v4210 = vunpack.c.l.b16 %v4178
        %v4211 = vunpack.c.l.b16 %v4179
        %v4212 = vunpack.c.l.b16 %v4180
        %v4213 = vunpack.c.l.b16 %v4181
        %v4214 = vunpack.c.l.b16 %v4182
        %v4215 = vunpack.c.l.b16 %v4183
        %v4216 = vunpack.c.l.b16 %v4184
        %v4217 = vunpack.c.l.b16 %v4185
        %v4218 = vunpack.c.l.b16 %v4186
        %v4219 = vunpack.c.l.b16 %v4187
        %v4220 = vunpack.c.l.b16 %v4188
        %v4221 = vunpack.c.l.b16 %v4189
        %v4222 = vunpack.c.l.b16 %v4190
        %v4223 = vunpack.c.l.b16 %v4191
        %v4224 = vunpack.c.l.b16 %v4192
        %v4225 = vpack.c.b16 %v4210, %v4209
        %v4226 = vpack.c.b16 %v4212, %v4211
        %v4227 = vpack.c.b16 %v4214, %v4213
        %v4228 = vpack.c.b16 %v4216, %v4215
        %v4229 = vpack.c.b16 %v4218, %v4217
        %v4230 = vpack.c.b16 %v4220, %v4219
        %v4231 = vpack.c.b16 %v4222, %v4221
        %v4232 = vpack.c.b16 %v4224, %v4223
        %4241 = vmatprep.subr.bf16.mxu0 0
        %4242 = vmatpush1.bf16.msra.mxu0 %v4232
        %4243 = vmatprep.subr.bf16.mxu0 0
        %4244 = vmatpush1.bf16.msra.mxu0 %v4231
        %4245 = vmatprep.subr.bf16.mxu0 0
        %4246 = vmatpush1.bf16.msra.mxu0 %v4230
        %4247 = vmatprep.subr.bf16.mxu0 0
        %4248 = vmatpush1.bf16.msra.mxu0 %v4229
        %4249 = vmatprep.subr.bf16.mxu0 0
        %4250 = vmatpush1.bf16.msra.mxu0 %v4228
        %4251 = vmatprep.subr.bf16.mxu0 0
        %4252 = vmatpush1.bf16.msra.mxu0 %v4227
        %4253 = vmatprep.subr.bf16.mxu0 0
        %4254 = vmatpush1.bf16.msra.mxu0 %v4226
        %4255 = vmatprep.subr.bf16.mxu0 0
        %4256 = vmatpush1.bf16.msra.mxu0 %v4225
        %4257 = vmatprep.subr.bf16.mxu0 0
        %4258 = vmatpush2.bf16.msra.mxu0 0
        %4259 = vmatprep.subr.bf16.mxu0 0
        %4260 = vmatpush2.bf16.msra.mxu0 0
        %4261 = vmatprep.subr.bf16.mxu0 0
        %4262 = vmatpush2.bf16.msra.mxu0 0
        %4263 = vmatprep.subr.bf16.mxu0 0
        %4264 = vmatpush2.bf16.msra.mxu0 0
        %4265 = vmatprep.subr.bf16.mxu0 0
        %4266 = vmatpush2.bf16.msra.mxu0 0
        %4267 = vmatprep.subr.bf16.mxu0 0
        %4268 = vmatpush2.bf16.msra.mxu0 0
        %4269 = vmatprep.subr.bf16.mxu0 0
        %4270 = vmatpush2.bf16.msra.mxu0 0
        %4271 = vmatprep.subr.bf16.mxu0 0
        %4272 = vmatpush2.bf16.msra.mxu0 0
        %4273 = vmatprep.mubr.bf16.mxu0 0
        %4274 = vmatmul.mubr.bf16.gmra.mxu0 %v3222
        %v4275 = vpop.f32.mrf.mxu0
        %v4276 = vadd.f32 0.0, %v4275
        %v4277 = vpop.f32.mrf.mxu0
        %v4278 = vpop.f32.mrf.mxu0
        %v4279 = vadd.f32 0.0, %v4278
        %v4280 = vpop.f32.mrf.mxu0
        %4281 = vdwg.mxu0
        %v4282 = vpack.c.bf16 %v4279, %v4276
        %v4283 = vld [vmem:[%s1412] sm:$0xf]
        %v4284 = vld [vmem:[%s1412 + $0x4] sm:$0xf]
        %v4285 = vld [vmem:[%s1412 + $0x8] sm:$0xf]
        %v4286 = vld [vmem:[%s1412 + $0xc] sm:$0xf]
        %v4287 = vld [vmem:[%s1412 + $0x10] sm:$0xf]
        %v4288 = vld [vmem:[%s1412 + $0x14] sm:$0xf]
        %v4289 = vld [vmem:[%s1412 + $0x18] sm:$0xf]
        %v4290 = vld [vmem:[%s1412 + $0x1c] sm:$0xf]
        %v4291 = vld [vmem:[%s1412 + $0x20] sm:$0xf]
        %v4292 = vld [vmem:[%s1412 + $0x24] sm:$0xf]
        %v4293 = vld [vmem:[%s1412 + $0x28] sm:$0xf]
        %v4294 = vld [vmem:[%s1412 + $0x2c] sm:$0xf]
        %v4295 = vld [vmem:[%s1412 + $0x30] sm:$0xf]
        %v4296 = vld [vmem:[%s1412 + $0x34] sm:$0xf]
        %v4297 = vld [vmem:[%s1412 + $0x38] sm:$0xf]
        %v4298 = vld [vmem:[%s1412 + $0x3c] sm:$0xf]
        %v4315 = vunpack.c.l.b16 %v4283
        %v4316 = vunpack.c.l.b16 %v4284
        %v4317 = vunpack.c.l.b16 %v4285
        %v4318 = vunpack.c.l.b16 %v4286
        %v4319 = vunpack.c.l.b16 %v4287
        %v4320 = vunpack.c.l.b16 %v4288
        %v4321 = vunpack.c.l.b16 %v4289
        %v4322 = vunpack.c.l.b16 %v4290
        %v4323 = vunpack.c.l.b16 %v4291
        %v4324 = vunpack.c.l.b16 %v4292
        %v4325 = vunpack.c.l.b16 %v4293
        %v4326 = vunpack.c.l.b16 %v4294
        %v4327 = vunpack.c.l.b16 %v4295
        %v4328 = vunpack.c.l.b16 %v4296
        %v4329 = vunpack.c.l.b16 %v4297
        %v4330 = vunpack.c.l.b16 %v4298
        %v4331 = vpack.c.b16 %v4316, %v4315
        %v4332 = vpack.c.b16 %v4318, %v4317
        %v4333 = vpack.c.b16 %v4320, %v4319
        %v4334 = vpack.c.b16 %v4322, %v4321
        %v4335 = vpack.c.b16 %v4324, %v4323
        %v4336 = vpack.c.b16 %v4326, %v4325
        %v4337 = vpack.c.b16 %v4328, %v4327
        %v4338 = vpack.c.b16 %v4330, %v4329
        %4347 = vmatprep.subr.bf16.mxu0 0
        %4348 = vmatpush1.bf16.msra.mxu0 %v4338
        %4349 = vmatprep.subr.bf16.mxu0 0
        %4350 = vmatpush1.bf16.msra.mxu0 %v4337
        %4351 = vmatprep.subr.bf16.mxu0 0
        %4352 = vmatpush1.bf16.msra.mxu0 %v4336
        %4353 = vmatprep.subr.bf16.mxu0 0
        %4354 = vmatpush1.bf16.msra.mxu0 %v4335
        %4355 = vmatprep.subr.bf16.mxu0 0
        %4356 = vmatpush1.bf16.msra.mxu0 %v4334
        %4357 = vmatprep.subr.bf16.mxu0 0
        %4358 = vmatpush1.bf16.msra.mxu0 %v4333
        %4359 = vmatprep.subr.bf16.mxu0 0
        %4360 = vmatpush1.bf16.msra.mxu0 %v4332
        %4361 = vmatprep.subr.bf16.mxu0 0
        %4362 = vmatpush1.bf16.msra.mxu0 %v4331
        %4363 = vmatprep.subr.bf16.mxu0 0
        %4364 = vmatpush2.bf16.msra.mxu0 0
        %4365 = vmatprep.subr.bf16.mxu0 0
        %4366 = vmatpush2.bf16.msra.mxu0 0
        %4367 = vmatprep.subr.bf16.mxu0 0
        %4368 = vmatpush2.bf16.msra.mxu0 0
        %4369 = vmatprep.subr.bf16.mxu0 0
        %4370 = vmatpush2.bf16.msra.mxu0 0
        %4371 = vmatprep.subr.bf16.mxu0 0
        %4372 = vmatpush2.bf16.msra.mxu0 0
        %4373 = vmatprep.subr.bf16.mxu0 0
        %4374 = vmatpush2.bf16.msra.mxu0 0
        %4375 = vmatprep.subr.bf16.mxu0 0
        %4376 = vmatpush2.bf16.msra.mxu0 0
        %4377 = vmatprep.subr.bf16.mxu0 0
        %4378 = vmatpush2.bf16.msra.mxu0 0
        %4379 = vmatprep.mubr.bf16.mxu0 0
        %4380 = vmatmul.mubr.bf16.gmra.mxu0 %v3222
        %v4381 = vpop.f32.mrf.mxu0
        %v4382 = vadd.f32 0.0, %v4381
        %v4383 = vpop.f32.mrf.mxu0
        %v4384 = vpop.f32.mrf.mxu0
        %v4385 = vadd.f32 0.0, %v4384
        %v4386 = vpop.f32.mrf.mxu0
        %4387 = vdwg.mxu0
        %v4388 = vpack.c.bf16 %v4385, %v4382
        %v4389 = vld [vmem:[%s1519] sm:$0xf]
        %v4390 = vld [vmem:[%s1519 + $0x4] sm:$0xf]
        %v4391 = vld [vmem:[%s1519 + $0x8] sm:$0xf]
        %v4392 = vld [vmem:[%s1519 + $0xc] sm:$0xf]
        %v4393 = vld [vmem:[%s1519 + $0x10] sm:$0xf]
        %v4394 = vld [vmem:[%s1519 + $0x14] sm:$0xf]
        %v4395 = vld [vmem:[%s1519 + $0x18] sm:$0xf]
        %v4396 = vld [vmem:[%s1519 + $0x1c] sm:$0xf]
        %v4397 = vld [vmem:[%s1519 + $0x20] sm:$0xf]
        %v4398 = vld [vmem:[%s1519 + $0x24] sm:$0xf]
        %v4399 = vld [vmem:[%s1519 + $0x28] sm:$0xf]
        %v4400 = vld [vmem:[%s1519 + $0x2c] sm:$0xf]
        %v4401 = vld [vmem:[%s1519 + $0x30] sm:$0xf]
        %v4402 = vld [vmem:[%s1519 + $0x34] sm:$0xf]
        %v4403 = vld [vmem:[%s1519 + $0x38] sm:$0xf]
        %v4404 = vld [vmem:[%s1519 + $0x3c] sm:$0xf]
        %v4421 = vunpack.c.l.b16 %v4389
        %v4422 = vunpack.c.l.b16 %v4390
        %v4423 = vunpack.c.l.b16 %v4391
        %v4424 = vunpack.c.l.b16 %v4392
        %v4425 = vunpack.c.l.b16 %v4393
        %v4426 = vunpack.c.l.b16 %v4394
        %v4427 = vunpack.c.l.b16 %v4395
        %v4428 = vunpack.c.l.b16 %v4396
        %v4429 = vunpack.c.l.b16 %v4397
        %v4430 = vunpack.c.l.b16 %v4398
        %v4431 = vunpack.c.l.b16 %v4399
        %v4432 = vunpack.c.l.b16 %v4400
        %v4433 = vunpack.c.l.b16 %v4401
        %v4434 = vunpack.c.l.b16 %v4402
        %v4435 = vunpack.c.l.b16 %v4403
        %v4436 = vunpack.c.l.b16 %v4404
        %v4437 = vpack.c.b16 %v4422, %v4421
        %v4438 = vpack.c.b16 %v4424, %v4423
        %v4439 = vpack.c.b16 %v4426, %v4425
        %v4440 = vpack.c.b16 %v4428, %v4427
        %v4441 = vpack.c.b16 %v4430, %v4429
        %v4442 = vpack.c.b16 %v4432, %v4431
        %v4443 = vpack.c.b16 %v4434, %v4433
        %v4444 = vpack.c.b16 %v4436, %v4435
        %4453 = vmatprep.subr.bf16.mxu0 0
        %4454 = vmatpush1.bf16.msra.mxu0 %v4444
        %4455 = vmatprep.subr.bf16.mxu0 0
        %4456 = vmatpush1.bf16.msra.mxu0 %v4443
        %4457 = vmatprep.subr.bf16.mxu0 0
        %4458 = vmatpush1.bf16.msra.mxu0 %v4442
        %4459 = vmatprep.subr.bf16.mxu0 0
        %4460 = vmatpush1.bf16.msra.mxu0 %v4441
        %4461 = vmatprep.subr.bf16.mxu0 0
        %4462 = vmatpush1.bf16.msra.mxu0 %v4440
        %4463 = vmatprep.subr.bf16.mxu0 0
        %4464 = vmatpush1.bf16.msra.mxu0 %v4439
        %4465 = vmatprep.subr.bf16.mxu0 0
        %4466 = vmatpush1.bf16.msra.mxu0 %v4438
        %4467 = vmatprep.subr.bf16.mxu0 0
        %4468 = vmatpush1.bf16.msra.mxu0 %v4437
        %4469 = vmatprep.subr.bf16.mxu0 0
        %4470 = vmatpush2.bf16.msra.mxu0 0
        %4471 = vmatprep.subr.bf16.mxu0 0
        %4472 = vmatpush2.bf16.msra.mxu0 0
        %4473 = vmatprep.subr.bf16.mxu0 0
        %4474 = vmatpush2.bf16.msra.mxu0 0
        %4475 = vmatprep.subr.bf16.mxu0 0
        %4476 = vmatpush2.bf16.msra.mxu0 0
        %4477 = vmatprep.subr.bf16.mxu0 0
        %4478 = vmatpush2.bf16.msra.mxu0 0
        %4479 = vmatprep.subr.bf16.mxu0 0
        %4480 = vmatpush2.bf16.msra.mxu0 0
        %4481 = vmatprep.subr.bf16.mxu0 0
        %4482 = vmatpush2.bf16.msra.mxu0 0
        %4483 = vmatprep.subr.bf16.mxu0 0
        %4484 = vmatpush2.bf16.msra.mxu0 0
        %4485 = vmatprep.mubr.bf16.mxu0 0
        %4486 = vmatmul.mubr.bf16.gmra.mxu0 %v3222
        %v4487 = vpop.f32.mrf.mxu0
        %v4488 = vadd.f32 0.0, %v4487
        %v4489 = vpop.f32.mrf.mxu0
        %v4490 = vpop.f32.mrf.mxu0
        %v4491 = vadd.f32 0.0, %v4490
        %v4492 = vpop.f32.mrf.mxu0
        %4493 = vdwg.mxu0
        %v4494 = vpack.c.bf16 %v4491, %v4488
        %v4495 = vld [vmem:[%s1626] sm:$0xf]
        %v4496 = vld [vmem:[%s1626 + $0x4] sm:$0xf]
        %v4497 = vld [vmem:[%s1626 + $0x8] sm:$0xf]
        %v4498 = vld [vmem:[%s1626 + $0xc] sm:$0xf]
        %v4499 = vld [vmem:[%s1626 + $0x10] sm:$0xf]
        %v4500 = vld [vmem:[%s1626 + $0x14] sm:$0xf]
        %v4501 = vld [vmem:[%s1626 + $0x18] sm:$0xf]
        %v4502 = vld [vmem:[%s1626 + $0x1c] sm:$0xf]
        %v4503 = vld [vmem:[%s1626 + $0x20] sm:$0xf]
        %v4504 = vld [vmem:[%s1626 + $0x24] sm:$0xf]
        %v4505 = vld [vmem:[%s1626 + $0x28] sm:$0xf]
        %v4506 = vld [vmem:[%s1626 + $0x2c] sm:$0xf]
        %v4507 = vld [vmem:[%s1626 + $0x30] sm:$0xf]
        %v4508 = vld [vmem:[%s1626 + $0x34] sm:$0xf]
        %v4509 = vld [vmem:[%s1626 + $0x38] sm:$0xf]
        %v4510 = vld [vmem:[%s1626 + $0x3c] sm:$0xf]
        %v4527 = vunpack.c.l.b16 %v4495
        %v4528 = vunpack.c.l.b16 %v4496
        %v4529 = vunpack.c.l.b16 %v4497
        %v4530 = vunpack.c.l.b16 %v4498
        %v4531 = vunpack.c.l.b16 %v4499
        %v4532 = vunpack.c.l.b16 %v4500
        %v4533 = vunpack.c.l.b16 %v4501
        %v4534 = vunpack.c.l.b16 %v4502
        %v4535 = vunpack.c.l.b16 %v4503
        %v4536 = vunpack.c.l.b16 %v4504
        %v4537 = vunpack.c.l.b16 %v4505
        %v4538 = vunpack.c.l.b16 %v4506
        %v4539 = vunpack.c.l.b16 %v4507
        %v4540 = vunpack.c.l.b16 %v4508
        %v4541 = vunpack.c.l.b16 %v4509
        %v4542 = vunpack.c.l.b16 %v4510
        %v4543 = vpack.c.b16 %v4528, %v4527
        %v4544 = vpack.c.b16 %v4530, %v4529
        %v4545 = vpack.c.b16 %v4532, %v4531
        %v4546 = vpack.c.b16 %v4534, %v4533
        %v4547 = vpack.c.b16 %v4536, %v4535
        %v4548 = vpack.c.b16 %v4538, %v4537
        %v4549 = vpack.c.b16 %v4540, %v4539
        %v4550 = vpack.c.b16 %v4542, %v4541
        %4559 = vmatprep.subr.bf16.mxu0 0
        %4560 = vmatpush1.bf16.msra.mxu0 %v4550
        %4561 = vmatprep.subr.bf16.mxu0 0
        %4562 = vmatpush1.bf16.msra.mxu0 %v4549
        %4563 = vmatprep.subr.bf16.mxu0 0
        %4564 = vmatpush1.bf16.msra.mxu0 %v4548
        %4565 = vmatprep.subr.bf16.mxu0 0
        %4566 = vmatpush1.bf16.msra.mxu0 %v4547
        %4567 = vmatprep.subr.bf16.mxu0 0
        %4568 = vmatpush1.bf16.msra.mxu0 %v4546
        %4569 = vmatprep.subr.bf16.mxu0 0
        %4570 = vmatpush1.bf16.msra.mxu0 %v4545
        %4571 = vmatprep.subr.bf16.mxu0 0
        %4572 = vmatpush1.bf16.msra.mxu0 %v4544
        %4573 = vmatprep.subr.bf16.mxu0 0
        %4574 = vmatpush1.bf16.msra.mxu0 %v4543
        %4575 = vmatprep.subr.bf16.mxu0 0
        %4576 = vmatpush2.bf16.msra.mxu0 0
        %4577 = vmatprep.subr.bf16.mxu0 0
        %4578 = vmatpush2.bf16.msra.mxu0 0
        %4579 = vmatprep.subr.bf16.mxu0 0
        %4580 = vmatpush2.bf16.msra.mxu0 0
        %4581 = vmatprep.subr.bf16.mxu0 0
        %4582 = vmatpush2.bf16.msra.mxu0 0
        %4583 = vmatprep.subr.bf16.mxu0 0
        %4584 = vmatpush2.bf16.msra.mxu0 0
        %4585 = vmatprep.subr.bf16.mxu0 0
        %4586 = vmatpush2.bf16.msra.mxu0 0
        %4587 = vmatprep.subr.bf16.mxu0 0
        %4588 = vmatpush2.bf16.msra.mxu0 0
        %4589 = vmatprep.subr.bf16.mxu0 0
        %4590 = vmatpush2.bf16.msra.mxu0 0
        %4591 = vmatprep.mubr.bf16.mxu0 0
        %4592 = vmatmul.mubr.bf16.gmra.mxu0 %v3222
        %v4593 = vpop.f32.mrf.mxu0
        %v4594 = vadd.f32 0.0, %v4593
        %v4595 = vpop.f32.mrf.mxu0
        %v4596 = vpop.f32.mrf.mxu0
        %v4597 = vadd.f32 0.0, %v4596
        %v4598 = vpop.f32.mrf.mxu0
        %4599 = vdwg.mxu0
        %v4600 = vpack.c.bf16 %v4597, %v4594
        %v4601 = vld [vmem:[%s1733] sm:$0xf]
        %v4602 = vld [vmem:[%s1733 + $0x4] sm:$0xf]
        %v4603 = vld [vmem:[%s1733 + $0x8] sm:$0xf]
        %v4604 = vld [vmem:[%s1733 + $0xc] sm:$0xf]
        %v4605 = vld [vmem:[%s1733 + $0x10] sm:$0xf]
        %v4606 = vld [vmem:[%s1733 + $0x14] sm:$0xf]
        %v4607 = vld [vmem:[%s1733 + $0x18] sm:$0xf]
        %v4608 = vld [vmem:[%s1733 + $0x1c] sm:$0xf]
        %v4609 = vld [vmem:[%s1733 + $0x20] sm:$0xf]
        %v4610 = vld [vmem:[%s1733 + $0x24] sm:$0xf]
        %v4611 = vld [vmem:[%s1733 + $0x28] sm:$0xf]
        %v4612 = vld [vmem:[%s1733 + $0x2c] sm:$0xf]
        %v4613 = vld [vmem:[%s1733 + $0x30] sm:$0xf]
        %v4614 = vld [vmem:[%s1733 + $0x34] sm:$0xf]
        %v4615 = vld [vmem:[%s1733 + $0x38] sm:$0xf]
        %v4616 = vld [vmem:[%s1733 + $0x3c] sm:$0xf]
        %v4633 = vunpack.c.l.b16 %v4601
        %v4634 = vunpack.c.l.b16 %v4602
        %v4635 = vunpack.c.l.b16 %v4603
        %v4636 = vunpack.c.l.b16 %v4604
        %v4637 = vunpack.c.l.b16 %v4605
        %v4638 = vunpack.c.l.b16 %v4606
        %v4639 = vunpack.c.l.b16 %v4607
        %v4640 = vunpack.c.l.b16 %v4608
        %v4641 = vunpack.c.l.b16 %v4609
        %v4642 = vunpack.c.l.b16 %v4610
        %v4643 = vunpack.c.l.b16 %v4611
        %v4644 = vunpack.c.l.b16 %v4612
        %v4645 = vunpack.c.l.b16 %v4613
        %v4646 = vunpack.c.l.b16 %v4614
        %v4647 = vunpack.c.l.b16 %v4615
        %v4648 = vunpack.c.l.b16 %v4616
        %v4649 = vpack.c.b16 %v4634, %v4633
        %v4650 = vpack.c.b16 %v4636, %v4635
        %v4651 = vpack.c.b16 %v4638, %v4637
        %v4652 = vpack.c.b16 %v4640, %v4639
        %v4653 = vpack.c.b16 %v4642, %v4641
        %v4654 = vpack.c.b16 %v4644, %v4643
        %v4655 = vpack.c.b16 %v4646, %v4645
        %v4656 = vpack.c.b16 %v4648, %v4647
        %4665 = vmatprep.subr.bf16.mxu0 0
        %4666 = vmatpush1.bf16.msra.mxu0 %v4656
        %4667 = vmatprep.subr.bf16.mxu0 0
        %4668 = vmatpush1.bf16.msra.mxu0 %v4655
        %4669 = vmatprep.subr.bf16.mxu0 0
        %4670 = vmatpush1.bf16.msra.mxu0 %v4654
        %4671 = vmatprep.subr.bf16.mxu0 0
        %4672 = vmatpush1.bf16.msra.mxu0 %v4653
        %4673 = vmatprep.subr.bf16.mxu0 0
        %4674 = vmatpush1.bf16.msra.mxu0 %v4652
        %4675 = vmatprep.subr.bf16.mxu0 0
        %4676 = vmatpush1.bf16.msra.mxu0 %v4651
        %4677 = vmatprep.subr.bf16.mxu0 0
        %4678 = vmatpush1.bf16.msra.mxu0 %v4650
        %4679 = vmatprep.subr.bf16.mxu0 0
        %4680 = vmatpush1.bf16.msra.mxu0 %v4649
        %4681 = vmatprep.subr.bf16.mxu0 0
        %4682 = vmatpush2.bf16.msra.mxu0 0
        %4683 = vmatprep.subr.bf16.mxu0 0
        %4684 = vmatpush2.bf16.msra.mxu0 0
        %4685 = vmatprep.subr.bf16.mxu0 0
        %4686 = vmatpush2.bf16.msra.mxu0 0
        %4687 = vmatprep.subr.bf16.mxu0 0
        %4688 = vmatpush2.bf16.msra.mxu0 0
        %4689 = vmatprep.subr.bf16.mxu0 0
        %4690 = vmatpush2.bf16.msra.mxu0 0
        %4691 = vmatprep.subr.bf16.mxu0 0
        %4692 = vmatpush2.bf16.msra.mxu0 0
        %4693 = vmatprep.subr.bf16.mxu0 0
        %4694 = vmatpush2.bf16.msra.mxu0 0
        %4695 = vmatprep.subr.bf16.mxu0 0
        %4696 = vmatpush2.bf16.msra.mxu0 0
        %4697 = vmatprep.mubr.bf16.mxu0 0
        %4698 = vmatmul.mubr.bf16.gmra.mxu0 %v3222
        %v4699 = vpop.f32.mrf.mxu0
        %v4700 = vadd.f32 0.0, %v4699
        %v4701 = vpop.f32.mrf.mxu0
        %v4702 = vpop.f32.mrf.mxu0
        %v4703 = vadd.f32 0.0, %v4702
        %v4704 = vpop.f32.mrf.mxu0
        %4705 = vdwg.mxu0
        %v4706 = vpack.c.bf16 %v4703, %v4700
        %v4707 = vld [vmem:[%s1840] sm:$0xf]
        %v4708 = vld [vmem:[%s1840 + $0x4] sm:$0xf]
        %v4709 = vld [vmem:[%s1840 + $0x8] sm:$0xf]
        %v4710 = vld [vmem:[%s1840 + $0xc] sm:$0xf]
        %v4711 = vld [vmem:[%s1840 + $0x10] sm:$0xf]
        %v4712 = vld [vmem:[%s1840 + $0x14] sm:$0xf]
        %v4713 = vld [vmem:[%s1840 + $0x18] sm:$0xf]
        %v4714 = vld [vmem:[%s1840 + $0x1c] sm:$0xf]
        %v4715 = vld [vmem:[%s1840 + $0x20] sm:$0xf]
        %v4716 = vld [vmem:[%s1840 + $0x24] sm:$0xf]
        %v4717 = vld [vmem:[%s1840 + $0x28] sm:$0xf]
        %v4718 = vld [vmem:[%s1840 + $0x2c] sm:$0xf]
        %v4719 = vld [vmem:[%s1840 + $0x30] sm:$0xf]
        %v4720 = vld [vmem:[%s1840 + $0x34] sm:$0xf]
        %v4721 = vld [vmem:[%s1840 + $0x38] sm:$0xf]
        %v4722 = vld [vmem:[%s1840 + $0x3c] sm:$0xf]
        %v4739 = vunpack.c.l.b16 %v4707
        %v4740 = vunpack.c.l.b16 %v4708
        %v4741 = vunpack.c.l.b16 %v4709
        %v4742 = vunpack.c.l.b16 %v4710
        %v4743 = vunpack.c.l.b16 %v4711
        %v4744 = vunpack.c.l.b16 %v4712
        %v4745 = vunpack.c.l.b16 %v4713
        %v4746 = vunpack.c.l.b16 %v4714
        %v4747 = vunpack.c.l.b16 %v4715
        %v4748 = vunpack.c.l.b16 %v4716
        %v4749 = vunpack.c.l.b16 %v4717
        %v4750 = vunpack.c.l.b16 %v4718
        %v4751 = vunpack.c.l.b16 %v4719
        %v4752 = vunpack.c.l.b16 %v4720
        %v4753 = vunpack.c.l.b16 %v4721
        %v4754 = vunpack.c.l.b16 %v4722
        %v4755 = vpack.c.b16 %v4740, %v4739
        %v4756 = vpack.c.b16 %v4742, %v4741
        %v4757 = vpack.c.b16 %v4744, %v4743
        %v4758 = vpack.c.b16 %v4746, %v4745
        %v4759 = vpack.c.b16 %v4748, %v4747
        %v4760 = vpack.c.b16 %v4750, %v4749
        %v4761 = vpack.c.b16 %v4752, %v4751
        %v4762 = vpack.c.b16 %v4754, %v4753
        %4771 = vmatprep.subr.bf16.mxu0 0
        %4772 = vmatpush1.bf16.msra.mxu0 %v4762
        %4773 = vmatprep.subr.bf16.mxu0 0
        %4774 = vmatpush1.bf16.msra.mxu0 %v4761
        %4775 = vmatprep.subr.bf16.mxu0 0
        %4776 = vmatpush1.bf16.msra.mxu0 %v4760
        %4777 = vmatprep.subr.bf16.mxu0 0
        %4778 = vmatpush1.bf16.msra.mxu0 %v4759
        %4779 = vmatprep.subr.bf16.mxu0 0
        %4780 = vmatpush1.bf16.msra.mxu0 %v4758
        %4781 = vmatprep.subr.bf16.mxu0 0
        %4782 = vmatpush1.bf16.msra.mxu0 %v4757
        %4783 = vmatprep.subr.bf16.mxu0 0
        %4784 = vmatpush1.bf16.msra.mxu0 %v4756
        %4785 = vmatprep.subr.bf16.mxu0 0
        %4786 = vmatpush1.bf16.msra.mxu0 %v4755
        %4787 = vmatprep.subr.bf16.mxu0 0
        %4788 = vmatpush2.bf16.msra.mxu0 0
        %4789 = vmatprep.subr.bf16.mxu0 0
        %4790 = vmatpush2.bf16.msra.mxu0 0
        %4791 = vmatprep.subr.bf16.mxu0 0
        %4792 = vmatpush2.bf16.msra.mxu0 0
        %4793 = vmatprep.subr.bf16.mxu0 0
        %4794 = vmatpush2.bf16.msra.mxu0 0
        %4795 = vmatprep.subr.bf16.mxu0 0
        %4796 = vmatpush2.bf16.msra.mxu0 0
        %4797 = vmatprep.subr.bf16.mxu0 0
        %4798 = vmatpush2.bf16.msra.mxu0 0
        %4799 = vmatprep.subr.bf16.mxu0 0
        %4800 = vmatpush2.bf16.msra.mxu0 0
        %4801 = vmatprep.subr.bf16.mxu0 0
        %4802 = vmatpush2.bf16.msra.mxu0 0
        %4803 = vmatprep.mubr.bf16.mxu0 0
        %4804 = vmatmul.mubr.bf16.gmra.mxu0 %v3222
        %v4805 = vpop.f32.mrf.mxu0
        %v4806 = vadd.f32 0.0, %v4805
        %v4807 = vpop.f32.mrf.mxu0
        %v4808 = vpop.f32.mrf.mxu0
        %v4809 = vadd.f32 0.0, %v4808
        %v4810 = vpop.f32.mrf.mxu0
        %4811 = vdwg.mxu0
        %v4812 = vpack.c.bf16 %v4809, %v4806
        %v4813 = vld [vmem:[%s1947] sm:$0xf]
        %v4814 = vld [vmem:[%s1947 + $0x4] sm:$0xf]
        %v4815 = vld [vmem:[%s1947 + $0x8] sm:$0xf]
        %v4816 = vld [vmem:[%s1947 + $0xc] sm:$0xf]
        %v4817 = vld [vmem:[%s1947 + $0x10] sm:$0xf]
        %v4818 = vld [vmem:[%s1947 + $0x14] sm:$0xf]
        %v4819 = vld [vmem:[%s1947 + $0x18] sm:$0xf]
        %v4820 = vld [vmem:[%s1947 + $0x1c] sm:$0xf]
        %v4821 = vld [vmem:[%s1947 + $0x20] sm:$0xf]
        %v4822 = vld [vmem:[%s1947 + $0x24] sm:$0xf]
        %v4823 = vld [vmem:[%s1947 + $0x28] sm:$0xf]
        %v4824 = vld [vmem:[%s1947 + $0x2c] sm:$0xf]
        %v4825 = vld [vmem:[%s1947 + $0x30] sm:$0xf]
        %v4826 = vld [vmem:[%s1947 + $0x34] sm:$0xf]
        %v4827 = vld [vmem:[%s1947 + $0x38] sm:$0xf]
        %v4828 = vld [vmem:[%s1947 + $0x3c] sm:$0xf]
        %v4845 = vunpack.c.l.b16 %v4813
        %v4846 = vunpack.c.l.b16 %v4814
        %v4847 = vunpack.c.l.b16 %v4815
        %v4848 = vunpack.c.l.b16 %v4816
        %v4849 = vunpack.c.l.b16 %v4817
        %v4850 = vunpack.c.l.b16 %v4818
        %v4851 = vunpack.c.l.b16 %v4819
        %v4852 = vunpack.c.l.b16 %v4820
        %v4853 = vunpack.c.l.b16 %v4821
        %v4854 = vunpack.c.l.b16 %v4822
        %v4855 = vunpack.c.l.b16 %v4823
        %v4856 = vunpack.c.l.b16 %v4824
        %v4857 = vunpack.c.l.b16 %v4825
        %v4858 = vunpack.c.l.b16 %v4826
        %v4859 = vunpack.c.l.b16 %v4827
        %v4860 = vunpack.c.l.b16 %v4828
        %v4861 = vpack.c.b16 %v4846, %v4845
        %v4862 = vpack.c.b16 %v4848, %v4847
        %v4863 = vpack.c.b16 %v4850, %v4849
        %v4864 = vpack.c.b16 %v4852, %v4851
        %v4865 = vpack.c.b16 %v4854, %v4853
        %v4866 = vpack.c.b16 %v4856, %v4855
        %v4867 = vpack.c.b16 %v4858, %v4857
        %v4868 = vpack.c.b16 %v4860, %v4859
        %4877 = vmatprep.subr.bf16.mxu0 0
        %4878 = vmatpush1.bf16.msra.mxu0 %v4868
        %4879 = vmatprep.subr.bf16.mxu0 0
        %4880 = vmatpush1.bf16.msra.mxu0 %v4867
        %4881 = vmatprep.subr.bf16.mxu0 0
        %4882 = vmatpush1.bf16.msra.mxu0 %v4866
        %4883 = vmatprep.subr.bf16.mxu0 0
        %4884 = vmatpush1.bf16.msra.mxu0 %v4865
        %4885 = vmatprep.subr.bf16.mxu0 0
        %4886 = vmatpush1.bf16.msra.mxu0 %v4864
        %4887 = vmatprep.subr.bf16.mxu0 0
        %4888 = vmatpush1.bf16.msra.mxu0 %v4863
        %4889 = vmatprep.subr.bf16.mxu0 0
        %4890 = vmatpush1.bf16.msra.mxu0 %v4862
        %4891 = vmatprep.subr.bf16.mxu0 0
        %4892 = vmatpush1.bf16.msra.mxu0 %v4861
        %4893 = vmatprep.subr.bf16.mxu0 0
        %4894 = vmatpush2.bf16.msra.mxu0 0
        %4895 = vmatprep.subr.bf16.mxu0 0
        %4896 = vmatpush2.bf16.msra.mxu0 0
        %4897 = vmatprep.subr.bf16.mxu0 0
        %4898 = vmatpush2.bf16.msra.mxu0 0
        %4899 = vmatprep.subr.bf16.mxu0 0
        %4900 = vmatpush2.bf16.msra.mxu0 0
        %4901 = vmatprep.subr.bf16.mxu0 0
        %4902 = vmatpush2.bf16.msra.mxu0 0
        %4903 = vmatprep.subr.bf16.mxu0 0
        %4904 = vmatpush2.bf16.msra.mxu0 0
        %4905 = vmatprep.subr.bf16.mxu0 0
        %4906 = vmatpush2.bf16.msra.mxu0 0
        %4907 = vmatprep.subr.bf16.mxu0 0
        %4908 = vmatpush2.bf16.msra.mxu0 0
        %4909 = vmatprep.mubr.bf16.mxu0 0
        %4910 = vmatmul.mubr.bf16.gmra.mxu0 %v3222
        %v4911 = vpop.f32.mrf.mxu0
        %v4912 = vadd.f32 0.0, %v4911
        %v4913 = vpop.f32.mrf.mxu0
        %v4914 = vpop.f32.mrf.mxu0
        %v4915 = vadd.f32 0.0, %v4914
        %v4916 = vpop.f32.mrf.mxu0
        %4917 = vdwg.mxu0
        %v4918 = vpack.c.bf16 %v4915, %v4912
        %v4919 = vld [vmem:[%s2054] sm:$0xf]
        %v4920 = vld [vmem:[%s2054 + $0x4] sm:$0xf]
        %v4921 = vld [vmem:[%s2054 + $0x8] sm:$0xf]
        %v4922 = vld [vmem:[%s2054 + $0xc] sm:$0xf]
        %v4923 = vld [vmem:[%s2054 + $0x10] sm:$0xf]
        %v4924 = vld [vmem:[%s2054 + $0x14] sm:$0xf]
        %v4925 = vld [vmem:[%s2054 + $0x18] sm:$0xf]
        %v4926 = vld [vmem:[%s2054 + $0x1c] sm:$0xf]
        %v4927 = vld [vmem:[%s2054 + $0x20] sm:$0xf]
        %v4928 = vld [vmem:[%s2054 + $0x24] sm:$0xf]
        %v4929 = vld [vmem:[%s2054 + $0x28] sm:$0xf]
        %v4930 = vld [vmem:[%s2054 + $0x2c] sm:$0xf]
        %v4931 = vld [vmem:[%s2054 + $0x30] sm:$0xf]
        %v4932 = vld [vmem:[%s2054 + $0x34] sm:$0xf]
        %v4933 = vld [vmem:[%s2054 + $0x38] sm:$0xf]
        %v4934 = vld [vmem:[%s2054 + $0x3c] sm:$0xf]
        %v4951 = vunpack.c.l.b16 %v4919
        %v4952 = vunpack.c.l.b16 %v4920
        %v4953 = vunpack.c.l.b16 %v4921
        %v4954 = vunpack.c.l.b16 %v4922
        %v4955 = vunpack.c.l.b16 %v4923
        %v4956 = vunpack.c.l.b16 %v4924
        %v4957 = vunpack.c.l.b16 %v4925
        %v4958 = vunpack.c.l.b16 %v4926
        %v4959 = vunpack.c.l.b16 %v4927
        %v4960 = vunpack.c.l.b16 %v4928
        %v4961 = vunpack.c.l.b16 %v4929
        %v4962 = vunpack.c.l.b16 %v4930
        %v4963 = vunpack.c.l.b16 %v4931
        %v4964 = vunpack.c.l.b16 %v4932
        %v4965 = vunpack.c.l.b16 %v4933
        %v4966 = vunpack.c.l.b16 %v4934
        %v4967 = vpack.c.b16 %v4952, %v4951
        %v4968 = vpack.c.b16 %v4954, %v4953
        %v4969 = vpack.c.b16 %v4956, %v4955
        %v4970 = vpack.c.b16 %v4958, %v4957
        %v4971 = vpack.c.b16 %v4960, %v4959
        %v4972 = vpack.c.b16 %v4962, %v4961
        %v4973 = vpack.c.b16 %v4964, %v4963
        %v4974 = vpack.c.b16 %v4966, %v4965
        %4983 = vmatprep.subr.bf16.mxu0 0
        %4984 = vmatpush1.bf16.msra.mxu0 %v4974
        %4985 = vmatprep.subr.bf16.mxu0 0
        %4986 = vmatpush1.bf16.msra.mxu0 %v4973
        %4987 = vmatprep.subr.bf16.mxu0 0
        %4988 = vmatpush1.bf16.msra.mxu0 %v4972
        %4989 = vmatprep.subr.bf16.mxu0 0
        %4990 = vmatpush1.bf16.msra.mxu0 %v4971
        %4991 = vmatprep.subr.bf16.mxu0 0
        %4992 = vmatpush1.bf16.msra.mxu0 %v4970
        %4993 = vmatprep.subr.bf16.mxu0 0
        %4994 = vmatpush1.bf16.msra.mxu0 %v4969
        %4995 = vmatprep.subr.bf16.mxu0 0
        %4996 = vmatpush1.bf16.msra.mxu0 %v4968
        %4997 = vmatprep.subr.bf16.mxu0 0
        %4998 = vmatpush1.bf16.msra.mxu0 %v4967
        %4999 = vmatprep.subr.bf16.mxu0 0
        %5000 = vmatpush2.bf16.msra.mxu0 0
        %5001 = vmatprep.subr.bf16.mxu0 0
        %5002 = vmatpush2.bf16.msra.mxu0 0
        %5003 = vmatprep.subr.bf16.mxu0 0
        %5004 = vmatpush2.bf16.msra.mxu0 0
        %5005 = vmatprep.subr.bf16.mxu0 0
        %5006 = vmatpush2.bf16.msra.mxu0 0
        %5007 = vmatprep.subr.bf16.mxu0 0
        %5008 = vmatpush2.bf16.msra.mxu0 0
        %5009 = vmatprep.subr.bf16.mxu0 0
        %5010 = vmatpush2.bf16.msra.mxu0 0
        %5011 = vmatprep.subr.bf16.mxu0 0
        %5012 = vmatpush2.bf16.msra.mxu0 0
        %5013 = vmatprep.subr.bf16.mxu0 0
        %5014 = vmatpush2.bf16.msra.mxu0 0
        %5015 = vmatprep.mubr.bf16.mxu0 0
        %5016 = vmatmul.mubr.bf16.gmra.mxu0 %v3222
        %v5017 = vpop.f32.mrf.mxu0
        %v5018 = vadd.f32 0.0, %v5017
        %v5019 = vpop.f32.mrf.mxu0
        %v5020 = vpop.f32.mrf.mxu0
        %v5021 = vadd.f32 0.0, %v5020
        %v5022 = vpop.f32.mrf.mxu0
        %5023 = vdwg.mxu0
        %v5024 = vpack.c.bf16 %v5021, %v5018
        %v5025 = vld [vmem:[%s2161] sm:$0xf]
        %v5026 = vld [vmem:[%s2161 + $0x4] sm:$0xf]
        %v5027 = vld [vmem:[%s2161 + $0x8] sm:$0xf]
        %v5028 = vld [vmem:[%s2161 + $0xc] sm:$0xf]
        %v5029 = vld [vmem:[%s2161 + $0x10] sm:$0xf]
        %v5030 = vld [vmem:[%s2161 + $0x14] sm:$0xf]
        %v5031 = vld [vmem:[%s2161 + $0x18] sm:$0xf]
        %v5032 = vld [vmem:[%s2161 + $0x1c] sm:$0xf]
        %v5033 = vld [vmem:[%s2161 + $0x20] sm:$0xf]
        %v5034 = vld [vmem:[%s2161 + $0x24] sm:$0xf]
        %v5035 = vld [vmem:[%s2161 + $0x28] sm:$0xf]
        %v5036 = vld [vmem:[%s2161 + $0x2c] sm:$0xf]
        %v5037 = vld [vmem:[%s2161 + $0x30] sm:$0xf]
        %v5038 = vld [vmem:[%s2161 + $0x34] sm:$0xf]
        %v5039 = vld [vmem:[%s2161 + $0x38] sm:$0xf]
        %v5040 = vld [vmem:[%s2161 + $0x3c] sm:$0xf]
        %v5057 = vunpack.c.l.b16 %v5025
        %v5058 = vunpack.c.l.b16 %v5026
        %v5059 = vunpack.c.l.b16 %v5027
        %v5060 = vunpack.c.l.b16 %v5028
        %v5061 = vunpack.c.l.b16 %v5029
        %v5062 = vunpack.c.l.b16 %v5030
        %v5063 = vunpack.c.l.b16 %v5031
        %v5064 = vunpack.c.l.b16 %v5032
        %v5065 = vunpack.c.l.b16 %v5033
        %v5066 = vunpack.c.l.b16 %v5034
        %v5067 = vunpack.c.l.b16 %v5035
        %v5068 = vunpack.c.l.b16 %v5036
        %v5069 = vunpack.c.l.b16 %v5037
        %v5070 = vunpack.c.l.b16 %v5038
        %v5071 = vunpack.c.l.b16 %v5039
        %v5072 = vunpack.c.l.b16 %v5040
        %v5073 = vpack.c.b16 %v5058, %v5057
        %v5074 = vpack.c.b16 %v5060, %v5059
        %v5075 = vpack.c.b16 %v5062, %v5061
        %v5076 = vpack.c.b16 %v5064, %v5063
        %v5077 = vpack.c.b16 %v5066, %v5065
        %v5078 = vpack.c.b16 %v5068, %v5067
        %v5079 = vpack.c.b16 %v5070, %v5069
        %v5080 = vpack.c.b16 %v5072, %v5071
        %5089 = vmatprep.subr.bf16.mxu0 0
        %5090 = vmatpush1.bf16.msra.mxu0 %v5080
        %5091 = vmatprep.subr.bf16.mxu0 0
        %5092 = vmatpush1.bf16.msra.mxu0 %v5079
        %5093 = vmatprep.subr.bf16.mxu0 0
        %5094 = vmatpush1.bf16.msra.mxu0 %v5078
        %5095 = vmatprep.subr.bf16.mxu0 0
        %5096 = vmatpush1.bf16.msra.mxu0 %v5077
        %5097 = vmatprep.subr.bf16.mxu0 0
        %5098 = vmatpush1.bf16.msra.mxu0 %v5076
        %5099 = vmatprep.subr.bf16.mxu0 0
        %5100 = vmatpush1.bf16.msra.mxu0 %v5075
        %5101 = vmatprep.subr.bf16.mxu0 0
        %5102 = vmatpush1.bf16.msra.mxu0 %v5074
        %5103 = vmatprep.subr.bf16.mxu0 0
        %5104 = vmatpush1.bf16.msra.mxu0 %v5073
        %5105 = vmatprep.subr.bf16.mxu0 0
        %5106 = vmatpush2.bf16.msra.mxu0 0
        %5107 = vmatprep.subr.bf16.mxu0 0
        %5108 = vmatpush2.bf16.msra.mxu0 0
        %5109 = vmatprep.subr.bf16.mxu0 0
        %5110 = vmatpush2.bf16.msra.mxu0 0
        %5111 = vmatprep.subr.bf16.mxu0 0
        %5112 = vmatpush2.bf16.msra.mxu0 0
        %5113 = vmatprep.subr.bf16.mxu0 0
        %5114 = vmatpush2.bf16.msra.mxu0 0
        %5115 = vmatprep.subr.bf16.mxu0 0
        %5116 = vmatpush2.bf16.msra.mxu0 0
        %5117 = vmatprep.subr.bf16.mxu0 0
        %5118 = vmatpush2.bf16.msra.mxu0 0
        %5119 = vmatprep.subr.bf16.mxu0 0
        %5120 = vmatpush2.bf16.msra.mxu0 0
        %5121 = vmatprep.mubr.bf16.mxu0 0
        %5122 = vmatmul.mubr.bf16.gmra.mxu0 %v3222
        %v5123 = vpop.f32.mrf.mxu0
        %v5124 = vadd.f32 0.0, %v5123
        %v5125 = vpop.f32.mrf.mxu0
        %v5126 = vpop.f32.mrf.mxu0
        %v5127 = vadd.f32 0.0, %v5126
        %v5128 = vpop.f32.mrf.mxu0
        %5129 = vdwg.mxu0
        %v5130 = vpack.c.bf16 %v5127, %v5124
        %v5131 = vld [vmem:[%s2268] sm:$0xf]
        %v5132 = vld [vmem:[%s2268 + $0x4] sm:$0xf]
        %v5133 = vld [vmem:[%s2268 + $0x8] sm:$0xf]
        %v5134 = vld [vmem:[%s2268 + $0xc] sm:$0xf]
        %v5135 = vld [vmem:[%s2268 + $0x10] sm:$0xf]
        %v5136 = vld [vmem:[%s2268 + $0x14] sm:$0xf]
        %v5137 = vld [vmem:[%s2268 + $0x18] sm:$0xf]
        %v5138 = vld [vmem:[%s2268 + $0x1c] sm:$0xf]
        %v5139 = vld [vmem:[%s2268 + $0x20] sm:$0xf]
        %v5140 = vld [vmem:[%s2268 + $0x24] sm:$0xf]
        %v5141 = vld [vmem:[%s2268 + $0x28] sm:$0xf]
        %v5142 = vld [vmem:[%s2268 + $0x2c] sm:$0xf]
        %v5143 = vld [vmem:[%s2268 + $0x30] sm:$0xf]
        %v5144 = vld [vmem:[%s2268 + $0x34] sm:$0xf]
        %v5145 = vld [vmem:[%s2268 + $0x38] sm:$0xf]
        %v5146 = vld [vmem:[%s2268 + $0x3c] sm:$0xf]
        %v5163 = vunpack.c.l.b16 %v5131
        %v5164 = vunpack.c.l.b16 %v5132
        %v5165 = vunpack.c.l.b16 %v5133
        %v5166 = vunpack.c.l.b16 %v5134
        %v5167 = vunpack.c.l.b16 %v5135
        %v5168 = vunpack.c.l.b16 %v5136
        %v5169 = vunpack.c.l.b16 %v5137
        %v5170 = vunpack.c.l.b16 %v5138
        %v5171 = vunpack.c.l.b16 %v5139
        %v5172 = vunpack.c.l.b16 %v5140
        %v5173 = vunpack.c.l.b16 %v5141
        %v5174 = vunpack.c.l.b16 %v5142
        %v5175 = vunpack.c.l.b16 %v5143
        %v5176 = vunpack.c.l.b16 %v5144
        %v5177 = vunpack.c.l.b16 %v5145
        %v5178 = vunpack.c.l.b16 %v5146
        %v5179 = vpack.c.b16 %v5164, %v5163
        %v5180 = vpack.c.b16 %v5166, %v5165
        %v5181 = vpack.c.b16 %v5168, %v5167
        %v5182 = vpack.c.b16 %v5170, %v5169
        %v5183 = vpack.c.b16 %v5172, %v5171
        %v5184 = vpack.c.b16 %v5174, %v5173
        %v5185 = vpack.c.b16 %v5176, %v5175
        %v5186 = vpack.c.b16 %v5178, %v5177
        %5195 = vmatprep.subr.bf16.mxu0 0
        %5196 = vmatpush1.bf16.msra.mxu0 %v5186
        %5197 = vmatprep.subr.bf16.mxu0 0
        %5198 = vmatpush1.bf16.msra.mxu0 %v5185
        %5199 = vmatprep.subr.bf16.mxu0 0
        %5200 = vmatpush1.bf16.msra.mxu0 %v5184
        %5201 = vmatprep.subr.bf16.mxu0 0
        %5202 = vmatpush1.bf16.msra.mxu0 %v5183
        %5203 = vmatprep.subr.bf16.mxu0 0
        %5204 = vmatpush1.bf16.msra.mxu0 %v5182
        %5205 = vmatprep.subr.bf16.mxu0 0
        %5206 = vmatpush1.bf16.msra.mxu0 %v5181
        %5207 = vmatprep.subr.bf16.mxu0 0
        %5208 = vmatpush1.bf16.msra.mxu0 %v5180
        %5209 = vmatprep.subr.bf16.mxu0 0
        %5210 = vmatpush1.bf16.msra.mxu0 %v5179
        %5211 = vmatprep.subr.bf16.mxu0 0
        %5212 = vmatpush2.bf16.msra.mxu0 0
        %5213 = vmatprep.subr.bf16.mxu0 0
        %5214 = vmatpush2.bf16.msra.mxu0 0
        %5215 = vmatprep.subr.bf16.mxu0 0
        %5216 = vmatpush2.bf16.msra.mxu0 0
        %5217 = vmatprep.subr.bf16.mxu0 0
        %5218 = vmatpush2.bf16.msra.mxu0 0
        %5219 = vmatprep.subr.bf16.mxu0 0
        %5220 = vmatpush2.bf16.msra.mxu0 0
        %5221 = vmatprep.subr.bf16.mxu0 0
        %5222 = vmatpush2.bf16.msra.mxu0 0
        %5223 = vmatprep.subr.bf16.mxu0 0
        %5224 = vmatpush2.bf16.msra.mxu0 0
        %5225 = vmatprep.subr.bf16.mxu0 0
        %5226 = vmatpush2.bf16.msra.mxu0 0
        %5227 = vmatprep.mubr.bf16.mxu0 0
        %5228 = vmatmul.mubr.bf16.gmra.mxu0 %v3222
        %v5229 = vpop.f32.mrf.mxu0
        %v5230 = vadd.f32 0.0, %v5229
        %v5231 = vpop.f32.mrf.mxu0
        %v5232 = vpop.f32.mrf.mxu0
        %v5233 = vadd.f32 0.0, %v5232
        %v5234 = vpop.f32.mrf.mxu0
        %5235 = vdwg.mxu0
        %v5236 = vpack.c.bf16 %v5233, %v5230
        %v5237 = vld [vmem:[%s2375] sm:$0xf]
        %v5238 = vld [vmem:[%s2375 + $0x4] sm:$0xf]
        %v5239 = vld [vmem:[%s2375 + $0x8] sm:$0xf]
        %v5240 = vld [vmem:[%s2375 + $0xc] sm:$0xf]
        %v5241 = vld [vmem:[%s2375 + $0x10] sm:$0xf]
        %v5242 = vld [vmem:[%s2375 + $0x14] sm:$0xf]
        %v5243 = vld [vmem:[%s2375 + $0x18] sm:$0xf]
        %v5244 = vld [vmem:[%s2375 + $0x1c] sm:$0xf]
        %v5245 = vld [vmem:[%s2375 + $0x20] sm:$0xf]
        %v5246 = vld [vmem:[%s2375 + $0x24] sm:$0xf]
        %v5247 = vld [vmem:[%s2375 + $0x28] sm:$0xf]
        %v5248 = vld [vmem:[%s2375 + $0x2c] sm:$0xf]
        %v5249 = vld [vmem:[%s2375 + $0x30] sm:$0xf]
        %v5250 = vld [vmem:[%s2375 + $0x34] sm:$0xf]
        %v5251 = vld [vmem:[%s2375 + $0x38] sm:$0xf]
        %v5252 = vld [vmem:[%s2375 + $0x3c] sm:$0xf]
        %v5269 = vunpack.c.l.b16 %v5237
        %v5270 = vunpack.c.l.b16 %v5238
        %v5271 = vunpack.c.l.b16 %v5239
        %v5272 = vunpack.c.l.b16 %v5240
        %v5273 = vunpack.c.l.b16 %v5241
        %v5274 = vunpack.c.l.b16 %v5242
        %v5275 = vunpack.c.l.b16 %v5243
        %v5276 = vunpack.c.l.b16 %v5244
        %v5277 = vunpack.c.l.b16 %v5245
        %v5278 = vunpack.c.l.b16 %v5246
        %v5279 = vunpack.c.l.b16 %v5247
        %v5280 = vunpack.c.l.b16 %v5248
        %v5281 = vunpack.c.l.b16 %v5249
        %v5282 = vunpack.c.l.b16 %v5250
        %v5283 = vunpack.c.l.b16 %v5251
        %v5284 = vunpack.c.l.b16 %v5252
        %v5285 = vpack.c.b16 %v5270, %v5269
        %v5286 = vpack.c.b16 %v5272, %v5271
        %v5287 = vpack.c.b16 %v5274, %v5273
        %v5288 = vpack.c.b16 %v5276, %v5275
        %v5289 = vpack.c.b16 %v5278, %v5277
        %v5290 = vpack.c.b16 %v5280, %v5279
        %v5291 = vpack.c.b16 %v5282, %v5281
        %v5292 = vpack.c.b16 %v5284, %v5283
        %5301 = vmatprep.subr.bf16.mxu0 0
        %5302 = vmatpush1.bf16.msra.mxu0 %v5292
        %5303 = vmatprep.subr.bf16.mxu0 0
        %5304 = vmatpush1.bf16.msra.mxu0 %v5291
        %5305 = vmatprep.subr.bf16.mxu0 0
        %5306 = vmatpush1.bf16.msra.mxu0 %v5290
        %5307 = vmatprep.subr.bf16.mxu0 0
        %5308 = vmatpush1.bf16.msra.mxu0 %v5289
        %5309 = vmatprep.subr.bf16.mxu0 0
        %5310 = vmatpush1.bf16.msra.mxu0 %v5288
        %5311 = vmatprep.subr.bf16.mxu0 0
        %5312 = vmatpush1.bf16.msra.mxu0 %v5287
        %5313 = vmatprep.subr.bf16.mxu0 0
        %5314 = vmatpush1.bf16.msra.mxu0 %v5286
        %5315 = vmatprep.subr.bf16.mxu0 0
        %5316 = vmatpush1.bf16.msra.mxu0 %v5285
        %5317 = vmatprep.subr.bf16.mxu0 0
        %5318 = vmatpush2.bf16.msra.mxu0 0
        %5319 = vmatprep.subr.bf16.mxu0 0
        %5320 = vmatpush2.bf16.msra.mxu0 0
        %5321 = vmatprep.subr.bf16.mxu0 0
        %5322 = vmatpush2.bf16.msra.mxu0 0
        %5323 = vmatprep.subr.bf16.mxu0 0
        %5324 = vmatpush2.bf16.msra.mxu0 0
        %5325 = vmatprep.subr.bf16.mxu0 0
        %5326 = vmatpush2.bf16.msra.mxu0 0
        %5327 = vmatprep.subr.bf16.mxu0 0
        %5328 = vmatpush2.bf16.msra.mxu0 0
        %5329 = vmatprep.subr.bf16.mxu0 0
        %5330 = vmatpush2.bf16.msra.mxu0 0
        %5331 = vmatprep.subr.bf16.mxu0 0
        %5332 = vmatpush2.bf16.msra.mxu0 0
        %5333 = vmatprep.mubr.bf16.mxu0 0
        %5334 = vmatmul.mubr.bf16.gmra.mxu0 %v3222
        %v5335 = vpop.f32.mrf.mxu0
        %v5336 = vadd.f32 0.0, %v5335
        %v5337 = vpop.f32.mrf.mxu0
        %v5338 = vpop.f32.mrf.mxu0
        %v5339 = vadd.f32 0.0, %v5338
        %v5340 = vpop.f32.mrf.mxu0
        %5341 = vdwg.mxu0
        %v5342 = vpack.c.bf16 %v5339, %v5336
        %v5343 = vld [vmem:[%s2482] sm:$0xf]
        %v5344 = vld [vmem:[%s2482 + $0x4] sm:$0xf]
        %v5345 = vld [vmem:[%s2482 + $0x8] sm:$0xf]
        %v5346 = vld [vmem:[%s2482 + $0xc] sm:$0xf]
        %v5347 = vld [vmem:[%s2482 + $0x10] sm:$0xf]
        %v5348 = vld [vmem:[%s2482 + $0x14] sm:$0xf]
        %v5349 = vld [vmem:[%s2482 + $0x18] sm:$0xf]
        %v5350 = vld [vmem:[%s2482 + $0x1c] sm:$0xf]
        %v5351 = vld [vmem:[%s2482 + $0x20] sm:$0xf]
        %v5352 = vld [vmem:[%s2482 + $0x24] sm:$0xf]
        %v5353 = vld [vmem:[%s2482 + $0x28] sm:$0xf]
        %v5354 = vld [vmem:[%s2482 + $0x2c] sm:$0xf]
        %v5355 = vld [vmem:[%s2482 + $0x30] sm:$0xf]
        %v5356 = vld [vmem:[%s2482 + $0x34] sm:$0xf]
        %v5357 = vld [vmem:[%s2482 + $0x38] sm:$0xf]
        %v5358 = vld [vmem:[%s2482 + $0x3c] sm:$0xf]
        %v5375 = vunpack.c.l.b16 %v5343
        %v5376 = vunpack.c.l.b16 %v5344
        %v5377 = vunpack.c.l.b16 %v5345
        %v5378 = vunpack.c.l.b16 %v5346
        %v5379 = vunpack.c.l.b16 %v5347
        %v5380 = vunpack.c.l.b16 %v5348
        %v5381 = vunpack.c.l.b16 %v5349
        %v5382 = vunpack.c.l.b16 %v5350
        %v5383 = vunpack.c.l.b16 %v5351
        %v5384 = vunpack.c.l.b16 %v5352
        %v5385 = vunpack.c.l.b16 %v5353
        %v5386 = vunpack.c.l.b16 %v5354
        %v5387 = vunpack.c.l.b16 %v5355
        %v5388 = vunpack.c.l.b16 %v5356
        %v5389 = vunpack.c.l.b16 %v5357
        %v5390 = vunpack.c.l.b16 %v5358
        %v5391 = vpack.c.b16 %v5376, %v5375
        %v5392 = vpack.c.b16 %v5378, %v5377
        %v5393 = vpack.c.b16 %v5380, %v5379
        %v5394 = vpack.c.b16 %v5382, %v5381
        %v5395 = vpack.c.b16 %v5384, %v5383
        %v5396 = vpack.c.b16 %v5386, %v5385
        %v5397 = vpack.c.b16 %v5388, %v5387
        %v5398 = vpack.c.b16 %v5390, %v5389
        %5407 = vmatprep.subr.bf16.mxu0 0
        %5408 = vmatpush1.bf16.msra.mxu0 %v5398
        %5409 = vmatprep.subr.bf16.mxu0 0
        %5410 = vmatpush1.bf16.msra.mxu0 %v5397
        %5411 = vmatprep.subr.bf16.mxu0 0
        %5412 = vmatpush1.bf16.msra.mxu0 %v5396
        %5413 = vmatprep.subr.bf16.mxu0 0
        %5414 = vmatpush1.bf16.msra.mxu0 %v5395
        %5415 = vmatprep.subr.bf16.mxu0 0
        %5416 = vmatpush1.bf16.msra.mxu0 %v5394
        %5417 = vmatprep.subr.bf16.mxu0 0
        %5418 = vmatpush1.bf16.msra.mxu0 %v5393
        %5419 = vmatprep.subr.bf16.mxu0 0
        %5420 = vmatpush1.bf16.msra.mxu0 %v5392
        %5421 = vmatprep.subr.bf16.mxu0 0
        %5422 = vmatpush1.bf16.msra.mxu0 %v5391
        %5423 = vmatprep.subr.bf16.mxu0 0
        %5424 = vmatpush2.bf16.msra.mxu0 0
        %5425 = vmatprep.subr.bf16.mxu0 0
        %5426 = vmatpush2.bf16.msra.mxu0 0
        %5427 = vmatprep.subr.bf16.mxu0 0
        %5428 = vmatpush2.bf16.msra.mxu0 0
        %5429 = vmatprep.subr.bf16.mxu0 0
        %5430 = vmatpush2.bf16.msra.mxu0 0
        %5431 = vmatprep.subr.bf16.mxu0 0
        %5432 = vmatpush2.bf16.msra.mxu0 0
        %5433 = vmatprep.subr.bf16.mxu0 0
        %5434 = vmatpush2.bf16.msra.mxu0 0
        %5435 = vmatprep.subr.bf16.mxu0 0
        %5436 = vmatpush2.bf16.msra.mxu0 0
        %5437 = vmatprep.subr.bf16.mxu0 0
        %5438 = vmatpush2.bf16.msra.mxu0 0
        %5439 = vmatprep.mubr.bf16.mxu0 0
        %5440 = vmatmul.mubr.bf16.gmra.mxu0 %v3222
        %v5441 = vpop.f32.mrf.mxu0
        %v5442 = vadd.f32 0.0, %v5441
        %v5443 = vpop.f32.mrf.mxu0
        %v5444 = vpop.f32.mrf.mxu0
        %v5445 = vadd.f32 0.0, %v5444
        %v5446 = vpop.f32.mrf.mxu0
        %5447 = vdwg.mxu0
        %v5448 = vpack.c.bf16 %v5445, %v5442
        %v5449 = vld [vmem:[%s2589] sm:$0xf]
        %v5450 = vld [vmem:[%s2589 + $0x4] sm:$0xf]
        %v5451 = vld [vmem:[%s2589 + $0x8] sm:$0xf]
        %v5452 = vld [vmem:[%s2589 + $0xc] sm:$0xf]
        %v5453 = vld [vmem:[%s2589 + $0x10] sm:$0xf]
        %v5454 = vld [vmem:[%s2589 + $0x14] sm:$0xf]
        %v5455 = vld [vmem:[%s2589 + $0x18] sm:$0xf]
        %v5456 = vld [vmem:[%s2589 + $0x1c] sm:$0xf]
        %v5457 = vld [vmem:[%s2589 + $0x20] sm:$0xf]
        %v5458 = vld [vmem:[%s2589 + $0x24] sm:$0xf]
        %v5459 = vld [vmem:[%s2589 + $0x28] sm:$0xf]
        %v5460 = vld [vmem:[%s2589 + $0x2c] sm:$0xf]
        %v5461 = vld [vmem:[%s2589 + $0x30] sm:$0xf]
        %v5462 = vld [vmem:[%s2589 + $0x34] sm:$0xf]
        %v5463 = vld [vmem:[%s2589 + $0x38] sm:$0xf]
        %v5464 = vld [vmem:[%s2589 + $0x3c] sm:$0xf]
        %v5481 = vunpack.c.l.b16 %v5449
        %v5482 = vunpack.c.l.b16 %v5450
        %v5483 = vunpack.c.l.b16 %v5451
        %v5484 = vunpack.c.l.b16 %v5452
        %v5485 = vunpack.c.l.b16 %v5453
        %v5486 = vunpack.c.l.b16 %v5454
        %v5487 = vunpack.c.l.b16 %v5455
        %v5488 = vunpack.c.l.b16 %v5456
        %v5489 = vunpack.c.l.b16 %v5457
        %v5490 = vunpack.c.l.b16 %v5458
        %v5491 = vunpack.c.l.b16 %v5459
        %v5492 = vunpack.c.l.b16 %v5460
        %v5493 = vunpack.c.l.b16 %v5461
        %v5494 = vunpack.c.l.b16 %v5462
        %v5495 = vunpack.c.l.b16 %v5463
        %v5496 = vunpack.c.l.b16 %v5464
        %v5497 = vpack.c.b16 %v5482, %v5481
        %v5498 = vpack.c.b16 %v5484, %v5483
        %v5499 = vpack.c.b16 %v5486, %v5485
        %v5500 = vpack.c.b16 %v5488, %v5487
        %v5501 = vpack.c.b16 %v5490, %v5489
        %v5502 = vpack.c.b16 %v5492, %v5491
        %v5503 = vpack.c.b16 %v5494, %v5493
        %v5504 = vpack.c.b16 %v5496, %v5495
        %5513 = vmatprep.subr.bf16.mxu0 0
        %5514 = vmatpush1.bf16.msra.mxu0 %v5504
        %5515 = vmatprep.subr.bf16.mxu0 0
        %5516 = vmatpush1.bf16.msra.mxu0 %v5503
        %5517 = vmatprep.subr.bf16.mxu0 0
        %5518 = vmatpush1.bf16.msra.mxu0 %v5502
        %5519 = vmatprep.subr.bf16.mxu0 0
        %5520 = vmatpush1.bf16.msra.mxu0 %v5501
        %5521 = vmatprep.subr.bf16.mxu0 0
        %5522 = vmatpush1.bf16.msra.mxu0 %v5500
        %5523 = vmatprep.subr.bf16.mxu0 0
        %5524 = vmatpush1.bf16.msra.mxu0 %v5499
        %5525 = vmatprep.subr.bf16.mxu0 0
        %5526 = vmatpush1.bf16.msra.mxu0 %v5498
        %5527 = vmatprep.subr.bf16.mxu0 0
        %5528 = vmatpush1.bf16.msra.mxu0 %v5497
        %5529 = vmatprep.subr.bf16.mxu0 0
        %5530 = vmatpush2.bf16.msra.mxu0 0
        %5531 = vmatprep.subr.bf16.mxu0 0
        %5532 = vmatpush2.bf16.msra.mxu0 0
        %5533 = vmatprep.subr.bf16.mxu0 0
        %5534 = vmatpush2.bf16.msra.mxu0 0
        %5535 = vmatprep.subr.bf16.mxu0 0
        %5536 = vmatpush2.bf16.msra.mxu0 0
        %5537 = vmatprep.subr.bf16.mxu0 0
        %5538 = vmatpush2.bf16.msra.mxu0 0
        %5539 = vmatprep.subr.bf16.mxu0 0
        %5540 = vmatpush2.bf16.msra.mxu0 0
        %5541 = vmatprep.subr.bf16.mxu0 0
        %5542 = vmatpush2.bf16.msra.mxu0 0
        %5543 = vmatprep.subr.bf16.mxu0 0
        %5544 = vmatpush2.bf16.msra.mxu0 0
        %5545 = vmatprep.mubr.bf16.mxu0 0
        %5546 = vmatmul.mubr.bf16.gmra.mxu0 %v3222
        %v5547 = vpop.f32.mrf.mxu0
        %v5548 = vadd.f32 0.0, %v5547
        %v5549 = vpop.f32.mrf.mxu0
        %v5550 = vpop.f32.mrf.mxu0
        %v5551 = vadd.f32 0.0, %v5550
        %v5552 = vpop.f32.mrf.mxu0
        %5553 = vdwg.mxu0
        %v5554 = vpack.c.bf16 %v5551, %v5548
        %v5555 = vld [vmem:[%s2696] sm:$0xf]
        %v5556 = vld [vmem:[%s2696 + $0x4] sm:$0xf]
        %v5557 = vld [vmem:[%s2696 + $0x8] sm:$0xf]
        %v5558 = vld [vmem:[%s2696 + $0xc] sm:$0xf]
        %v5559 = vld [vmem:[%s2696 + $0x10] sm:$0xf]
        %v5560 = vld [vmem:[%s2696 + $0x14] sm:$0xf]
        %v5561 = vld [vmem:[%s2696 + $0x18] sm:$0xf]
        %v5562 = vld [vmem:[%s2696 + $0x1c] sm:$0xf]
        %v5563 = vld [vmem:[%s2696 + $0x20] sm:$0xf]
        %v5564 = vld [vmem:[%s2696 + $0x24] sm:$0xf]
        %v5565 = vld [vmem:[%s2696 + $0x28] sm:$0xf]
        %v5566 = vld [vmem:[%s2696 + $0x2c] sm:$0xf]
        %v5567 = vld [vmem:[%s2696 + $0x30] sm:$0xf]
        %v5568 = vld [vmem:[%s2696 + $0x34] sm:$0xf]
        %v5569 = vld [vmem:[%s2696 + $0x38] sm:$0xf]
        %v5570 = vld [vmem:[%s2696 + $0x3c] sm:$0xf]
        %v5587 = vunpack.c.l.b16 %v5555
        %v5588 = vunpack.c.l.b16 %v5556
        %v5589 = vunpack.c.l.b16 %v5557
        %v5590 = vunpack.c.l.b16 %v5558
        %v5591 = vunpack.c.l.b16 %v5559
        %v5592 = vunpack.c.l.b16 %v5560
        %v5593 = vunpack.c.l.b16 %v5561
        %v5594 = vunpack.c.l.b16 %v5562
        %v5595 = vunpack.c.l.b16 %v5563
        %v5596 = vunpack.c.l.b16 %v5564
        %v5597 = vunpack.c.l.b16 %v5565
        %v5598 = vunpack.c.l.b16 %v5566
        %v5599 = vunpack.c.l.b16 %v5567
        %v5600 = vunpack.c.l.b16 %v5568
        %v5601 = vunpack.c.l.b16 %v5569
        %v5602 = vunpack.c.l.b16 %v5570
        %v5603 = vpack.c.b16 %v5588, %v5587
        %v5604 = vpack.c.b16 %v5590, %v5589
        %v5605 = vpack.c.b16 %v5592, %v5591
        %v5606 = vpack.c.b16 %v5594, %v5593
        %v5607 = vpack.c.b16 %v5596, %v5595
        %v5608 = vpack.c.b16 %v5598, %v5597
        %v5609 = vpack.c.b16 %v5600, %v5599
        %v5610 = vpack.c.b16 %v5602, %v5601
        %5619 = vmatprep.subr.bf16.mxu0 0
        %5620 = vmatpush1.bf16.msra.mxu0 %v5610
        %5621 = vmatprep.subr.bf16.mxu0 0
        %5622 = vmatpush1.bf16.msra.mxu0 %v5609
        %5623 = vmatprep.subr.bf16.mxu0 0
        %5624 = vmatpush1.bf16.msra.mxu0 %v5608
        %5625 = vmatprep.subr.bf16.mxu0 0
        %5626 = vmatpush1.bf16.msra.mxu0 %v5607
        %5627 = vmatprep.subr.bf16.mxu0 0
        %5628 = vmatpush1.bf16.msra.mxu0 %v5606
        %5629 = vmatprep.subr.bf16.mxu0 0
        %5630 = vmatpush1.bf16.msra.mxu0 %v5605
        %5631 = vmatprep.subr.bf16.mxu0 0
        %5632 = vmatpush1.bf16.msra.mxu0 %v5604
        %5633 = vmatprep.subr.bf16.mxu0 0
        %5634 = vmatpush1.bf16.msra.mxu0 %v5603
        %5635 = vmatprep.subr.bf16.mxu0 0
        %5636 = vmatpush2.bf16.msra.mxu0 0
        %5637 = vmatprep.subr.bf16.mxu0 0
        %5638 = vmatpush2.bf16.msra.mxu0 0
        %5639 = vmatprep.subr.bf16.mxu0 0
        %5640 = vmatpush2.bf16.msra.mxu0 0
        %5641 = vmatprep.subr.bf16.mxu0 0
        %5642 = vmatpush2.bf16.msra.mxu0 0
        %5643 = vmatprep.subr.bf16.mxu0 0
        %5644 = vmatpush2.bf16.msra.mxu0 0
        %5645 = vmatprep.subr.bf16.mxu0 0
        %5646 = vmatpush2.bf16.msra.mxu0 0
        %5647 = vmatprep.subr.bf16.mxu0 0
        %5648 = vmatpush2.bf16.msra.mxu0 0
        %5649 = vmatprep.subr.bf16.mxu0 0
        %5650 = vmatpush2.bf16.msra.mxu0 0
        %5651 = vmatprep.mubr.bf16.mxu0 0
        %5652 = vmatmul.mubr.bf16.gmra.mxu0 %v3222
        %v5653 = vpop.f32.mrf.mxu0
        %v5654 = vadd.f32 0.0, %v5653
        %v5655 = vpop.f32.mrf.mxu0
        %v5656 = vpop.f32.mrf.mxu0
        %v5657 = vadd.f32 0.0, %v5656
        %v5658 = vpop.f32.mrf.mxu0
        %5659 = vdwg.mxu0
        %v5660 = vpack.c.bf16 %v5657, %v5654
        %v5661 = vld [vmem:[%s2803] sm:$0xf]
        %v5662 = vld [vmem:[%s2803 + $0x4] sm:$0xf]
        %v5663 = vld [vmem:[%s2803 + $0x8] sm:$0xf]
        %v5664 = vld [vmem:[%s2803 + $0xc] sm:$0xf]
        %v5665 = vld [vmem:[%s2803 + $0x10] sm:$0xf]
        %v5666 = vld [vmem:[%s2803 + $0x14] sm:$0xf]
        %v5667 = vld [vmem:[%s2803 + $0x18] sm:$0xf]
        %v5668 = vld [vmem:[%s2803 + $0x1c] sm:$0xf]
        %v5669 = vld [vmem:[%s2803 + $0x20] sm:$0xf]
        %v5670 = vld [vmem:[%s2803 + $0x24] sm:$0xf]
        %v5671 = vld [vmem:[%s2803 + $0x28] sm:$0xf]
        %v5672 = vld [vmem:[%s2803 + $0x2c] sm:$0xf]
        %v5673 = vld [vmem:[%s2803 + $0x30] sm:$0xf]
        %v5674 = vld [vmem:[%s2803 + $0x34] sm:$0xf]
        %v5675 = vld [vmem:[%s2803 + $0x38] sm:$0xf]
        %v5676 = vld [vmem:[%s2803 + $0x3c] sm:$0xf]
        %v5693 = vunpack.c.l.b16 %v5661
        %v5694 = vunpack.c.l.b16 %v5662
        %v5695 = vunpack.c.l.b16 %v5663
        %v5696 = vunpack.c.l.b16 %v5664
        %v5697 = vunpack.c.l.b16 %v5665
        %v5698 = vunpack.c.l.b16 %v5666
        %v5699 = vunpack.c.l.b16 %v5667
        %v5700 = vunpack.c.l.b16 %v5668
        %v5701 = vunpack.c.l.b16 %v5669
        %v5702 = vunpack.c.l.b16 %v5670
        %v5703 = vunpack.c.l.b16 %v5671
        %v5704 = vunpack.c.l.b16 %v5672
        %v5705 = vunpack.c.l.b16 %v5673
        %v5706 = vunpack.c.l.b16 %v5674
        %v5707 = vunpack.c.l.b16 %v5675
        %v5708 = vunpack.c.l.b16 %v5676
        %v5709 = vpack.c.b16 %v5694, %v5693
        %v5710 = vpack.c.b16 %v5696, %v5695
        %v5711 = vpack.c.b16 %v5698, %v5697
        %v5712 = vpack.c.b16 %v5700, %v5699
        %v5713 = vpack.c.b16 %v5702, %v5701
        %v5714 = vpack.c.b16 %v5704, %v5703
        %v5715 = vpack.c.b16 %v5706, %v5705
        %v5716 = vpack.c.b16 %v5708, %v5707
        %5725 = vmatprep.subr.bf16.mxu0 0
        %5726 = vmatpush1.bf16.msra.mxu0 %v5716
        %5727 = vmatprep.subr.bf16.mxu0 0
        %5728 = vmatpush1.bf16.msra.mxu0 %v5715
        %5729 = vmatprep.subr.bf16.mxu0 0
        %5730 = vmatpush1.bf16.msra.mxu0 %v5714
        %5731 = vmatprep.subr.bf16.mxu0 0
        %5732 = vmatpush1.bf16.msra.mxu0 %v5713
        %5733 = vmatprep.subr.bf16.mxu0 0
        %5734 = vmatpush1.bf16.msra.mxu0 %v5712
        %5735 = vmatprep.subr.bf16.mxu0 0
        %5736 = vmatpush1.bf16.msra.mxu0 %v5711
        %5737 = vmatprep.subr.bf16.mxu0 0
        %5738 = vmatpush1.bf16.msra.mxu0 %v5710
        %5739 = vmatprep.subr.bf16.mxu0 0
        %5740 = vmatpush1.bf16.msra.mxu0 %v5709
        %5741 = vmatprep.subr.bf16.mxu0 0
        %5742 = vmatpush2.bf16.msra.mxu0 0
        %5743 = vmatprep.subr.bf16.mxu0 0
        %5744 = vmatpush2.bf16.msra.mxu0 0
        %5745 = vmatprep.subr.bf16.mxu0 0
        %5746 = vmatpush2.bf16.msra.mxu0 0
        %5747 = vmatprep.subr.bf16.mxu0 0
        %5748 = vmatpush2.bf16.msra.mxu0 0
        %5749 = vmatprep.subr.bf16.mxu0 0
        %5750 = vmatpush2.bf16.msra.mxu0 0
        %5751 = vmatprep.subr.bf16.mxu0 0
        %5752 = vmatpush2.bf16.msra.mxu0 0
        %5753 = vmatprep.subr.bf16.mxu0 0
        %5754 = vmatpush2.bf16.msra.mxu0 0
        %5755 = vmatprep.subr.bf16.mxu0 0
        %5756 = vmatpush2.bf16.msra.mxu0 0
        %5757 = vmatprep.mubr.bf16.mxu0 0
        %5758 = vmatmul.mubr.bf16.gmra.mxu0 %v3222
        %v5759 = vpop.f32.mrf.mxu0
        %v5760 = vadd.f32 0.0, %v5759
        %v5761 = vpop.f32.mrf.mxu0
        %v5762 = vpop.f32.mrf.mxu0
        %v5763 = vadd.f32 0.0, %v5762
        %v5764 = vpop.f32.mrf.mxu0
        %5765 = vdwg.mxu0
        %v5766 = vpack.c.bf16 %v5763, %v5760
        %v5767 = vld [vmem:[%s2910] sm:$0xf]
        %v5768 = vld [vmem:[%s2910 + $0x4] sm:$0xf]
        %v5769 = vld [vmem:[%s2910 + $0x8] sm:$0xf]
        %v5770 = vld [vmem:[%s2910 + $0xc] sm:$0xf]
        %v5771 = vld [vmem:[%s2910 + $0x10] sm:$0xf]
        %v5772 = vld [vmem:[%s2910 + $0x14] sm:$0xf]
        %v5773 = vld [vmem:[%s2910 + $0x18] sm:$0xf]
        %v5774 = vld [vmem:[%s2910 + $0x1c] sm:$0xf]
        %v5775 = vld [vmem:[%s2910 + $0x20] sm:$0xf]
        %v5776 = vld [vmem:[%s2910 + $0x24] sm:$0xf]
        %v5777 = vld [vmem:[%s2910 + $0x28] sm:$0xf]
        %v5778 = vld [vmem:[%s2910 + $0x2c] sm:$0xf]
        %v5779 = vld [vmem:[%s2910 + $0x30] sm:$0xf]
        %v5780 = vld [vmem:[%s2910 + $0x34] sm:$0xf]
        %v5781 = vld [vmem:[%s2910 + $0x38] sm:$0xf]
        %v5782 = vld [vmem:[%s2910 + $0x3c] sm:$0xf]
        %v5799 = vunpack.c.l.b16 %v5767
        %v5800 = vunpack.c.l.b16 %v5768
        %v5801 = vunpack.c.l.b16 %v5769
        %v5802 = vunpack.c.l.b16 %v5770
        %v5803 = vunpack.c.l.b16 %v5771
        %v5804 = vunpack.c.l.b16 %v5772
        %v5805 = vunpack.c.l.b16 %v5773
        %v5806 = vunpack.c.l.b16 %v5774
        %v5807 = vunpack.c.l.b16 %v5775
        %v5808 = vunpack.c.l.b16 %v5776
        %v5809 = vunpack.c.l.b16 %v5777
        %v5810 = vunpack.c.l.b16 %v5778
        %v5811 = vunpack.c.l.b16 %v5779
        %v5812 = vunpack.c.l.b16 %v5780
        %v5813 = vunpack.c.l.b16 %v5781
        %v5814 = vunpack.c.l.b16 %v5782
        %v5815 = vpack.c.b16 %v5800, %v5799
        %v5816 = vpack.c.b16 %v5802, %v5801
        %v5817 = vpack.c.b16 %v5804, %v5803
        %v5818 = vpack.c.b16 %v5806, %v5805
        %v5819 = vpack.c.b16 %v5808, %v5807
        %v5820 = vpack.c.b16 %v5810, %v5809
        %v5821 = vpack.c.b16 %v5812, %v5811
        %v5822 = vpack.c.b16 %v5814, %v5813
        %5831 = vmatprep.subr.bf16.mxu0 0
        %5832 = vmatpush1.bf16.msra.mxu0 %v5822
        %5833 = vmatprep.subr.bf16.mxu0 0
        %5834 = vmatpush1.bf16.msra.mxu0 %v5821
        %5835 = vmatprep.subr.bf16.mxu0 0
        %5836 = vmatpush1.bf16.msra.mxu0 %v5820
        %5837 = vmatprep.subr.bf16.mxu0 0
        %5838 = vmatpush1.bf16.msra.mxu0 %v5819
        %5839 = vmatprep.subr.bf16.mxu0 0
        %5840 = vmatpush1.bf16.msra.mxu0 %v5818
        %5841 = vmatprep.subr.bf16.mxu0 0
        %5842 = vmatpush1.bf16.msra.mxu0 %v5817
        %5843 = vmatprep.subr.bf16.mxu0 0
        %5844 = vmatpush1.bf16.msra.mxu0 %v5816
        %5845 = vmatprep.subr.bf16.mxu0 0
        %5846 = vmatpush1.bf16.msra.mxu0 %v5815
        %5847 = vmatprep.subr.bf16.mxu0 0
        %5848 = vmatpush2.bf16.msra.mxu0 0
        %5849 = vmatprep.subr.bf16.mxu0 0
        %5850 = vmatpush2.bf16.msra.mxu0 0
        %5851 = vmatprep.subr.bf16.mxu0 0
        %5852 = vmatpush2.bf16.msra.mxu0 0
        %5853 = vmatprep.subr.bf16.mxu0 0
        %5854 = vmatpush2.bf16.msra.mxu0 0
        %5855 = vmatprep.subr.bf16.mxu0 0
        %5856 = vmatpush2.bf16.msra.mxu0 0
        %5857 = vmatprep.subr.bf16.mxu0 0
        %5858 = vmatpush2.bf16.msra.mxu0 0
        %5859 = vmatprep.subr.bf16.mxu0 0
        %5860 = vmatpush2.bf16.msra.mxu0 0
        %5861 = vmatprep.subr.bf16.mxu0 0
        %5862 = vmatpush2.bf16.msra.mxu0 0
        %5863 = vmatprep.mubr.bf16.mxu0 0
        %5864 = vmatmul.mubr.bf16.gmra.mxu0 %v3222
        %v5865 = vpop.f32.mrf.mxu0
        %v5866 = vadd.f32 0.0, %v5865
        %v5867 = vpop.f32.mrf.mxu0
        %v5868 = vpop.f32.mrf.mxu0
        %v5869 = vadd.f32 0.0, %v5868
        %v5870 = vpop.f32.mrf.mxu0
        %5871 = vdwg.mxu0
        %v5872 = vpack.c.bf16 %v5869, %v5866
        %s5873 = scalar_lea.vmem [#allocation2], 64
        %v5874 = vld [vmem:[%s5873] sm:$0xff]
        %v5875 = vld [vmem:[%s5873 + $0x8] sm:$0xff]
        %v5876 = vld [vmem:[%s5873 + $0x10] sm:$0xff]
        %v5877 = vld [vmem:[%s5873 + $0x18] sm:$0xff]
        %v5878 = vld [vmem:[%s5873 + $0x20] sm:$0xff]
        %v5879 = vld [vmem:[%s5873 + $0x28] sm:$0xff]
        %v5880 = vld [vmem:[%s5873 + $0x30] sm:$0xff]
        %v5881 = vld [vmem:[%s5873 + $0x38] sm:$0xff]
        %s5882 = scalar_lea.vmem %s2, 32
        %v5883 = vld [vmem:[%s5882] sm:$0xff]
        %v5884 = vld [vmem:[%s5882 + $0x8] sm:$0xff]
        %v5885 = vld [vmem:[%s5882 + $0x10] sm:$0xff]
        %v5886 = vld [vmem:[%s5882 + $0x18] sm:$0xff]
        %5888 = vset.pattern.permute.xlu0 0
        %5889 = vperm.xlu0 %5888, %v5883
        %v5890 = vpop.permute.xlu0 %5889
        %5893 = vset.pattern.permute.xlu0 0
        %5894 = vperm.xlu0 %5893, %v5884
        %v5895 = vpop.permute.xlu0 %5894
        %5898 = vset.pattern.permute.xlu0 0
        %5899 = vperm.xlu0 %5898, %v5885
        %v5900 = vpop.permute.xlu0 %5899
        %5903 = vset.pattern.permute.xlu0 0
        %5904 = vperm.xlu0 %5903, %v5886
        %v5905 = vpop.permute.xlu0 %5904
        %v5915 = vunpack.c.l.b16 %v5874
        %v5916 = vunpack.c.h.b16 %v5874
        %v5917 = vunpack.c.l.b16 %v5875
        %v5918 = vunpack.c.h.b16 %v5875
        %v5919 = vunpack.c.l.b16 %v5876
        %v5920 = vunpack.c.h.b16 %v5876
        %v5921 = vunpack.c.l.b16 %v5877
        %v5922 = vunpack.c.h.b16 %v5877
        %v5923 = vunpack.c.l.b16 %v5878
        %v5924 = vunpack.c.h.b16 %v5878
        %v5925 = vunpack.c.l.b16 %v5879
        %v5926 = vunpack.c.h.b16 %v5879
        %v5927 = vunpack.c.l.b16 %v5880
        %v5928 = vunpack.c.h.b16 %v5880
        %v5929 = vunpack.c.l.b16 %v5881
        %v5930 = vunpack.c.h.b16 %v5881
        %v5931 = vpack.c.b16 %v5919, %v5915
        %v5932 = vpack.c.b16 %v5920, %v5916
        %v5933 = vpack.c.b16 %v5921, %v5917
        %v5934 = vpack.c.b16 %v5922, %v5918
        %v5935 = vpack.c.b16 %v5927, %v5923
        %v5936 = vpack.c.b16 %v5928, %v5924
        %v5937 = vpack.c.b16 %v5929, %v5925
        %v5938 = vpack.c.b16 %v5930, %v5926
        %v5946 = vsel %vm3087, %v5934, 0
        %v5949 = vsel %vm3087, %v5938, 0
        %5951 = vmatprep.subr.bf16.mxu0 0
        %5952 = vmatpush1.bf16.msra.mxu0 %v4070
        %5953 = vmatprep.subr.bf16.mxu0 0
        %5954 = vmatpush1.bf16.msra.mxu0 %v3964
        %5955 = vmatprep.subr.bf16.mxu0 0
        %5956 = vmatpush1.bf16.msra.mxu0 %v3858
        %5957 = vmatprep.subr.bf16.mxu0 0
        %5958 = vmatpush1.bf16.msra.mxu0 %v3752
        %5959 = vmatprep.subr.bf16.mxu0 0
        %5960 = vmatpush1.bf16.msra.mxu0 %v3646
        %5961 = vmatprep.subr.bf16.mxu0 0
        %5962 = vmatpush1.bf16.msra.mxu0 %v3540
        %5963 = vmatprep.subr.bf16.mxu0 0
        %5964 = vmatpush1.bf16.msra.mxu0 %v3434
        %5965 = vmatprep.subr.bf16.mxu0 0
        %5966 = vmatpush1.bf16.msra.mxu0 %v3328
        %5967 = vmatprep.subr.bf16.mxu0 0
        %5968 = vmatpush2.bf16.msra.mxu0 %v4918
        %5969 = vmatprep.subr.bf16.mxu0 0
        %5970 = vmatpush2.bf16.msra.mxu0 %v4812
        %5971 = vmatprep.subr.bf16.mxu0 0
        %5972 = vmatpush2.bf16.msra.mxu0 %v4706
        %5973 = vmatprep.subr.bf16.mxu0 0
        %5974 = vmatpush2.bf16.msra.mxu0 %v4600
        %5975 = vmatprep.subr.bf16.mxu0 0
        %5976 = vmatpush2.bf16.msra.mxu0 %v4494
        %5977 = vmatprep.subr.bf16.mxu0 0
        %5978 = vmatpush2.bf16.msra.mxu0 %v4388
        %5979 = vmatprep.subr.bf16.mxu0 0
        %5980 = vmatpush2.bf16.msra.mxu0 %v4282
        %5981 = vmatprep.subr.bf16.mxu0 0
        %5982 = vmatpush2.bf16.msra.mxu0 %v4176
        %5983 = vmatprep.mubr.bf16.mxu0 %v5932
        %5984 = vmatmul.mubr.bf16.gmra.mxu0 %v5931
        %v5985 = vpop.f32.mrf.mxu0
        %v5986 = vadd.f32 %v5890, %v5985
        %v5987 = vpop.f32.mrf.mxu0
        %v5988 = vpop.f32.mrf.mxu0
        %v5989 = vadd.f32 %v5895, %v5988
        %v5990 = vpop.f32.mrf.mxu0
        %5991 = vmatprep.mubr.bf16.mxu0 %v5936
        %5992 = vmatmul.mubr.bf16.gmra.mxu0 %v5935
        %v5993 = vpop.f32.mrf.mxu0
        %v5994 = vadd.f32 %v5900, %v5993
        %v5995 = vpop.f32.mrf.mxu0
        %v5996 = vpop.f32.mrf.mxu0
        %v5997 = vadd.f32 %v5905, %v5996
        %v5998 = vpop.f32.mrf.mxu0
        %5999 = vdwg.mxu0
        %6000 = vmatprep.subr.bf16.mxu0 0
        %6001 = vmatpush1.bf16.msra.mxu0 %v5766
        %6002 = vmatprep.subr.bf16.mxu0 0
        %6003 = vmatpush1.bf16.msra.mxu0 %v5660
        %6004 = vmatprep.subr.bf16.mxu0 0
        %6005 = vmatpush1.bf16.msra.mxu0 %v5554
        %6006 = vmatprep.subr.bf16.mxu0 0
        %6007 = vmatpush1.bf16.msra.mxu0 %v5448
        %6008 = vmatprep.subr.bf16.mxu0 0
        %6009 = vmatpush1.bf16.msra.mxu0 %v5342
        %6010 = vmatprep.subr.bf16.mxu0 0
        %6011 = vmatpush1.bf16.msra.mxu0 %v5236
        %6012 = vmatprep.subr.bf16.mxu0 0
        %6013 = vmatpush1.bf16.msra.mxu0 %v5130
        %6014 = vmatprep.subr.bf16.mxu0 0
        %6015 = vmatpush1.bf16.msra.mxu0 %v5024
        %6016 = vmatprep.subr.bf16.mxu0 0
        %6017 = vmatpush2.bf16.msra.mxu0 0
        %6018 = vmatprep.subr.bf16.mxu0 0
        %6019 = vmatpush2.bf16.msra.mxu0 0
        %6020 = vmatprep.subr.bf16.mxu0 0
        %6021 = vmatpush2.bf16.msra.mxu0 0
        %6022 = vmatprep.subr.bf16.mxu0 0
        %6023 = vmatpush2.bf16.msra.mxu0 0
        %6024 = vmatprep.subr.bf16.mxu0 0
        %6025 = vmatpush2.bf16.msra.mxu0 0
        %6026 = vmatprep.subr.bf16.mxu0 0
        %6027 = vmatpush2.bf16.msra.mxu0 0
        %6028 = vmatprep.subr.bf16.mxu0 0
        %6029 = vmatpush2.bf16.msra.mxu0 0
        %6030 = vmatprep.subr.bf16.mxu0 0
        %6031 = vmatpush2.bf16.msra.mxu0 %v5872
        %6032 = vmatprep.mubr.bf16.mxu0 %v5946
        %6033 = vmatmul.mubr.bf16.gmra.mxu0 %v5933
        %v6034 = vpop.f32.mrf.mxu0
        %v6035 = vadd.f32 %v5986, %v6034
        %v6036 = vpop.f32.mrf.mxu0
        %v6037 = vpop.f32.mrf.mxu0
        %v6038 = vadd.f32 %v5989, %v6037
        %v6039 = vpop.f32.mrf.mxu0
        %6040 = vmatprep.mubr.bf16.mxu0 %v5949
        %6041 = vmatmul.mubr.bf16.gmra.mxu0 %v5937
        %v6042 = vpop.f32.mrf.mxu0
        %v6043 = vadd.f32 %v5994, %v6042
        %v6044 = vpop.f32.mrf.mxu0
        %v6045 = vpop.f32.mrf.mxu0
        %v6046 = vadd.f32 %v5997, %v6045
        %v6047 = vpop.f32.mrf.mxu0
        %6048 = vdwg.mxu0
        %v6049 = vxor.u32 %v6035, 2147483648
        %v6050 = vmul.f32 %v6049, 1.442695
        %v6051 = vpow.pop %v6050
        %v6052 = vadd.f32 %v6051, 1.0
        %v6053 = vrcp.pop %v6052
        %v6054 = vmul.f32 1.0, %v6053
        %v6055 = vxor.u32 %v6038, 2147483648
        %v6056 = vmul.f32 %v6055, 1.442695
        %v6057 = vpow.pop %v6056
        %v6058 = vadd.f32 %v6057, 1.0
        %v6059 = vrcp.pop %v6058
        %v6060 = vmul.f32 1.0, %v6059
        %v6061 = vxor.u32 %v6043, 2147483648
        %v6062 = vmul.f32 %v6061, 1.442695
        %v6063 = vpow.pop %v6062
        %v6064 = vadd.f32 %v6063, 1.0
        %v6065 = vrcp.pop %v6064
        %v6066 = vmul.f32 1.0, %v6065
        %v6067 = vtanh.pop %v6046
        %v6068 = vmul.f32 %v6060, %v3221
        %v6069 = vmul.f32 %v6054, %v6067
        %v6070 = vadd.f32 %v6068, %v6069
        %v6071 = vtanh.pop %v6070
        %v6072 = vmul.f32 %v6066, %v6071
        %6073 = vst [vmem:[%s3218] sm:$0xff] %v6072
        %6074 = vst [vmem:[%s3220] sm:$0xff] %v6070
        %6075 = vst [vmem:[%s325] sm:$0xff] %v6072
        %p6076 = scmp.lt.s32.totalorder %s22, 1
        %s6077 = scalar_select %p6076, %s22, 1
        %s6078 = smul.addr %s6077, 8
        %s6079 = scalar_lea.vmem %s6, %s6078
        // Predicated region
        $region57: #{conv_nn_v2_forward.5} parent=43 // pred_check
          %p6080 = pneg %p171
        $region58: #{conv_nn_v2_forward.5} parent=43 // pred_check_branch
          %6082 = sbr.rel (%p6080) target = $region60
        $region59: #{conv_nn_v2_forward.5} parent=43 // pred_region
          _
        $region60: #{conv_nn_v2_forward.5} parent=43 // pred_fallthru
          _
        // Predicated region
        $region61: #{conv_nn_v2_forward.5} parent=43 // pred_check
          %p6083 = pneg %p192
        $region62: #{conv_nn_v2_forward.5} parent=43 // pred_check_branch
          %6085 = sbr.rel (%p6083) target = $region64
        $region63: #{conv_nn_v2_forward.5} parent=43 // pred_region
          _
        $region64: #{conv_nn_v2_forward.5} parent=43 // pred_fallthru
          _
        // Predicated region
        $region65: #{conv_nn_v2_forward.5} parent=43 // pred_check
          %p6086 = pneg %p213
        $region66: #{conv_nn_v2_forward.5} parent=43 // pred_check_branch
          %6088 = sbr.rel (%p6086) target = $region68
        $region67: #{conv_nn_v2_forward.5} parent=43 // pred_region
          _
        $region68: #{conv_nn_v2_forward.5} parent=43 // pred_fallthru
          _
        // Predicated region
        $region69: #{conv_nn_v2_forward.5} parent=43 // pred_check
          %p6089 = pneg %p192
        $region70: #{conv_nn_v2_forward.5} parent=43 // pred_check_branch
          %6091 = sbr.rel (%p6089) target = $region72
        $region71: #{conv_nn_v2_forward.5} parent=43 // pred_region
          _
        $region72: #{conv_nn_v2_forward.5} parent=43 // pred_fallthru
          _
        // Predicated region
        $region73: #{conv_nn_v2_forward.5} parent=43 // pred_check
          %p6092 = pneg %p213
        $region74: #{conv_nn_v2_forward.5} parent=43 // pred_check_branch
          %6094 = sbr.rel (%p6092) target = $region76
        $region75: #{conv_nn_v2_forward.5} parent=43 // pred_region
          _
        $region76: #{conv_nn_v2_forward.5} parent=43 // pred_fallthru
          _
      $region44: #{conv_nn_v2_forward.5} parent=5 // pred_fallthru
        _
      %p6095 = scmp.le.s32.totalorder 2, %s17
      // Predicated region
      $region77: #{conv_nn_v2_forward.5} parent=5 // pred_check
        %p6096 = pneg %p6095
      $region78: #{conv_nn_v2_forward.5} parent=5 // pred_check_branch
        %6098 = sbr.rel (%p6096) target = $region80
      $region79: #{conv_nn_v2_forward.5} parent=5 // pred_region
        %s6099 = ssub.s32 %s17, 2
        // Predicated region
        $region81: #{conv_nn_v2_forward.5} parent=79 // pred_check
          %p6100 = pneg %p177
        $region82: #{conv_nn_v2_forward.5} parent=79 // pred_check_branch
          %6102 = sbr.rel (%p6100) target = $region84
        $region83: #{conv_nn_v2_forward.5} parent=79 // pred_region
          %p6103 = scmp.lt.s32.totalorder %s23, 1
          %s6104 = scalar_select %p6103, %s23, 1
          %s6105 = smul.addr %s6104, 8
          %s6106 = scalar_lea.vmem %s6, %s6105
        $region84: #{conv_nn_v2_forward.5} parent=79 // pred_fallthru
          _
      $region80: #{conv_nn_v2_forward.5} parent=5 // pred_fallthru
        _
    $region6: #{conv_nn_v2_forward.5} parent=1 // loop_footer
      %s21 = sadd.s32 1, %s17
    $region7: #{conv_nn_v2_forward.5} parent=1 // loop_footer_branch
      %16 = sbr.rel target = $region3
    $region8: #{conv_nn_v2_forward.5} parent=1 // loop_exit
      _
    %6107 = vsyncpa [#allocation3], 1
    %s6108 = scalar_lea.sflag [#allocation3], 1
    %6109 = vsyncpa %s6108, 1
    %6110 = vsyncpa [#allocation5], 1

// kernel: conv_nn_v2_forward.6
$region0: #{conv_nn_v2_forward.6}
  #allocation0 [shape = 'u32[]', space=smem, size = 0x4, offset = 0x4, fixed_abs, tag = 'smem constant byte address 0x4 - core index']
  #allocation1 [shape = 'u32[144,128]{1,0:T(1,128)}', space=vmem, size = 0x12000, scoped, tag = 'internal scratch']
  %s0 = inlined_call_operand.vmem [shape: bf16[8,200], index: 0, kind: input, shape index: {}]
  %s1 = inlined_call_operand.vmem [shape: bf16[200,256], index: 1, kind: input, shape index: {}]
  %s2 = inlined_call_operand.vmem [shape: f32[8,1], index: 2, kind: input, shape index: {}]
  %s3 = inlined_call_operand.vmem [shape: f32[8,256], index: 3, kind: output, shape index: {}]
  %s4 = sld [smem:[#allocation0]]
  $region22: #{conv_nn_v2_forward.6} parent=0
    _
  %s6 = ssub.s32 1, %s4
  %s7 = scalar_select 0, %s6, %s4
  // Predicated region
  $region2: #{conv_nn_v2_forward.6} parent=0 // pred_check
    _
  $region3: #{conv_nn_v2_forward.6} parent=0 // pred_check_branch
    %9 = sbr.rel (0) target = $region5
  $region4: #{conv_nn_v2_forward.6} parent=0 // pred_region
    _
  $region5: #{conv_nn_v2_forward.6} parent=0 // pred_fallthru
    _
  // Predicated region
  $region6: #{conv_nn_v2_forward.6} parent=0 // pred_check
    _
  $region7: #{conv_nn_v2_forward.6} parent=0 // pred_check_branch
    %11 = sbr.rel (0) target = $region9
  $region8: #{conv_nn_v2_forward.6} parent=0 // pred_region
    _
  $region9: #{conv_nn_v2_forward.6} parent=0 // pred_fallthru
    _
  // Predicated region
  $region10: #{conv_nn_v2_forward.6} parent=0 // pred_check
    _
  $region11: #{conv_nn_v2_forward.6} parent=0 // pred_check_branch
    %13 = sbr.rel (0) target = $region13
  $region12: #{conv_nn_v2_forward.6} parent=0 // pred_region
    _
  $region13: #{conv_nn_v2_forward.6} parent=0 // pred_fallthru
    _
  %v15 = vld [vmem:[%s0] sm:$0xff]
  %v16 = vld [vmem:[%s1] sm:$0xff]
  %v17 = vld [vmem:[%s1 + $0x8] sm:$0xff]
  %v18 = vld [vmem:[%s1 + $0x10] sm:$0xff]
  %v19 = vld [vmem:[%s1 + $0x18] sm:$0xff]
  %v20 = vld [vmem:[%s1 + $0x20] sm:$0xff]
  %v21 = vld [vmem:[%s1 + $0x28] sm:$0xff]
  %v22 = vld [vmem:[%s1 + $0x30] sm:$0xff]
  %v23 = vld [vmem:[%s1 + $0x38] sm:$0xff]
  %v24 = vld [vmem:[%s1 + $0x40] sm:$0xff]
  %v25 = vld [vmem:[%s1 + $0x48] sm:$0xff]
  %v26 = vld [vmem:[%s1 + $0x50] sm:$0xff]
  %v27 = vld [vmem:[%s1 + $0x58] sm:$0xff]
  %v28 = vld [vmem:[%s1 + $0x60] sm:$0xff]
  %v29 = vld [vmem:[%s1 + $0x68] sm:$0xff]
  %v30 = vld [vmem:[%s1 + $0x70] sm:$0xff]
  %v31 = vld [vmem:[%s1 + $0x78] sm:$0xff]
  %v32 = vld [vmem:[%s1 + $0x80] sm:$0xff]
  %v33 = vld [vmem:[%s1 + $0x88] sm:$0xff]
  %v34 = vld [vmem:[%s1 + $0x90] sm:$0xff]
  %v35 = vld [vmem:[%s1 + $0x98] sm:$0xff]
  %v36 = vld [vmem:[%s1 + $0xa0] sm:$0xff]
  %v37 = vld [vmem:[%s1 + $0xa8] sm:$0xff]
  %v38 = vld [vmem:[%s1 + $0xb0] sm:$0xff]
  %v39 = vld [vmem:[%s1 + $0xb8] sm:$0xff]
  %v40 = vld [vmem:[%s1 + $0xc0] sm:$0xff]
  %v41 = vld [vmem:[%s2] sm:$0xff]
  %43 = vset.pattern.permute.xlu0 0
  %44 = vperm.xlu0 %43, %v41
  %v45 = vpop.permute.xlu0 %44
  %v48 = vunpack.c.l.b16 %v15
  %v49 = vunpack.c.h.b16 %v15
  %v50 = vpack.c.b16 %v48, %v48
  %v51 = vpack.c.b16 %v49, %v49
  %v78 = vunpack.c.l.b16 %v16
  %v79 = vunpack.c.h.b16 %v16
  %v80 = vunpack.c.l.b16 %v17
  %v81 = vunpack.c.h.b16 %v17
  %v82 = vunpack.c.l.b16 %v18
  %v83 = vunpack.c.h.b16 %v18
  %v84 = vunpack.c.l.b16 %v19
  %v85 = vunpack.c.h.b16 %v19
  %v86 = vunpack.c.l.b16 %v20
  %v87 = vunpack.c.h.b16 %v20
  %v88 = vunpack.c.l.b16 %v21
  %v89 = vunpack.c.h.b16 %v21
  %v90 = vunpack.c.l.b16 %v22
  %v91 = vunpack.c.h.b16 %v22
  %v92 = vunpack.c.l.b16 %v23
  %v93 = vunpack.c.h.b16 %v23
  %v94 = vunpack.c.l.b16 %v24
  %v95 = vunpack.c.h.b16 %v24
  %v96 = vunpack.c.l.b16 %v25
  %v97 = vunpack.c.h.b16 %v25
  %v98 = vunpack.c.l.b16 %v26
  %v99 = vunpack.c.h.b16 %v26
  %v100 = vunpack.c.l.b16 %v27
  %v101 = vunpack.c.h.b16 %v27
  %v102 = vunpack.c.l.b16 %v28
  %v103 = vunpack.c.h.b16 %v28
  %v104 = vunpack.c.l.b16 %v29
  %v105 = vunpack.c.h.b16 %v29
  %v106 = vunpack.c.l.b16 %v30
  %v107 = vunpack.c.h.b16 %v30
  %v108 = vunpack.c.l.b16 %v31
  %v109 = vunpack.c.h.b16 %v31
  %v110 = vunpack.c.l.b16 %v32
  %v111 = vunpack.c.h.b16 %v32
  %v112 = vunpack.c.l.b16 %v33
  %v113 = vunpack.c.h.b16 %v33
  %v114 = vunpack.c.l.b16 %v34
  %v115 = vunpack.c.h.b16 %v34
  %v116 = vunpack.c.l.b16 %v35
  %v117 = vunpack.c.h.b16 %v35
  %v118 = vunpack.c.l.b16 %v36
  %v119 = vunpack.c.h.b16 %v36
  %v120 = vunpack.c.l.b16 %v37
  %v121 = vunpack.c.h.b16 %v37
  %v122 = vunpack.c.l.b16 %v38
  %v123 = vunpack.c.h.b16 %v38
  %v124 = vunpack.c.l.b16 %v39
  %v125 = vunpack.c.h.b16 %v39
  %v126 = vunpack.c.l.b16 %v40
  %v127 = vunpack.c.h.b16 %v40
  %v128 = vpack.c.b16 %v80, %v78
  %v129 = vpack.c.b16 %v81, %v79
  %v130 = vpack.c.b16 %v84, %v82
  %v131 = vpack.c.b16 %v85, %v83
  %v132 = vpack.c.b16 %v88, %v86
  %v133 = vpack.c.b16 %v89, %v87
  %v134 = vpack.c.b16 %v92, %v90
  %v135 = vpack.c.b16 %v93, %v91
  %v136 = vpack.c.b16 %v96, %v94
  %v137 = vpack.c.b16 %v97, %v95
  %v138 = vpack.c.b16 %v100, %v98
  %v139 = vpack.c.b16 %v101, %v99
  %v140 = vpack.c.b16 %v104, %v102
  %v141 = vpack.c.b16 %v105, %v103
  %v142 = vpack.c.b16 %v108, %v106
  %v143 = vpack.c.b16 %v109, %v107
  %v144 = vpack.c.b16 %v112, %v110
  %v145 = vpack.c.b16 %v113, %v111
  %v146 = vpack.c.b16 %v116, %v114
  %v147 = vpack.c.b16 %v117, %v115
  %v148 = vpack.c.b16 %v120, %v118
  %v149 = vpack.c.b16 %v121, %v119
  %v150 = vpack.c.b16 %v124, %v122
  %v151 = vpack.c.b16 %v125, %v123
  %v152 = vpack.c.b16 %v126, %v126
  %v153 = vpack.c.b16 %v127, %v127
  %vm178 = vcmask 588800
  %v180 = vsel %vm178, %v51, 0
  %vm182 = vcmask 1043456
  %v184 = vsel %vm182, %v152, 0
  %v187 = vsel %vm182, %v153, 0
  %189 = vmatprep.subr.bf16.mxu0 %v143
  %190 = vmatpush1.bf16.msra.mxu0 %v142
  %191 = vmatprep.subr.bf16.mxu0 %v141
  %192 = vmatpush1.bf16.msra.mxu0 %v140
  %193 = vmatprep.subr.bf16.mxu0 %v139
  %194 = vmatpush1.bf16.msra.mxu0 %v138
  %195 = vmatprep.subr.bf16.mxu0 %v137
  %196 = vmatpush1.bf16.msra.mxu0 %v136
  %197 = vmatprep.subr.bf16.mxu0 %v135
  %198 = vmatpush1.bf16.msra.mxu0 %v134
  %199 = vmatprep.subr.bf16.mxu0 %v133
  %200 = vmatpush1.bf16.msra.mxu0 %v132
  %201 = vmatprep.subr.bf16.mxu0 %v131
  %202 = vmatpush1.bf16.msra.mxu0 %v130
  %203 = vmatprep.subr.bf16.mxu0 %v129
  %204 = vmatpush1.bf16.msra.mxu0 %v128
  %205 = vmatprep.subr.bf16.mxu0 0
  %206 = vmatpush2.bf16.msra.mxu0 0
  %207 = vmatprep.subr.bf16.mxu0 0
  %208 = vmatpush2.bf16.msra.mxu0 0
  %209 = vmatprep.subr.bf16.mxu0 0
  %210 = vmatpush2.bf16.msra.mxu0 0
  %211 = vmatprep.subr.bf16.mxu0 %v187
  %212 = vmatpush2.bf16.msra.mxu0 %v184
  %213 = vmatprep.subr.bf16.mxu0 %v151
  %214 = vmatpush2.bf16.msra.mxu0 %v150
  %215 = vmatprep.subr.bf16.mxu0 %v149
  %216 = vmatpush2.bf16.msra.mxu0 %v148
  %217 = vmatprep.subr.bf16.mxu0 %v147
  %218 = vmatpush2.bf16.msra.mxu0 %v146
  %219 = vmatprep.subr.bf16.mxu0 %v145
  %220 = vmatpush2.bf16.msra.mxu0 %v144
  %221 = vmatprep.mubr.bf16.mxu0 %v180
  %222 = vmatmul.mubr.bf16.gmra.mxu0 %v50
  %v223 = vpop.f32.mrf.mxu0
  %v224 = vadd.f32 %v45, %v223
  %v225 = vpop.f32.mrf.mxu0
  %v226 = vadd.f32 %v45, %v225
  %v227 = vpop.f32.mrf.mxu0
  %v228 = vpop.f32.mrf.mxu0
  %229 = vdwg.mxu0
  %v230 = vtanh.pop %v224
  %v231 = vtanh.pop %v226
  %232 = vst [vmem:[%s3] sm:$0xff] %v230
  %233 = vst [vmem:[%s3 + $0x8] sm:$0xff] %v231
  // Predicated region
  $region14: #{conv_nn_v2_forward.6} parent=0 // pred_check
    _
  $region15: #{conv_nn_v2_forward.6} parent=0 // pred_check_branch
    %235 = sbr.rel (0) target = $region17
  $region16: #{conv_nn_v2_forward.6} parent=0 // pred_region
    _
  $region17: #{conv_nn_v2_forward.6} parent=0 // pred_fallthru
    _
  // Predicated region
  $region18: #{conv_nn_v2_forward.6} parent=0 // pred_check
    _
  $region19: #{conv_nn_v2_forward.6} parent=0 // pred_check_branch
    %237 = sbr.rel (0) target = $region21
  $region20: #{conv_nn_v2_forward.6} parent=0 // pred_region
    _
  $region21: #{conv_nn_v2_forward.6} parent=0 // pred_fallthru
    _

// kernel: conv_nn_v2_forward.7
$region0: #{conv_nn_v2_forward.7}
  #allocation0 [shape = 'u32[]', space=smem, size = 0x4, offset = 0x4, fixed_abs, tag = 'smem constant byte address 0x4 - core index']
  #allocation1 [shape = 'u32[144,128]{1,0:T(1,128)}', space=vmem, size = 0x12000, scoped, tag = 'internal scratch']
  %s0 = inlined_call_operand.vmem [shape: bf16[10,1000], index: 0, kind: input, shape index: {}]
  %s1 = inlined_call_operand.vmem [shape: bf16[1000,256], index: 1, kind: input, shape index: {}]
  %s2 = inlined_call_operand.vmem [shape: f32[10,256], index: 2, kind: output, shape index: {}]
  %s3 = sld [smem:[#allocation0]]
  $region18: #{conv_nn_v2_forward.7} parent=0
    _
  %s5 = ssub.s32 1, %s3
  %s6 = scalar_select 0, %s5, %s3
  // Predicated region
  $region2: #{conv_nn_v2_forward.7} parent=0 // pred_check
    _
  $region3: #{conv_nn_v2_forward.7} parent=0 // pred_check_branch
    %8 = sbr.rel (0) target = $region5
  $region4: #{conv_nn_v2_forward.7} parent=0 // pred_region
    _
  $region5: #{conv_nn_v2_forward.7} parent=0 // pred_fallthru
    _
  // Predicated region
  $region6: #{conv_nn_v2_forward.7} parent=0 // pred_check
    _
  $region7: #{conv_nn_v2_forward.7} parent=0 // pred_check_branch
    %10 = sbr.rel (0) target = $region9
  $region8: #{conv_nn_v2_forward.7} parent=0 // pred_region
    _
  $region9: #{conv_nn_v2_forward.7} parent=0 // pred_fallthru
    _
  %v12 = vld [vmem:[%s0] sm:$0xff]
  %v13 = vld [vmem:[%s0 + $0x8] sm:$0xff]
  %v14 = vld [vmem:[%s0 + $0x10] sm:$0xff]
  %v15 = vld [vmem:[%s0 + $0x18] sm:$0xff]
  %v16 = vld [vmem:[%s0 + $0x20] sm:$0x11]
  %v17 = vld [vmem:[%s0 + $0x28] sm:$0x11]
  %v18 = vld [vmem:[%s0 + $0x30] sm:$0x11]
  %v19 = vld [vmem:[%s0 + $0x38] sm:$0x11]
  %v20 = vld [vmem:[%s1] sm:$0xff]
  %v21 = vld [vmem:[%s1 + $0x8] sm:$0xff]
  %v22 = vld [vmem:[%s1 + $0x10] sm:$0xff]
  %v23 = vld [vmem:[%s1 + $0x18] sm:$0xff]
  %v24 = vld [vmem:[%s1 + $0x20] sm:$0xff]
  %v25 = vld [vmem:[%s1 + $0x28] sm:$0xff]
  %v26 = vld [vmem:[%s1 + $0x30] sm:$0xff]
  %v27 = vld [vmem:[%s1 + $0x38] sm:$0xff]
  %v28 = vld [vmem:[%s1 + $0x40] sm:$0xff]
  %v29 = vld [vmem:[%s1 + $0x48] sm:$0xff]
  %v30 = vld [vmem:[%s1 + $0x50] sm:$0xff]
  %v31 = vld [vmem:[%s1 + $0x58] sm:$0xff]
  %v32 = vld [vmem:[%s1 + $0x60] sm:$0xff]
  %v33 = vld [vmem:[%s1 + $0x68] sm:$0xff]
  %v34 = vld [vmem:[%s1 + $0x70] sm:$0xff]
  %v35 = vld [vmem:[%s1 + $0x78] sm:$0xff]
  %v36 = vld [vmem:[%s1 + $0x80] sm:$0xff]
  %v37 = vld [vmem:[%s1 + $0x88] sm:$0xff]
  %v38 = vld [vmem:[%s1 + $0x90] sm:$0xff]
  %v39 = vld [vmem:[%s1 + $0x98] sm:$0xff]
  %v40 = vld [vmem:[%s1 + $0xa0] sm:$0xff]
  %v41 = vld [vmem:[%s1 + $0xa8] sm:$0xff]
  %v42 = vld [vmem:[%s1 + $0xb0] sm:$0xff]
  %v43 = vld [vmem:[%s1 + $0xb8] sm:$0xff]
  %v44 = vld [vmem:[%s1 + $0xc0] sm:$0xff]
  %v45 = vld [vmem:[%s1 + $0xc8] sm:$0xff]
  %v46 = vld [vmem:[%s1 + $0xd0] sm:$0xff]
  %v47 = vld [vmem:[%s1 + $0xd8] sm:$0xff]
  %v48 = vld [vmem:[%s1 + $0xe0] sm:$0xff]
  %v49 = vld [vmem:[%s1 + $0xe8] sm:$0xff]
  %v50 = vld [vmem:[%s1 + $0xf0] sm:$0xff]
  %v51 = vld [vmem:[%s1 + $0xf8] sm:$0xff]
  %v52 = vld [vmem:[%s1 + $0x100] sm:$0xff]
  %v53 = vld [vmem:[%s1 + $0x108] sm:$0xff]
  %v54 = vld [vmem:[%s1 + $0x110] sm:$0xff]
  %v55 = vld [vmem:[%s1 + $0x118] sm:$0xff]
  %v56 = vld [vmem:[%s1 + $0x120] sm:$0xff]
  %v57 = vld [vmem:[%s1 + $0x128] sm:$0xff]
  %v58 = vld [vmem:[%s1 + $0x130] sm:$0xff]
  %v59 = vld [vmem:[%s1 + $0x138] sm:$0xff]
  %v60 = vld [vmem:[%s1 + $0x140] sm:$0xff]
  %v61 = vld [vmem:[%s1 + $0x148] sm:$0xff]
  %v62 = vld [vmem:[%s1 + $0x150] sm:$0xff]
  %v63 = vld [vmem:[%s1 + $0x158] sm:$0xff]
  %v64 = vld [vmem:[%s1 + $0x160] sm:$0xff]
  %v65 = vld [vmem:[%s1 + $0x168] sm:$0xff]
  %v66 = vld [vmem:[%s1 + $0x170] sm:$0xff]
  %v67 = vld [vmem:[%s1 + $0x178] sm:$0xff]
  %v68 = vld [vmem:[%s1 + $0x180] sm:$0xff]
  %v69 = vld [vmem:[%s1 + $0x188] sm:$0xff]
  %v70 = vld [vmem:[%s1 + $0x190] sm:$0xff]
  %v71 = vld [vmem:[%s1 + $0x198] sm:$0xff]
  %v72 = vld [vmem:[%s1 + $0x1a0] sm:$0xff]
  %v73 = vld [vmem:[%s1 + $0x1a8] sm:$0xff]
  %v74 = vld [vmem:[%s1 + $0x1b0] sm:$0xff]
  %v75 = vld [vmem:[%s1 + $0x1b8] sm:$0xff]
  %v76 = vld [vmem:[%s1 + $0x1c0] sm:$0xff]
  %v77 = vld [vmem:[%s1 + $0x1c8] sm:$0xff]
  %v78 = vld [vmem:[%s1 + $0x1d0] sm:$0xff]
  %v79 = vld [vmem:[%s1 + $0x1d8] sm:$0xff]
  %v80 = vld [vmem:[%s1 + $0x1e0] sm:$0xff]
  %v81 = vld [vmem:[%s1 + $0x1e8] sm:$0xff]
  %v82 = vld [vmem:[%s1 + $0x1f0] sm:$0xff]
  %v83 = vld [vmem:[%s1 + $0x1f8] sm:$0xff]
  %v84 = vld [vmem:[%s1 + $0x200] sm:$0xff]
  %v85 = vld [vmem:[%s1 + $0x208] sm:$0xff]
  %v86 = vld [vmem:[%s1 + $0x210] sm:$0xff]
  %v87 = vld [vmem:[%s1 + $0x218] sm:$0xff]
  %v88 = vld [vmem:[%s1 + $0x220] sm:$0xff]
  %v89 = vld [vmem:[%s1 + $0x228] sm:$0xff]
  %v90 = vld [vmem:[%s1 + $0x230] sm:$0xff]
  %v91 = vld [vmem:[%s1 + $0x238] sm:$0xff]
  %v92 = vld [vmem:[%s1 + $0x240] sm:$0xff]
  %v93 = vld [vmem:[%s1 + $0x248] sm:$0xff]
  %v94 = vld [vmem:[%s1 + $0x250] sm:$0xff]
  %v95 = vld [vmem:[%s1 + $0x258] sm:$0xff]
  %v96 = vld [vmem:[%s1 + $0x260] sm:$0xff]
  %v97 = vld [vmem:[%s1 + $0x268] sm:$0xff]
  %v98 = vld [vmem:[%s1 + $0x270] sm:$0xff]
  %v99 = vld [vmem:[%s1 + $0x278] sm:$0xff]
  %v100 = vld [vmem:[%s1 + $0x280] sm:$0xff]
  %v101 = vld [vmem:[%s1 + $0x288] sm:$0xff]
  %v102 = vld [vmem:[%s1 + $0x290] sm:$0xff]
  %v103 = vld [vmem:[%s1 + $0x298] sm:$0xff]
  %v104 = vld [vmem:[%s1 + $0x2a0] sm:$0xff]
  %v105 = vld [vmem:[%s1 + $0x2a8] sm:$0xff]
  %v106 = vld [vmem:[%s1 + $0x2b0] sm:$0xff]
  %v107 = vld [vmem:[%s1 + $0x2b8] sm:$0xff]
  %v108 = vld [vmem:[%s1 + $0x2c0] sm:$0xff]
  %v109 = vld [vmem:[%s1 + $0x2c8] sm:$0xff]
  %v110 = vld [vmem:[%s1 + $0x2d0] sm:$0xff]
  %v111 = vld [vmem:[%s1 + $0x2d8] sm:$0xff]
  %v112 = vld [vmem:[%s1 + $0x2e0] sm:$0xff]
  %v113 = vld [vmem:[%s1 + $0x2e8] sm:$0xff]
  %v114 = vld [vmem:[%s1 + $0x2f0] sm:$0xff]
  %v115 = vld [vmem:[%s1 + $0x2f8] sm:$0xff]
  %v116 = vld [vmem:[%s1 + $0x300] sm:$0xff]
  %v117 = vld [vmem:[%s1 + $0x308] sm:$0xff]
  %v118 = vld [vmem:[%s1 + $0x310] sm:$0xff]
  %v119 = vld [vmem:[%s1 + $0x318] sm:$0xff]
  %v120 = vld [vmem:[%s1 + $0x320] sm:$0xff]
  %v121 = vld [vmem:[%s1 + $0x328] sm:$0xff]
  %v122 = vld [vmem:[%s1 + $0x330] sm:$0xff]
  %v123 = vld [vmem:[%s1 + $0x338] sm:$0xff]
  %v124 = vld [vmem:[%s1 + $0x340] sm:$0xff]
  %v125 = vld [vmem:[%s1 + $0x348] sm:$0xff]
  %v126 = vld [vmem:[%s1 + $0x350] sm:$0xff]
  %v127 = vld [vmem:[%s1 + $0x358] sm:$0xff]
  %v128 = vld [vmem:[%s1 + $0x360] sm:$0xff]
  %v129 = vld [vmem:[%s1 + $0x368] sm:$0xff]
  %v130 = vld [vmem:[%s1 + $0x370] sm:$0xff]
  %v131 = vld [vmem:[%s1 + $0x378] sm:$0xff]
  %v132 = vld [vmem:[%s1 + $0x380] sm:$0xff]
  %v133 = vld [vmem:[%s1 + $0x388] sm:$0xff]
  %v134 = vld [vmem:[%s1 + $0x390] sm:$0xff]
  %v135 = vld [vmem:[%s1 + $0x398] sm:$0xff]
  %v136 = vld [vmem:[%s1 + $0x3a0] sm:$0xff]
  %v137 = vld [vmem:[%s1 + $0x3a8] sm:$0xff]
  %v138 = vld [vmem:[%s1 + $0x3b0] sm:$0xff]
  %v139 = vld [vmem:[%s1 + $0x3b8] sm:$0xff]
  %v140 = vld [vmem:[%s1 + $0x3c0] sm:$0xff]
  %v141 = vld [vmem:[%s1 + $0x3c8] sm:$0xff]
  %v142 = vld [vmem:[%s1 + $0x3d0] sm:$0xff]
  %v143 = vld [vmem:[%s1 + $0x3d8] sm:$0xff]
  %v144 = vld [vmem:[%s1 + $0x3e0] sm:$0xff]
  %v153 = vunpack.c.l.b16 %v12
  %v154 = vunpack.c.h.b16 %v12
  %v155 = vunpack.c.l.b16 %v13
  %v156 = vunpack.c.h.b16 %v13
  %v157 = vunpack.c.l.b16 %v14
  %v158 = vunpack.c.h.b16 %v14
  %v159 = vunpack.c.l.b16 %v15
  %v160 = vunpack.c.h.b16 %v15
  %v161 = vunpack.c.l.b16 %v16
  %v162 = vunpack.c.h.b16 %v16
  %v163 = vunpack.c.l.b16 %v17
  %v164 = vunpack.c.h.b16 %v17
  %v165 = vunpack.c.l.b16 %v18
  %v166 = vunpack.c.h.b16 %v18
  %v167 = vunpack.c.l.b16 %v19
  %v168 = vunpack.c.h.b16 %v19
  %v169 = vpack.c.b16 %v161, %v153
  %v170 = vpack.c.b16 %v162, %v154
  %v171 = vpack.c.b16 %v163, %v155
  %v172 = vpack.c.b16 %v164, %v156
  %v173 = vpack.c.b16 %v165, %v157
  %v174 = vpack.c.b16 %v166, %v158
  %v175 = vpack.c.b16 %v167, %v159
  %v176 = vpack.c.b16 %v168, %v160
  %v309 = vunpack.c.l.b16 %v20
  %v310 = vunpack.c.h.b16 %v20
  %v311 = vunpack.c.l.b16 %v21
  %v312 = vunpack.c.h.b16 %v21
  %v313 = vunpack.c.l.b16 %v22
  %v314 = vunpack.c.h.b16 %v22
  %v315 = vunpack.c.l.b16 %v23
  %v316 = vunpack.c.h.b16 %v23
  %v317 = vunpack.c.l.b16 %v24
  %v318 = vunpack.c.h.b16 %v24
  %v319 = vunpack.c.l.b16 %v25
  %v320 = vunpack.c.h.b16 %v25
  %v321 = vunpack.c.l.b16 %v26
  %v322 = vunpack.c.h.b16 %v26
  %v323 = vunpack.c.l.b16 %v27
  %v324 = vunpack.c.h.b16 %v27
  %v325 = vunpack.c.l.b16 %v28
  %v326 = vunpack.c.h.b16 %v28
  %v327 = vunpack.c.l.b16 %v29
  %v328 = vunpack.c.h.b16 %v29
  %v329 = vunpack.c.l.b16 %v30
  %v330 = vunpack.c.h.b16 %v30
  %v331 = vunpack.c.l.b16 %v31
  %v332 = vunpack.c.h.b16 %v31
  %v333 = vunpack.c.l.b16 %v32
  %v334 = vunpack.c.h.b16 %v32
  %v335 = vunpack.c.l.b16 %v33
  %v336 = vunpack.c.h.b16 %v33
  %v337 = vunpack.c.l.b16 %v34
  %v338 = vunpack.c.h.b16 %v34
  %v339 = vunpack.c.l.b16 %v35
  %v340 = vunpack.c.h.b16 %v35
  %v341 = vunpack.c.l.b16 %v36
  %v342 = vunpack.c.h.b16 %v36
  %v343 = vunpack.c.l.b16 %v37
  %v344 = vunpack.c.h.b16 %v37
  %v345 = vunpack.c.l.b16 %v38
  %v346 = vunpack.c.h.b16 %v38
  %v347 = vunpack.c.l.b16 %v39
  %v348 = vunpack.c.h.b16 %v39
  %v349 = vunpack.c.l.b16 %v40
  %v350 = vunpack.c.h.b16 %v40
  %v351 = vunpack.c.l.b16 %v41
  %v352 = vunpack.c.h.b16 %v41
  %v353 = vunpack.c.l.b16 %v42
  %v354 = vunpack.c.h.b16 %v42
  %v355 = vunpack.c.l.b16 %v43
  %v356 = vunpack.c.h.b16 %v43
  %v357 = vunpack.c.l.b16 %v44
  %v358 = vunpack.c.h.b16 %v44
  %v359 = vunpack.c.l.b16 %v45
  %v360 = vunpack.c.h.b16 %v45
  %v361 = vunpack.c.l.b16 %v46
  %v362 = vunpack.c.h.b16 %v46
  %v363 = vunpack.c.l.b16 %v47
  %v364 = vunpack.c.h.b16 %v47
  %v365 = vunpack.c.l.b16 %v48
  %v366 = vunpack.c.h.b16 %v48
  %v367 = vunpack.c.l.b16 %v49
  %v368 = vunpack.c.h.b16 %v49
  %v369 = vunpack.c.l.b16 %v50
  %v370 = vunpack.c.h.b16 %v50
  %v371 = vunpack.c.l.b16 %v51
  %v372 = vunpack.c.h.b16 %v51
  %v373 = vunpack.c.l.b16 %v52
  %v374 = vunpack.c.h.b16 %v52
  %v375 = vunpack.c.l.b16 %v53
  %v376 = vunpack.c.h.b16 %v53
  %v377 = vunpack.c.l.b16 %v54
  %v378 = vunpack.c.h.b16 %v54
  %v379 = vunpack.c.l.b16 %v55
  %v380 = vunpack.c.h.b16 %v55
  %v381 = vunpack.c.l.b16 %v56
  %v382 = vunpack.c.h.b16 %v56
  %v383 = vunpack.c.l.b16 %v57
  %v384 = vunpack.c.h.b16 %v57
  %v385 = vunpack.c.l.b16 %v58
  %v386 = vunpack.c.h.b16 %v58
  %v387 = vunpack.c.l.b16 %v59
  %v388 = vunpack.c.h.b16 %v59
  %v389 = vunpack.c.l.b16 %v60
  %v390 = vunpack.c.h.b16 %v60
  %v391 = vunpack.c.l.b16 %v61
  %v392 = vunpack.c.h.b16 %v61
  %v393 = vunpack.c.l.b16 %v62
  %v394 = vunpack.c.h.b16 %v62
  %v395 = vunpack.c.l.b16 %v63
  %v396 = vunpack.c.h.b16 %v63
  %v397 = vunpack.c.l.b16 %v64
  %v398 = vunpack.c.h.b16 %v64
  %v399 = vunpack.c.l.b16 %v65
  %v400 = vunpack.c.h.b16 %v65
  %v401 = vunpack.c.l.b16 %v66
  %v402 = vunpack.c.h.b16 %v66
  %v403 = vunpack.c.l.b16 %v67
  %v404 = vunpack.c.h.b16 %v67
  %v405 = vunpack.c.l.b16 %v68
  %v406 = vunpack.c.h.b16 %v68
  %v407 = vunpack.c.l.b16 %v69
  %v408 = vunpack.c.h.b16 %v69
  %v409 = vunpack.c.l.b16 %v70
  %v410 = vunpack.c.h.b16 %v70
  %v411 = vunpack.c.l.b16 %v71
  %v412 = vunpack.c.h.b16 %v71
  %v413 = vunpack.c.l.b16 %v72
  %v414 = vunpack.c.h.b16 %v72
  %v415 = vunpack.c.l.b16 %v73
  %v416 = vunpack.c.h.b16 %v73
  %v417 = vunpack.c.l.b16 %v74
  %v418 = vunpack.c.h.b16 %v74
  %v419 = vunpack.c.l.b16 %v75
  %v420 = vunpack.c.h.b16 %v75
  %v421 = vunpack.c.l.b16 %v76
  %v422 = vunpack.c.h.b16 %v76
  %v423 = vunpack.c.l.b16 %v77
  %v424 = vunpack.c.h.b16 %v77
  %v425 = vunpack.c.l.b16 %v78
  %v426 = vunpack.c.h.b16 %v78
  %v427 = vunpack.c.l.b16 %v79
  %v428 = vunpack.c.h.b16 %v79
  %v429 = vunpack.c.l.b16 %v80
  %v430 = vunpack.c.h.b16 %v80
  %v431 = vunpack.c.l.b16 %v81
  %v432 = vunpack.c.h.b16 %v81
  %v433 = vunpack.c.l.b16 %v82
  %v434 = vunpack.c.h.b16 %v82
  %v435 = vunpack.c.l.b16 %v83
  %v436 = vunpack.c.h.b16 %v83
  %v437 = vunpack.c.l.b16 %v84
  %v438 = vunpack.c.h.b16 %v84
  %v439 = vunpack.c.l.b16 %v85
  %v440 = vunpack.c.h.b16 %v85
  %v441 = vunpack.c.l.b16 %v86
  %v442 = vunpack.c.h.b16 %v86
  %v443 = vunpack.c.l.b16 %v87
  %v444 = vunpack.c.h.b16 %v87
  %v445 = vunpack.c.l.b16 %v88
  %v446 = vunpack.c.h.b16 %v88
  %v447 = vunpack.c.l.b16 %v89
  %v448 = vunpack.c.h.b16 %v89
  %v449 = vunpack.c.l.b16 %v90
  %v450 = vunpack.c.h.b16 %v90
  %v451 = vunpack.c.l.b16 %v91
  %v452 = vunpack.c.h.b16 %v91
  %v453 = vunpack.c.l.b16 %v92
  %v454 = vunpack.c.h.b16 %v92
  %v455 = vunpack.c.l.b16 %v93
  %v456 = vunpack.c.h.b16 %v93
  %v457 = vunpack.c.l.b16 %v94
  %v458 = vunpack.c.h.b16 %v94
  %v459 = vunpack.c.l.b16 %v95
  %v460 = vunpack.c.h.b16 %v95
  %v461 = vunpack.c.l.b16 %v96
  %v462 = vunpack.c.h.b16 %v96
  %v463 = vunpack.c.l.b16 %v97
  %v464 = vunpack.c.h.b16 %v97
  %v465 = vunpack.c.l.b16 %v98
  %v466 = vunpack.c.h.b16 %v98
  %v467 = vunpack.c.l.b16 %v99
  %v468 = vunpack.c.h.b16 %v99
  %v469 = vunpack.c.l.b16 %v100
  %v470 = vunpack.c.h.b16 %v100
  %v471 = vunpack.c.l.b16 %v101
  %v472 = vunpack.c.h.b16 %v101
  %v473 = vunpack.c.l.b16 %v102
  %v474 = vunpack.c.h.b16 %v102
  %v475 = vunpack.c.l.b16 %v103
  %v476 = vunpack.c.h.b16 %v103
  %v477 = vunpack.c.l.b16 %v104
  %v478 = vunpack.c.h.b16 %v104
  %v479 = vunpack.c.l.b16 %v105
  %v480 = vunpack.c.h.b16 %v105
  %v481 = vunpack.c.l.b16 %v106
  %v482 = vunpack.c.h.b16 %v106
  %v483 = vunpack.c.l.b16 %v107
  %v484 = vunpack.c.h.b16 %v107
  %v485 = vunpack.c.l.b16 %v108
  %v486 = vunpack.c.h.b16 %v108
  %v487 = vunpack.c.l.b16 %v109
  %v488 = vunpack.c.h.b16 %v109
  %v489 = vunpack.c.l.b16 %v110
  %v490 = vunpack.c.h.b16 %v110
  %v491 = vunpack.c.l.b16 %v111
  %v492 = vunpack.c.h.b16 %v111
  %v493 = vunpack.c.l.b16 %v112
  %v494 = vunpack.c.h.b16 %v112
  %v495 = vunpack.c.l.b16 %v113
  %v496 = vunpack.c.h.b16 %v113
  %v497 = vunpack.c.l.b16 %v114
  %v498 = vunpack.c.h.b16 %v114
  %v499 = vunpack.c.l.b16 %v115
  %v500 = vunpack.c.h.b16 %v115
  %v501 = vunpack.c.l.b16 %v116
  %v502 = vunpack.c.h.b16 %v116
  %v503 = vunpack.c.l.b16 %v117
  %v504 = vunpack.c.h.b16 %v117
  %v505 = vunpack.c.l.b16 %v118
  %v506 = vunpack.c.h.b16 %v118
  %v507 = vunpack.c.l.b16 %v119
  %v508 = vunpack.c.h.b16 %v119
  %v509 = vunpack.c.l.b16 %v120
  %v510 = vunpack.c.h.b16 %v120
  %v511 = vunpack.c.l.b16 %v121
  %v512 = vunpack.c.h.b16 %v121
  %v513 = vunpack.c.l.b16 %v122
  %v514 = vunpack.c.h.b16 %v122
  %v515 = vunpack.c.l.b16 %v123
  %v516 = vunpack.c.h.b16 %v123
  %v517 = vunpack.c.l.b16 %v124
  %v518 = vunpack.c.h.b16 %v124
  %v519 = vunpack.c.l.b16 %v125
  %v520 = vunpack.c.h.b16 %v125
  %v521 = vunpack.c.l.b16 %v126
  %v522 = vunpack.c.h.b16 %v126
  %v523 = vunpack.c.l.b16 %v127
  %v524 = vunpack.c.h.b16 %v127
  %v525 = vunpack.c.l.b16 %v128
  %v526 = vunpack.c.h.b16 %v128
  %v527 = vunpack.c.l.b16 %v129
  %v528 = vunpack.c.h.b16 %v129
  %v529 = vunpack.c.l.b16 %v130
  %v530 = vunpack.c.h.b16 %v130
  %v531 = vunpack.c.l.b16 %v131
  %v532 = vunpack.c.h.b16 %v131
  %v533 = vunpack.c.l.b16 %v132
  %v534 = vunpack.c.h.b16 %v132
  %v535 = vunpack.c.l.b16 %v133
  %v536 = vunpack.c.h.b16 %v133
  %v537 = vunpack.c.l.b16 %v134
  %v538 = vunpack.c.h.b16 %v134
  %v539 = vunpack.c.l.b16 %v135
  %v540 = vunpack.c.h.b16 %v135
  %v541 = vunpack.c.l.b16 %v136
  %v542 = vunpack.c.h.b16 %v136
  %v543 = vunpack.c.l.b16 %v137
  %v544 = vunpack.c.h.b16 %v137
  %v545 = vunpack.c.l.b16 %v138
  %v546 = vunpack.c.h.b16 %v138
  %v547 = vunpack.c.l.b16 %v139
  %v548 = vunpack.c.h.b16 %v139
  %v549 = vunpack.c.l.b16 %v140
  %v550 = vunpack.c.h.b16 %v140
  %v551 = vunpack.c.l.b16 %v141
  %v552 = vunpack.c.h.b16 %v141
  %v553 = vunpack.c.l.b16 %v142
  %v554 = vunpack.c.h.b16 %v142
  %v555 = vunpack.c.l.b16 %v143
  %v556 = vunpack.c.h.b16 %v143
  %v557 = vunpack.c.l.b16 %v144
  %v558 = vunpack.c.h.b16 %v144
  %v559 = vpack.c.b16 %v311, %v309
  %v560 = vpack.c.b16 %v312, %v310
  %v561 = vpack.c.b16 %v315, %v313
  %v562 = vpack.c.b16 %v316, %v314
  %v563 = vpack.c.b16 %v319, %v317
  %v564 = vpack.c.b16 %v320, %v318
  %v565 = vpack.c.b16 %v323, %v321
  %v566 = vpack.c.b16 %v324, %v322
  %v567 = vpack.c.b16 %v327, %v325
  %v568 = vpack.c.b16 %v328, %v326
  %v569 = vpack.c.b16 %v331, %v329
  %v570 = vpack.c.b16 %v332, %v330
  %v571 = vpack.c.b16 %v335, %v333
  %v572 = vpack.c.b16 %v336, %v334
  %v573 = vpack.c.b16 %v339, %v337
  %v574 = vpack.c.b16 %v340, %v338
  %v575 = vpack.c.b16 %v343, %v341
  %v576 = vpack.c.b16 %v344, %v342
  %v577 = vpack.c.b16 %v347, %v345
  %v578 = vpack.c.b16 %v348, %v346
  %v579 = vpack.c.b16 %v351, %v349
  %v580 = vpack.c.b16 %v352, %v350
  %v581 = vpack.c.b16 %v355, %v353
  %v582 = vpack.c.b16 %v356, %v354
  %v583 = vpack.c.b16 %v359, %v357
  %v584 = vpack.c.b16 %v360, %v358
  %v585 = vpack.c.b16 %v363, %v361
  %v586 = vpack.c.b16 %v364, %v362
  %v587 = vpack.c.b16 %v367, %v365
  %v588 = vpack.c.b16 %v368, %v366
  %v589 = vpack.c.b16 %v371, %v369
  %v590 = vpack.c.b16 %v372, %v370
  %v591 = vpack.c.b16 %v375, %v373
  %v592 = vpack.c.b16 %v376, %v374
  %v593 = vpack.c.b16 %v379, %v377
  %v594 = vpack.c.b16 %v380, %v378
  %v595 = vpack.c.b16 %v383, %v381
  %v596 = vpack.c.b16 %v384, %v382
  %v597 = vpack.c.b16 %v387, %v385
  %v598 = vpack.c.b16 %v388, %v386
  %v599 = vpack.c.b16 %v391, %v389
  %v600 = vpack.c.b16 %v392, %v390
  %v601 = vpack.c.b16 %v395, %v393
  %v602 = vpack.c.b16 %v396, %v394
  %v603 = vpack.c.b16 %v399, %v397
  %v604 = vpack.c.b16 %v400, %v398
  %v605 = vpack.c.b16 %v403, %v401
  %v606 = vpack.c.b16 %v404, %v402
  %v607 = vpack.c.b16 %v407, %v405
  %v608 = vpack.c.b16 %v408, %v406
  %v609 = vpack.c.b16 %v411, %v409
  %v610 = vpack.c.b16 %v412, %v410
  %v611 = vpack.c.b16 %v415, %v413
  %v612 = vpack.c.b16 %v416, %v414
  %v613 = vpack.c.b16 %v419, %v417
  %v614 = vpack.c.b16 %v420, %v418
  %v615 = vpack.c.b16 %v423, %v421
  %v616 = vpack.c.b16 %v424, %v422
  %v617 = vpack.c.b16 %v427, %v425
  %v618 = vpack.c.b16 %v428, %v426
  %v619 = vpack.c.b16 %v431, %v429
  %v620 = vpack.c.b16 %v432, %v430
  %v621 = vpack.c.b16 %v435, %v433
  %v622 = vpack.c.b16 %v436, %v434
  %v623 = vpack.c.b16 %v439, %v437
  %v624 = vpack.c.b16 %v440, %v438
  %v625 = vpack.c.b16 %v443, %v441
  %v626 = vpack.c.b16 %v444, %v442
  %v627 = vpack.c.b16 %v447, %v445
  %v628 = vpack.c.b16 %v448, %v446
  %v629 = vpack.c.b16 %v451, %v449
  %v630 = vpack.c.b16 %v452, %v450
  %v631 = vpack.c.b16 %v455, %v453
  %v632 = vpack.c.b16 %v456, %v454
  %v633 = vpack.c.b16 %v459, %v457
  %v634 = vpack.c.b16 %v460, %v458
  %v635 = vpack.c.b16 %v463, %v461
  %v636 = vpack.c.b16 %v464, %v462
  %v637 = vpack.c.b16 %v467, %v465
  %v638 = vpack.c.b16 %v468, %v466
  %v639 = vpack.c.b16 %v471, %v469
  %v640 = vpack.c.b16 %v472, %v470
  %v641 = vpack.c.b16 %v475, %v473
  %v642 = vpack.c.b16 %v476, %v474
  %v643 = vpack.c.b16 %v479, %v477
  %v644 = vpack.c.b16 %v480, %v478
  %v645 = vpack.c.b16 %v483, %v481
  %v646 = vpack.c.b16 %v484, %v482
  %v647 = vpack.c.b16 %v487, %v485
  %v648 = vpack.c.b16 %v488, %v486
  %v649 = vpack.c.b16 %v491, %v489
  %v650 = vpack.c.b16 %v492, %v490
  %v651 = vpack.c.b16 %v495, %v493
  %v652 = vpack.c.b16 %v496, %v494
  %v653 = vpack.c.b16 %v499, %v497
  %v654 = vpack.c.b16 %v500, %v498
  %v655 = vpack.c.b16 %v503, %v501
  %v656 = vpack.c.b16 %v504, %v502
  %v657 = vpack.c.b16 %v507, %v505
  %v658 = vpack.c.b16 %v508, %v506
  %v659 = vpack.c.b16 %v511, %v509
  %v660 = vpack.c.b16 %v512, %v510
  %v661 = vpack.c.b16 %v515, %v513
  %v662 = vpack.c.b16 %v516, %v514
  %v663 = vpack.c.b16 %v519, %v517
  %v664 = vpack.c.b16 %v520, %v518
  %v665 = vpack.c.b16 %v523, %v521
  %v666 = vpack.c.b16 %v524, %v522
  %v667 = vpack.c.b16 %v527, %v525
  %v668 = vpack.c.b16 %v528, %v526
  %v669 = vpack.c.b16 %v531, %v529
  %v670 = vpack.c.b16 %v532, %v530
  %v671 = vpack.c.b16 %v535, %v533
  %v672 = vpack.c.b16 %v536, %v534
  %v673 = vpack.c.b16 %v539, %v537
  %v674 = vpack.c.b16 %v540, %v538
  %v675 = vpack.c.b16 %v543, %v541
  %v676 = vpack.c.b16 %v544, %v542
  %v677 = vpack.c.b16 %v547, %v545
  %v678 = vpack.c.b16 %v548, %v546
  %v679 = vpack.c.b16 %v551, %v549
  %v680 = vpack.c.b16 %v552, %v550
  %v681 = vpack.c.b16 %v555, %v553
  %v682 = vpack.c.b16 %v556, %v554
  %v683 = vpack.c.b16 %v557, %v557
  %v684 = vpack.c.b16 %v558, %v558
  %vm809 = vcmask 850944
  %v811 = vsel %vm809, %v176, 0
  %vm813 = vcmask 1043456
  %v815 = vsel %vm813, %v683, 0
  %v818 = vsel %vm813, %v684, 0
  %820 = vmatprep.subr.bf16.mxu0 %v574
  %821 = vmatpush1.bf16.msra.mxu0 %v573
  %822 = vmatprep.subr.bf16.mxu0 %v572
  %823 = vmatpush1.bf16.msra.mxu0 %v571
  %824 = vmatprep.subr.bf16.mxu0 %v570
  %825 = vmatpush1.bf16.msra.mxu0 %v569
  %826 = vmatprep.subr.bf16.mxu0 %v568
  %827 = vmatpush1.bf16.msra.mxu0 %v567
  %828 = vmatprep.subr.bf16.mxu0 %v566
  %829 = vmatpush1.bf16.msra.mxu0 %v565
  %830 = vmatprep.subr.bf16.mxu0 %v564
  %831 = vmatpush1.bf16.msra.mxu0 %v563
  %832 = vmatprep.subr.bf16.mxu0 %v562
  %833 = vmatpush1.bf16.msra.mxu0 %v561
  %834 = vmatprep.subr.bf16.mxu0 %v560
  %835 = vmatpush1.bf16.msra.mxu0 %v559
  %836 = vmatprep.subr.bf16.mxu0 %v590
  %837 = vmatpush2.bf16.msra.mxu0 %v589
  %838 = vmatprep.subr.bf16.mxu0 %v588
  %839 = vmatpush2.bf16.msra.mxu0 %v587
  %840 = vmatprep.subr.bf16.mxu0 %v586
  %841 = vmatpush2.bf16.msra.mxu0 %v585
  %842 = vmatprep.subr.bf16.mxu0 %v584
  %843 = vmatpush2.bf16.msra.mxu0 %v583
  %844 = vmatprep.subr.bf16.mxu0 %v582
  %845 = vmatpush2.bf16.msra.mxu0 %v581
  %846 = vmatprep.subr.bf16.mxu0 %v580
  %847 = vmatpush2.bf16.msra.mxu0 %v579
  %848 = vmatprep.subr.bf16.mxu0 %v578
  %849 = vmatpush2.bf16.msra.mxu0 %v577
  %850 = vmatprep.subr.bf16.mxu0 %v576
  %851 = vmatpush2.bf16.msra.mxu0 %v575
  %852 = vmatprep.mubr.bf16.mxu0 %v170
  %853 = vmatmul.mubr.bf16.gmra.mxu0 %v169
  %v854 = vpop.f32.mrf.mxu0
  %v855 = vadd.f32 0.0, %v854
  %v856 = vpop.f32.mrf.mxu0
  %v857 = vadd.f32 0.0, %v856
  %v858 = vpop.f32.mrf.mxu0
  %v859 = vadd.f32 0.0, %v858
  %v860 = vpop.f32.mrf.mxu0
  %v861 = vadd.f32 0.0, %v860
  %862 = vdwg.mxu0
  %863 = vmatprep.subr.bf16.mxu0 %v606
  %864 = vmatpush1.bf16.msra.mxu0 %v605
  %865 = vmatprep.subr.bf16.mxu0 %v604
  %866 = vmatpush1.bf16.msra.mxu0 %v603
  %867 = vmatprep.subr.bf16.mxu0 %v602
  %868 = vmatpush1.bf16.msra.mxu0 %v601
  %869 = vmatprep.subr.bf16.mxu0 %v600
  %870 = vmatpush1.bf16.msra.mxu0 %v599
  %871 = vmatprep.subr.bf16.mxu0 %v598
  %872 = vmatpush1.bf16.msra.mxu0 %v597
  %873 = vmatprep.subr.bf16.mxu0 %v596
  %874 = vmatpush1.bf16.msra.mxu0 %v595
  %875 = vmatprep.subr.bf16.mxu0 %v594
  %876 = vmatpush1.bf16.msra.mxu0 %v593
  %877 = vmatprep.subr.bf16.mxu0 %v592
  %878 = vmatpush1.bf16.msra.mxu0 %v591
  %879 = vmatprep.subr.bf16.mxu0 %v622
  %880 = vmatpush2.bf16.msra.mxu0 %v621
  %881 = vmatprep.subr.bf16.mxu0 %v620
  %882 = vmatpush2.bf16.msra.mxu0 %v619
  %883 = vmatprep.subr.bf16.mxu0 %v618
  %884 = vmatpush2.bf16.msra.mxu0 %v617
  %885 = vmatprep.subr.bf16.mxu0 %v616
  %886 = vmatpush2.bf16.msra.mxu0 %v615
  %887 = vmatprep.subr.bf16.mxu0 %v614
  %888 = vmatpush2.bf16.msra.mxu0 %v613
  %889 = vmatprep.subr.bf16.mxu0 %v612
  %890 = vmatpush2.bf16.msra.mxu0 %v611
  %891 = vmatprep.subr.bf16.mxu0 %v610
  %892 = vmatpush2.bf16.msra.mxu0 %v609
  %893 = vmatprep.subr.bf16.mxu0 %v608
  %894 = vmatpush2.bf16.msra.mxu0 %v607
  %895 = vmatprep.mubr.bf16.mxu0 %v172
  %896 = vmatmul.mubr.bf16.gmra.mxu0 %v171
  %v897 = vpop.f32.mrf.mxu0
  %v898 = vadd.f32 %v855, %v897
  %v899 = vpop.f32.mrf.mxu0
  %v900 = vadd.f32 %v857, %v899
  %v901 = vpop.f32.mrf.mxu0
  %v902 = vadd.f32 %v859, %v901
  %v903 = vpop.f32.mrf.mxu0
  %v904 = vadd.f32 %v861, %v903
  %905 = vdwg.mxu0
  %906 = vmatprep.subr.bf16.mxu0 %v638
  %907 = vmatpush1.bf16.msra.mxu0 %v637
  %908 = vmatprep.subr.bf16.mxu0 %v636
  %909 = vmatpush1.bf16.msra.mxu0 %v635
  %910 = vmatprep.subr.bf16.mxu0 %v634
  %911 = vmatpush1.bf16.msra.mxu0 %v633
  %912 = vmatprep.subr.bf16.mxu0 %v632
  %913 = vmatpush1.bf16.msra.mxu0 %v631
  %914 = vmatprep.subr.bf16.mxu0 %v630
  %915 = vmatpush1.bf16.msra.mxu0 %v629
  %916 = vmatprep.subr.bf16.mxu0 %v628
  %917 = vmatpush1.bf16.msra.mxu0 %v627
  %918 = vmatprep.subr.bf16.mxu0 %v626
  %919 = vmatpush1.bf16.msra.mxu0 %v625
  %920 = vmatprep.subr.bf16.mxu0 %v624
  %921 = vmatpush1.bf16.msra.mxu0 %v623
  %922 = vmatprep.subr.bf16.mxu0 %v654
  %923 = vmatpush2.bf16.msra.mxu0 %v653
  %924 = vmatprep.subr.bf16.mxu0 %v652
  %925 = vmatpush2.bf16.msra.mxu0 %v651
  %926 = vmatprep.subr.bf16.mxu0 %v650
  %927 = vmatpush2.bf16.msra.mxu0 %v649
  %928 = vmatprep.subr.bf16.mxu0 %v648
  %929 = vmatpush2.bf16.msra.mxu0 %v647
  %930 = vmatprep.subr.bf16.mxu0 %v646
  %931 = vmatpush2.bf16.msra.mxu0 %v645
  %932 = vmatprep.subr.bf16.mxu0 %v644
  %933 = vmatpush2.bf16.msra.mxu0 %v643
  %934 = vmatprep.subr.bf16.mxu0 %v642
  %935 = vmatpush2.bf16.msra.mxu0 %v641
  %936 = vmatprep.subr.bf16.mxu0 %v640
  %937 = vmatpush2.bf16.msra.mxu0 %v639
  %938 = vmatprep.mubr.bf16.mxu0 %v174
  %939 = vmatmul.mubr.bf16.gmra.mxu0 %v173
  %v940 = vpop.f32.mrf.mxu0
  %v941 = vadd.f32 %v898, %v940
  %v942 = vpop.f32.mrf.mxu0
  %v943 = vadd.f32 %v900, %v942
  %v944 = vpop.f32.mrf.mxu0
  %v945 = vadd.f32 %v902, %v944
  %v946 = vpop.f32.mrf.mxu0
  %v947 = vadd.f32 %v904, %v946
  %948 = vdwg.mxu0
  %949 = vmatprep.subr.bf16.mxu0 %v670
  %950 = vmatpush1.bf16.msra.mxu0 %v669
  %951 = vmatprep.subr.bf16.mxu0 %v668
  %952 = vmatpush1.bf16.msra.mxu0 %v667
  %953 = vmatprep.subr.bf16.mxu0 %v666
  %954 = vmatpush1.bf16.msra.mxu0 %v665
  %955 = vmatprep.subr.bf16.mxu0 %v664
  %956 = vmatpush1.bf16.msra.mxu0 %v663
  %957 = vmatprep.subr.bf16.mxu0 %v662
  %958 = vmatpush1.bf16.msra.mxu0 %v661
  %959 = vmatprep.subr.bf16.mxu0 %v660
  %960 = vmatpush1.bf16.msra.mxu0 %v659
  %961 = vmatprep.subr.bf16.mxu0 %v658
  %962 = vmatpush1.bf16.msra.mxu0 %v657
  %963 = vmatprep.subr.bf16.mxu0 %v656
  %964 = vmatpush1.bf16.msra.mxu0 %v655
  %965 = vmatprep.subr.bf16.mxu0 0
  %966 = vmatpush2.bf16.msra.mxu0 0
  %967 = vmatprep.subr.bf16.mxu0 %v818
  %968 = vmatpush2.bf16.msra.mxu0 %v815
  %969 = vmatprep.subr.bf16.mxu0 %v682
  %970 = vmatpush2.bf16.msra.mxu0 %v681
  %971 = vmatprep.subr.bf16.mxu0 %v680
  %972 = vmatpush2.bf16.msra.mxu0 %v679
  %973 = vmatprep.subr.bf16.mxu0 %v678
  %974 = vmatpush2.bf16.msra.mxu0 %v677
  %975 = vmatprep.subr.bf16.mxu0 %v676
  %976 = vmatpush2.bf16.msra.mxu0 %v675
  %977 = vmatprep.subr.bf16.mxu0 %v674
  %978 = vmatpush2.bf16.msra.mxu0 %v673
  %979 = vmatprep.subr.bf16.mxu0 %v672
  %980 = vmatpush2.bf16.msra.mxu0 %v671
  %981 = vmatprep.mubr.bf16.mxu0 %v811
  %982 = vmatmul.mubr.bf16.gmra.mxu0 %v175
  %v983 = vpop.f32.mrf.mxu0
  %v984 = vadd.f32 %v941, %v983
  %v985 = vpop.f32.mrf.mxu0
  %v986 = vadd.f32 %v943, %v985
  %v987 = vpop.f32.mrf.mxu0
  %v988 = vadd.f32 %v945, %v987
  %v989 = vpop.f32.mrf.mxu0
  %v990 = vadd.f32 %v947, %v989
  %991 = vdwg.mxu0
  %v992 = vxor.u32 %v984, 2147483648
  %v993 = vxor.u32 %v986, 2147483648
  %v994 = vxor.u32 %v988, 2147483648
  %v995 = vxor.u32 %v990, 2147483648
  %v996 = vmul.f32 %v992, 1.442695
  %v997 = vpow.pop %v996
  %v998 = vmul.f32 %v993, 1.442695
  %v999 = vpow.pop %v998
  %v1000 = vmul.f32 %v994, 1.442695
  %v1001 = vpow.pop %v1000
  %v1002 = vmul.f32 %v995, 1.442695
  %v1003 = vpow.pop %v1002
  %v1004 = vadd.f32 %v997, 1.0
  %v1005 = vadd.f32 %v999, 1.0
  %v1006 = vadd.f32 %v1001, 1.0
  %v1007 = vadd.f32 %v1003, 1.0
  %v1008 = vrcp.pop %v1004
  %v1009 = vmul.f32 1.0, %v1008
  %v1010 = vrcp.pop %v1005
  %v1011 = vmul.f32 1.0, %v1010
  %v1012 = vrcp.pop %v1006
  %v1013 = vmul.f32 1.0, %v1012
  %v1014 = vrcp.pop %v1007
  %v1015 = vmul.f32 1.0, %v1014
  %1016 = vst [vmem:[%s2] sm:$0xff] %v1009
  %1017 = vst [vmem:[%s2 + $0x8] sm:$0xff] %v1011
  %1018 = vst [vmem:[%s2 + $0x10] sm:$0x3] %v1013
  %1019 = vst [vmem:[%s2 + $0x18] sm:$0x3] %v1015
  // Predicated region
  $region10: #{conv_nn_v2_forward.7} parent=0 // pred_check
    _
  $region11: #{conv_nn_v2_forward.7} parent=0 // pred_check_branch
    %1021 = sbr.rel (0) target = $region13
  $region12: #{conv_nn_v2_forward.7} parent=0 // pred_region
    _
  $region13: #{conv_nn_v2_forward.7} parent=0 // pred_fallthru
    _
  // Predicated region
  $region14: #{conv_nn_v2_forward.7} parent=0 // pred_check
    _
  $region15: #{conv_nn_v2_forward.7} parent=0 // pred_check_branch
    %1023 = sbr.rel (0) target = $region17
  $region16: #{conv_nn_v2_forward.7} parent=0 // pred_region
    _
  $region17: #{conv_nn_v2_forward.7} parent=0 // pred_fallthru
    _

</llo_original>
